<compile_context>
chip_gen: v6e
topology: v6e:2x2x1
jax: 0.10.0
libtpu: 0.0.40
codegen_flags: <defaults>
</compile_context>

<pallas_src>
import functools

import jax
import jax.numpy as jnp
from jax import lax
from jax.experimental import pallas as pl
from jax.experimental.pallas import tpu as pltpu

EPS = 1e-8      # GlobalLayerNorm eps (matches the PyTorch module)
LN_EPS = 1e-5   # nn.LayerNorm default eps (ChannelWiseLayerNorm)
POOL = 4        # nn.AvgPool1d(4)


# ---------------------------------------------------------------------------
# Hardware-aware VMEM budget (v5e/v6e: 128 MiB physical, v7x: 64 MiB).
# ---------------------------------------------------------------------------
@functools.lru_cache(maxsize=None)
def _vmem_limit_bytes():
    cap = 128 * 1024 * 1024
    try:
        cap = int(pltpu.get_tpu_info().vmem_capacity_bytes)
    except Exception:
        pass
    # Leave headroom for input double-buffers / compiler-internal scratch.
    return int(min(cap * 3 // 4, 100 * 1024 * 1024))


# ---------------------------------------------------------------------------
# One-time probe: pltpu.roll availability / direction on this backend.
# Returns +1 if pltpu.roll matches jnp.roll (element i -> i+shift), -1 if it rotates the
# opposite way, 0 if it does not lower (the fused kernel then uses a concat fallback).
# ---------------------------------------------------------------------------
@functools.lru_cache(maxsize=None)
def _roll_direction():
    try:
        def k(x_ref, o_ref):
            o_ref[...] = pltpu.roll(x_ref[...], 3, 0)
        x = jnp.arange(16 * 256, dtype=jnp.float32).reshape(16, 256)
        y = jax.block_until_ready(
            pl.pallas_call(k, out_shape=jax.ShapeDtypeStruct((16, 256), jnp.float32))(x))
        if bool(jnp.array_equal(y[3], x[0])):
            return 1
        if bool(jnp.array_equal(y[0], x[3])):
            return -1
        return 0
    except Exception:   # defensive: fall back to the concat-based shift path
        return 0


# ---------------------------------------------------------------------------
# Shared kernel body: X TemporalBlocks on a resident [K, B] activation + AvgPool1d(pool).
# Each block: 1x1 conv -> PReLU -> gLN -> depthwise dilated conv -> PReLU
#             -> (gLN folded into) pointwise conv -> + residual
# ---------------------------------------------------------------------------
def _gln_mean_inv(t, eps):
    """One-pass gLN stats over (time, channels): reduce the time axis first so the
    expensive cross-lane reduce only touches a [1, H] row; rsqrt on the EUP.
    Inputs are post-norm / post-PReLU activations with O(1) mean/var, so one-pass
    f32 variance is well conditioned here.
    # TODO(synk): switch to a shifted/Welford accumulation if K grows to >~100k frames.
    """
    n = float(t.shape[0] * t.shape[1])
    c1 = jnp.sum(t, axis=0, keepdims=True)           # [1, H]  (VPU sublane adds)
    c2 = jnp.sum(t * t, axis=0, keepdims=True)       # [1, H]
    s1 = jnp.sum(c1, axis=1, keepdims=True)          # [1, 1]  (single XLU reduce)
    s2 = jnp.sum(c2, axis=1, keepdims=True)          # [1, 1]
    mean = s1 * (1.0 / n)
    var = jnp.maximum(s2 * (1.0 / n) - mean * mean, 0.0)
    return mean, lax.rsqrt(var + eps)


def _stack_body(x, alpha_ref, w1_ref, g1_ref, b1_ref, wd_ref,
                w2g_ref, gw2_ref, bw2_ref, o_ref, act_ref,
                *, ksize, nblocks, pool, roll_dir):
    K = x.shape[0]
    row = lax.broadcasted_iota(jnp.int32, (K, 1), 0)     # time index for boundary masks

    # TODO(synk): if the bundle dump shows spills from this fully unrolled body, convert to
    # lax.fori_loop with dynamic block indexing to bound live ranges.
    for blk in range(nblocks):                           # static unroll over the X blocks
        dilation = 2 ** blk
        pad = (ksize - 1) * dilation // 2

        # --- 1x1 conv (B -> H): bf16 operands, f32 MXU accumulation ---
        y = jnp.dot(x.astype(jnp.bfloat16), w1_ref[blk],
                    preferred_element_type=jnp.float32)                   # [K, H]
        # --- PReLU (alpha scalar from SMEM) ---
        y = jnp.where(y >= 0.0, y, alpha_ref[0, blk] * y)
        # --- gLN1: one-pass stats, hoisted scale/bias, 2-op affine ---
        mean1, inv1 = _gln_mean_inv(y, EPS)
        scale1 = g1_ref[blk] * inv1                                       # [1, H]
        bias1 = b1_ref[blk] - mean1 * scale1                              # [1, H]
        y = y * scale1 + bias1

        # --- depthwise dilated conv, 'same' padding:
        #     out[t] = sum_p wd[p] * y[t + p*d - pad]  (zeros outside) ---
        H = y.shape[1]
        wd = wd_ref[blk]                                                  # [ksize, H] f32
        z = None
        if roll_dir != 0:
            # shift on the XLU (roll) + VPU boundary mask; no padded copy materialized
            # TODO(synk): on v6e/v7x the per-tap K*H mask could be replaced by an unmasked
            # roll-accumulate + <=pad boundary-row fix-up; elementwise work is the binding
            # slot there.
            for p in range(ksize):
                s = p * dilation - pad
                tap = wd[p:p + 1, :]
                if s == 0:
                    c = y * tap
                else:
                    shifted = pltpu.roll(y, (-s * roll_dir) % K, 0)
                    ok = jnp.logical_and(row + s >= 0, row + s < K)
                    c = jnp.where(ok, shifted * tap, 0.0)
                z = c if z is None else z + c
        else:
            # fallback: explicit zero-padded copy (always-supported path)
            zpad = jnp.zeros((pad, H), dtype=y.dtype)
            yp = jnp.concatenate([zpad, y, zpad], axis=0)
            for p in range(ksize):
                c = yp[p * dilation: p * dilation + K, :] * wd[p:p + 1, :]
                z = c if z is None else z + c

        # --- PReLU ---
        z = jnp.where(z >= 0.0, z, alpha_ref[1, blk] * z)
        # --- gLN2 folded into the pointwise conv (H -> B):
        #     gLN2(z) @ W2 = inv*(z @ (g2 (.) W2)) + (b2 @ W2 - mean*inv*(g2 @ W2)) ---
        mean2, inv2 = _gln_mean_inv(z, EPS)
        dz = jnp.dot(z.astype(jnp.bfloat16), w2g_ref[blk],
                     preferred_element_type=jnp.float32)                  # [K, B]
        bias2 = bw2_ref[blk] - (mean2 * inv2) * gw2_ref[blk]              # [1, B]
        contrib = dz * inv2 + bias2
        if blk == nblocks - 1:
            # final residual goes straight into the pool scratch (no extra full-tensor copy)
            act_ref[...] = x + contrib
        else:
            x = x + contrib

    # --- fused AvgPool1d(pool): strided sublane reads of the resident activation.
    #     Ko = K // pool floors the trailing remainder, matching nn.AvgPool1d. ---
    Ko = K // pool
    acc = act_ref[pl.ds(0, Ko, stride=pool)]
    for q in range(1, pool):
        acc = acc + act_ref[pl.ds(q, Ko, stride=pool)]
    o_ref[0] = acc * (1.0 / pool)


def _tcn_pool_kernel(alpha_ref, x_ref, w1_ref, g1_ref, b1_ref, wd_ref,
                     w2g_ref, gw2_ref, bw2_ref, o_ref, act_ref,
                     *, ksize, nblocks, pool, roll_dir):
    _stack_body(x_ref[0], alpha_ref, w1_ref, g1_ref, b1_ref, wd_ref,
                w2g_ref, gw2_ref, bw2_ref, o_ref, act_ref,
                ksize=ksize, nblocks=nblocks, pool=pool, roll_dir=roll_dir)


def _enc_tcn_pool_kernel(alpha_ref, ch_ref, wt_ref, wb_ref, cg_ref, cb_ref,
                         w1_ref, g1_ref, b1_ref, wd_ref, w2g_ref, gw2_ref, bw2_ref,
                         o_ref, act_ref, *, ksize, nblocks, pool, roll_dir):
    # Encoder prologue: Conv1d(1, N, L, stride=L//2, padding=L//2, bias=False) expressed as
    # two half-window matmuls on non-overlapping chunks, then ReLU and per-row cLN.
    K = ch_ref.shape[1] - 1
    c = ch_ref[0]                                                        # [K+1, L//2] bf16
    y = (jnp.dot(c[:K], wt_ref[...], preferred_element_type=jnp.float32) +
         jnp.dot(c[1:], wb_ref[...], preferred_element_type=jnp.float32))   # [K, N] f32
    y = jnp.maximum(y, 0.0)                                              # ReLU
    # ChannelWiseLayerNorm over channels (last dim): one-pass stats + rsqrt scale
    n = float(y.shape[-1])
    s1 = jnp.sum(y, axis=-1, keepdims=True)
    s2 = jnp.sum(y * y, axis=-1, keepdims=True)
    mean = s1 * (1.0 / n)
    var = jnp.maximum(s2 * (1.0 / n) - mean * mean, 0.0)
    inv = lax.rsqrt(var + LN_EPS)                                        # [K, 1]
    x = (y - mean) * inv * cg_ref[...] + cb_ref[...]                     # residual stream
    _stack_body(x, alpha_ref, w1_ref, g1_ref, b1_ref, wd_ref,
                w2g_ref, gw2_ref, bw2_ref, o_ref, act_ref,
                ksize=ksize, nblocks=nblocks, pool=pool, roll_dir=roll_dir)


# ---------------------------------------------------------------------------
# Wrappers
# ---------------------------------------------------------------------------
def _fold_stack(stk):
    """Precompute the gLN2->pointwise folding constants (tiny, outside the kernel)."""
    w2 = stk["w2"]                                                   # [X, H, B] f32
    g2 = stk["g2"]                                                   # [X, 1, H]
    w2g = (w2 * jnp.swapaxes(g2, 1, 2)).astype(jnp.bfloat16)         # gamma (.) W2
    gw2 = jnp.einsum("xuh,xhb->xub", g2, w2)                         # gamma @ W2  [X,1,B]
    bw2 = jnp.einsum("xuh,xhb->xub", stk["b2"], w2)                  # beta  @ W2  [X,1,B]
    return (stk["w1"], stk["g1"], stk["b1"], stk["wd"], w2g, gw2, bw2)


def _stack_in_specs(X, B, H, ksize):
    return [
        pl.BlockSpec((X, B, H), lambda m: (0, 0, 0)),       # 1x1 conv weights      (bf16)
        pl.BlockSpec((X, 1, H), lambda m: (0, 0, 0)),       # gLN1 gamma
        pl.BlockSpec((X, 1, H), lambda m: (0, 0, 0)),       # gLN1 beta
        pl.BlockSpec((X, ksize, H), lambda m: (0, 0, 0)),   # depthwise taps        (f32)
        pl.BlockSpec((X, H, B), lambda m: (0, 0, 0)),       # gamma (.) w2          (bf16)
        pl.BlockSpec((X, 1, B), lambda m: (0, 0, 0)),       # gamma @ w2            (f32)
        pl.BlockSpec((X, 1, B), lambda m: (0, 0, 0)),       # beta  @ w2            (f32)
    ]


def _cost(M, K, B, H, ksize, X, pool, enc=None):
    flops = M * X * (4 * K * B * H                 # 1x1 + pointwise matmuls
                     + 2 * K * H * ksize           # depthwise dilated conv
                     + 14 * K * H + 8 * K * B)     # PReLU / gLN stats + affine / residual
    flops += M * K * B                             # pooling
    trans = 2 * M * X
    bytes_accessed = (M * (K // pool) * B * 4
                      + X * (2 * B * H * 2 + (ksize + 2) * H * 4 + 2 * B * 4))
    if enc is None:
        bytes_accessed += M * K * B * 4
    else:
        L, N = enc
        flops += M * (2 * K * L * N + 10 * K * N)
        trans += M * K
        bytes_accessed += M * (K + 1) * (L // 2) * 2 + L * N * 2 + 2 * N * 4
    return pl.CostEstimate(flops=int(flops), transcendentals=int(trans),
                           bytes_accessed=int(bytes_accessed))


def encoder_tcn_stack_pool(chunks, enc_w, cln_w, cln_b, stk, *, ksize, pool=POOL):
    """One fused pallas_call = encoder (Conv1d+ReLU+cLN) -> tcn (X blocks) -> AvgPool1d."""
    M, Kp1, S = chunks.shape
    K = Kp1 - 1
    N = enc_w.shape[1]
    X, B, H = stk["w1"].shape
    assert N == B, "encoder channel count must equal the TCN in_channels"
    Ko = K // pool
    w_top, w_bot = enc_w[:S], enc_w[S:]
    kern = functools.partial(_enc_tcn_pool_kernel, ksize=ksize, nblocks=X, pool=pool,
                             roll_dir=_roll_direction())
    return pl.pallas_call(
        kern,
        out_shape=jax.ShapeDtypeStruct((M, Ko, B), jnp.float32),
        grid=(M,),
        in_specs=[
            pl.BlockSpec(memory_space=pltpu.MemorySpace.SMEM),    # PReLU alphas [2, X]
            pl.BlockSpec((1, Kp1, S), lambda m: (m, 0, 0)),       # audio chunks (bf16)
            pl.BlockSpec((S, N), lambda m: (0, 0)),               # encoder W, first half
            pl.BlockSpec((S, N), lambda m: (0, 0)),               # encoder W, second half
            pl.BlockSpec((1, N), lambda m: (0, 0)),               # cLN gamma
            pl.BlockSpec((1, N), lambda m: (0, 0)),               # cLN beta
        ] + _stack_in_specs(X, B, H, ksize),
        out_specs=pl.BlockSpec((1, Ko, B), lambda m: (m, 0, 0)),
        scratch_shapes=[pltpu.VMEM((K, B), jnp.float32)],
        compiler_params=pltpu.CompilerParams(
            dimension_semantics=("parallel",),
            vmem_limit_bytes=_vmem_limit_bytes()),
        cost_estimate=_cost(M, K, B, H, ksize, X, pool, enc=(2 * S, N)),
    )(stk["alpha"], chunks, w_top, w_bot, cln_w, cln_b, *_fold_stack(stk))


def tcn_stack_pool(x, stk, *, ksize, pool=POOL):
    """One fused pallas_call = tcn (X TemporalBlocks) followed by AvgPool1d(pool)."""
    M, K, B = x.shape
    X, _, H = stk["w1"].shape
    Ko = K // pool
    kern = functools.partial(_tcn_pool_kernel, ksize=ksize, nblocks=X, pool=pool,
                             roll_dir=_roll_direction())
    # TODO(synk): for v7x (64 MiB VMEM) with very long K, tile the time axis with a
    # two-pass gLN (per-tile s1/s2 accumulation) instead of keeping the whole K resident.
    return pl.pallas_call(
        kern,
        out_shape=jax.ShapeDtypeStruct((M, Ko, B), jnp.float32),
        grid=(M,),
        in_specs=[
            pl.BlockSpec(memory_space=pltpu.MemorySpace.SMEM),    # PReLU alphas [2, X]
            pl.BlockSpec((1, K, B), lambda m: (m, 0, 0)),         # activation (f32)
        ] + _stack_in_specs(X, B, H, ksize),
        out_specs=pl.BlockSpec((1, Ko, B), lambda m: (m, 0, 0)),
        scratch_shapes=[pltpu.VMEM((K, B), jnp.float32)],
        compiler_params=pltpu.CompilerParams(
            dimension_semantics=("parallel",),
            vmem_limit_bytes=_vmem_limit_bytes()),
        cost_estimate=_cost(M, K, B, H, ksize, X, pool),
    )(stk["alpha"], x, *_fold_stack(stk))


# ---------------------------------------------------------------------------
# Parameter init (deterministic, synthetic) and full forward
# ---------------------------------------------------------------------------
def init_params(key, L, N, B, H, P, X):
    keys = jax.random.split(key, 32)
    kit = iter(keys)

    def w(shape, fan_in, dtype=jnp.float32):
        v = jax.random.normal(next(kit), shape, jnp.float32) / jnp.sqrt(float(fan_in))
        return v.astype(dtype)

    def make_stack():
        return {
            "w1": w((X, B, H), B, jnp.bfloat16),                                    # 1x1 (B->H)
            "alpha": jax.random.uniform(next(kit), (2, X), jnp.float32, 0.1, 0.4),  # PReLU
            "g1": 1.0 + 0.1 * jax.random.normal(next(kit), (X, 1, H), jnp.float32),
            "b1": 0.1 * jax.random.normal(next(kit), (X, 1, H), jnp.float32),
            "wd": w((X, P, H), P, jnp.float32),                                     # depthwise
            "g2": 1.0 + 0.1 * jax.random.normal(next(kit), (X, 1, H), jnp.float32),
            "b2": 0.1 * jax.random.normal(next(kit), (X, 1, H), jnp.float32),
            "w2": w((X, H, B), H, jnp.float32),                                     # pointwise
        }

    return {
        "enc_w": w((L, N), L, jnp.bfloat16),      # Conv1d(1, N, L) weight stored as [L, N]
        "cln_w": jnp.ones((1, N), jnp.float32),
        "cln_b": jnp.zeros((1, N), jnp.float32),
        "tcn1": make_stack(),
        "tcn2": make_stack(),
    }


def audio_net(a, params, *, L, P):
    """Full forward; output is NCL like the PyTorch module: [M, N, K // 16]."""
    M, T = a.shape
    assert L % 2 == 0
    stride = L // 2                   # original module: stride=L//2, padding=40 (== L//2)
    K = T // stride + 1               # == (T + 2*(L//2) - L) // stride + 1
    # Non-overlapping half-window chunks (frame[k] = concat(chunk[k], chunk[k+1])):
    # half the HBM bytes of explicit frames and no gather.
    a_p = jnp.pad(a, ((0, 0), (stride, (K + 1) * stride - stride - T)))
    chunks = a_p.reshape(M, K + 1, stride).astype(jnp.bfloat16)

    x = encoder_tcn_stack_pool(chunks, params["enc_w"], params["cln_w"], params["cln_b"],
                               params["tcn1"], ksize=P)           # encoder + tcn_1 + pool_1
    x = tcn_stack_pool(x, params["tcn2"], ksize=P)                # tcn_2 + pool_2
    return jnp.transpose(x, (0, 2, 1))                            # PyTorch NCL


# ---------------------------------------------------------------------------
# Pure-JAX reference (mirrors the PyTorch graph; bf16 matmul operands, f32 norms)
# ---------------------------------------------------------------------------
def reference_forward(a, params, *, L, P, pool=POOL):
    M, T = a.shape
    stride = L // 2
    pad = L // 2
    a_p = jnp.pad(a, ((0, 0), (pad, pad)))
    K = (T + 2 * pad - L) // stride + 1
    idx = jnp.arange(K)[:, None] * stride + jnp.arange(L)[None, :]
    frames = a_p[:, idx].astype(jnp.bfloat16)

    y = jnp.einsum("mkl,ln->mkn", frames, params["enc_w"],
                   preferred_element_type=jnp.float32)
    y = jnp.maximum(y, 0.0)
    mean = jnp.mean(y, axis=-1, keepdims=True)
    var = jnp.mean((y - mean) ** 2, axis=-1, keepdims=True)
    x = (y - mean) / jnp.sqrt(var + LN_EPS) * params["cln_w"] + params["cln_b"]

    def gln(t, gamma, beta):
        mean = jnp.mean(t, axis=(1, 2), keepdims=True)
        var = jnp.mean((t - mean) ** 2, axis=(1, 2), keepdims=True)
        return gamma * (t - mean) / jnp.sqrt(var + EPS) + beta

    def run_stack(x, stk):
        Mb, Kb, Bb = x.shape
        X = stk["w1"].shape[0]
        for i in range(X):
            d = 2 ** i
            pd = (P - 1) * d // 2
            y = jnp.einsum("mkb,bh->mkh", x.astype(jnp.bfloat16), stk["w1"][i],
                           preferred_element_type=jnp.float32)
            y = jnp.where(y >= 0.0, y, stk["alpha"][0, i] * y)
            y = gln(y, stk["g1"][i], stk["b1"][i])
            yp = jnp.pad(y, ((0, 0), (pd, pd), (0, 0)))
            z = sum(yp[:, p * d: p * d + Kb, :] * stk["wd"][i, p] for p in range(P))
            z = jnp.where(z >= 0.0, z, stk["alpha"][1, i] * z)
            z = gln(z, stk["g2"][i], stk["b2"][i])
            x = x + jnp.einsum("mkh,hb->mkb", z.astype(jnp.bfloat16),
                               stk["w2"][i].astype(jnp.bfloat16),
                               preferred_element_type=jnp.float32)
        Ko = Kb // pool
        return jnp.mean(x[:, :Ko * pool].reshape(Mb, Ko, pool, Bb), axis=2)

    x = run_stack(x, params["tcn1"])
    x = run_stack(x, params["tcn2"])
    return jnp.transpose(x, (0, 2, 1))


if __name__ == "__main__":
    # Small shapes consistent with the module (original: L=80, N=B=256, H=512, P=3, X=4).
    # T is chosen so K = T // (L//2) + 1 = 64 divides both 4x pools (stacks run at K=64, 16).
    L, N, B, H, P, X = 16, 128, 128, 256, 3, 4
    M, T = 2, 504

    key = jax.random.PRNGKey(0)
    pkey, dkey = jax.random.split(key)
    params = init_params(pkey, L, N, B, H, P, X)
    a = jax.random.normal(dkey, (M, T), jnp.float32)       # raw audio [batch, samples]

    fwd = jax.jit(functools.partial(audio_net, L=L, P=P))
    out = jax.block_until_ready(fwd(a, params))

    K = T // (L // 2) + 1
    expected = (M, N, (K // 4) // 4)
    assert out.shape == expected, (out.shape, expected)
    assert bool(jnp.all(jnp.isfinite(out)))

    ref = jax.block_until_ready(reference_forward(a, params, L=L, P=P))
    err = float(jnp.max(jnp.abs(out - ref)))
    rel = float(jnp.linalg.norm(out - ref) / (jnp.linalg.norm(ref) + 1e-6))
    # bf16 MXU operands are rounded at different points in the kernel (gLN2 is folded into
    # the pointwise weights) than in the reference, so use a magnitude-aware abs tolerance
    # plus a tight relative (Frobenius) check.
    tol = 5e-2 * max(1.0, float(jnp.max(jnp.abs(ref))))
    assert err < tol, f"kernel/reference mismatch: max abs diff = {err} (tol {tol})"
    assert rel < 2e-2, f"kernel/reference relative error too large: {rel}"

    print("KERNEL_OK")
</pallas_src>

<mosaic_0001>
module attributes {stable_mosaic.version = 11 : i64} {
  func.func @_enc_tcn_pool_kernel(%arg0: i32, %arg1: memref<2x4xf32, #tpu.memory_space<smem>>, %arg2: memref<1x65x8xbf16, #tpu.memory_space<vmem>>, %arg3: memref<8x128xbf16, #tpu.memory_space<vmem>>, %arg4: memref<8x128xbf16, #tpu.memory_space<vmem>>, %arg5: memref<1x128xf32, #tpu.memory_space<vmem>>, %arg6: memref<1x128xf32, #tpu.memory_space<vmem>>, %arg7: memref<4x128x256xbf16, #tpu.memory_space<vmem>>, %arg8: memref<4x1x256xf32, #tpu.memory_space<vmem>>, %arg9: memref<4x1x256xf32, #tpu.memory_space<vmem>>, %arg10: memref<4x3x256xf32, #tpu.memory_space<vmem>>, %arg11: memref<4x256x128xbf16, #tpu.memory_space<vmem>>, %arg12: memref<4x1x128xf32, #tpu.memory_space<vmem>>, %arg13: memref<4x1x128xf32, #tpu.memory_space<vmem>>, %arg14: memref<1x16x128xf32, #tpu.memory_space<vmem>>, %arg15: memref<64x128xf32, #tpu.memory_space<vmem>>) attributes {dimension_semantics = [#tpu.dimension_semantics<parallel>], iteration_bounds = array<i64: 2>, scalar_prefetch = 0 : i64, scratch_operands = 1 : i64, tpu.core_type = #tpu.core_type<tc>, window_params = [{transform_indices = @transform_0, window_bounds = array<i64: 2, 4>}, {transform_indices = @transform_1, window_bounds = array<i64: 1, 65, 8>}, {pipeline_mode = #tpu.pipeline_mode<synchronous>, transform_indices = @transform_2, window_bounds = array<i64: 8, 128>}, {pipeline_mode = #tpu.pipeline_mode<synchronous>, transform_indices = @transform_3, window_bounds = array<i64: 8, 128>}, {pipeline_mode = #tpu.pipeline_mode<synchronous>, transform_indices = @transform_4, window_bounds = array<i64: 1, 128>}, {pipeline_mode = #tpu.pipeline_mode<synchronous>, transform_indices = @transform_5, window_bounds = array<i64: 1, 128>}, {pipeline_mode = #tpu.pipeline_mode<synchronous>, transform_indices = @transform_6, window_bounds = array<i64: 4, 128, 256>}, {pipeline_mode = #tpu.pipeline_mode<synchronous>, transform_indices = @transform_7, window_bounds = array<i64: 4, 1, 256>}, {pipeline_mode = #tpu.pipeline_mode<synchronous>, transform_indices = @transform_8, window_bounds = array<i64: 4, 1, 256>}, {pipeline_mode = #tpu.pipeline_mode<synchronous>, transform_indices = @transform_9, window_bounds = array<i64: 4, 3, 256>}, {pipeline_mode = #tpu.pipeline_mode<synchronous>, transform_indices = @transform_10, window_bounds = array<i64: 4, 256, 128>}, {pipeline_mode = #tpu.pipeline_mode<synchronous>, transform_indices = @transform_11, window_bounds = array<i64: 4, 1, 128>}, {pipeline_mode = #tpu.pipeline_mode<synchronous>, transform_indices = @transform_12, window_bounds = array<i64: 4, 1, 128>}, {transform_indices = @transform_13, window_bounds = array<i64: 1, 16, 128>}]} {
    %c0 = arith.constant 0 : index
    %c0_0 = arith.constant 0 : index
    %c0_1 = arith.constant 0 : index
    %0 = vector.load %arg2[%c0, %c0_0, %c0_1] : memref<1x65x8xbf16, #tpu.memory_space<vmem>>, vector<1x65x8xbf16>
    %1 = vector.shape_cast %0 : vector<1x65x8xbf16> to vector<65x8xbf16>
    %2 = vector.extract_strided_slice %1 {offsets = [0, 0], sizes = [64, 8], strides = [1, 1]} : vector<65x8xbf16> to vector<64x8xbf16>
    %c0_2 = arith.constant 0 : index
    %c0_3 = arith.constant 0 : index
    %3 = vector.load %arg3[%c0_2, %c0_3] : memref<8x128xbf16, #tpu.memory_space<vmem>>, vector<8x128xbf16>
    %cst = arith.constant dense<0.000000e+00> : vector<64x128xf32>
    %4 = tpu.matmul %2, %3, %cst {dimension_numbers = #tpu.dot_dimension_numbers<[1], [0], [0], [1], [0, 0, 1, 1], [], []>} : vector<64x8xbf16>, vector<8x128xbf16>, vector<64x128xf32> -> vector<64x128xf32>
    %5 = vector.extract_strided_slice %1 {offsets = [1, 0], sizes = [64, 8], strides = [1, 1]} : vector<65x8xbf16> to vector<64x8xbf16>
    %c0_4 = arith.constant 0 : index
    %c0_5 = arith.constant 0 : index
    %6 = vector.load %arg4[%c0_4, %c0_5] : memref<8x128xbf16, #tpu.memory_space<vmem>>, vector<8x128xbf16>
    %cst_6 = arith.constant dense<0.000000e+00> : vector<64x128xf32>
    %7 = tpu.matmul %5, %6, %cst_6 {dimension_numbers = #tpu.dot_dimension_numbers<[1], [0], [0], [1], [0, 0, 1, 1], [], []>} : vector<64x8xbf16>, vector<8x128xbf16>, vector<64x128xf32> -> vector<64x128xf32>
    %8 = arith.addf %4, %7 : vector<64x128xf32>
    %cst_7 = arith.constant 0.000000e+00 : f32
    %9 = vector.broadcast %cst_7 : f32 to vector<64x128xf32>
    %10 = arith.maximumf %8, %9 : vector<64x128xf32>
    %cst_8 = arith.constant dense<0.000000e+00> : vector<64xf32>
    %11 = vector.multi_reduction <add>, %10, %cst_8 [1] : vector<64x128xf32> to vector<64xf32>
    %12 = vector.shape_cast %11 : vector<64xf32> to vector<64x1xf32>
    %13 = arith.mulf %10, %10 : vector<64x128xf32>
    %cst_9 = arith.constant dense<0.000000e+00> : vector<64xf32>
    %14 = vector.multi_reduction <add>, %13, %cst_9 [1] : vector<64x128xf32> to vector<64xf32>
    %15 = vector.shape_cast %14 : vector<64xf32> to vector<64x1xf32>
    %cst_10 = arith.constant 7.812500e-03 : f32
    %16 = vector.broadcast %cst_10 : f32 to vector<64x1xf32>
    %17 = arith.mulf %12, %16 : vector<64x1xf32>
    %cst_11 = arith.constant 7.812500e-03 : f32
    %18 = vector.broadcast %cst_11 : f32 to vector<64x1xf32>
    %19 = arith.mulf %15, %18 : vector<64x1xf32>
    %20 = arith.mulf %17, %17 : vector<64x1xf32>
    %21 = arith.subf %19, %20 : vector<64x1xf32>
    %cst_12 = arith.constant 0.000000e+00 : f32
    %22 = vector.broadcast %cst_12 : f32 to vector<64x1xf32>
    %23 = arith.maximumf %21, %22 : vector<64x1xf32>
    %cst_13 = arith.constant 9.99999974E-6 : f32
    %24 = vector.broadcast %cst_13 : f32 to vector<64x1xf32>
    %25 = arith.addf %23, %24 : vector<64x1xf32>
    %26 = math.rsqrt %25 : vector<64x1xf32>
    %27 = vector.broadcast %17 : vector<64x1xf32> to vector<64x128xf32>
    %28 = arith.subf %10, %27 : vector<64x128xf32>
    %29 = vector.broadcast %26 : vector<64x1xf32> to vector<64x128xf32>
    %30 = arith.mulf %28, %29 : vector<64x128xf32>
    %c0_14 = arith.constant 0 : index
    %c0_15 = arith.constant 0 : index
    %31 = vector.load %arg5[%c0_14, %c0_15] : memref<1x128xf32, #tpu.memory_space<vmem>>, vector<1x128xf32>
    %32 = vector.broadcast %31 : vector<1x128xf32> to vector<64x128xf32>
    %33 = arith.mulf %30, %32 : vector<64x128xf32>
    %c0_16 = arith.constant 0 : index
    %c0_17 = arith.constant 0 : index
    %34 = vector.load %arg6[%c0_16, %c0_17] : memref<1x128xf32, #tpu.memory_space<vmem>>, vector<1x128xf32>
    %35 = vector.broadcast %34 : vector<1x128xf32> to vector<64x128xf32>
    %36 = arith.addf %33, %35 : vector<64x128xf32>
    %37 = arith.truncf %36 : vector<64x128xf32> to vector<64x128xbf16>
    %c0_18 = arith.constant 0 : index
    %c0_19 = arith.constant 0 : index
    %c0_20 = arith.constant 0 : index
    %38 = vector.load %arg7[%c0_18, %c0_19, %c0_20] : memref<4x128x256xbf16, #tpu.memory_space<vmem>>, vector<1x128x256xbf16>
    %39 = vector.shape_cast %38 : vector<1x128x256xbf16> to vector<128x256xbf16>
    %cst_21 = arith.constant dense<0.000000e+00> : vector<64x256xf32>
    %40 = tpu.matmul %37, %39, %cst_21 {dimension_numbers = #tpu.dot_dimension_numbers<[1], [0], [0], [1], [0, 0, 1, 1], [], []>} : vector<64x128xbf16>, vector<128x256xbf16>, vector<64x256xf32> -> vector<64x256xf32>
    %cst_22 = arith.constant 0.000000e+00 : f32
    %41 = vector.broadcast %cst_22 : f32 to vector<64x256xf32>
    %42 = arith.cmpf oge, %40, %41 : vector<64x256xf32>
    %c0_23 = arith.constant 0 : index
    %c0_24 = arith.constant 0 : index
    %43 = memref.load %arg1[%c0_23, %c0_24] : memref<2x4xf32, #tpu.memory_space<smem>>
    %44 = vector.broadcast %43 : f32 to vector<64x256xf32>
    %45 = arith.mulf %44, %40 : vector<64x256xf32>
    %46 = arith.select %42, %40, %45 : vector<64x256xi1>, vector<64x256xf32>
    %cst_25 = arith.constant dense<0.000000e+00> : vector<256xf32>
    %47 = vector.multi_reduction <add>, %46, %cst_25 [0] : vector<64x256xf32> to vector<256xf32>
    %48 = vector.shape_cast %47 : vector<256xf32> to vector<1x256xf32>
    %49 = arith.mulf %46, %46 : vector<64x256xf32>
    %cst_26 = arith.constant dense<0.000000e+00> : vector<256xf32>
    %50 = vector.multi_reduction <add>, %49, %cst_26 [0] : vector<64x256xf32> to vector<256xf32>
    %51 = vector.shape_cast %50 : vector<256xf32> to vector<1x256xf32>
    %cst_27 = arith.constant dense<0.000000e+00> : vector<1xf32>
    %52 = vector.multi_reduction <add>, %48, %cst_27 [1] : vector<1x256xf32> to vector<1xf32>
    %53 = vector.shape_cast %52 : vector<1xf32> to vector<1x1xf32>
    %cst_28 = arith.constant dense<0.000000e+00> : vector<1xf32>
    %54 = vector.multi_reduction <add>, %51, %cst_28 [1] : vector<1x256xf32> to vector<1xf32>
    %55 = vector.shape_cast %54 : vector<1xf32> to vector<1x1xf32>
    %cst_29 = arith.constant 6.10351563E-5 : f32
    %56 = vector.broadcast %cst_29 : f32 to vector<1x1xf32>
    %57 = arith.mulf %53, %56 : vector<1x1xf32>
    %cst_30 = arith.constant 6.10351563E-5 : f32
    %58 = vector.broadcast %cst_30 : f32 to vector<1x1xf32>
    %59 = arith.mulf %55, %58 : vector<1x1xf32>
    %60 = arith.mulf %57, %57 : vector<1x1xf32>
    %61 = arith.subf %59, %60 : vector<1x1xf32>
    %cst_31 = arith.constant 0.000000e+00 : f32
    %62 = vector.broadcast %cst_31 : f32 to vector<1x1xf32>
    %63 = arith.maximumf %61, %62 : vector<1x1xf32>
    %cst_32 = arith.constant 9.99999993E-9 : f32
    %64 = vector.broadcast %cst_32 : f32 to vector<1x1xf32>
    %65 = arith.addf %63, %64 : vector<1x1xf32>
    %66 = math.rsqrt %65 : vector<1x1xf32>
    %c0_33 = arith.constant 0 : index
    %c0_34 = arith.constant 0 : index
    %c0_35 = arith.constant 0 : index
    %67 = vector.load %arg8[%c0_33, %c0_34, %c0_35] : memref<4x1x256xf32, #tpu.memory_space<vmem>>, vector<1x1x256xf32>
    %68 = vector.shape_cast %67 : vector<1x1x256xf32> to vector<1x256xf32>
    %69 = vector.broadcast %66 : vector<1x1xf32> to vector<1x256xf32>
    %70 = arith.mulf %68, %69 : vector<1x256xf32>
    %c0_36 = arith.constant 0 : index
    %c0_37 = arith.constant 0 : index
    %c0_38 = arith.constant 0 : index
    %71 = vector.load %arg9[%c0_36, %c0_37, %c0_38] : memref<4x1x256xf32, #tpu.memory_space<vmem>>, vector<1x1x256xf32>
    %72 = vector.shape_cast %71 : vector<1x1x256xf32> to vector<1x256xf32>
    %73 = vector.broadcast %57 : vector<1x1xf32> to vector<1x256xf32>
    %74 = arith.mulf %73, %70 : vector<1x256xf32>
    %75 = arith.subf %72, %74 : vector<1x256xf32>
    %76 = vector.broadcast %70 : vector<1x256xf32> to vector<64x256xf32>
    %77 = arith.mulf %46, %76 : vector<64x256xf32>
    %78 = vector.broadcast %75 : vector<1x256xf32> to vector<64x256xf32>
    %79 = arith.addf %77, %78 : vector<64x256xf32>
    %c0_39 = arith.constant 0 : index
    %c0_40 = arith.constant 0 : index
    %c0_41 = arith.constant 0 : index
    %80 = vector.load %arg10[%c0_39, %c0_40, %c0_41] : memref<4x3x256xf32, #tpu.memory_space<vmem>>, vector<1x3x256xf32>
    %81 = vector.shape_cast %80 : vector<1x3x256xf32> to vector<3x256xf32>
    %cst_42 = arith.constant 0.000000e+00 : f32
    %82 = vector.broadcast %cst_42 : f32 to vector<1x256xf32>
    %83 = tpu.concatenate %82, %79, %82 in 0 : vector<1x256xf32>, vector<64x256xf32>, vector<1x256xf32> -> vector<66x256xf32>
    %84 = vector.extract_strided_slice %83 {offsets = [0, 0], sizes = [64, 256], strides = [1, 1]} : vector<66x256xf32> to vector<64x256xf32>
    %85 = vector.extract_strided_slice %81 {offsets = [0, 0], sizes = [1, 256], strides = [1, 1]} : vector<3x256xf32> to vector<1x256xf32>
    %86 = vector.broadcast %85 : vector<1x256xf32> to vector<64x256xf32>
    %87 = arith.mulf %84, %86 : vector<64x256xf32>
    %88 = vector.extract_strided_slice %83 {offsets = [1, 0], sizes = [64, 256], strides = [1, 1]} : vector<66x256xf32> to vector<64x256xf32>
    %89 = vector.extract_strided_slice %81 {offsets = [1, 0], sizes = [1, 256], strides = [1, 1]} : vector<3x256xf32> to vector<1x256xf32>
    %90 = vector.broadcast %89 : vector<1x256xf32> to vector<64x256xf32>
    %91 = arith.mulf %88, %90 : vector<64x256xf32>
    %92 = arith.addf %87, %91 : vector<64x256xf32>
    %93 = vector.extract_strided_slice %83 {offsets = [2, 0], sizes = [64, 256], strides = [1, 1]} : vector<66x256xf32> to vector<64x256xf32>
    %94 = vector.extract_strided_slice %81 {offsets = [2, 0], sizes = [1, 256], strides = [1, 1]} : vector<3x256xf32> to vector<1x256xf32>
    %95 = vector.broadcast %94 : vector<1x256xf32> to vector<64x256xf32>
    %96 = arith.mulf %93, %95 : vector<64x256xf32>
    %97 = arith.addf %92, %96 : vector<64x256xf32>
    %cst_43 = arith.constant 0.000000e+00 : f32
    %98 = vector.broadcast %cst_43 : f32 to vector<64x256xf32>
    %99 = arith.cmpf oge, %97, %98 : vector<64x256xf32>
    %c1 = arith.constant 1 : index
    %c0_44 = arith.constant 0 : index
    %100 = memref.load %arg1[%c1, %c0_44] : memref<2x4xf32, #tpu.memory_space<smem>>
    %101 = vector.broadcast %100 : f32 to vector<64x256xf32>
    %102 = arith.mulf %101, %97 : vector<64x256xf32>
    %103 = arith.select %99, %97, %102 : vector<64x256xi1>, vector<64x256xf32>
    %cst_45 = arith.constant dense<0.000000e+00> : vector<256xf32>
    %104 = vector.multi_reduction <add>, %103, %cst_45 [0] : vector<64x256xf32> to vector<256xf32>
    %105 = vector.shape_cast %104 : vector<256xf32> to vector<1x256xf32>
    %106 = arith.mulf %103, %103 : vector<64x256xf32>
    %cst_46 = arith.constant dense<0.000000e+00> : vector<256xf32>
    %107 = vector.multi_reduction <add>, %106, %cst_46 [0] : vector<64x256xf32> to vector<256xf32>
    %108 = vector.shape_cast %107 : vector<256xf32> to vector<1x256xf32>
    %cst_47 = arith.constant dense<0.000000e+00> : vector<1xf32>
    %109 = vector.multi_reduction <add>, %105, %cst_47 [1] : vector<1x256xf32> to vector<1xf32>
    %110 = vector.shape_cast %109 : vector<1xf32> to vector<1x1xf32>
    %cst_48 = arith.constant dense<0.000000e+00> : vector<1xf32>
    %111 = vector.multi_reduction <add>, %108, %cst_48 [1] : vector<1x256xf32> to vector<1xf32>
    %112 = vector.shape_cast %111 : vector<1xf32> to vector<1x1xf32>
    %cst_49 = arith.constant 6.10351563E-5 : f32
    %113 = vector.broadcast %cst_49 : f32 to vector<1x1xf32>
    %114 = arith.mulf %110, %113 : vector<1x1xf32>
    %cst_50 = arith.constant 6.10351563E-5 : f32
    %115 = vector.broadcast %cst_50 : f32 to vector<1x1xf32>
    %116 = arith.mulf %112, %115 : vector<1x1xf32>
    %117 = arith.mulf %114, %114 : vector<1x1xf32>
    %118 = arith.subf %116, %117 : vector<1x1xf32>
    %cst_51 = arith.constant 0.000000e+00 : f32
    %119 = vector.broadcast %cst_51 : f32 to vector<1x1xf32>
    %120 = arith.maximumf %118, %119 : vector<1x1xf32>
    %cst_52 = arith.constant 9.99999993E-9 : f32
    %121 = vector.broadcast %cst_52 : f32 to vector<1x1xf32>
    %122 = arith.addf %120, %121 : vector<1x1xf32>
    %123 = math.rsqrt %122 : vector<1x1xf32>
    %124 = arith.truncf %103 : vector<64x256xf32> to vector<64x256xbf16>
    %c0_53 = arith.constant 0 : index
    %c0_54 = arith.constant 0 : index
    %c0_55 = arith.constant 0 : index
    %125 = vector.load %arg11[%c0_53, %c0_54, %c0_55] : memref<4x256x128xbf16, #tpu.memory_space<vmem>>, vector<1x256x128xbf16>
    %126 = vector.shape_cast %125 : vector<1x256x128xbf16> to vector<256x128xbf16>
    %cst_56 = arith.constant dense<0.000000e+00> : vector<64x128xf32>
    %127 = tpu.matmul %124, %126, %cst_56 {dimension_numbers = #tpu.dot_dimension_numbers<[1], [0], [0], [1], [0, 0, 1, 1], [], []>} : vector<64x256xbf16>, vector<256x128xbf16>, vector<64x128xf32> -> vector<64x128xf32>
    %c0_57 = arith.constant 0 : index
    %c0_58 = arith.constant 0 : index
    %c0_59 = arith.constant 0 : index
    %128 = vector.load %arg13[%c0_57, %c0_58, %c0_59] : memref<4x1x128xf32, #tpu.memory_space<vmem>>, vector<1x1x128xf32>
    %129 = vector.shape_cast %128 : vector<1x1x128xf32> to vector<1x128xf32>
    %130 = arith.mulf %114, %123 : vector<1x1xf32>
    %c0_60 = arith.constant 0 : index
    %c0_61 = arith.constant 0 : index
    %c0_62 = arith.constant 0 : index
    %131 = vector.load %arg12[%c0_60, %c0_61, %c0_62] : memref<4x1x128xf32, #tpu.memory_space<vmem>>, vector<1x1x128xf32>
    %132 = vector.shape_cast %131 : vector<1x1x128xf32> to vector<1x128xf32>
    %133 = vector.broadcast %130 : vector<1x1xf32> to vector<1x128xf32>
    %134 = arith.mulf %133, %132 : vector<1x128xf32>
    %135 = arith.subf %129, %134 : vector<1x128xf32>
    %136 = vector.broadcast %123 : vector<1x1xf32> to vector<64x128xf32>
    %137 = arith.mulf %127, %136 : vector<64x128xf32>
    %138 = vector.broadcast %135 : vector<1x128xf32> to vector<64x128xf32>
    %139 = arith.addf %137, %138 : vector<64x128xf32>
    %140 = arith.addf %36, %139 : vector<64x128xf32>
    %141 = arith.truncf %140 : vector<64x128xf32> to vector<64x128xbf16>
    %c1_63 = arith.constant 1 : index
    %c0_64 = arith.constant 0 : index
    %c0_65 = arith.constant 0 : index
    %142 = vector.load %arg7[%c1_63, %c0_64, %c0_65] : memref<4x128x256xbf16, #tpu.memory_space<vmem>>, vector<1x128x256xbf16>
    %143 = vector.shape_cast %142 : vector<1x128x256xbf16> to vector<128x256xbf16>
    %cst_66 = arith.constant dense<0.000000e+00> : vector<64x256xf32>
    %144 = tpu.matmul %141, %143, %cst_66 {dimension_numbers = #tpu.dot_dimension_numbers<[1], [0], [0], [1], [0, 0, 1, 1], [], []>} : vector<64x128xbf16>, vector<128x256xbf16>, vector<64x256xf32> -> vector<64x256xf32>
    %cst_67 = arith.constant 0.000000e+00 : f32
    %145 = vector.broadcast %cst_67 : f32 to vector<64x256xf32>
    %146 = arith.cmpf oge, %144, %145 : vector<64x256xf32>
    %c0_68 = arith.constant 0 : index
    %c1_69 = arith.constant 1 : index
    %147 = memref.load %arg1[%c0_68, %c1_69] : memref<2x4xf32, #tpu.memory_space<smem>>
    %148 = vector.broadcast %147 : f32 to vector<64x256xf32>
    %149 = arith.mulf %148, %144 : vector<64x256xf32>
    %150 = arith.select %146, %144, %149 : vector<64x256xi1>, vector<64x256xf32>
    %cst_70 = arith.constant dense<0.000000e+00> : vector<256xf32>
    %151 = vector.multi_reduction <add>, %150, %cst_70 [0] : vector<64x256xf32> to vector<256xf32>
    %152 = vector.shape_cast %151 : vector<256xf32> to vector<1x256xf32>
    %153 = arith.mulf %150, %150 : vector<64x256xf32>
    %cst_71 = arith.constant dense<0.000000e+00> : vector<256xf32>
    %154 = vector.multi_reduction <add>, %153, %cst_71 [0] : vector<64x256xf32> to vector<256xf32>
    %155 = vector.shape_cast %154 : vector<256xf32> to vector<1x256xf32>
    %cst_72 = arith.constant dense<0.000000e+00> : vector<1xf32>
    %156 = vector.multi_reduction <add>, %152, %cst_72 [1] : vector<1x256xf32> to vector<1xf32>
    %157 = vector.shape_cast %156 : vector<1xf32> to vector<1x1xf32>
    %cst_73 = arith.constant dense<0.000000e+00> : vector<1xf32>
    %158 = vector.multi_reduction <add>, %155, %cst_73 [1] : vector<1x256xf32> to vector<1xf32>
    %159 = vector.shape_cast %158 : vector<1xf32> to vector<1x1xf32>
    %cst_74 = arith.constant 6.10351563E-5 : f32
    %160 = vector.broadcast %cst_74 : f32 to vector<1x1xf32>
    %161 = arith.mulf %157, %160 : vector<1x1xf32>
    %cst_75 = arith.constant 6.10351563E-5 : f32
    %162 = vector.broadcast %cst_75 : f32 to vector<1x1xf32>
    %163 = arith.mulf %159, %162 : vector<1x1xf32>
    %164 = arith.mulf %161, %161 : vector<1x1xf32>
    %165 = arith.subf %163, %164 : vector<1x1xf32>
    %cst_76 = arith.constant 0.000000e+00 : f32
    %166 = vector.broadcast %cst_76 : f32 to vector<1x1xf32>
    %167 = arith.maximumf %165, %166 : vector<1x1xf32>
    %cst_77 = arith.constant 9.99999993E-9 : f32
    %168 = vector.broadcast %cst_77 : f32 to vector<1x1xf32>
    %169 = arith.addf %167, %168 : vector<1x1xf32>
    %170 = math.rsqrt %169 : vector<1x1xf32>
    %c1_78 = arith.constant 1 : index
    %c0_79 = arith.constant 0 : index
    %c0_80 = arith.constant 0 : index
    %171 = vector.load %arg8[%c1_78, %c0_79, %c0_80] : memref<4x1x256xf32, #tpu.memory_space<vmem>>, vector<1x1x256xf32>
    %172 = vector.shape_cast %171 : vector<1x1x256xf32> to vector<1x256xf32>
    %173 = vector.broadcast %170 : vector<1x1xf32> to vector<1x256xf32>
    %174 = arith.mulf %172, %173 : vector<1x256xf32>
    %c1_81 = arith.constant 1 : index
    %c0_82 = arith.constant 0 : index
    %c0_83 = arith.constant 0 : index
    %175 = vector.load %arg9[%c1_81, %c0_82, %c0_83] : memref<4x1x256xf32, #tpu.memory_space<vmem>>, vector<1x1x256xf32>
    %176 = vector.shape_cast %175 : vector<1x1x256xf32> to vector<1x256xf32>
    %177 = vector.broadcast %161 : vector<1x1xf32> to vector<1x256xf32>
    %178 = arith.mulf %177, %174 : vector<1x256xf32>
    %179 = arith.subf %176, %178 : vector<1x256xf32>
    %180 = vector.broadcast %174 : vector<1x256xf32> to vector<64x256xf32>
    %181 = arith.mulf %150, %180 : vector<64x256xf32>
    %182 = vector.broadcast %179 : vector<1x256xf32> to vector<64x256xf32>
    %183 = arith.addf %181, %182 : vector<64x256xf32>
    %c1_84 = arith.constant 1 : index
    %c0_85 = arith.constant 0 : index
    %c0_86 = arith.constant 0 : index
    %184 = vector.load %arg10[%c1_84, %c0_85, %c0_86] : memref<4x3x256xf32, #tpu.memory_space<vmem>>, vector<1x3x256xf32>
    %185 = vector.shape_cast %184 : vector<1x3x256xf32> to vector<3x256xf32>
    %cst_87 = arith.constant 0.000000e+00 : f32
    %186 = vector.broadcast %cst_87 : f32 to vector<2x256xf32>
    %187 = tpu.concatenate %186, %183, %186 in 0 : vector<2x256xf32>, vector<64x256xf32>, vector<2x256xf32> -> vector<68x256xf32>
    %188 = vector.extract_strided_slice %187 {offsets = [0, 0], sizes = [64, 256], strides = [1, 1]} : vector<68x256xf32> to vector<64x256xf32>
    %189 = vector.extract_strided_slice %185 {offsets = [0, 0], sizes = [1, 256], strides = [1, 1]} : vector<3x256xf32> to vector<1x256xf32>
    %190 = vector.broadcast %189 : vector<1x256xf32> to vector<64x256xf32>
    %191 = arith.mulf %188, %190 : vector<64x256xf32>
    %192 = vector.extract_strided_slice %187 {offsets = [2, 0], sizes = [64, 256], strides = [1, 1]} : vector<68x256xf32> to vector<64x256xf32>
    %193 = vector.extract_strided_slice %185 {offsets = [1, 0], sizes = [1, 256], strides = [1, 1]} : vector<3x256xf32> to vector<1x256xf32>
    %194 = vector.broadcast %193 : vector<1x256xf32> to vector<64x256xf32>
    %195 = arith.mulf %192, %194 : vector<64x256xf32>
    %196 = arith.addf %191, %195 : vector<64x256xf32>
    %197 = vector.extract_strided_slice %187 {offsets = [4, 0], sizes = [64, 256], strides = [1, 1]} : vector<68x256xf32> to vector<64x256xf32>
    %198 = vector.extract_strided_slice %185 {offsets = [2, 0], sizes = [1, 256], strides = [1, 1]} : vector<3x256xf32> to vector<1x256xf32>
    %199 = vector.broadcast %198 : vector<1x256xf32> to vector<64x256xf32>
    %200 = arith.mulf %197, %199 : vector<64x256xf32>
    %201 = arith.addf %196, %200 : vector<64x256xf32>
    %cst_88 = arith.constant 0.000000e+00 : f32
    %202 = vector.broadcast %cst_88 : f32 to vector<64x256xf32>
    %203 = arith.cmpf oge, %201, %202 : vector<64x256xf32>
    %c1_89 = arith.constant 1 : index
    %c1_90 = arith.constant 1 : index
    %204 = memref.load %arg1[%c1_89, %c1_90] : memref<2x4xf32, #tpu.memory_space<smem>>
    %205 = vector.broadcast %204 : f32 to vector<64x256xf32>
    %206 = arith.mulf %205, %201 : vector<64x256xf32>
    %207 = arith.select %203, %201, %206 : vector<64x256xi1>, vector<64x256xf32>
    %cst_91 = arith.constant dense<0.000000e+00> : vector<256xf32>
    %208 = vector.multi_reduction <add>, %207, %cst_91 [0] : vector<64x256xf32> to vector<256xf32>
    %209 = vector.shape_cast %208 : vector<256xf32> to vector<1x256xf32>
    %210 = arith.mulf %207, %207 : vector<64x256xf32>
    %cst_92 = arith.constant dense<0.000000e+00> : vector<256xf32>
    %211 = vector.multi_reduction <add>, %210, %cst_92 [0] : vector<64x256xf32> to vector<256xf32>
    %212 = vector.shape_cast %211 : vector<256xf32> to vector<1x256xf32>
    %cst_93 = arith.constant dense<0.000000e+00> : vector<1xf32>
    %213 = vector.multi_reduction <add>, %209, %cst_93 [1] : vector<1x256xf32> to vector<1xf32>
    %214 = vector.shape_cast %213 : vector<1xf32> to vector<1x1xf32>
    %cst_94 = arith.constant dense<0.000000e+00> : vector<1xf32>
    %215 = vector.multi_reduction <add>, %212, %cst_94 [1] : vector<1x256xf32> to vector<1xf32>
    %216 = vector.shape_cast %215 : vector<1xf32> to vector<1x1xf32>
    %cst_95 = arith.constant 6.10351563E-5 : f32
    %217 = vector.broadcast %cst_95 : f32 to vector<1x1xf32>
    %218 = arith.mulf %214, %217 : vector<1x1xf32>
    %cst_96 = arith.constant 6.10351563E-5 : f32
    %219 = vector.broadcast %cst_96 : f32 to vector<1x1xf32>
    %220 = arith.mulf %216, %219 : vector<1x1xf32>
    %221 = arith.mulf %218, %218 : vector<1x1xf32>
    %222 = arith.subf %220, %221 : vector<1x1xf32>
    %cst_97 = arith.constant 0.000000e+00 : f32
    %223 = vector.broadcast %cst_97 : f32 to vector<1x1xf32>
    %224 = arith.maximumf %222, %223 : vector<1x1xf32>
    %cst_98 = arith.constant 9.99999993E-9 : f32
    %225 = vector.broadcast %cst_98 : f32 to vector<1x1xf32>
    %226 = arith.addf %224, %225 : vector<1x1xf32>
    %227 = math.rsqrt %226 : vector<1x1xf32>
    %228 = arith.truncf %207 : vector<64x256xf32> to vector<64x256xbf16>
    %c1_99 = arith.constant 1 : index
    %c0_100 = arith.constant 0 : index
    %c0_101 = arith.constant 0 : index
    %229 = vector.load %arg11[%c1_99, %c0_100, %c0_101] : memref<4x256x128xbf16, #tpu.memory_space<vmem>>, vector<1x256x128xbf16>
    %230 = vector.shape_cast %229 : vector<1x256x128xbf16> to vector<256x128xbf16>
    %cst_102 = arith.constant dense<0.000000e+00> : vector<64x128xf32>
    %231 = tpu.matmul %228, %230, %cst_102 {dimension_numbers = #tpu.dot_dimension_numbers<[1], [0], [0], [1], [0, 0, 1, 1], [], []>} : vector<64x256xbf16>, vector<256x128xbf16>, vector<64x128xf32> -> vector<64x128xf32>
    %c1_103 = arith.constant 1 : index
    %c0_104 = arith.constant 0 : index
    %c0_105 = arith.constant 0 : index
    %232 = vector.load %arg13[%c1_103, %c0_104, %c0_105] : memref<4x1x128xf32, #tpu.memory_space<vmem>>, vector<1x1x128xf32>
    %233 = vector.shape_cast %232 : vector<1x1x128xf32> to vector<1x128xf32>
    %234 = arith.mulf %218, %227 : vector<1x1xf32>
    %c1_106 = arith.constant 1 : index
    %c0_107 = arith.constant 0 : index
    %c0_108 = arith.constant 0 : index
    %235 = vector.load %arg12[%c1_106, %c0_107, %c0_108] : memref<4x1x128xf32, #tpu.memory_space<vmem>>, vector<1x1x128xf32>
    %236 = vector.shape_cast %235 : vector<1x1x128xf32> to vector<1x128xf32>
    %237 = vector.broadcast %234 : vector<1x1xf32> to vector<1x128xf32>
    %238 = arith.mulf %237, %236 : vector<1x128xf32>
    %239 = arith.subf %233, %238 : vector<1x128xf32>
    %240 = vector.broadcast %227 : vector<1x1xf32> to vector<64x128xf32>
    %241 = arith.mulf %231, %240 : vector<64x128xf32>
    %242 = vector.broadcast %239 : vector<1x128xf32> to vector<64x128xf32>
    %243 = arith.addf %241, %242 : vector<64x128xf32>
    %244 = arith.addf %140, %243 : vector<64x128xf32>
    %245 = arith.truncf %244 : vector<64x128xf32> to vector<64x128xbf16>
    %c2 = arith.constant 2 : index
    %c0_109 = arith.constant 0 : index
    %c0_110 = arith.constant 0 : index
    %246 = vector.load %arg7[%c2, %c0_109, %c0_110] : memref<4x128x256xbf16, #tpu.memory_space<vmem>>, vector<1x128x256xbf16>
    %247 = vector.shape_cast %246 : vector<1x128x256xbf16> to vector<128x256xbf16>
    %cst_111 = arith.constant dense<0.000000e+00> : vector<64x256xf32>
    %248 = tpu.matmul %245, %247, %cst_111 {dimension_numbers = #tpu.dot_dimension_numbers<[1], [0], [0], [1], [0, 0, 1, 1], [], []>} : vector<64x128xbf16>, vector<128x256xbf16>, vector<64x256xf32> -> vector<64x256xf32>
    %cst_112 = arith.constant 0.000000e+00 : f32
    %249 = vector.broadcast %cst_112 : f32 to vector<64x256xf32>
    %250 = arith.cmpf oge, %248, %249 : vector<64x256xf32>
    %c0_113 = arith.constant 0 : index
    %c2_114 = arith.constant 2 : index
    %251 = memref.load %arg1[%c0_113, %c2_114] : memref<2x4xf32, #tpu.memory_space<smem>>
    %252 = vector.broadcast %251 : f32 to vector<64x256xf32>
    %253 = arith.mulf %252, %248 : vector<64x256xf32>
    %254 = arith.select %250, %248, %253 : vector<64x256xi1>, vector<64x256xf32>
    %cst_115 = arith.constant dense<0.000000e+00> : vector<256xf32>
    %255 = vector.multi_reduction <add>, %254, %cst_115 [0] : vector<64x256xf32> to vector<256xf32>
    %256 = vector.shape_cast %255 : vector<256xf32> to vector<1x256xf32>
    %257 = arith.mulf %254, %254 : vector<64x256xf32>
    %cst_116 = arith.constant dense<0.000000e+00> : vector<256xf32>
    %258 = vector.multi_reduction <add>, %257, %cst_116 [0] : vector<64x256xf32> to vector<256xf32>
    %259 = vector.shape_cast %258 : vector<256xf32> to vector<1x256xf32>
    %cst_117 = arith.constant dense<0.000000e+00> : vector<1xf32>
    %260 = vector.multi_reduction <add>, %256, %cst_117 [1] : vector<1x256xf32> to vector<1xf32>
    %261 = vector.shape_cast %260 : vector<1xf32> to vector<1x1xf32>
    %cst_118 = arith.constant dense<0.000000e+00> : vector<1xf32>
    %262 = vector.multi_reduction <add>, %259, %cst_118 [1] : vector<1x256xf32> to vector<1xf32>
    %263 = vector.shape_cast %262 : vector<1xf32> to vector<1x1xf32>
    %cst_119 = arith.constant 6.10351563E-5 : f32
    %264 = vector.broadcast %cst_119 : f32 to vector<1x1xf32>
    %265 = arith.mulf %261, %264 : vector<1x1xf32>
    %cst_120 = arith.constant 6.10351563E-5 : f32
    %266 = vector.broadcast %cst_120 : f32 to vector<1x1xf32>
    %267 = arith.mulf %263, %266 : vector<1x1xf32>
    %268 = arith.mulf %265, %265 : vector<1x1xf32>
    %269 = arith.subf %267, %268 : vector<1x1xf32>
    %cst_121 = arith.constant 0.000000e+00 : f32
    %270 = vector.broadcast %cst_121 : f32 to vector<1x1xf32>
    %271 = arith.maximumf %269, %270 : vector<1x1xf32>
    %cst_122 = arith.constant 9.99999993E-9 : f32
    %272 = vector.broadcast %cst_122 : f32 to vector<1x1xf32>
    %273 = arith.addf %271, %272 : vector<1x1xf32>
    %274 = math.rsqrt %273 : vector<1x1xf32>
    %c2_123 = arith.constant 2 : index
    %c0_124 = arith.constant 0 : index
    %c0_125 = arith.constant 0 : index
    %275 = vector.load %arg8[%c2_123, %c0_124, %c0_125] : memref<4x1x256xf32, #tpu.memory_space<vmem>>, vector<1x1x256xf32>
    %276 = vector.shape_cast %275 : vector<1x1x256xf32> to vector<1x256xf32>
    %277 = vector.broadcast %274 : vector<1x1xf32> to vector<1x256xf32>
    %278 = arith.mulf %276, %277 : vector<1x256xf32>
    %c2_126 = arith.constant 2 : index
    %c0_127 = arith.constant 0 : index
    %c0_128 = arith.constant 0 : index
    %279 = vector.load %arg9[%c2_126, %c0_127, %c0_128] : memref<4x1x256xf32, #tpu.memory_space<vmem>>, vector<1x1x256xf32>
    %280 = vector.shape_cast %279 : vector<1x1x256xf32> to vector<1x256xf32>
    %281 = vector.broadcast %265 : vector<1x1xf32> to vector<1x256xf32>
    %282 = arith.mulf %281, %278 : vector<1x256xf32>
    %283 = arith.subf %280, %282 : vector<1x256xf32>
    %284 = vector.broadcast %278 : vector<1x256xf32> to vector<64x256xf32>
    %285 = arith.mulf %254, %284 : vector<64x256xf32>
    %286 = vector.broadcast %283 : vector<1x256xf32> to vector<64x256xf32>
    %287 = arith.addf %285, %286 : vector<64x256xf32>
    %c2_129 = arith.constant 2 : index
    %c0_130 = arith.constant 0 : index
    %c0_131 = arith.constant 0 : index
    %288 = vector.load %arg10[%c2_129, %c0_130, %c0_131] : memref<4x3x256xf32, #tpu.memory_space<vmem>>, vector<1x3x256xf32>
    %289 = vector.shape_cast %288 : vector<1x3x256xf32> to vector<3x256xf32>
    %cst_132 = arith.constant 0.000000e+00 : f32
    %290 = vector.broadcast %cst_132 : f32 to vector<4x256xf32>
    %291 = tpu.concatenate %290, %287, %290 in 0 : vector<4x256xf32>, vector<64x256xf32>, vector<4x256xf32> -> vector<72x256xf32>
    %292 = vector.extract_strided_slice %291 {offsets = [0, 0], sizes = [64, 256], strides = [1, 1]} : vector<72x256xf32> to vector<64x256xf32>
    %293 = vector.extract_strided_slice %289 {offsets = [0, 0], sizes = [1, 256], strides = [1, 1]} : vector<3x256xf32> to vector<1x256xf32>
    %294 = vector.broadcast %293 : vector<1x256xf32> to vector<64x256xf32>
    %295 = arith.mulf %292, %294 : vector<64x256xf32>
    %296 = vector.extract_strided_slice %291 {offsets = [4, 0], sizes = [64, 256], strides = [1, 1]} : vector<72x256xf32> to vector<64x256xf32>
    %297 = vector.extract_strided_slice %289 {offsets = [1, 0], sizes = [1, 256], strides = [1, 1]} : vector<3x256xf32> to vector<1x256xf32>
    %298 = vector.broadcast %297 : vector<1x256xf32> to vector<64x256xf32>
    %299 = arith.mulf %296, %298 : vector<64x256xf32>
    %300 = arith.addf %295, %299 : vector<64x256xf32>
    %301 = vector.extract_strided_slice %291 {offsets = [8, 0], sizes = [64, 256], strides = [1, 1]} : vector<72x256xf32> to vector<64x256xf32>
    %302 = vector.extract_strided_slice %289 {offsets = [2, 0], sizes = [1, 256], strides = [1, 1]} : vector<3x256xf32> to vector<1x256xf32>
    %303 = vector.broadcast %302 : vector<1x256xf32> to vector<64x256xf32>
    %304 = arith.mulf %301, %303 : vector<64x256xf32>
    %305 = arith.addf %300, %304 : vector<64x256xf32>
    %cst_133 = arith.constant 0.000000e+00 : f32
    %306 = vector.broadcast %cst_133 : f32 to vector<64x256xf32>
    %307 = arith.cmpf oge, %305, %306 : vector<64x256xf32>
    %c1_134 = arith.constant 1 : index
    %c2_135 = arith.constant 2 : index
    %308 = memref.load %arg1[%c1_134, %c2_135] : memref<2x4xf32, #tpu.memory_space<smem>>
    %309 = vector.broadcast %308 : f32 to vector<64x256xf32>
    %310 = arith.mulf %309, %305 : vector<64x256xf32>
    %311 = arith.select %307, %305, %310 : vector<64x256xi1>, vector<64x256xf32>
    %cst_136 = arith.constant dense<0.000000e+00> : vector<256xf32>
    %312 = vector.multi_reduction <add>, %311, %cst_136 [0] : vector<64x256xf32> to vector<256xf32>
    %313 = vector.shape_cast %312 : vector<256xf32> to vector<1x256xf32>
    %314 = arith.mulf %311, %311 : vector<64x256xf32>
    %cst_137 = arith.constant dense<0.000000e+00> : vector<256xf32>
    %315 = vector.multi_reduction <add>, %314, %cst_137 [0] : vector<64x256xf32> to vector<256xf32>
    %316 = vector.shape_cast %315 : vector<256xf32> to vector<1x256xf32>
    %cst_138 = arith.constant dense<0.000000e+00> : vector<1xf32>
    %317 = vector.multi_reduction <add>, %313, %cst_138 [1] : vector<1x256xf32> to vector<1xf32>
    %318 = vector.shape_cast %317 : vector<1xf32> to vector<1x1xf32>
    %cst_139 = arith.constant dense<0.000000e+00> : vector<1xf32>
    %319 = vector.multi_reduction <add>, %316, %cst_139 [1] : vector<1x256xf32> to vector<1xf32>
    %320 = vector.shape_cast %319 : vector<1xf32> to vector<1x1xf32>
    %cst_140 = arith.constant 6.10351563E-5 : f32
    %321 = vector.broadcast %cst_140 : f32 to vector<1x1xf32>
    %322 = arith.mulf %318, %321 : vector<1x1xf32>
    %cst_141 = arith.constant 6.10351563E-5 : f32
    %323 = vector.broadcast %cst_141 : f32 to vector<1x1xf32>
    %324 = arith.mulf %320, %323 : vector<1x1xf32>
    %325 = arith.mulf %322, %322 : vector<1x1xf32>
    %326 = arith.subf %324, %325 : vector<1x1xf32>
    %cst_142 = arith.constant 0.000000e+00 : f32
    %327 = vector.broadcast %cst_142 : f32 to vector<1x1xf32>
    %328 = arith.maximumf %326, %327 : vector<1x1xf32>
    %cst_143 = arith.constant 9.99999993E-9 : f32
    %329 = vector.broadcast %cst_143 : f32 to vector<1x1xf32>
    %330 = arith.addf %328, %329 : vector<1x1xf32>
    %331 = math.rsqrt %330 : vector<1x1xf32>
    %332 = arith.truncf %311 : vector<64x256xf32> to vector<64x256xbf16>
    %c2_144 = arith.constant 2 : index
    %c0_145 = arith.constant 0 : index
    %c0_146 = arith.constant 0 : index
    %333 = vector.load %arg11[%c2_144, %c0_145, %c0_146] : memref<4x256x128xbf16, #tpu.memory_space<vmem>>, vector<1x256x128xbf16>
    %334 = vector.shape_cast %333 : vector<1x256x128xbf16> to vector<256x128xbf16>
    %cst_147 = arith.constant dense<0.000000e+00> : vector<64x128xf32>
    %335 = tpu.matmul %332, %334, %cst_147 {dimension_numbers = #tpu.dot_dimension_numbers<[1], [0], [0], [1], [0, 0, 1, 1], [], []>} : vector<64x256xbf16>, vector<256x128xbf16>, vector<64x128xf32> -> vector<64x128xf32>
    %c2_148 = arith.constant 2 : index
    %c0_149 = arith.constant 0 : index
    %c0_150 = arith.constant 0 : index
    %336 = vector.load %arg13[%c2_148, %c0_149, %c0_150] : memref<4x1x128xf32, #tpu.memory_space<vmem>>, vector<1x1x128xf32>
    %337 = vector.shape_cast %336 : vector<1x1x128xf32> to vector<1x128xf32>
    %338 = arith.mulf %322, %331 : vector<1x1xf32>
    %c2_151 = arith.constant 2 : index
    %c0_152 = arith.constant 0 : index
    %c0_153 = arith.constant 0 : index
    %339 = vector.load %arg12[%c2_151, %c0_152, %c0_153] : memref<4x1x128xf32, #tpu.memory_space<vmem>>, vector<1x1x128xf32>
    %340 = vector.shape_cast %339 : vector<1x1x128xf32> to vector<1x128xf32>
    %341 = vector.broadcast %338 : vector<1x1xf32> to vector<1x128xf32>
    %342 = arith.mulf %341, %340 : vector<1x128xf32>
    %343 = arith.subf %337, %342 : vector<1x128xf32>
    %344 = vector.broadcast %331 : vector<1x1xf32> to vector<64x128xf32>
    %345 = arith.mulf %335, %344 : vector<64x128xf32>
    %346 = vector.broadcast %343 : vector<1x128xf32> to vector<64x128xf32>
    %347 = arith.addf %345, %346 : vector<64x128xf32>
    %348 = arith.addf %244, %347 : vector<64x128xf32>
    %349 = arith.truncf %348 : vector<64x128xf32> to vector<64x128xbf16>
    %c3 = arith.constant 3 : index
    %c0_154 = arith.constant 0 : index
    %c0_155 = arith.constant 0 : index
    %350 = vector.load %arg7[%c3, %c0_154, %c0_155] : memref<4x128x256xbf16, #tpu.memory_space<vmem>>, vector<1x128x256xbf16>
    %351 = vector.shape_cast %350 : vector<1x128x256xbf16> to vector<128x256xbf16>
    %cst_156 = arith.constant dense<0.000000e+00> : vector<64x256xf32>
    %352 = tpu.matmul %349, %351, %cst_156 {dimension_numbers = #tpu.dot_dimension_numbers<[1], [0], [0], [1], [0, 0, 1, 1], [], []>} : vector<64x128xbf16>, vector<128x256xbf16>, vector<64x256xf32> -> vector<64x256xf32>
    %cst_157 = arith.constant 0.000000e+00 : f32
    %353 = vector.broadcast %cst_157 : f32 to vector<64x256xf32>
    %354 = arith.cmpf oge, %352, %353 : vector<64x256xf32>
    %c0_158 = arith.constant 0 : index
    %c3_159 = arith.constant 3 : index
    %355 = memref.load %arg1[%c0_158, %c3_159] : memref<2x4xf32, #tpu.memory_space<smem>>
    %356 = vector.broadcast %355 : f32 to vector<64x256xf32>
    %357 = arith.mulf %356, %352 : vector<64x256xf32>
    %358 = arith.select %354, %352, %357 : vector<64x256xi1>, vector<64x256xf32>
    %cst_160 = arith.constant dense<0.000000e+00> : vector<256xf32>
    %359 = vector.multi_reduction <add>, %358, %cst_160 [0] : vector<64x256xf32> to vector<256xf32>
    %360 = vector.shape_cast %359 : vector<256xf32> to vector<1x256xf32>
    %361 = arith.mulf %358, %358 : vector<64x256xf32>
    %cst_161 = arith.constant dense<0.000000e+00> : vector<256xf32>
    %362 = vector.multi_reduction <add>, %361, %cst_161 [0] : vector<64x256xf32> to vector<256xf32>
    %363 = vector.shape_cast %362 : vector<256xf32> to vector<1x256xf32>
    %cst_162 = arith.constant dense<0.000000e+00> : vector<1xf32>
    %364 = vector.multi_reduction <add>, %360, %cst_162 [1] : vector<1x256xf32> to vector<1xf32>
    %365 = vector.shape_cast %364 : vector<1xf32> to vector<1x1xf32>
    %cst_163 = arith.constant dense<0.000000e+00> : vector<1xf32>
    %366 = vector.multi_reduction <add>, %363, %cst_163 [1] : vector<1x256xf32> to vector<1xf32>
    %367 = vector.shape_cast %366 : vector<1xf32> to vector<1x1xf32>
    %cst_164 = arith.constant 6.10351563E-5 : f32
    %368 = vector.broadcast %cst_164 : f32 to vector<1x1xf32>
    %369 = arith.mulf %365, %368 : vector<1x1xf32>
    %cst_165 = arith.constant 6.10351563E-5 : f32
    %370 = vector.broadcast %cst_165 : f32 to vector<1x1xf32>
    %371 = arith.mulf %367, %370 : vector<1x1xf32>
    %372 = arith.mulf %369, %369 : vector<1x1xf32>
    %373 = arith.subf %371, %372 : vector<1x1xf32>
    %cst_166 = arith.constant 0.000000e+00 : f32
    %374 = vector.broadcast %cst_166 : f32 to vector<1x1xf32>
    %375 = arith.maximumf %373, %374 : vector<1x1xf32>
    %cst_167 = arith.constant 9.99999993E-9 : f32
    %376 = vector.broadcast %cst_167 : f32 to vector<1x1xf32>
    %377 = arith.addf %375, %376 : vector<1x1xf32>
    %378 = math.rsqrt %377 : vector<1x1xf32>
    %c3_168 = arith.constant 3 : index
    %c0_169 = arith.constant 0 : index
    %c0_170 = arith.constant 0 : index
    %379 = vector.load %arg8[%c3_168, %c0_169, %c0_170] : memref<4x1x256xf32, #tpu.memory_space<vmem>>, vector<1x1x256xf32>
    %380 = vector.shape_cast %379 : vector<1x1x256xf32> to vector<1x256xf32>
    %381 = vector.broadcast %378 : vector<1x1xf32> to vector<1x256xf32>
    %382 = arith.mulf %380, %381 : vector<1x256xf32>
    %c3_171 = arith.constant 3 : index
    %c0_172 = arith.constant 0 : index
    %c0_173 = arith.constant 0 : index
    %383 = vector.load %arg9[%c3_171, %c0_172, %c0_173] : memref<4x1x256xf32, #tpu.memory_space<vmem>>, vector<1x1x256xf32>
    %384 = vector.shape_cast %383 : vector<1x1x256xf32> to vector<1x256xf32>
    %385 = vector.broadcast %369 : vector<1x1xf32> to vector<1x256xf32>
    %386 = arith.mulf %385, %382 : vector<1x256xf32>
    %387 = arith.subf %384, %386 : vector<1x256xf32>
    %388 = vector.broadcast %382 : vector<1x256xf32> to vector<64x256xf32>
    %389 = arith.mulf %358, %388 : vector<64x256xf32>
    %390 = vector.broadcast %387 : vector<1x256xf32> to vector<64x256xf32>
    %391 = arith.addf %389, %390 : vector<64x256xf32>
    %c3_174 = arith.constant 3 : index
    %c0_175 = arith.constant 0 : index
    %c0_176 = arith.constant 0 : index
    %392 = vector.load %arg10[%c3_174, %c0_175, %c0_176] : memref<4x3x256xf32, #tpu.memory_space<vmem>>, vector<1x3x256xf32>
    %393 = vector.shape_cast %392 : vector<1x3x256xf32> to vector<3x256xf32>
    %cst_177 = arith.constant 0.000000e+00 : f32
    %394 = vector.broadcast %cst_177 : f32 to vector<8x256xf32>
    %395 = tpu.concatenate %394, %391, %394 in 0 : vector<8x256xf32>, vector<64x256xf32>, vector<8x256xf32> -> vector<80x256xf32>
    %396 = vector.extract_strided_slice %395 {offsets = [0, 0], sizes = [64, 256], strides = [1, 1]} : vector<80x256xf32> to vector<64x256xf32>
    %397 = vector.extract_strided_slice %393 {offsets = [0, 0], sizes = [1, 256], strides = [1, 1]} : vector<3x256xf32> to vector<1x256xf32>
    %398 = vector.broadcast %397 : vector<1x256xf32> to vector<64x256xf32>
    %399 = arith.mulf %396, %398 : vector<64x256xf32>
    %400 = vector.extract_strided_slice %395 {offsets = [8, 0], sizes = [64, 256], strides = [1, 1]} : vector<80x256xf32> to vector<64x256xf32>
    %401 = vector.extract_strided_slice %393 {offsets = [1, 0], sizes = [1, 256], strides = [1, 1]} : vector<3x256xf32> to vector<1x256xf32>
    %402 = vector.broadcast %401 : vector<1x256xf32> to vector<64x256xf32>
    %403 = arith.mulf %400, %402 : vector<64x256xf32>
    %404 = arith.addf %399, %403 : vector<64x256xf32>
    %405 = vector.extract_strided_slice %395 {offsets = [16, 0], sizes = [64, 256], strides = [1, 1]} : vector<80x256xf32> to vector<64x256xf32>
    %406 = vector.extract_strided_slice %393 {offsets = [2, 0], sizes = [1, 256], strides = [1, 1]} : vector<3x256xf32> to vector<1x256xf32>
    %407 = vector.broadcast %406 : vector<1x256xf32> to vector<64x256xf32>
    %408 = arith.mulf %405, %407 : vector<64x256xf32>
    %409 = arith.addf %404, %408 : vector<64x256xf32>
    %cst_178 = arith.constant 0.000000e+00 : f32
    %410 = vector.broadcast %cst_178 : f32 to vector<64x256xf32>
    %411 = arith.cmpf oge, %409, %410 : vector<64x256xf32>
    %c1_179 = arith.constant 1 : index
    %c3_180 = arith.constant 3 : index
    %412 = memref.load %arg1[%c1_179, %c3_180] : memref<2x4xf32, #tpu.memory_space<smem>>
    %413 = vector.broadcast %412 : f32 to vector<64x256xf32>
    %414 = arith.mulf %413, %409 : vector<64x256xf32>
    %415 = arith.select %411, %409, %414 : vector<64x256xi1>, vector<64x256xf32>
    %cst_181 = arith.constant dense<0.000000e+00> : vector<256xf32>
    %416 = vector.multi_reduction <add>, %415, %cst_181 [0] : vector<64x256xf32> to vector<256xf32>
    %417 = vector.shape_cast %416 : vector<256xf32> to vector<1x256xf32>
    %418 = arith.mulf %415, %415 : vector<64x256xf32>
    %cst_182 = arith.constant dense<0.000000e+00> : vector<256xf32>
    %419 = vector.multi_reduction <add>, %418, %cst_182 [0] : vector<64x256xf32> to vector<256xf32>
    %420 = vector.shape_cast %419 : vector<256xf32> to vector<1x256xf32>
    %cst_183 = arith.constant dense<0.000000e+00> : vector<1xf32>
    %421 = vector.multi_reduction <add>, %417, %cst_183 [1] : vector<1x256xf32> to vector<1xf32>
    %422 = vector.shape_cast %421 : vector<1xf32> to vector<1x1xf32>
    %cst_184 = arith.constant dense<0.000000e+00> : vector<1xf32>
    %423 = vector.multi_reduction <add>, %420, %cst_184 [1] : vector<1x256xf32> to vector<1xf32>
    %424 = vector.shape_cast %423 : vector<1xf32> to vector<1x1xf32>
    %cst_185 = arith.constant 6.10351563E-5 : f32
    %425 = vector.broadcast %cst_185 : f32 to vector<1x1xf32>
    %426 = arith.mulf %422, %425 : vector<1x1xf32>
    %cst_186 = arith.constant 6.10351563E-5 : f32
    %427 = vector.broadcast %cst_186 : f32 to vector<1x1xf32>
    %428 = arith.mulf %424, %427 : vector<1x1xf32>
    %429 = arith.mulf %426, %426 : vector<1x1xf32>
    %430 = arith.subf %428, %429 : vector<1x1xf32>
    %cst_187 = arith.constant 0.000000e+00 : f32
    %431 = vector.broadcast %cst_187 : f32 to vector<1x1xf32>
    %432 = arith.maximumf %430, %431 : vector<1x1xf32>
    %cst_188 = arith.constant 9.99999993E-9 : f32
    %433 = vector.broadcast %cst_188 : f32 to vector<1x1xf32>
    %434 = arith.addf %432, %433 : vector<1x1xf32>
    %435 = math.rsqrt %434 : vector<1x1xf32>
    %436 = arith.truncf %415 : vector<64x256xf32> to vector<64x256xbf16>
    %c3_189 = arith.constant 3 : index
    %c0_190 = arith.constant 0 : index
    %c0_191 = arith.constant 0 : index
    %437 = vector.load %arg11[%c3_189, %c0_190, %c0_191] : memref<4x256x128xbf16, #tpu.memory_space<vmem>>, vector<1x256x128xbf16>
    %438 = vector.shape_cast %437 : vector<1x256x128xbf16> to vector<256x128xbf16>
    %cst_192 = arith.constant dense<0.000000e+00> : vector<64x128xf32>
    %439 = tpu.matmul %436, %438, %cst_192 {dimension_numbers = #tpu.dot_dimension_numbers<[1], [0], [0], [1], [0, 0, 1, 1], [], []>} : vector<64x256xbf16>, vector<256x128xbf16>, vector<64x128xf32> -> vector<64x128xf32>
    %c3_193 = arith.constant 3 : index
    %c0_194 = arith.constant 0 : index
    %c0_195 = arith.constant 0 : index
    %440 = vector.load %arg13[%c3_193, %c0_194, %c0_195] : memref<4x1x128xf32, #tpu.memory_space<vmem>>, vector<1x1x128xf32>
    %441 = vector.shape_cast %440 : vector<1x1x128xf32> to vector<1x128xf32>
    %442 = arith.mulf %426, %435 : vector<1x1xf32>
    %c3_196 = arith.constant 3 : index
    %c0_197 = arith.constant 0 : index
    %c0_198 = arith.constant 0 : index
    %443 = vector.load %arg12[%c3_196, %c0_197, %c0_198] : memref<4x1x128xf32, #tpu.memory_space<vmem>>, vector<1x1x128xf32>
    %444 = vector.shape_cast %443 : vector<1x1x128xf32> to vector<1x128xf32>
    %445 = vector.broadcast %442 : vector<1x1xf32> to vector<1x128xf32>
    %446 = arith.mulf %445, %444 : vector<1x128xf32>
    %447 = arith.subf %441, %446 : vector<1x128xf32>
    %448 = vector.broadcast %435 : vector<1x1xf32> to vector<64x128xf32>
    %449 = arith.mulf %439, %448 : vector<64x128xf32>
    %450 = vector.broadcast %447 : vector<1x128xf32> to vector<64x128xf32>
    %451 = arith.addf %449, %450 : vector<64x128xf32>
    %452 = arith.addf %348, %451 : vector<64x128xf32>
    %c0_199 = arith.constant 0 : index
    %c0_200 = arith.constant 0 : index
    %453 = vector.load %arg15[%c0_199, %c0_200] : memref<64x128xf32, #tpu.memory_space<vmem>>, vector<64x128xf32>
    tpu.vector_store %arg15[%c0_199, %c0_200], %452 {strides = array<i32>} : memref<64x128xf32, #tpu.memory_space<vmem>>, vector<64x128xf32>,
    %c0_201 = arith.constant 0 : index
    %c0_202 = arith.constant 0 : index
    %454 = tpu.strided_load %arg15[%c0_201, %c0_202] {strides = array<i32: 4, 1>} : memref<64x128xf32, #tpu.memory_space<vmem>>, vector<16x128xf32>
    %c1_203 = arith.constant 1 : index
    %c0_204 = arith.constant 0 : index
    %455 = tpu.strided_load %arg15[%c1_203, %c0_204] {strides = array<i32: 4, 1>} : memref<64x128xf32, #tpu.memory_space<vmem>>, vector<16x128xf32>
    %456 = arith.addf %454, %455 : vector<16x128xf32>
    %c2_205 = arith.constant 2 : index
    %c0_206 = arith.constant 0 : index
    %457 = tpu.strided_load %arg15[%c2_205, %c0_206] {strides = array<i32: 4, 1>} : memref<64x128xf32, #tpu.memory_space<vmem>>, vector<16x128xf32>
    %458 = arith.addf %456, %457 : vector<16x128xf32>
    %c3_207 = arith.constant 3 : index
    %c0_208 = arith.constant 0 : index
    %459 = tpu.strided_load %arg15[%c3_207, %c0_208] {strides = array<i32: 4, 1>} : memref<64x128xf32, #tpu.memory_space<vmem>>, vector<16x128xf32>
    %460 = arith.addf %458, %459 : vector<16x128xf32>
    %cst_209 = arith.constant 2.500000e-01 : f32
    %461 = vector.broadcast %cst_209 : f32 to vector<16x128xf32>
    %462 = arith.mulf %460, %461 : vector<16x128xf32>
    %c0_210 = arith.constant 0 : index
    %c0_211 = arith.constant 0 : index
    %c0_212 = arith.constant 0 : index
    %463 = vector.load %arg14[%c0_210, %c0_211, %c0_212] : memref<1x16x128xf32, #tpu.memory_space<vmem>>, vector<1x16x128xf32>
    %464 = vector.shape_cast %463 : vector<1x16x128xf32> to vector<16x128xf32>
    %465 = vector.shape_cast %462 : vector<16x128xf32> to vector<1x16x128xf32>
    tpu.vector_store %arg14[%c0_210, %c0_211, %c0_212], %465 {strides = array<i32>} : memref<1x16x128xf32, #tpu.memory_space<vmem>>, vector<1x16x128xf32>,
    return
  }
  func.func @transform_0(%arg0: i32) -> (i32, i32) {
    %c0_i32 = arith.constant 0 : i32
    %c0_i32_0 = arith.constant 0 : i32
    %c0_i32_1 = arith.constant 0 : i32
    return %c0_i32, %c0_i32_0 : i32, i32
  }
  func.func @transform_1(%arg0: i32) -> (i32, i32, i32) {
    %c0_i32 = arith.constant 0 : i32
    %c0_i32_0 = arith.constant 0 : i32
    %c0_i32_1 = arith.constant 0 : i32
    return %arg0, %c0_i32, %c0_i32_0 : i32, i32, i32
  }
  func.func @transform_2(%arg0: i32) -> (i32, i32) {
    %c0_i32 = arith.constant 0 : i32
    %c0_i32_0 = arith.constant 0 : i32
    %c0_i32_1 = arith.constant 0 : i32
    return %c0_i32, %c0_i32_0 : i32, i32
  }
  func.func @transform_3(%arg0: i32) -> (i32, i32) {
    %c0_i32 = arith.constant 0 : i32
    %c0_i32_0 = arith.constant 0 : i32
    %c0_i32_1 = arith.constant 0 : i32
    return %c0_i32, %c0_i32_0 : i32, i32
  }
  func.func @transform_4(%arg0: i32) -> (i32, i32) {
    %c0_i32 = arith.constant 0 : i32
    %c0_i32_0 = arith.constant 0 : i32
    %c0_i32_1 = arith.constant 0 : i32
    return %c0_i32, %c0_i32_0 : i32, i32
  }
  func.func @transform_5(%arg0: i32) -> (i32, i32) {
    %c0_i32 = arith.constant 0 : i32
    %c0_i32_0 = arith.constant 0 : i32
    %c0_i32_1 = arith.constant 0 : i32
    return %c0_i32, %c0_i32_0 : i32, i32
  }
  func.func @transform_6(%arg0: i32) -> (i32, i32, i32) {
    %c0_i32 = arith.constant 0 : i32
    %c0_i32_0 = arith.constant 0 : i32
    %c0_i32_1 = arith.constant 0 : i32
    %c0_i32_2 = arith.constant 0 : i32
    return %c0_i32, %c0_i32_0, %c0_i32_1 : i32, i32, i32
  }
  func.func @transform_7(%arg0: i32) -> (i32, i32, i32) {
    %c0_i32 = arith.constant 0 : i32
    %c0_i32_0 = arith.constant 0 : i32
    %c0_i32_1 = arith.constant 0 : i32
    %c0_i32_2 = arith.constant 0 : i32
    return %c0_i32, %c0_i32_0, %c0_i32_1 : i32, i32, i32
  }
  func.func @transform_8(%arg0: i32) -> (i32, i32, i32) {
    %c0_i32 = arith.constant 0 : i32
    %c0_i32_0 = arith.constant 0 : i32
    %c0_i32_1 = arith.constant 0 : i32
    %c0_i32_2 = arith.constant 0 : i32
    return %c0_i32, %c0_i32_0, %c0_i32_1 : i32, i32, i32
  }
  func.func @transform_9(%arg0: i32) -> (i32, i32, i32) {
    %c0_i32 = arith.constant 0 : i32
    %c0_i32_0 = arith.constant 0 : i32
    %c0_i32_1 = arith.constant 0 : i32
    %c0_i32_2 = arith.constant 0 : i32
    return %c0_i32, %c0_i32_0, %c0_i32_1 : i32, i32, i32
  }
  func.func @transform_10(%arg0: i32) -> (i32, i32, i32) {
    %c0_i32 = arith.constant 0 : i32
    %c0_i32_0 = arith.constant 0 : i32
    %c0_i32_1 = arith.constant 0 : i32
    %c0_i32_2 = arith.constant 0 : i32
    return %c0_i32, %c0_i32_0, %c0_i32_1 : i32, i32, i32
  }
  func.func @transform_11(%arg0: i32) -> (i32, i32, i32) {
    %c0_i32 = arith.constant 0 : i32
    %c0_i32_0 = arith.constant 0 : i32
    %c0_i32_1 = arith.constant 0 : i32
    %c0_i32_2 = arith.constant 0 : i32
    return %c0_i32, %c0_i32_0, %c0_i32_1 : i32, i32, i32
  }
  func.func @transform_12(%arg0: i32) -> (i32, i32, i32) {
    %c0_i32 = arith.constant 0 : i32
    %c0_i32_0 = arith.constant 0 : i32
    %c0_i32_1 = arith.constant 0 : i32
    %c0_i32_2 = arith.constant 0 : i32
    return %c0_i32, %c0_i32_0, %c0_i32_1 : i32, i32, i32
  }
  func.func @transform_13(%arg0: i32) -> (i32, i32, i32) {
    %c0_i32 = arith.constant 0 : i32
    %c0_i32_0 = arith.constant 0 : i32
    %c0_i32_1 = arith.constant 0 : i32
    return %arg0, %c0_i32, %c0_i32_0 : i32, i32, i32
  }
}

module attributes {stable_mosaic.version = 11 : i64} {
  func.func @_tcn_pool_kernel(%arg0: i32, %arg1: memref<2x4xf32, #tpu.memory_space<smem>>, %arg2: memref<1x16x128xf32, #tpu.memory_space<vmem>>, %arg3: memref<4x128x256xbf16, #tpu.memory_space<vmem>>, %arg4: memref<4x1x256xf32, #tpu.memory_space<vmem>>, %arg5: memref<4x1x256xf32, #tpu.memory_space<vmem>>, %arg6: memref<4x3x256xf32, #tpu.memory_space<vmem>>, %arg7: memref<4x256x128xbf16, #tpu.memory_space<vmem>>, %arg8: memref<4x1x128xf32, #tpu.memory_space<vmem>>, %arg9: memref<4x1x128xf32, #tpu.memory_space<vmem>>, %arg10: memref<1x4x128xf32, #tpu.memory_space<vmem>>, %arg11: memref<16x128xf32, #tpu.memory_space<vmem>>) attributes {dimension_semantics = [#tpu.dimension_semantics<parallel>], iteration_bounds = array<i64: 2>, scalar_prefetch = 0 : i64, scratch_operands = 1 : i64, tpu.core_type = #tpu.core_type<tc>, window_params = [{transform_indices = @transform_0, window_bounds = array<i64: 2, 4>}, {transform_indices = @transform_1, window_bounds = array<i64: 1, 16, 128>}, {pipeline_mode = #tpu.pipeline_mode<synchronous>, transform_indices = @transform_2, window_bounds = array<i64: 4, 128, 256>}, {pipeline_mode = #tpu.pipeline_mode<synchronous>, transform_indices = @transform_3, window_bounds = array<i64: 4, 1, 256>}, {pipeline_mode = #tpu.pipeline_mode<synchronous>, transform_indices = @transform_4, window_bounds = array<i64: 4, 1, 256>}, {pipeline_mode = #tpu.pipeline_mode<synchronous>, transform_indices = @transform_5, window_bounds = array<i64: 4, 3, 256>}, {pipeline_mode = #tpu.pipeline_mode<synchronous>, transform_indices = @transform_6, window_bounds = array<i64: 4, 256, 128>}, {pipeline_mode = #tpu.pipeline_mode<synchronous>, transform_indices = @transform_7, window_bounds = array<i64: 4, 1, 128>}, {pipeline_mode = #tpu.pipeline_mode<synchronous>, transform_indices = @transform_8, window_bounds = array<i64: 4, 1, 128>}, {transform_indices = @transform_9, window_bounds = array<i64: 1, 4, 128>}]} {
    %c0 = arith.constant 0 : index
    %c0_0 = arith.constant 0 : index
    %c0_1 = arith.constant 0 : index
    %0 = vector.load %arg2[%c0, %c0_0, %c0_1] : memref<1x16x128xf32, #tpu.memory_space<vmem>>, vector<1x16x128xf32>
    %1 = vector.shape_cast %0 : vector<1x16x128xf32> to vector<16x128xf32>
    %2 = arith.truncf %1 : vector<16x128xf32> to vector<16x128xbf16>
    %c0_2 = arith.constant 0 : index
    %c0_3 = arith.constant 0 : index
    %c0_4 = arith.constant 0 : index
    %3 = vector.load %arg3[%c0_2, %c0_3, %c0_4] : memref<4x128x256xbf16, #tpu.memory_space<vmem>>, vector<1x128x256xbf16>
    %4 = vector.shape_cast %3 : vector<1x128x256xbf16> to vector<128x256xbf16>
    %cst = arith.constant dense<0.000000e+00> : vector<16x256xf32>
    %5 = tpu.matmul %2, %4, %cst {dimension_numbers = #tpu.dot_dimension_numbers<[1], [0], [0], [1], [0, 0, 1, 1], [], []>} : vector<16x128xbf16>, vector<128x256xbf16>, vector<16x256xf32> -> vector<16x256xf32>
    %cst_5 = arith.constant 0.000000e+00 : f32
    %6 = vector.broadcast %cst_5 : f32 to vector<16x256xf32>
    %7 = arith.cmpf oge, %5, %6 : vector<16x256xf32>
    %c0_6 = arith.constant 0 : index
    %c0_7 = arith.constant 0 : index
    %8 = memref.load %arg1[%c0_6, %c0_7] : memref<2x4xf32, #tpu.memory_space<smem>>
    %9 = vector.broadcast %8 : f32 to vector<16x256xf32>
    %10 = arith.mulf %9, %5 : vector<16x256xf32>
    %11 = arith.select %7, %5, %10 : vector<16x256xi1>, vector<16x256xf32>
    %cst_8 = arith.constant dense<0.000000e+00> : vector<256xf32>
    %12 = vector.multi_reduction <add>, %11, %cst_8 [0] : vector<16x256xf32> to vector<256xf32>
    %13 = vector.shape_cast %12 : vector<256xf32> to vector<1x256xf32>
    %14 = arith.mulf %11, %11 : vector<16x256xf32>
    %cst_9 = arith.constant dense<0.000000e+00> : vector<256xf32>
    %15 = vector.multi_reduction <add>, %14, %cst_9 [0] : vector<16x256xf32> to vector<256xf32>
    %16 = vector.shape_cast %15 : vector<256xf32> to vector<1x256xf32>
    %cst_10 = arith.constant dense<0.000000e+00> : vector<1xf32>
    %17 = vector.multi_reduction <add>, %13, %cst_10 [1] : vector<1x256xf32> to vector<1xf32>
    %18 = vector.shape_cast %17 : vector<1xf32> to vector<1x1xf32>
    %cst_11 = arith.constant dense<0.000000e+00> : vector<1xf32>
    %19 = vector.multi_reduction <add>, %16, %cst_11 [1] : vector<1x256xf32> to vector<1xf32>
    %20 = vector.shape_cast %19 : vector<1xf32> to vector<1x1xf32>
    %cst_12 = arith.constant 2.44140625E-4 : f32
    %21 = vector.broadcast %cst_12 : f32 to vector<1x1xf32>
    %22 = arith.mulf %18, %21 : vector<1x1xf32>
    %cst_13 = arith.constant 2.44140625E-4 : f32
    %23 = vector.broadcast %cst_13 : f32 to vector<1x1xf32>
    %24 = arith.mulf %20, %23 : vector<1x1xf32>
    %25 = arith.mulf %22, %22 : vector<1x1xf32>
    %26 = arith.subf %24, %25 : vector<1x1xf32>
    %cst_14 = arith.constant 0.000000e+00 : f32
    %27 = vector.broadcast %cst_14 : f32 to vector<1x1xf32>
    %28 = arith.maximumf %26, %27 : vector<1x1xf32>
    %cst_15 = arith.constant 9.99999993E-9 : f32
    %29 = vector.broadcast %cst_15 : f32 to vector<1x1xf32>
    %30 = arith.addf %28, %29 : vector<1x1xf32>
    %31 = math.rsqrt %30 : vector<1x1xf32>
    %c0_16 = arith.constant 0 : index
    %c0_17 = arith.constant 0 : index
    %c0_18 = arith.constant 0 : index
    %32 = vector.load %arg4[%c0_16, %c0_17, %c0_18] : memref<4x1x256xf32, #tpu.memory_space<vmem>>, vector<1x1x256xf32>
    %33 = vector.shape_cast %32 : vector<1x1x256xf32> to vector<1x256xf32>
    %34 = vector.broadcast %31 : vector<1x1xf32> to vector<1x256xf32>
    %35 = arith.mulf %33, %34 : vector<1x256xf32>
    %c0_19 = arith.constant 0 : index
    %c0_20 = arith.constant 0 : index
    %c0_21 = arith.constant 0 : index
    %36 = vector.load %arg5[%c0_19, %c0_20, %c0_21] : memref<4x1x256xf32, #tpu.memory_space<vmem>>, vector<1x1x256xf32>
    %37 = vector.shape_cast %36 : vector<1x1x256xf32> to vector<1x256xf32>
    %38 = vector.broadcast %22 : vector<1x1xf32> to vector<1x256xf32>
    %39 = arith.mulf %38, %35 : vector<1x256xf32>
    %40 = arith.subf %37, %39 : vector<1x256xf32>
    %41 = vector.broadcast %35 : vector<1x256xf32> to vector<16x256xf32>
    %42 = arith.mulf %11, %41 : vector<16x256xf32>
    %43 = vector.broadcast %40 : vector<1x256xf32> to vector<16x256xf32>
    %44 = arith.addf %42, %43 : vector<16x256xf32>
    %c0_22 = arith.constant 0 : index
    %c0_23 = arith.constant 0 : index
    %c0_24 = arith.constant 0 : index
    %45 = vector.load %arg6[%c0_22, %c0_23, %c0_24] : memref<4x3x256xf32, #tpu.memory_space<vmem>>, vector<1x3x256xf32>
    %46 = vector.shape_cast %45 : vector<1x3x256xf32> to vector<3x256xf32>
    %cst_25 = arith.constant 0.000000e+00 : f32
    %47 = vector.broadcast %cst_25 : f32 to vector<1x256xf32>
    %48 = tpu.concatenate %47, %44, %47 in 0 : vector<1x256xf32>, vector<16x256xf32>, vector<1x256xf32> -> vector<18x256xf32>
    %49 = vector.extract_strided_slice %48 {offsets = [0, 0], sizes = [16, 256], strides = [1, 1]} : vector<18x256xf32> to vector<16x256xf32>
    %50 = vector.extract_strided_slice %46 {offsets = [0, 0], sizes = [1, 256], strides = [1, 1]} : vector<3x256xf32> to vector<1x256xf32>
    %51 = vector.broadcast %50 : vector<1x256xf32> to vector<16x256xf32>
    %52 = arith.mulf %49, %51 : vector<16x256xf32>
    %53 = vector.extract_strided_slice %48 {offsets = [1, 0], sizes = [16, 256], strides = [1, 1]} : vector<18x256xf32> to vector<16x256xf32>
    %54 = vector.extract_strided_slice %46 {offsets = [1, 0], sizes = [1, 256], strides = [1, 1]} : vector<3x256xf32> to vector<1x256xf32>
    %55 = vector.broadcast %54 : vector<1x256xf32> to vector<16x256xf32>
    %56 = arith.mulf %53, %55 : vector<16x256xf32>
    %57 = arith.addf %52, %56 : vector<16x256xf32>
    %58 = vector.extract_strided_slice %48 {offsets = [2, 0], sizes = [16, 256], strides = [1, 1]} : vector<18x256xf32> to vector<16x256xf32>
    %59 = vector.extract_strided_slice %46 {offsets = [2, 0], sizes = [1, 256], strides = [1, 1]} : vector<3x256xf32> to vector<1x256xf32>
    %60 = vector.broadcast %59 : vector<1x256xf32> to vector<16x256xf32>
    %61 = arith.mulf %58, %60 : vector<16x256xf32>
    %62 = arith.addf %57, %61 : vector<16x256xf32>
    %cst_26 = arith.constant 0.000000e+00 : f32
    %63 = vector.broadcast %cst_26 : f32 to vector<16x256xf32>
    %64 = arith.cmpf oge, %62, %63 : vector<16x256xf32>
    %c1 = arith.constant 1 : index
    %c0_27 = arith.constant 0 : index
    %65 = memref.load %arg1[%c1, %c0_27] : memref<2x4xf32, #tpu.memory_space<smem>>
    %66 = vector.broadcast %65 : f32 to vector<16x256xf32>
    %67 = arith.mulf %66, %62 : vector<16x256xf32>
    %68 = arith.select %64, %62, %67 : vector<16x256xi1>, vector<16x256xf32>
    %cst_28 = arith.constant dense<0.000000e+00> : vector<256xf32>
    %69 = vector.multi_reduction <add>, %68, %cst_28 [0] : vector<16x256xf32> to vector<256xf32>
    %70 = vector.shape_cast %69 : vector<256xf32> to vector<1x256xf32>
    %71 = arith.mulf %68, %68 : vector<16x256xf32>
    %cst_29 = arith.constant dense<0.000000e+00> : vector<256xf32>
    %72 = vector.multi_reduction <add>, %71, %cst_29 [0] : vector<16x256xf32> to vector<256xf32>
    %73 = vector.shape_cast %72 : vector<256xf32> to vector<1x256xf32>
    %cst_30 = arith.constant dense<0.000000e+00> : vector<1xf32>
    %74 = vector.multi_reduction <add>, %70, %cst_30 [1] : vector<1x256xf32> to vector<1xf32>
    %75 = vector.shape_cast %74 : vector<1xf32> to vector<1x1xf32>
    %cst_31 = arith.constant dense<0.000000e+00> : vector<1xf32>
    %76 = vector.multi_reduction <add>, %73, %cst_31 [1] : vector<1x256xf32> to vector<1xf32>
    %77 = vector.shape_cast %76 : vector<1xf32> to vector<1x1xf32>
    %cst_32 = arith.constant 2.44140625E-4 : f32
    %78 = vector.broadcast %cst_32 : f32 to vector<1x1xf32>
    %79 = arith.mulf %75, %78 : vector<1x1xf32>
    %cst_33 = arith.constant 2.44140625E-4 : f32
    %80 = vector.broadcast %cst_33 : f32 to vector<1x1xf32>
    %81 = arith.mulf %77, %80 : vector<1x1xf32>
    %82 = arith.mulf %79, %79 : vector<1x1xf32>
    %83 = arith.subf %81, %82 : vector<1x1xf32>
    %cst_34 = arith.constant 0.000000e+00 : f32
    %84 = vector.broadcast %cst_34 : f32 to vector<1x1xf32>
    %85 = arith.maximumf %83, %84 : vector<1x1xf32>
    %cst_35 = arith.constant 9.99999993E-9 : f32
    %86 = vector.broadcast %cst_35 : f32 to vector<1x1xf32>
    %87 = arith.addf %85, %86 : vector<1x1xf32>
    %88 = math.rsqrt %87 : vector<1x1xf32>
    %89 = arith.truncf %68 : vector<16x256xf32> to vector<16x256xbf16>
    %c0_36 = arith.constant 0 : index
    %c0_37 = arith.constant 0 : index
    %c0_38 = arith.constant 0 : index
    %90 = vector.load %arg7[%c0_36, %c0_37, %c0_38] : memref<4x256x128xbf16, #tpu.memory_space<vmem>>, vector<1x256x128xbf16>
    %91 = vector.shape_cast %90 : vector<1x256x128xbf16> to vector<256x128xbf16>
    %cst_39 = arith.constant dense<0.000000e+00> : vector<16x128xf32>
    %92 = tpu.matmul %89, %91, %cst_39 {dimension_numbers = #tpu.dot_dimension_numbers<[1], [0], [0], [1], [0, 0, 1, 1], [], []>} : vector<16x256xbf16>, vector<256x128xbf16>, vector<16x128xf32> -> vector<16x128xf32>
    %c0_40 = arith.constant 0 : index
    %c0_41 = arith.constant 0 : index
    %c0_42 = arith.constant 0 : index
    %93 = vector.load %arg9[%c0_40, %c0_41, %c0_42] : memref<4x1x128xf32, #tpu.memory_space<vmem>>, vector<1x1x128xf32>
    %94 = vector.shape_cast %93 : vector<1x1x128xf32> to vector<1x128xf32>
    %95 = arith.mulf %79, %88 : vector<1x1xf32>
    %c0_43 = arith.constant 0 : index
    %c0_44 = arith.constant 0 : index
    %c0_45 = arith.constant 0 : index
    %96 = vector.load %arg8[%c0_43, %c0_44, %c0_45] : memref<4x1x128xf32, #tpu.memory_space<vmem>>, vector<1x1x128xf32>
    %97 = vector.shape_cast %96 : vector<1x1x128xf32> to vector<1x128xf32>
    %98 = vector.broadcast %95 : vector<1x1xf32> to vector<1x128xf32>
    %99 = arith.mulf %98, %97 : vector<1x128xf32>
    %100 = arith.subf %94, %99 : vector<1x128xf32>
    %101 = vector.broadcast %88 : vector<1x1xf32> to vector<16x128xf32>
    %102 = arith.mulf %92, %101 : vector<16x128xf32>
    %103 = vector.broadcast %100 : vector<1x128xf32> to vector<16x128xf32>
    %104 = arith.addf %102, %103 : vector<16x128xf32>
    %105 = arith.addf %1, %104 : vector<16x128xf32>
    %106 = arith.truncf %105 : vector<16x128xf32> to vector<16x128xbf16>
    %c1_46 = arith.constant 1 : index
    %c0_47 = arith.constant 0 : index
    %c0_48 = arith.constant 0 : index
    %107 = vector.load %arg3[%c1_46, %c0_47, %c0_48] : memref<4x128x256xbf16, #tpu.memory_space<vmem>>, vector<1x128x256xbf16>
    %108 = vector.shape_cast %107 : vector<1x128x256xbf16> to vector<128x256xbf16>
    %cst_49 = arith.constant dense<0.000000e+00> : vector<16x256xf32>
    %109 = tpu.matmul %106, %108, %cst_49 {dimension_numbers = #tpu.dot_dimension_numbers<[1], [0], [0], [1], [0, 0, 1, 1], [], []>} : vector<16x128xbf16>, vector<128x256xbf16>, vector<16x256xf32> -> vector<16x256xf32>
    %cst_50 = arith.constant 0.000000e+00 : f32
    %110 = vector.broadcast %cst_50 : f32 to vector<16x256xf32>
    %111 = arith.cmpf oge, %109, %110 : vector<16x256xf32>
    %c0_51 = arith.constant 0 : index
    %c1_52 = arith.constant 1 : index
    %112 = memref.load %arg1[%c0_51, %c1_52] : memref<2x4xf32, #tpu.memory_space<smem>>
    %113 = vector.broadcast %112 : f32 to vector<16x256xf32>
    %114 = arith.mulf %113, %109 : vector<16x256xf32>
    %115 = arith.select %111, %109, %114 : vector<16x256xi1>, vector<16x256xf32>
    %cst_53 = arith.constant dense<0.000000e+00> : vector<256xf32>
    %116 = vector.multi_reduction <add>, %115, %cst_53 [0] : vector<16x256xf32> to vector<256xf32>
    %117 = vector.shape_cast %116 : vector<256xf32> to vector<1x256xf32>
    %118 = arith.mulf %115, %115 : vector<16x256xf32>
    %cst_54 = arith.constant dense<0.000000e+00> : vector<256xf32>
    %119 = vector.multi_reduction <add>, %118, %cst_54 [0] : vector<16x256xf32> to vector<256xf32>
    %120 = vector.shape_cast %119 : vector<256xf32> to vector<1x256xf32>
    %cst_55 = arith.constant dense<0.000000e+00> : vector<1xf32>
    %121 = vector.multi_reduction <add>, %117, %cst_55 [1] : vector<1x256xf32> to vector<1xf32>
    %122 = vector.shape_cast %121 : vector<1xf32> to vector<1x1xf32>
    %cst_56 = arith.constant dense<0.000000e+00> : vector<1xf32>
    %123 = vector.multi_reduction <add>, %120, %cst_56 [1] : vector<1x256xf32> to vector<1xf32>
    %124 = vector.shape_cast %123 : vector<1xf32> to vector<1x1xf32>
    %cst_57 = arith.constant 2.44140625E-4 : f32
    %125 = vector.broadcast %cst_57 : f32 to vector<1x1xf32>
    %126 = arith.mulf %122, %125 : vector<1x1xf32>
    %cst_58 = arith.constant 2.44140625E-4 : f32
    %127 = vector.broadcast %cst_58 : f32 to vector<1x1xf32>
    %128 = arith.mulf %124, %127 : vector<1x1xf32>
    %129 = arith.mulf %126, %126 : vector<1x1xf32>
    %130 = arith.subf %128, %129 : vector<1x1xf32>
    %cst_59 = arith.constant 0.000000e+00 : f32
    %131 = vector.broadcast %cst_59 : f32 to vector<1x1xf32>
    %132 = arith.maximumf %130, %131 : vector<1x1xf32>
    %cst_60 = arith.constant 9.99999993E-9 : f32
    %133 = vector.broadcast %cst_60 : f32 to vector<1x1xf32>
    %134 = arith.addf %132, %133 : vector<1x1xf32>
    %135 = math.rsqrt %134 : vector<1x1xf32>
    %c1_61 = arith.constant 1 : index
    %c0_62 = arith.constant 0 : index
    %c0_63 = arith.constant 0 : index
    %136 = vector.load %arg4[%c1_61, %c0_62, %c0_63] : memref<4x1x256xf32, #tpu.memory_space<vmem>>, vector<1x1x256xf32>
    %137 = vector.shape_cast %136 : vector<1x1x256xf32> to vector<1x256xf32>
    %138 = vector.broadcast %135 : vector<1x1xf32> to vector<1x256xf32>
    %139 = arith.mulf %137, %138 : vector<1x256xf32>
    %c1_64 = arith.constant 1 : index
    %c0_65 = arith.constant 0 : index
    %c0_66 = arith.constant 0 : index
    %140 = vector.load %arg5[%c1_64, %c0_65, %c0_66] : memref<4x1x256xf32, #tpu.memory_space<vmem>>, vector<1x1x256xf32>
    %141 = vector.shape_cast %140 : vector<1x1x256xf32> to vector<1x256xf32>
    %142 = vector.broadcast %126 : vector<1x1xf32> to vector<1x256xf32>
    %143 = arith.mulf %142, %139 : vector<1x256xf32>
    %144 = arith.subf %141, %143 : vector<1x256xf32>
    %145 = vector.broadcast %139 : vector<1x256xf32> to vector<16x256xf32>
    %146 = arith.mulf %115, %145 : vector<16x256xf32>
    %147 = vector.broadcast %144 : vector<1x256xf32> to vector<16x256xf32>
    %148 = arith.addf %146, %147 : vector<16x256xf32>
    %c1_67 = arith.constant 1 : index
    %c0_68 = arith.constant 0 : index
    %c0_69 = arith.constant 0 : index
    %149 = vector.load %arg6[%c1_67, %c0_68, %c0_69] : memref<4x3x256xf32, #tpu.memory_space<vmem>>, vector<1x3x256xf32>
    %150 = vector.shape_cast %149 : vector<1x3x256xf32> to vector<3x256xf32>
    %cst_70 = arith.constant 0.000000e+00 : f32
    %151 = vector.broadcast %cst_70 : f32 to vector<2x256xf32>
    %152 = tpu.concatenate %151, %148, %151 in 0 : vector<2x256xf32>, vector<16x256xf32>, vector<2x256xf32> -> vector<20x256xf32>
    %153 = vector.extract_strided_slice %152 {offsets = [0, 0], sizes = [16, 256], strides = [1, 1]} : vector<20x256xf32> to vector<16x256xf32>
    %154 = vector.extract_strided_slice %150 {offsets = [0, 0], sizes = [1, 256], strides = [1, 1]} : vector<3x256xf32> to vector<1x256xf32>
    %155 = vector.broadcast %154 : vector<1x256xf32> to vector<16x256xf32>
    %156 = arith.mulf %153, %155 : vector<16x256xf32>
    %157 = vector.extract_strided_slice %152 {offsets = [2, 0], sizes = [16, 256], strides = [1, 1]} : vector<20x256xf32> to vector<16x256xf32>
    %158 = vector.extract_strided_slice %150 {offsets = [1, 0], sizes = [1, 256], strides = [1, 1]} : vector<3x256xf32> to vector<1x256xf32>
    %159 = vector.broadcast %158 : vector<1x256xf32> to vector<16x256xf32>
    %160 = arith.mulf %157, %159 : vector<16x256xf32>
    %161 = arith.addf %156, %160 : vector<16x256xf32>
    %162 = vector.extract_strided_slice %152 {offsets = [4, 0], sizes = [16, 256], strides = [1, 1]} : vector<20x256xf32> to vector<16x256xf32>
    %163 = vector.extract_strided_slice %150 {offsets = [2, 0], sizes = [1, 256], strides = [1, 1]} : vector<3x256xf32> to vector<1x256xf32>
    %164 = vector.broadcast %163 : vector<1x256xf32> to vector<16x256xf32>
    %165 = arith.mulf %162, %164 : vector<16x256xf32>
    %166 = arith.addf %161, %165 : vector<16x256xf32>
    %cst_71 = arith.constant 0.000000e+00 : f32
    %167 = vector.broadcast %cst_71 : f32 to vector<16x256xf32>
    %168 = arith.cmpf oge, %166, %167 : vector<16x256xf32>
    %c1_72 = arith.constant 1 : index
    %c1_73 = arith.constant 1 : index
    %169 = memref.load %arg1[%c1_72, %c1_73] : memref<2x4xf32, #tpu.memory_space<smem>>
    %170 = vector.broadcast %169 : f32 to vector<16x256xf32>
    %171 = arith.mulf %170, %166 : vector<16x256xf32>
    %172 = arith.select %168, %166, %171 : vector<16x256xi1>, vector<16x256xf32>
    %cst_74 = arith.constant dense<0.000000e+00> : vector<256xf32>
    %173 = vector.multi_reduction <add>, %172, %cst_74 [0] : vector<16x256xf32> to vector<256xf32>
    %174 = vector.shape_cast %173 : vector<256xf32> to vector<1x256xf32>
    %175 = arith.mulf %172, %172 : vector<16x256xf32>
    %cst_75 = arith.constant dense<0.000000e+00> : vector<256xf32>
    %176 = vector.multi_reduction <add>, %175, %cst_75 [0] : vector<16x256xf32> to vector<256xf32>
    %177 = vector.shape_cast %176 : vector<256xf32> to vector<1x256xf32>
    %cst_76 = arith.constant dense<0.000000e+00> : vector<1xf32>
    %178 = vector.multi_reduction <add>, %174, %cst_76 [1] : vector<1x256xf32> to vector<1xf32>
    %179 = vector.shape_cast %178 : vector<1xf32> to vector<1x1xf32>
    %cst_77 = arith.constant dense<0.000000e+00> : vector<1xf32>
    %180 = vector.multi_reduction <add>, %177, %cst_77 [1] : vector<1x256xf32> to vector<1xf32>
    %181 = vector.shape_cast %180 : vector<1xf32> to vector<1x1xf32>
    %cst_78 = arith.constant 2.44140625E-4 : f32
    %182 = vector.broadcast %cst_78 : f32 to vector<1x1xf32>
    %183 = arith.mulf %179, %182 : vector<1x1xf32>
    %cst_79 = arith.constant 2.44140625E-4 : f32
    %184 = vector.broadcast %cst_79 : f32 to vector<1x1xf32>
    %185 = arith.mulf %181, %184 : vector<1x1xf32>
    %186 = arith.mulf %183, %183 : vector<1x1xf32>
    %187 = arith.subf %185, %186 : vector<1x1xf32>
    %cst_80 = arith.constant 0.000000e+00 : f32
    %188 = vector.broadcast %cst_80 : f32 to vector<1x1xf32>
    %189 = arith.maximumf %187, %188 : vector<1x1xf32>
    %cst_81 = arith.constant 9.99999993E-9 : f32
    %190 = vector.broadcast %cst_81 : f32 to vector<1x1xf32>
    %191 = arith.addf %189, %190 : vector<1x1xf32>
    %192 = math.rsqrt %191 : vector<1x1xf32>
    %193 = arith.truncf %172 : vector<16x256xf32> to vector<16x256xbf16>
    %c1_82 = arith.constant 1 : index
    %c0_83 = arith.constant 0 : index
    %c0_84 = arith.constant 0 : index
    %194 = vector.load %arg7[%c1_82, %c0_83, %c0_84] : memref<4x256x128xbf16, #tpu.memory_space<vmem>>, vector<1x256x128xbf16>
    %195 = vector.shape_cast %194 : vector<1x256x128xbf16> to vector<256x128xbf16>
    %cst_85 = arith.constant dense<0.000000e+00> : vector<16x128xf32>
    %196 = tpu.matmul %193, %195, %cst_85 {dimension_numbers = #tpu.dot_dimension_numbers<[1], [0], [0], [1], [0, 0, 1, 1], [], []>} : vector<16x256xbf16>, vector<256x128xbf16>, vector<16x128xf32> -> vector<16x128xf32>
    %c1_86 = arith.constant 1 : index
    %c0_87 = arith.constant 0 : index
    %c0_88 = arith.constant 0 : index
    %197 = vector.load %arg9[%c1_86, %c0_87, %c0_88] : memref<4x1x128xf32, #tpu.memory_space<vmem>>, vector<1x1x128xf32>
    %198 = vector.shape_cast %197 : vector<1x1x128xf32> to vector<1x128xf32>
    %199 = arith.mulf %183, %192 : vector<1x1xf32>
    %c1_89 = arith.constant 1 : index
    %c0_90 = arith.constant 0 : index
    %c0_91 = arith.constant 0 : index
    %200 = vector.load %arg8[%c1_89, %c0_90, %c0_91] : memref<4x1x128xf32, #tpu.memory_space<vmem>>, vector<1x1x128xf32>
    %201 = vector.shape_cast %200 : vector<1x1x128xf32> to vector<1x128xf32>
    %202 = vector.broadcast %199 : vector<1x1xf32> to vector<1x128xf32>
    %203 = arith.mulf %202, %201 : vector<1x128xf32>
    %204 = arith.subf %198, %203 : vector<1x128xf32>
    %205 = vector.broadcast %192 : vector<1x1xf32> to vector<16x128xf32>
    %206 = arith.mulf %196, %205 : vector<16x128xf32>
    %207 = vector.broadcast %204 : vector<1x128xf32> to vector<16x128xf32>
    %208 = arith.addf %206, %207 : vector<16x128xf32>
    %209 = arith.addf %105, %208 : vector<16x128xf32>
    %210 = arith.truncf %209 : vector<16x128xf32> to vector<16x128xbf16>
    %c2 = arith.constant 2 : index
    %c0_92 = arith.constant 0 : index
    %c0_93 = arith.constant 0 : index
    %211 = vector.load %arg3[%c2, %c0_92, %c0_93] : memref<4x128x256xbf16, #tpu.memory_space<vmem>>, vector<1x128x256xbf16>
    %212 = vector.shape_cast %211 : vector<1x128x256xbf16> to vector<128x256xbf16>
    %cst_94 = arith.constant dense<0.000000e+00> : vector<16x256xf32>
    %213 = tpu.matmul %210, %212, %cst_94 {dimension_numbers = #tpu.dot_dimension_numbers<[1], [0], [0], [1], [0, 0, 1, 1], [], []>} : vector<16x128xbf16>, vector<128x256xbf16>, vector<16x256xf32> -> vector<16x256xf32>
    %cst_95 = arith.constant 0.000000e+00 : f32
    %214 = vector.broadcast %cst_95 : f32 to vector<16x256xf32>
    %215 = arith.cmpf oge, %213, %214 : vector<16x256xf32>
    %c0_96 = arith.constant 0 : index
    %c2_97 = arith.constant 2 : index
    %216 = memref.load %arg1[%c0_96, %c2_97] : memref<2x4xf32, #tpu.memory_space<smem>>
    %217 = vector.broadcast %216 : f32 to vector<16x256xf32>
    %218 = arith.mulf %217, %213 : vector<16x256xf32>
    %219 = arith.select %215, %213, %218 : vector<16x256xi1>, vector<16x256xf32>
    %cst_98 = arith.constant dense<0.000000e+00> : vector<256xf32>
    %220 = vector.multi_reduction <add>, %219, %cst_98 [0] : vector<16x256xf32> to vector<256xf32>
    %221 = vector.shape_cast %220 : vector<256xf32> to vector<1x256xf32>
    %222 = arith.mulf %219, %219 : vector<16x256xf32>
    %cst_99 = arith.constant dense<0.000000e+00> : vector<256xf32>
    %223 = vector.multi_reduction <add>, %222, %cst_99 [0] : vector<16x256xf32> to vector<256xf32>
    %224 = vector.shape_cast %223 : vector<256xf32> to vector<1x256xf32>
    %cst_100 = arith.constant dense<0.000000e+00> : vector<1xf32>
    %225 = vector.multi_reduction <add>, %221, %cst_100 [1] : vector<1x256xf32> to vector<1xf32>
    %226 = vector.shape_cast %225 : vector<1xf32> to vector<1x1xf32>
    %cst_101 = arith.constant dense<0.000000e+00> : vector<1xf32>
    %227 = vector.multi_reduction <add>, %224, %cst_101 [1] : vector<1x256xf32> to vector<1xf32>
    %228 = vector.shape_cast %227 : vector<1xf32> to vector<1x1xf32>
    %cst_102 = arith.constant 2.44140625E-4 : f32
    %229 = vector.broadcast %cst_102 : f32 to vector<1x1xf32>
    %230 = arith.mulf %226, %229 : vector<1x1xf32>
    %cst_103 = arith.constant 2.44140625E-4 : f32
    %231 = vector.broadcast %cst_103 : f32 to vector<1x1xf32>
    %232 = arith.mulf %228, %231 : vector<1x1xf32>
    %233 = arith.mulf %230, %230 : vector<1x1xf32>
    %234 = arith.subf %232, %233 : vector<1x1xf32>
    %cst_104 = arith.constant 0.000000e+00 : f32
    %235 = vector.broadcast %cst_104 : f32 to vector<1x1xf32>
    %236 = arith.maximumf %234, %235 : vector<1x1xf32>
    %cst_105 = arith.constant 9.99999993E-9 : f32
    %237 = vector.broadcast %cst_105 : f32 to vector<1x1xf32>
    %238 = arith.addf %236, %237 : vector<1x1xf32>
    %239 = math.rsqrt %238 : vector<1x1xf32>
    %c2_106 = arith.constant 2 : index
    %c0_107 = arith.constant 0 : index
    %c0_108 = arith.constant 0 : index
    %240 = vector.load %arg4[%c2_106, %c0_107, %c0_108] : memref<4x1x256xf32, #tpu.memory_space<vmem>>, vector<1x1x256xf32>
    %241 = vector.shape_cast %240 : vector<1x1x256xf32> to vector<1x256xf32>
    %242 = vector.broadcast %239 : vector<1x1xf32> to vector<1x256xf32>
    %243 = arith.mulf %241, %242 : vector<1x256xf32>
    %c2_109 = arith.constant 2 : index
    %c0_110 = arith.constant 0 : index
    %c0_111 = arith.constant 0 : index
    %244 = vector.load %arg5[%c2_109, %c0_110, %c0_111] : memref<4x1x256xf32, #tpu.memory_space<vmem>>, vector<1x1x256xf32>
    %245 = vector.shape_cast %244 : vector<1x1x256xf32> to vector<1x256xf32>
    %246 = vector.broadcast %230 : vector<1x1xf32> to vector<1x256xf32>
    %247 = arith.mulf %246, %243 : vector<1x256xf32>
    %248 = arith.subf %245, %247 : vector<1x256xf32>
    %249 = vector.broadcast %243 : vector<1x256xf32> to vector<16x256xf32>
    %250 = arith.mulf %219, %249 : vector<16x256xf32>
    %251 = vector.broadcast %248 : vector<1x256xf32> to vector<16x256xf32>
    %252 = arith.addf %250, %251 : vector<16x256xf32>
    %c2_112 = arith.constant 2 : index
    %c0_113 = arith.constant 0 : index
    %c0_114 = arith.constant 0 : index
    %253 = vector.load %arg6[%c2_112, %c0_113, %c0_114] : memref<4x3x256xf32, #tpu.memory_space<vmem>>, vector<1x3x256xf32>
    %254 = vector.shape_cast %253 : vector<1x3x256xf32> to vector<3x256xf32>
    %cst_115 = arith.constant 0.000000e+00 : f32
    %255 = vector.broadcast %cst_115 : f32 to vector<4x256xf32>
    %256 = tpu.concatenate %255, %252, %255 in 0 : vector<4x256xf32>, vector<16x256xf32>, vector<4x256xf32> -> vector<24x256xf32>
    %257 = vector.extract_strided_slice %256 {offsets = [0, 0], sizes = [16, 256], strides = [1, 1]} : vector<24x256xf32> to vector<16x256xf32>
    %258 = vector.extract_strided_slice %254 {offsets = [0, 0], sizes = [1, 256], strides = [1, 1]} : vector<3x256xf32> to vector<1x256xf32>
    %259 = vector.broadcast %258 : vector<1x256xf32> to vector<16x256xf32>
    %260 = arith.mulf %257, %259 : vector<16x256xf32>
    %261 = vector.extract_strided_slice %256 {offsets = [4, 0], sizes = [16, 256], strides = [1, 1]} : vector<24x256xf32> to vector<16x256xf32>
    %262 = vector.extract_strided_slice %254 {offsets = [1, 0], sizes = [1, 256], strides = [1, 1]} : vector<3x256xf32> to vector<1x256xf32>
    %263 = vector.broadcast %262 : vector<1x256xf32> to vector<16x256xf32>
    %264 = arith.mulf %261, %263 : vector<16x256xf32>
    %265 = arith.addf %260, %264 : vector<16x256xf32>
    %266 = vector.extract_strided_slice %256 {offsets = [8, 0], sizes = [16, 256], strides = [1, 1]} : vector<24x256xf32> to vector<16x256xf32>
    %267 = vector.extract_strided_slice %254 {offsets = [2, 0], sizes = [1, 256], strides = [1, 1]} : vector<3x256xf32> to vector<1x256xf32>
    %268 = vector.broadcast %267 : vector<1x256xf32> to vector<16x256xf32>
    %269 = arith.mulf %266, %268 : vector<16x256xf32>
    %270 = arith.addf %265, %269 : vector<16x256xf32>
    %cst_116 = arith.constant 0.000000e+00 : f32
    %271 = vector.broadcast %cst_116 : f32 to vector<16x256xf32>
    %272 = arith.cmpf oge, %270, %271 : vector<16x256xf32>
    %c1_117 = arith.constant 1 : index
    %c2_118 = arith.constant 2 : index
    %273 = memref.load %arg1[%c1_117, %c2_118] : memref<2x4xf32, #tpu.memory_space<smem>>
    %274 = vector.broadcast %273 : f32 to vector<16x256xf32>
    %275 = arith.mulf %274, %270 : vector<16x256xf32>
    %276 = arith.select %272, %270, %275 : vector<16x256xi1>, vector<16x256xf32>
    %cst_119 = arith.constant dense<0.000000e+00> : vector<256xf32>
    %277 = vector.multi_reduction <add>, %276, %cst_119 [0] : vector<16x256xf32> to vector<256xf32>
    %278 = vector.shape_cast %277 : vector<256xf32> to vector<1x256xf32>
    %279 = arith.mulf %276, %276 : vector<16x256xf32>
    %cst_120 = arith.constant dense<0.000000e+00> : vector<256xf32>
    %280 = vector.multi_reduction <add>, %279, %cst_120 [0] : vector<16x256xf32> to vector<256xf32>
    %281 = vector.shape_cast %280 : vector<256xf32> to vector<1x256xf32>
    %cst_121 = arith.constant dense<0.000000e+00> : vector<1xf32>
    %282 = vector.multi_reduction <add>, %278, %cst_121 [1] : vector<1x256xf32> to vector<1xf32>
    %283 = vector.shape_cast %282 : vector<1xf32> to vector<1x1xf32>
    %cst_122 = arith.constant dense<0.000000e+00> : vector<1xf32>
    %284 = vector.multi_reduction <add>, %281, %cst_122 [1] : vector<1x256xf32> to vector<1xf32>
    %285 = vector.shape_cast %284 : vector<1xf32> to vector<1x1xf32>
    %cst_123 = arith.constant 2.44140625E-4 : f32
    %286 = vector.broadcast %cst_123 : f32 to vector<1x1xf32>
    %287 = arith.mulf %283, %286 : vector<1x1xf32>
    %cst_124 = arith.constant 2.44140625E-4 : f32
    %288 = vector.broadcast %cst_124 : f32 to vector<1x1xf32>
    %289 = arith.mulf %285, %288 : vector<1x1xf32>
    %290 = arith.mulf %287, %287 : vector<1x1xf32>
    %291 = arith.subf %289, %290 : vector<1x1xf32>
    %cst_125 = arith.constant 0.000000e+00 : f32
    %292 = vector.broadcast %cst_125 : f32 to vector<1x1xf32>
    %293 = arith.maximumf %291, %292 : vector<1x1xf32>
    %cst_126 = arith.constant 9.99999993E-9 : f32
    %294 = vector.broadcast %cst_126 : f32 to vector<1x1xf32>
    %295 = arith.addf %293, %294 : vector<1x1xf32>
    %296 = math.rsqrt %295 : vector<1x1xf32>
    %297 = arith.truncf %276 : vector<16x256xf32> to vector<16x256xbf16>
    %c2_127 = arith.constant 2 : index
    %c0_128 = arith.constant 0 : index
    %c0_129 = arith.constant 0 : index
    %298 = vector.load %arg7[%c2_127, %c0_128, %c0_129] : memref<4x256x128xbf16, #tpu.memory_space<vmem>>, vector<1x256x128xbf16>
    %299 = vector.shape_cast %298 : vector<1x256x128xbf16> to vector<256x128xbf16>
    %cst_130 = arith.constant dense<0.000000e+00> : vector<16x128xf32>
    %300 = tpu.matmul %297, %299, %cst_130 {dimension_numbers = #tpu.dot_dimension_numbers<[1], [0], [0], [1], [0, 0, 1, 1], [], []>} : vector<16x256xbf16>, vector<256x128xbf16>, vector<16x128xf32> -> vector<16x128xf32>
    %c2_131 = arith.constant 2 : index
    %c0_132 = arith.constant 0 : index
    %c0_133 = arith.constant 0 : index
    %301 = vector.load %arg9[%c2_131, %c0_132, %c0_133] : memref<4x1x128xf32, #tpu.memory_space<vmem>>, vector<1x1x128xf32>
    %302 = vector.shape_cast %301 : vector<1x1x128xf32> to vector<1x128xf32>
    %303 = arith.mulf %287, %296 : vector<1x1xf32>
    %c2_134 = arith.constant 2 : index
    %c0_135 = arith.constant 0 : index
    %c0_136 = arith.constant 0 : index
    %304 = vector.load %arg8[%c2_134, %c0_135, %c0_136] : memref<4x1x128xf32, #tpu.memory_space<vmem>>, vector<1x1x128xf32>
    %305 = vector.shape_cast %304 : vector<1x1x128xf32> to vector<1x128xf32>
    %306 = vector.broadcast %303 : vector<1x1xf32> to vector<1x128xf32>
    %307 = arith.mulf %306, %305 : vector<1x128xf32>
    %308 = arith.subf %302, %307 : vector<1x128xf32>
    %309 = vector.broadcast %296 : vector<1x1xf32> to vector<16x128xf32>
    %310 = arith.mulf %300, %309 : vector<16x128xf32>
    %311 = vector.broadcast %308 : vector<1x128xf32> to vector<16x128xf32>
    %312 = arith.addf %310, %311 : vector<16x128xf32>
    %313 = arith.addf %209, %312 : vector<16x128xf32>
    %314 = arith.truncf %313 : vector<16x128xf32> to vector<16x128xbf16>
    %c3 = arith.constant 3 : index
    %c0_137 = arith.constant 0 : index
    %c0_138 = arith.constant 0 : index
    %315 = vector.load %arg3[%c3, %c0_137, %c0_138] : memref<4x128x256xbf16, #tpu.memory_space<vmem>>, vector<1x128x256xbf16>
    %316 = vector.shape_cast %315 : vector<1x128x256xbf16> to vector<128x256xbf16>
    %cst_139 = arith.constant dense<0.000000e+00> : vector<16x256xf32>
    %317 = tpu.matmul %314, %316, %cst_139 {dimension_numbers = #tpu.dot_dimension_numbers<[1], [0], [0], [1], [0, 0, 1, 1], [], []>} : vector<16x128xbf16>, vector<128x256xbf16>, vector<16x256xf32> -> vector<16x256xf32>
    %cst_140 = arith.constant 0.000000e+00 : f32
    %318 = vector.broadcast %cst_140 : f32 to vector<16x256xf32>
    %319 = arith.cmpf oge, %317, %318 : vector<16x256xf32>
    %c0_141 = arith.constant 0 : index
    %c3_142 = arith.constant 3 : index
    %320 = memref.load %arg1[%c0_141, %c3_142] : memref<2x4xf32, #tpu.memory_space<smem>>
    %321 = vector.broadcast %320 : f32 to vector<16x256xf32>
    %322 = arith.mulf %321, %317 : vector<16x256xf32>
    %323 = arith.select %319, %317, %322 : vector<16x256xi1>, vector<16x256xf32>
    %cst_143 = arith.constant dense<0.000000e+00> : vector<256xf32>
    %324 = vector.multi_reduction <add>, %323, %cst_143 [0] : vector<16x256xf32> to vector<256xf32>
    %325 = vector.shape_cast %324 : vector<256xf32> to vector<1x256xf32>
    %326 = arith.mulf %323, %323 : vector<16x256xf32>
    %cst_144 = arith.constant dense<0.000000e+00> : vector<256xf32>
    %327 = vector.multi_reduction <add>, %326, %cst_144 [0] : vector<16x256xf32> to vector<256xf32>
    %328 = vector.shape_cast %327 : vector<256xf32> to vector<1x256xf32>
    %cst_145 = arith.constant dense<0.000000e+00> : vector<1xf32>
    %329 = vector.multi_reduction <add>, %325, %cst_145 [1] : vector<1x256xf32> to vector<1xf32>
    %330 = vector.shape_cast %329 : vector<1xf32> to vector<1x1xf32>
    %cst_146 = arith.constant dense<0.000000e+00> : vector<1xf32>
    %331 = vector.multi_reduction <add>, %328, %cst_146 [1] : vector<1x256xf32> to vector<1xf32>
    %332 = vector.shape_cast %331 : vector<1xf32> to vector<1x1xf32>
    %cst_147 = arith.constant 2.44140625E-4 : f32
    %333 = vector.broadcast %cst_147 : f32 to vector<1x1xf32>
    %334 = arith.mulf %330, %333 : vector<1x1xf32>
    %cst_148 = arith.constant 2.44140625E-4 : f32
    %335 = vector.broadcast %cst_148 : f32 to vector<1x1xf32>
    %336 = arith.mulf %332, %335 : vector<1x1xf32>
    %337 = arith.mulf %334, %334 : vector<1x1xf32>
    %338 = arith.subf %336, %337 : vector<1x1xf32>
    %cst_149 = arith.constant 0.000000e+00 : f32
    %339 = vector.broadcast %cst_149 : f32 to vector<1x1xf32>
    %340 = arith.maximumf %338, %339 : vector<1x1xf32>
    %cst_150 = arith.constant 9.99999993E-9 : f32
    %341 = vector.broadcast %cst_150 : f32 to vector<1x1xf32>
    %342 = arith.addf %340, %341 : vector<1x1xf32>
    %343 = math.rsqrt %342 : vector<1x1xf32>
    %c3_151 = arith.constant 3 : index
    %c0_152 = arith.constant 0 : index
    %c0_153 = arith.constant 0 : index
    %344 = vector.load %arg4[%c3_151, %c0_152, %c0_153] : memref<4x1x256xf32, #tpu.memory_space<vmem>>, vector<1x1x256xf32>
    %345 = vector.shape_cast %344 : vector<1x1x256xf32> to vector<1x256xf32>
    %346 = vector.broadcast %343 : vector<1x1xf32> to vector<1x256xf32>
    %347 = arith.mulf %345, %346 : vector<1x256xf32>
    %c3_154 = arith.constant 3 : index
    %c0_155 = arith.constant 0 : index
    %c0_156 = arith.constant 0 : index
    %348 = vector.load %arg5[%c3_154, %c0_155, %c0_156] : memref<4x1x256xf32, #tpu.memory_space<vmem>>, vector<1x1x256xf32>
    %349 = vector.shape_cast %348 : vector<1x1x256xf32> to vector<1x256xf32>
    %350 = vector.broadcast %334 : vector<1x1xf32> to vector<1x256xf32>
    %351 = arith.mulf %350, %347 : vector<1x256xf32>
    %352 = arith.subf %349, %351 : vector<1x256xf32>
    %353 = vector.broadcast %347 : vector<1x256xf32> to vector<16x256xf32>
    %354 = arith.mulf %323, %353 : vector<16x256xf32>
    %355 = vector.broadcast %352 : vector<1x256xf32> to vector<16x256xf32>
    %356 = arith.addf %354, %355 : vector<16x256xf32>
    %c3_157 = arith.constant 3 : index
    %c0_158 = arith.constant 0 : index
    %c0_159 = arith.constant 0 : index
    %357 = vector.load %arg6[%c3_157, %c0_158, %c0_159] : memref<4x3x256xf32, #tpu.memory_space<vmem>>, vector<1x3x256xf32>
    %358 = vector.shape_cast %357 : vector<1x3x256xf32> to vector<3x256xf32>
    %cst_160 = arith.constant 0.000000e+00 : f32
    %359 = vector.broadcast %cst_160 : f32 to vector<8x256xf32>
    %360 = tpu.concatenate %359, %356, %359 in 0 : vector<8x256xf32>, vector<16x256xf32>, vector<8x256xf32> -> vector<32x256xf32>
    %361 = vector.extract_strided_slice %360 {offsets = [0, 0], sizes = [16, 256], strides = [1, 1]} : vector<32x256xf32> to vector<16x256xf32>
    %362 = vector.extract_strided_slice %358 {offsets = [0, 0], sizes = [1, 256], strides = [1, 1]} : vector<3x256xf32> to vector<1x256xf32>
    %363 = vector.broadcast %362 : vector<1x256xf32> to vector<16x256xf32>
    %364 = arith.mulf %361, %363 : vector<16x256xf32>
    %365 = vector.extract_strided_slice %360 {offsets = [8, 0], sizes = [16, 256], strides = [1, 1]} : vector<32x256xf32> to vector<16x256xf32>
    %366 = vector.extract_strided_slice %358 {offsets = [1, 0], sizes = [1, 256], strides = [1, 1]} : vector<3x256xf32> to vector<1x256xf32>
    %367 = vector.broadcast %366 : vector<1x256xf32> to vector<16x256xf32>
    %368 = arith.mulf %365, %367 : vector<16x256xf32>
    %369 = arith.addf %364, %368 : vector<16x256xf32>
    %370 = vector.extract_strided_slice %360 {offsets = [16, 0], sizes = [16, 256], strides = [1, 1]} : vector<32x256xf32> to vector<16x256xf32>
    %371 = vector.extract_strided_slice %358 {offsets = [2, 0], sizes = [1, 256], strides = [1, 1]} : vector<3x256xf32> to vector<1x256xf32>
    %372 = vector.broadcast %371 : vector<1x256xf32> to vector<16x256xf32>
    %373 = arith.mulf %370, %372 : vector<16x256xf32>
    %374 = arith.addf %369, %373 : vector<16x256xf32>
    %cst_161 = arith.constant 0.000000e+00 : f32
    %375 = vector.broadcast %cst_161 : f32 to vector<16x256xf32>
    %376 = arith.cmpf oge, %374, %375 : vector<16x256xf32>
    %c1_162 = arith.constant 1 : index
    %c3_163 = arith.constant 3 : index
    %377 = memref.load %arg1[%c1_162, %c3_163] : memref<2x4xf32, #tpu.memory_space<smem>>
    %378 = vector.broadcast %377 : f32 to vector<16x256xf32>
    %379 = arith.mulf %378, %374 : vector<16x256xf32>
    %380 = arith.select %376, %374, %379 : vector<16x256xi1>, vector<16x256xf32>
    %cst_164 = arith.constant dense<0.000000e+00> : vector<256xf32>
    %381 = vector.multi_reduction <add>, %380, %cst_164 [0] : vector<16x256xf32> to vector<256xf32>
    %382 = vector.shape_cast %381 : vector<256xf32> to vector<1x256xf32>
    %383 = arith.mulf %380, %380 : vector<16x256xf32>
    %cst_165 = arith.constant dense<0.000000e+00> : vector<256xf32>
    %384 = vector.multi_reduction <add>, %383, %cst_165 [0] : vector<16x256xf32> to vector<256xf32>
    %385 = vector.shape_cast %384 : vector<256xf32> to vector<1x256xf32>
    %cst_166 = arith.constant dense<0.000000e+00> : vector<1xf32>
    %386 = vector.multi_reduction <add>, %382, %cst_166 [1] : vector<1x256xf32> to vector<1xf32>
    %387 = vector.shape_cast %386 : vector<1xf32> to vector<1x1xf32>
    %cst_167 = arith.constant dense<0.000000e+00> : vector<1xf32>
    %388 = vector.multi_reduction <add>, %385, %cst_167 [1] : vector<1x256xf32> to vector<1xf32>
    %389 = vector.shape_cast %388 : vector<1xf32> to vector<1x1xf32>
    %cst_168 = arith.constant 2.44140625E-4 : f32
    %390 = vector.broadcast %cst_168 : f32 to vector<1x1xf32>
    %391 = arith.mulf %387, %390 : vector<1x1xf32>
    %cst_169 = arith.constant 2.44140625E-4 : f32
    %392 = vector.broadcast %cst_169 : f32 to vector<1x1xf32>
    %393 = arith.mulf %389, %392 : vector<1x1xf32>
    %394 = arith.mulf %391, %391 : vector<1x1xf32>
    %395 = arith.subf %393, %394 : vector<1x1xf32>
    %cst_170 = arith.constant 0.000000e+00 : f32
    %396 = vector.broadcast %cst_170 : f32 to vector<1x1xf32>
    %397 = arith.maximumf %395, %396 : vector<1x1xf32>
    %cst_171 = arith.constant 9.99999993E-9 : f32
    %398 = vector.broadcast %cst_171 : f32 to vector<1x1xf32>
    %399 = arith.addf %397, %398 : vector<1x1xf32>
    %400 = math.rsqrt %399 : vector<1x1xf32>
    %401 = arith.truncf %380 : vector<16x256xf32> to vector<16x256xbf16>
    %c3_172 = arith.constant 3 : index
    %c0_173 = arith.constant 0 : index
    %c0_174 = arith.constant 0 : index
    %402 = vector.load %arg7[%c3_172, %c0_173, %c0_174] : memref<4x256x128xbf16, #tpu.memory_space<vmem>>, vector<1x256x128xbf16>
    %403 = vector.shape_cast %402 : vector<1x256x128xbf16> to vector<256x128xbf16>
    %cst_175 = arith.constant dense<0.000000e+00> : vector<16x128xf32>
    %404 = tpu.matmul %401, %403, %cst_175 {dimension_numbers = #tpu.dot_dimension_numbers<[1], [0], [0], [1], [0, 0, 1, 1], [], []>} : vector<16x256xbf16>, vector<256x128xbf16>, vector<16x128xf32> -> vector<16x128xf32>
    %c3_176 = arith.constant 3 : index
    %c0_177 = arith.constant 0 : index
    %c0_178 = arith.constant 0 : index
    %405 = vector.load %arg9[%c3_176, %c0_177, %c0_178] : memref<4x1x128xf32, #tpu.memory_space<vmem>>, vector<1x1x128xf32>
    %406 = vector.shape_cast %405 : vector<1x1x128xf32> to vector<1x128xf32>
    %407 = arith.mulf %391, %400 : vector<1x1xf32>
    %c3_179 = arith.constant 3 : index
    %c0_180 = arith.constant 0 : index
    %c0_181 = arith.constant 0 : index
    %408 = vector.load %arg8[%c3_179, %c0_180, %c0_181] : memref<4x1x128xf32, #tpu.memory_space<vmem>>, vector<1x1x128xf32>
    %409 = vector.shape_cast %408 : vector<1x1x128xf32> to vector<1x128xf32>
    %410 = vector.broadcast %407 : vector<1x1xf32> to vector<1x128xf32>
    %411 = arith.mulf %410, %409 : vector<1x128xf32>
    %412 = arith.subf %406, %411 : vector<1x128xf32>
    %413 = vector.broadcast %400 : vector<1x1xf32> to vector<16x128xf32>
    %414 = arith.mulf %404, %413 : vector<16x128xf32>
    %415 = vector.broadcast %412 : vector<1x128xf32> to vector<16x128xf32>
    %416 = arith.addf %414, %415 : vector<16x128xf32>
    %417 = arith.addf %313, %416 : vector<16x128xf32>
    %c0_182 = arith.constant 0 : index
    %c0_183 = arith.constant 0 : index
    %418 = vector.load %arg11[%c0_182, %c0_183] : memref<16x128xf32, #tpu.memory_space<vmem>>, vector<16x128xf32>
    tpu.vector_store %arg11[%c0_182, %c0_183], %417 {strides = array<i32>} : memref<16x128xf32, #tpu.memory_space<vmem>>, vector<16x128xf32>,
    %c0_184 = arith.constant 0 : index
    %c0_185 = arith.constant 0 : index
    %419 = tpu.strided_load %arg11[%c0_184, %c0_185] {strides = array<i32: 4, 1>} : memref<16x128xf32, #tpu.memory_space<vmem>>, vector<4x128xf32>
    %c1_186 = arith.constant 1 : index
    %c0_187 = arith.constant 0 : index
    %420 = tpu.strided_load %arg11[%c1_186, %c0_187] {strides = array<i32: 4, 1>} : memref<16x128xf32, #tpu.memory_space<vmem>>, vector<4x128xf32>
    %421 = arith.addf %419, %420 : vector<4x128xf32>
    %c2_188 = arith.constant 2 : index
    %c0_189 = arith.constant 0 : index
    %422 = tpu.strided_load %arg11[%c2_188, %c0_189] {strides = array<i32: 4, 1>} : memref<16x128xf32, #tpu.memory_space<vmem>>, vector<4x128xf32>
    %423 = arith.addf %421, %422 : vector<4x128xf32>
    %c3_190 = arith.constant 3 : index
    %c0_191 = arith.constant 0 : index
    %424 = tpu.strided_load %arg11[%c3_190, %c0_191] {strides = array<i32: 4, 1>} : memref<16x128xf32, #tpu.memory_space<vmem>>, vector<4x128xf32>
    %425 = arith.addf %423, %424 : vector<4x128xf32>
    %cst_192 = arith.constant 2.500000e-01 : f32
    %426 = vector.broadcast %cst_192 : f32 to vector<4x128xf32>
    %427 = arith.mulf %425, %426 : vector<4x128xf32>
    %c0_193 = arith.constant 0 : index
    %c0_194 = arith.constant 0 : index
    %c0_195 = arith.constant 0 : index
    %428 = vector.load %arg10[%c0_193, %c0_194, %c0_195] : memref<1x4x128xf32, #tpu.memory_space<vmem>>, vector<1x4x128xf32>
    %429 = vector.shape_cast %428 : vector<1x4x128xf32> to vector<4x128xf32>
    %430 = vector.shape_cast %427 : vector<4x128xf32> to vector<1x4x128xf32>
    tpu.vector_store %arg10[%c0_193, %c0_194, %c0_195], %430 {strides = array<i32>} : memref<1x4x128xf32, #tpu.memory_space<vmem>>, vector<1x4x128xf32>,
    return
  }
  func.func @transform_0(%arg0: i32) -> (i32, i32) {
    %c0_i32 = arith.constant 0 : i32
    %c0_i32_0 = arith.constant 0 : i32
    %c0_i32_1 = arith.constant 0 : i32
    return %c0_i32, %c0_i32_0 : i32, i32
  }
  func.func @transform_1(%arg0: i32) -> (i32, i32, i32) {
    %c0_i32 = arith.constant 0 : i32
    %c0_i32_0 = arith.constant 0 : i32
    %c0_i32_1 = arith.constant 0 : i32
    return %arg0, %c0_i32, %c0_i32_0 : i32, i32, i32
  }
  func.func @transform_2(%arg0: i32) -> (i32, i32, i32) {
    %c0_i32 = arith.constant 0 : i32
    %c0_i32_0 = arith.constant 0 : i32
    %c0_i32_1 = arith.constant 0 : i32
    %c0_i32_2 = arith.constant 0 : i32
    return %c0_i32, %c0_i32_0, %c0_i32_1 : i32, i32, i32
  }
  func.func @transform_3(%arg0: i32) -> (i32, i32, i32) {
    %c0_i32 = arith.constant 0 : i32
    %c0_i32_0 = arith.constant 0 : i32
    %c0_i32_1 = arith.constant 0 : i32
    %c0_i32_2 = arith.constant 0 : i32
    return %c0_i32, %c0_i32_0, %c0_i32_1 : i32, i32, i32
  }
  func.func @transform_4(%arg0: i32) -> (i32, i32, i32) {
    %c0_i32 = arith.constant 0 : i32
    %c0_i32_0 = arith.constant 0 : i32
    %c0_i32_1 = arith.constant 0 : i32
    %c0_i32_2 = arith.constant 0 : i32
    return %c0_i32, %c0_i32_0, %c0_i32_1 : i32, i32, i32
  }
  func.func @transform_5(%arg0: i32) -> (i32, i32, i32) {
    %c0_i32 = arith.constant 0 : i32
    %c0_i32_0 = arith.constant 0 : i32
    %c0_i32_1 = arith.constant 0 : i32
    %c0_i32_2 = arith.constant 0 : i32
    return %c0_i32, %c0_i32_0, %c0_i32_1 : i32, i32, i32
  }
  func.func @transform_6(%arg0: i32) -> (i32, i32, i32) {
    %c0_i32 = arith.constant 0 : i32
    %c0_i32_0 = arith.constant 0 : i32
    %c0_i32_1 = arith.constant 0 : i32
    %c0_i32_2 = arith.constant 0 : i32
    return %c0_i32, %c0_i32_0, %c0_i32_1 : i32, i32, i32
  }
  func.func @transform_7(%arg0: i32) -> (i32, i32, i32) {
    %c0_i32 = arith.constant 0 : i32
    %c0_i32_0 = arith.constant 0 : i32
    %c0_i32_1 = arith.constant 0 : i32
    %c0_i32_2 = arith.constant 0 : i32
    return %c0_i32, %c0_i32_0, %c0_i32_1 : i32, i32, i32
  }
  func.func @transform_8(%arg0: i32) -> (i32, i32, i32) {
    %c0_i32 = arith.constant 0 : i32
    %c0_i32_0 = arith.constant 0 : i32
    %c0_i32_1 = arith.constant 0 : i32
    %c0_i32_2 = arith.constant 0 : i32
    return %c0_i32, %c0_i32_0, %c0_i32_1 : i32, i32, i32
  }
  func.func @transform_9(%arg0: i32) -> (i32, i32, i32) {
    %c0_i32 = arith.constant 0 : i32
    %c0_i32_0 = arith.constant 0 : i32
    %c0_i32_1 = arith.constant 0 : i32
    return %arg0, %c0_i32, %c0_i32_0 : i32, i32, i32
  }
}

</mosaic_0001>

<llo_original>
// kernel: audio_net.3
$region0: #{audio_net.3}
  #allocation0 [shape = 'u32[]', space=smem, size = 0x4, offset = 0x4, fixed_abs, tag = 'smem constant byte address 0x4 - core index']
  #allocation1 [shape = 'u32[144,128]{1,0:T(1,128)}', space=vmem, size = 0x12000, scoped, tag = 'internal scratch']
  #allocation2 [shape = 'f32[16,128]{1,0:T(8,128)}', space=vmem, size = 0x2000, scoped, tag = 'scratch operand']
  %s0 = inlined_call_operand.vmem [shape: f32[2,4], index: 0, kind: input, shape index: {}]
  %s1 = inlined_call_operand.vmem [shape: f32[2,16,128], index: 1, kind: input, shape index: {}]
  %s2 = inlined_call_operand.vmem [shape: bf16[4,128,256], index: 2, kind: input, shape index: {}]
  %s3 = inlined_call_operand.vmem [shape: f32[4,1,256], index: 3, kind: input, shape index: {}]
  %s4 = inlined_call_operand.vmem [shape: f32[4,1,256], index: 4, kind: input, shape index: {}]
  %s5 = inlined_call_operand.vmem [shape: f32[4,3,256], index: 5, kind: input, shape index: {}]
  %s6 = inlined_call_operand.vmem [shape: bf16[4,256,128], index: 6, kind: input, shape index: {}]
  %s7 = inlined_call_operand.vmem [shape: f32[4,1,128], index: 7, kind: input, shape index: {}]
  %s8 = inlined_call_operand.vmem [shape: f32[4,1,128], index: 8, kind: input, shape index: {}]
  %s9 = inlined_call_operand.hbm [shape: f32[2,4,128], index: 9, kind: output, shape index: {}]
  %s10 = sld [smem:[#allocation0]]
  $region73: #{audio_net.3} parent=0
    _
  %s12 = ssub.s32 1, %s10
  %s13 = scalar_select 0, %s12, %s10
  $region1: #{audio_net.3} parent=0
    #allocation3 [shape = 'u8[1024]{0}', space=smem, size = 0x400, scoped, tag = 'input window, operand 0, single buffered']
    #allocation4 [shape = 's32[2]{0}', space=sflag, size = 0x8, scoped, tag = 'scoped memory for audio_net.3']
    #allocation5 [shape = 's32[2]{0}', space=sflag, size = 0x8, scoped, tag = 'scoped memory for audio_net.3']
    #allocation6 [shape = 'u8[4096]{0}', space=vmem, size = 0x1000, scoped, tag = 'output window, operand 0']
    %14 = vsyncpa [#allocation5], 0
    %15 = vsyncpa [#allocation4], 0
    %s16 = scalar_lea.sflag [#allocation4], 1
    %17 = vsyncpa %s16, 0
    loop: start=0, step=1, limit=4
    $region2: #{audio_net.3} parent=1 // loop_pre_header
      _
    $region3: #{audio_net.3} parent=1 // loop_header
      %s19 = sphi 0, %s23
      %p20 = scmp.ge.s32.totalorder %s19, 4
      %s27 = sphi 0, %s27
      %s29 = sphi 0, %s27
      %s30 = sphi 0, %s29
      %s44 = sphi 0, %s30
      %s50 = sphi 0, %s52
      %s53 = sphi 0, %s50
      %s54 = sphi 0, %s53
      %s70 = sphi 0, %s54
      %s74 = sphi 0, %s74
      %s76 = sphi 0, %s74
      %s77 = sphi 0, %s76
      %s91 = sphi 0, %s77
      %s95 = sphi 0, %s95
      %s97 = sphi 0, %s95
      %s98 = sphi 0, %s97
      %s112 = sphi 0, %s98
      %s116 = sphi 0, %s116
      %s118 = sphi 0, %s116
      %s119 = sphi 0, %s118
      %s133 = sphi 0, %s119
      %s137 = sphi 0, %s137
      %s139 = sphi 0, %s137
      %s140 = sphi 0, %s139
      %s154 = sphi 0, %s140
      %s158 = sphi 0, %s158
      %s160 = sphi 0, %s158
      %s161 = sphi 0, %s160
      %s175 = sphi 0, %s161
      %s179 = sphi 0, %s179
      %s181 = sphi 0, %s179
      %s182 = sphi 0, %s181
      %s196 = sphi 0, %s182
      %s200 = sphi 0, %s200
      %s202 = sphi 0, %s200
      %s203 = sphi 0, %s202
      %s217 = sphi 0, %s203
      %s223 = sphi 0, %s225
      %s226 = sphi 0, %s223
      %s227 = sphi 0, %s226
      %s243 = sphi 0, %s227
    $region4: #{audio_net.3} parent=1 // loop_header_branch
      %22 = sbr.rel (%p20) target = $region8
    $region5: #{audio_net.3} parent=1 // loop_body
      %s24 = ssub.s32 %s19, 1
      %s25 = ssub.s32 %s19, 2
      %s26 = sadd.s32 %s19, 1
      %s28 = sadd.s32 %s27, 1
      %p31 = scmp.eq.s32.totalorder %s19, 1
      %p32 = scmp.ne.s32.totalorder %s27, %s29
      %p33 = scmp.eq.s32.totalorder %s19, 0
      %p34 = por %p32, %p33
      %p35 = scmp.ne.s32.totalorder %s27, %s29
      %p36 = scmp.eq.s32.totalorder %s24, 1
      %p37 = por %p35, %p36
      %p38 = scmp.ne.s32.totalorder %s29, %s30
      %p39 = scmp.eq.s32.totalorder %s24, 0
      %p40 = por %p38, %p39
      %p41 = scmp.ne.s32.totalorder %s29, %s30
      %p42 = scmp.eq.s32.totalorder %s25, 1
      %p43 = por %p41, %p42
      %p45 = scmp.ne.s32.totalorder %s30, %s44
      %p46 = scmp.eq.s32.totalorder %s25, 0
      %p47 = por %p45, %p46
      %s48 = ssub.s32 %s19, %s26
      %p49 = scmp.eq.s32.totalorder %s48, 0
      %s51 = sadd.s32 %s50, 1
      %s52 = scalar_select %p49, %s50, %s51
      %p55 = pneg %p49
      %p56 = scmp.eq.s32.totalorder %s19, 1
      %p57 = por %p55, %p56
      %p58 = scmp.ne.s32.totalorder %s50, %s53
      %p59 = scmp.eq.s32.totalorder %s19, 0
      %p60 = por %p58, %p59
      %p61 = scmp.ne.s32.totalorder %s50, %s53
      %p62 = scmp.eq.s32.totalorder %s24, 1
      %p63 = por %p61, %p62
      %p64 = scmp.ne.s32.totalorder %s53, %s54
      %p65 = scmp.eq.s32.totalorder %s24, 0
      %p66 = por %p64, %p65
      %p67 = scmp.ne.s32.totalorder %s53, %s54
      %p68 = scmp.eq.s32.totalorder %s25, 1
      %p69 = por %p67, %p68
      %p71 = scmp.ne.s32.totalorder %s54, %s70
      %p72 = scmp.eq.s32.totalorder %s25, 0
      %p73 = por %p71, %p72
      %s75 = sadd.s32 %s74, 1
      %p78 = scmp.eq.s32.totalorder %s19, 1
      %p79 = scmp.ne.s32.totalorder %s74, %s76
      %p80 = scmp.eq.s32.totalorder %s19, 0
      %p81 = por %p79, %p80
      %p82 = scmp.ne.s32.totalorder %s74, %s76
      %p83 = scmp.eq.s32.totalorder %s24, 1
      %p84 = por %p82, %p83
      %p85 = scmp.ne.s32.totalorder %s76, %s77
      %p86 = scmp.eq.s32.totalorder %s24, 0
      %p87 = por %p85, %p86
      %p88 = scmp.ne.s32.totalorder %s76, %s77
      %p89 = scmp.eq.s32.totalorder %s25, 1
      %p90 = por %p88, %p89
      %p92 = scmp.ne.s32.totalorder %s77, %s91
      %p93 = scmp.eq.s32.totalorder %s25, 0
      %p94 = por %p92, %p93
      %s96 = sadd.s32 %s95, 1
      %p99 = scmp.eq.s32.totalorder %s19, 1
      %p100 = scmp.ne.s32.totalorder %s95, %s97
      %p101 = scmp.eq.s32.totalorder %s19, 0
      %p102 = por %p100, %p101
      %p103 = scmp.ne.s32.totalorder %s95, %s97
      %p104 = scmp.eq.s32.totalorder %s24, 1
      %p105 = por %p103, %p104
      %p106 = scmp.ne.s32.totalorder %s97, %s98
      %p107 = scmp.eq.s32.totalorder %s24, 0
      %p108 = por %p106, %p107
      %p109 = scmp.ne.s32.totalorder %s97, %s98
      %p110 = scmp.eq.s32.totalorder %s25, 1
      %p111 = por %p109, %p110
      %p113 = scmp.ne.s32.totalorder %s98, %s112
      %p114 = scmp.eq.s32.totalorder %s25, 0
      %p115 = por %p113, %p114
      %s117 = sadd.s32 %s116, 1
      %p120 = scmp.eq.s32.totalorder %s19, 1
      %p121 = scmp.ne.s32.totalorder %s116, %s118
      %p122 = scmp.eq.s32.totalorder %s19, 0
      %p123 = por %p121, %p122
      %p124 = scmp.ne.s32.totalorder %s116, %s118
      %p125 = scmp.eq.s32.totalorder %s24, 1
      %p126 = por %p124, %p125
      %p127 = scmp.ne.s32.totalorder %s118, %s119
      %p128 = scmp.eq.s32.totalorder %s24, 0
      %p129 = por %p127, %p128
      %p130 = scmp.ne.s32.totalorder %s118, %s119
      %p131 = scmp.eq.s32.totalorder %s25, 1
      %p132 = por %p130, %p131
      %p134 = scmp.ne.s32.totalorder %s119, %s133
      %p135 = scmp.eq.s32.totalorder %s25, 0
      %p136 = por %p134, %p135
      %s138 = sadd.s32 %s137, 1
      %p141 = scmp.eq.s32.totalorder %s19, 1
      %p142 = scmp.ne.s32.totalorder %s137, %s139
      %p143 = scmp.eq.s32.totalorder %s19, 0
      %p144 = por %p142, %p143
      %p145 = scmp.ne.s32.totalorder %s137, %s139
      %p146 = scmp.eq.s32.totalorder %s24, 1
      %p147 = por %p145, %p146
      %p148 = scmp.ne.s32.totalorder %s139, %s140
      %p149 = scmp.eq.s32.totalorder %s24, 0
      %p150 = por %p148, %p149
      %p151 = scmp.ne.s32.totalorder %s139, %s140
      %p152 = scmp.eq.s32.totalorder %s25, 1
      %p153 = por %p151, %p152
      %p155 = scmp.ne.s32.totalorder %s140, %s154
      %p156 = scmp.eq.s32.totalorder %s25, 0
      %p157 = por %p155, %p156
      %s159 = sadd.s32 %s158, 1
      %p162 = scmp.eq.s32.totalorder %s19, 1
      %p163 = scmp.ne.s32.totalorder %s158, %s160
      %p164 = scmp.eq.s32.totalorder %s19, 0
      %p165 = por %p163, %p164
      %p166 = scmp.ne.s32.totalorder %s158, %s160
      %p167 = scmp.eq.s32.totalorder %s24, 1
      %p168 = por %p166, %p167
      %p169 = scmp.ne.s32.totalorder %s160, %s161
      %p170 = scmp.eq.s32.totalorder %s24, 0
      %p171 = por %p169, %p170
      %p172 = scmp.ne.s32.totalorder %s160, %s161
      %p173 = scmp.eq.s32.totalorder %s25, 1
      %p174 = por %p172, %p173
      %p176 = scmp.ne.s32.totalorder %s161, %s175
      %p177 = scmp.eq.s32.totalorder %s25, 0
      %p178 = por %p176, %p177
      %s180 = sadd.s32 %s179, 1
      %p183 = scmp.eq.s32.totalorder %s19, 1
      %p184 = scmp.ne.s32.totalorder %s179, %s181
      %p185 = scmp.eq.s32.totalorder %s19, 0
      %p186 = por %p184, %p185
      %p187 = scmp.ne.s32.totalorder %s179, %s181
      %p188 = scmp.eq.s32.totalorder %s24, 1
      %p189 = por %p187, %p188
      %p190 = scmp.ne.s32.totalorder %s181, %s182
      %p191 = scmp.eq.s32.totalorder %s24, 0
      %p192 = por %p190, %p191
      %p193 = scmp.ne.s32.totalorder %s181, %s182
      %p194 = scmp.eq.s32.totalorder %s25, 1
      %p195 = por %p193, %p194
      %p197 = scmp.ne.s32.totalorder %s182, %s196
      %p198 = scmp.eq.s32.totalorder %s25, 0
      %p199 = por %p197, %p198
      %s201 = sadd.s32 %s200, 1
      %p204 = scmp.eq.s32.totalorder %s19, 1
      %p205 = scmp.ne.s32.totalorder %s200, %s202
      %p206 = scmp.eq.s32.totalorder %s19, 0
      %p207 = por %p205, %p206
      %p208 = scmp.ne.s32.totalorder %s200, %s202
      %p209 = scmp.eq.s32.totalorder %s24, 1
      %p210 = por %p208, %p209
      %p211 = scmp.ne.s32.totalorder %s202, %s203
      %p212 = scmp.eq.s32.totalorder %s24, 0
      %p213 = por %p211, %p212
      %p214 = scmp.ne.s32.totalorder %s202, %s203
      %p215 = scmp.eq.s32.totalorder %s25, 1
      %p216 = por %p214, %p215
      %p218 = scmp.ne.s32.totalorder %s203, %s217
      %p219 = scmp.eq.s32.totalorder %s25, 0
      %p220 = por %p218, %p219
      %s221 = ssub.s32 %s19, %s26
      %p222 = scmp.eq.s32.totalorder %s221, 0
      %s224 = sadd.s32 %s223, 1
      %s225 = scalar_select %p222, %s223, %s224
      %p228 = pneg %p222
      %p229 = scmp.eq.s32.totalorder %s19, 1
      %p230 = por %p228, %p229
      %p231 = scmp.ne.s32.totalorder %s223, %s226
      %p232 = scmp.eq.s32.totalorder %s19, 0
      %p233 = por %p231, %p232
      %p234 = scmp.ne.s32.totalorder %s223, %s226
      %p235 = scmp.eq.s32.totalorder %s24, 1
      %p236 = por %p234, %p235
      %p237 = scmp.ne.s32.totalorder %s226, %s227
      %p238 = scmp.eq.s32.totalorder %s24, 0
      %p239 = por %p237, %p238
      %p240 = scmp.ne.s32.totalorder %s226, %s227
      %p241 = scmp.eq.s32.totalorder %s25, 1
      %p242 = por %p240, %p241
      %p244 = scmp.ne.s32.totalorder %s227, %s243
      %p245 = scmp.eq.s32.totalorder %s25, 0
      %p246 = por %p244, %p245
      %p247 = scmp.le.s32.totalorder 1, %s19
      %p248 = scmp.lt.s32.totalorder %s19, 3
      %p249 = pnand %p247, %p248
      %p250 = pneg %p249
      // Predicated region
      $region9: #{audio_net.3} parent=5 // pred_check
        _
      $region10: #{audio_net.3} parent=5 // pred_check_branch
        %252 = sbr.rel (%p249) target = $region12
      $region11: #{audio_net.3} parent=5 // pred_region
        %s253 = ssub.s32 %s19, 1
        // Predicated region
        $region13: #{audio_net.3} parent=11 // pred_check
          %p254 = pneg %p40
        $region14: #{audio_net.3} parent=11 // pred_check_branch
          %256 = sbr.rel (%p254) target = $region16
        $region15: #{audio_net.3} parent=11 // pred_region
          %s258 = ssub.s32 32, 32
          %259 = vsyncadd [#allocation5], %s258
          %s261 = sshll.u32 %s0, 4
          %s262 = int_to_ptr.vmem [resolvable:$true] %s261
          %264 = dma.vmem_to_smem %s262, 32, [#allocation3], [#allocation5]
        $region16: #{audio_net.3} parent=11 // pred_fallthru
          _
        // Predicated region
        $region17: #{audio_net.3} parent=11 // pred_check
          %p265 = pneg %p87
        $region18: #{audio_net.3} parent=11 // pred_check_branch
          %267 = sbr.rel (%p265) target = $region20
        $region19: #{audio_net.3} parent=11 // pred_region
          _
        $region20: #{audio_net.3} parent=11 // pred_fallthru
          _
        // Predicated region
        $region21: #{audio_net.3} parent=11 // pred_check
          %p268 = pneg %p108
        $region22: #{audio_net.3} parent=11 // pred_check_branch
          %270 = sbr.rel (%p268) target = $region24
        $region23: #{audio_net.3} parent=11 // pred_region
          _
        $region24: #{audio_net.3} parent=11 // pred_fallthru
          _
        // Predicated region
        $region25: #{audio_net.3} parent=11 // pred_check
          %p271 = pneg %p129
        $region26: #{audio_net.3} parent=11 // pred_check_branch
          %273 = sbr.rel (%p271) target = $region28
        $region27: #{audio_net.3} parent=11 // pred_region
          _
        $region28: #{audio_net.3} parent=11 // pred_fallthru
          _
        // Predicated region
        $region29: #{audio_net.3} parent=11 // pred_check
          %p274 = pneg %p150
        $region30: #{audio_net.3} parent=11 // pred_check_branch
          %276 = sbr.rel (%p274) target = $region32
        $region31: #{audio_net.3} parent=11 // pred_region
          _
        $region32: #{audio_net.3} parent=11 // pred_fallthru
          _
        // Predicated region
        $region33: #{audio_net.3} parent=11 // pred_check
          %p277 = pneg %p171
        $region34: #{audio_net.3} parent=11 // pred_check_branch
          %279 = sbr.rel (%p277) target = $region36
        $region35: #{audio_net.3} parent=11 // pred_region
          _
        $region36: #{audio_net.3} parent=11 // pred_fallthru
          _
        // Predicated region
        $region37: #{audio_net.3} parent=11 // pred_check
          %p280 = pneg %p192
        $region38: #{audio_net.3} parent=11 // pred_check_branch
          %282 = sbr.rel (%p280) target = $region40
        $region39: #{audio_net.3} parent=11 // pred_region
          _
        $region40: #{audio_net.3} parent=11 // pred_fallthru
          _
        // Predicated region
        $region41: #{audio_net.3} parent=11 // pred_check
          %p283 = pneg %p213
        $region42: #{audio_net.3} parent=11 // pred_check_branch
          %285 = sbr.rel (%p283) target = $region44
        $region43: #{audio_net.3} parent=11 // pred_region
          _
        $region44: #{audio_net.3} parent=11 // pred_fallthru
          _
      $region12: #{audio_net.3} parent=5 // pred_fallthru
        _
      %p286 = scmp.lt.s32.totalorder %s19, 2
      // Predicated region
      $region45: #{audio_net.3} parent=5 // pred_check
        %p287 = pneg %p286
      $region46: #{audio_net.3} parent=5 // pred_check_branch
        %289 = sbr.rel (%p287) target = $region48
      $region47: #{audio_net.3} parent=5 // pred_region
        // Predicated region
        $region49: #{audio_net.3} parent=47 // pred_check
          %p290 = pneg %p60
        $region50: #{audio_net.3} parent=47 // pred_check_branch
          %292 = sbr.rel (%p290) target = $region52
        $region51: #{audio_net.3} parent=47 // pred_region
          %p293 = scmp.lt.s32.totalorder %s19, 1
          %s294 = scalar_select %p293, %s19, 1
          %s295 = smul.addr %s294, 2
          %s296 = smul.addr %s295, 8
          %s297 = scalar_lea.vmem %s1, %s296
        $region52: #{audio_net.3} parent=47 // pred_fallthru
          _
      $region48: #{audio_net.3} parent=5 // pred_fallthru
        _
      %p298 = scmp.le.s32.totalorder 1, %s19
      %p299 = scmp.lt.s32.totalorder %s19, 3
      %p300 = pnand %p298, %p299
      %p301 = pneg %p300
      // Predicated region
      $region53: #{audio_net.3} parent=5 // pred_check
        _
      $region54: #{audio_net.3} parent=5 // pred_check_branch
        %303 = sbr.rel (%p300) target = $region56
      $region55: #{audio_net.3} parent=5 // pred_region
        %s304 = ssub.s32 %s19, 1
        // Predicated region
        $region57: #{audio_net.3} parent=55 // pred_check
          %p305 = pneg %p40
        $region58: #{audio_net.3} parent=55 // pred_check_branch
          %307 = sbr.rel (%p305) target = $region60
        $region59: #{audio_net.3} parent=55 // pred_region
          %308 = dma.done [#allocation5], 32
        $region60: #{audio_net.3} parent=55 // pred_fallthru
          _
        %309 = sfence
        %p310 = pneg %p40
        %p311 = pneg %p37
        %p312 = scmp.lt.s32.totalorder %s24, 1
        %s313 = scalar_select %p312, %s24, 1
        %s314 = smul.addr %s313, 2
        %s315 = smul.addr %s314, 8
        %s316 = scalar_lea.vmem %s1, %s315
        %p317 = pneg %p66
        %p318 = pneg %p63
        %p319 = pneg %p87
        %p320 = pneg %p84
        %p321 = pneg %p108
        %p322 = pneg %p105
        %p323 = pneg %p129
        %p324 = pneg %p126
        %p325 = pneg %p150
        %p326 = pneg %p147
        %p327 = pneg %p171
        %p328 = pneg %p168
        %p329 = pneg %p192
        %p330 = pneg %p189
        %p331 = pneg %p213
        %p332 = pneg %p210
        %p333 = pneg %p239
        %p334 = pneg %p236
        %s335 = sand.u32 %s226, 1
        %s336 = scalar_lea.sflag [#allocation4], %s335
        %s337 = sand.u32 %s226, 1
        %s338 = smul.addr %s337, 4
        %s339 = scalar_lea.vmem [#allocation6], %s338
        %p340 = scmp.lt.s32.totalorder %s24, 1
        %s341 = scalar_select %p340, %s24, 1
        %s342 = smul.addr %s341, 2
        %s343 = smul.addr %s342, 8
        %s344 = scalar_lea.vmem %s1, %s343
        %v346 = vld [vmem:[%s344] sm:$0xff]
        %v347 = vld [vmem:[%s344 + $0x8] sm:$0xff]
        %v348 = vpack.c.bf16 %v347, %v346
        %v349 = vld [vmem:[%s2] sm:$0xff]
        %v350 = vld [vmem:[%s2 + $0x8] sm:$0xff]
        %v351 = vld [vmem:[%s2 + $0x10] sm:$0xff]
        %v352 = vld [vmem:[%s2 + $0x18] sm:$0xff]
        %v353 = vld [vmem:[%s2 + $0x20] sm:$0xff]
        %v354 = vld [vmem:[%s2 + $0x28] sm:$0xff]
        %v355 = vld [vmem:[%s2 + $0x30] sm:$0xff]
        %v356 = vld [vmem:[%s2 + $0x38] sm:$0xff]
        %v357 = vld [vmem:[%s2 + $0x40] sm:$0xff]
        %v358 = vld [vmem:[%s2 + $0x48] sm:$0xff]
        %v359 = vld [vmem:[%s2 + $0x50] sm:$0xff]
        %v360 = vld [vmem:[%s2 + $0x58] sm:$0xff]
        %v361 = vld [vmem:[%s2 + $0x60] sm:$0xff]
        %v362 = vld [vmem:[%s2 + $0x68] sm:$0xff]
        %v363 = vld [vmem:[%s2 + $0x70] sm:$0xff]
        %v364 = vld [vmem:[%s2 + $0x78] sm:$0xff]
        %v381 = vunpack.c.l.b16 %v349
        %v382 = vunpack.c.h.b16 %v349
        %v383 = vunpack.c.l.b16 %v350
        %v384 = vunpack.c.h.b16 %v350
        %v385 = vunpack.c.l.b16 %v351
        %v386 = vunpack.c.h.b16 %v351
        %v387 = vunpack.c.l.b16 %v352
        %v388 = vunpack.c.h.b16 %v352
        %v389 = vunpack.c.l.b16 %v353
        %v390 = vunpack.c.h.b16 %v353
        %v391 = vunpack.c.l.b16 %v354
        %v392 = vunpack.c.h.b16 %v354
        %v393 = vunpack.c.l.b16 %v355
        %v394 = vunpack.c.h.b16 %v355
        %v395 = vunpack.c.l.b16 %v356
        %v396 = vunpack.c.h.b16 %v356
        %v397 = vunpack.c.l.b16 %v357
        %v398 = vunpack.c.h.b16 %v357
        %v399 = vunpack.c.l.b16 %v358
        %v400 = vunpack.c.h.b16 %v358
        %v401 = vunpack.c.l.b16 %v359
        %v402 = vunpack.c.h.b16 %v359
        %v403 = vunpack.c.l.b16 %v360
        %v404 = vunpack.c.h.b16 %v360
        %v405 = vunpack.c.l.b16 %v361
        %v406 = vunpack.c.h.b16 %v361
        %v407 = vunpack.c.l.b16 %v362
        %v408 = vunpack.c.h.b16 %v362
        %v409 = vunpack.c.l.b16 %v363
        %v410 = vunpack.c.h.b16 %v363
        %v411 = vunpack.c.l.b16 %v364
        %v412 = vunpack.c.h.b16 %v364
        %v413 = vpack.c.b16 %v383, %v381
        %v414 = vpack.c.b16 %v384, %v382
        %v415 = vpack.c.b16 %v387, %v385
        %v416 = vpack.c.b16 %v388, %v386
        %v417 = vpack.c.b16 %v391, %v389
        %v418 = vpack.c.b16 %v392, %v390
        %v419 = vpack.c.b16 %v395, %v393
        %v420 = vpack.c.b16 %v396, %v394
        %v421 = vpack.c.b16 %v399, %v397
        %v422 = vpack.c.b16 %v400, %v398
        %v423 = vpack.c.b16 %v403, %v401
        %v424 = vpack.c.b16 %v404, %v402
        %v425 = vpack.c.b16 %v407, %v405
        %v426 = vpack.c.b16 %v408, %v406
        %v427 = vpack.c.b16 %v411, %v409
        %v428 = vpack.c.b16 %v412, %v410
        %445 = vmatprep.subr.bf16.mxu0 %v428
        %446 = vmatpush1.bf16.msra.mxu0 %v427
        %447 = vmatprep.subr.bf16.mxu0 %v426
        %448 = vmatpush1.bf16.msra.mxu0 %v425
        %449 = vmatprep.subr.bf16.mxu0 %v424
        %450 = vmatpush1.bf16.msra.mxu0 %v423
        %451 = vmatprep.subr.bf16.mxu0 %v422
        %452 = vmatpush1.bf16.msra.mxu0 %v421
        %453 = vmatprep.subr.bf16.mxu0 %v420
        %454 = vmatpush1.bf16.msra.mxu0 %v419
        %455 = vmatprep.subr.bf16.mxu0 %v418
        %456 = vmatpush1.bf16.msra.mxu0 %v417
        %457 = vmatprep.subr.bf16.mxu0 %v416
        %458 = vmatpush1.bf16.msra.mxu0 %v415
        %459 = vmatprep.subr.bf16.mxu0 %v414
        %460 = vmatpush1.bf16.msra.mxu0 %v413
        %461 = vmatprep.subr.bf16.mxu0 0
        %462 = vmatpush2.bf16.msra.mxu0 0
        %463 = vmatprep.subr.bf16.mxu0 0
        %464 = vmatpush2.bf16.msra.mxu0 0
        %465 = vmatprep.subr.bf16.mxu0 0
        %466 = vmatpush2.bf16.msra.mxu0 0
        %467 = vmatprep.subr.bf16.mxu0 0
        %468 = vmatpush2.bf16.msra.mxu0 0
        %469 = vmatprep.subr.bf16.mxu0 0
        %470 = vmatpush2.bf16.msra.mxu0 0
        %471 = vmatprep.subr.bf16.mxu0 0
        %472 = vmatpush2.bf16.msra.mxu0 0
        %473 = vmatprep.subr.bf16.mxu0 0
        %474 = vmatpush2.bf16.msra.mxu0 0
        %475 = vmatprep.subr.bf16.mxu0 0
        %476 = vmatpush2.bf16.msra.mxu0 0
        %477 = vmatprep.mubr.bf16.mxu0 0
        %478 = vmatmul.mubr.bf16.gmra.mxu0 %v348
        %v479 = vpop.f32.mrf.mxu0
        %v480 = vadd.f32 0.0, %v479
        %v481 = vpop.f32.mrf.mxu0
        %v482 = vadd.f32 0.0, %v481
        %v483 = vpop.f32.mrf.mxu0
        %v484 = vadd.f32 0.0, %v483
        %v485 = vpop.f32.mrf.mxu0
        %v486 = vadd.f32 0.0, %v485
        %487 = vdwg.mxu0
        %vm488 = vcmp.ge.f32.partialorder %v480, 0.0
        %vm489 = vcmp.ge.f32.partialorder %v482, 0.0
        %vm490 = vcmp.ge.f32.partialorder %v484, 0.0
        %vm491 = vcmp.ge.f32.partialorder %v486, 0.0
        %s492 = sld [smem:[#allocation3]]
        %v493 = vstv %s492
        %v494 = vmul.f32 %v493, %v480
        %v495 = vmul.f32 %v493, %v482
        %v496 = vmul.f32 %v493, %v484
        %v497 = vmul.f32 %v493, %v486
        %v498 = vsel %vm488, %v480, %v494
        %v499 = vsel %vm489, %v482, %v495
        %v500 = vsel %vm490, %v484, %v496
        %v501 = vsel %vm491, %v486, %v497
        %v502 = vadd.f32 %v498, %v500
        %v503 = vrot.slane %v502, 4
        %v504 = vadd.f32 %v502, %v503
        %v505 = vrot.slane %v504, 2
        %v506 = vadd.f32 %v504, %v505
        %v507 = vrot.slane %v506, 1
        %v508 = vadd.f32 %v506, %v507
        %v509 = vadd.f32 %v499, %v501
        %v510 = vrot.slane %v509, 4
        %v511 = vadd.f32 %v509, %v510
        %v512 = vrot.slane %v511, 2
        %v513 = vadd.f32 %v511, %v512
        %v514 = vrot.slane %v513, 1
        %v515 = vadd.f32 %v513, %v514
        %v516 = vmul.f32 %v498, %v498
        %v517 = vmul.f32 %v499, %v499
        %v518 = vmul.f32 %v500, %v500
        %v519 = vmul.f32 %v501, %v501
        %v520 = vadd.f32 %v516, %v518
        %v521 = vrot.slane %v520, 4
        %v522 = vadd.f32 %v520, %v521
        %v523 = vrot.slane %v522, 2
        %v524 = vadd.f32 %v522, %v523
        %v525 = vrot.slane %v524, 1
        %v526 = vadd.f32 %v524, %v525
        %v527 = vadd.f32 %v517, %v519
        %v528 = vrot.slane %v527, 4
        %v529 = vadd.f32 %v527, %v528
        %v530 = vrot.slane %v529, 2
        %v531 = vadd.f32 %v529, %v530
        %v532 = vrot.slane %v531, 1
        %v533 = vadd.f32 %v531, %v532
        %v534 = vadd.f32 %v508, %v515
        %535 = vadd.xlane.f32.xlu0 %v534
        %v536 = vpop.xlane.xlu0 %535
        %v537 = vadd.f32 %v526, %v533
        %538 = vadd.xlane.f32.xlu0 %v537
        %v539 = vpop.xlane.xlu0 %538
        %v540 = vmul.f32 %v536, 0.00024414063
        %v541 = vmul.f32 %v539, 0.00024414063
        %v542 = vmul.f32 %v540, %v540
        %v543 = vsub.f32 %v541, %v542
        %v544 = vmax.f32 %v543, 0.0
        %v545 = vadd.f32 %v544, 1e-08
        %v546 = vrsqrt.pop %v545
        %v547 = vld [vmem:[%s3] sm:$0x3]
        %v548 = vmul.f32 %v547, %v546
        %v549 = vld [vmem:[%s4] sm:$0x3]
        %v550 = vmul.f32 %v540, %v548
        %v551 = vsub.f32 %v549, %v550
        %v553 = vlaneseq
        %v554 = vshrl.u32 %v553, 7
        %v555 = vsub.s32 0, %v554
        %v556 = vrot.slane %v548, %v555
        %v557 = vlaneseq
        %v558 = vshrl.u32 %v557, 7
        %v559 = vsub.s32 1, %v558
        %v560 = vrot.slane %v548, %v559
        %v563 = vmul.f32 %v498, %v556
        %v564 = vmul.f32 %v499, %v560
        %v565 = vmul.f32 %v500, %v556
        %v566 = vmul.f32 %v501, %v560
        %v568 = vlaneseq
        %v569 = vshrl.u32 %v568, 7
        %v570 = vsub.s32 0, %v569
        %v571 = vrot.slane %v551, %v570
        %v572 = vlaneseq
        %v573 = vshrl.u32 %v572, 7
        %v574 = vsub.s32 1, %v573
        %v575 = vrot.slane %v551, %v574
        %v578 = vadd.f32 %v563, %v571
        %v579 = vadd.f32 %v564, %v575
        %v580 = vadd.f32 %v565, %v571
        %v581 = vadd.f32 %v566, %v575
        %v582 = vld [vmem:[%s5] sm:$0x77]
        %vm587 = vcmask 1040384
        %v588 = vrot.slane %v578, 7
        %v589 = vrot.slane %v579, 7
        %v590 = vrot.slane %v580, 7
        %v591 = vsel %vm587, %v588, %v590
        %v592 = vrot.slane %v581, 7
        %v593 = vsel %vm587, %v589, %v592
        %v600 = vsel %vm587, 0.0, %v588
        %v601 = vsel %vm587, 0.0, %v589
        %v602 = vsel %vm587, %v590, 0.0
        %v603 = vsel %vm587, %v592, 0.0
        %v605 = vlaneseq
        %v606 = vshrl.u32 %v605, 7
        %v607 = vsub.s32 0, %v606
        %v608 = vrot.slane %v582, %v607
        %v609 = vlaneseq
        %v610 = vshrl.u32 %v609, 7
        %v611 = vsub.s32 4, %v610
        %v612 = vrot.slane %v582, %v611
        %v615 = vlaneseq
        %v616 = vshrl.u32 %v615, 7
        %v617 = vsub.s32 0, %v616
        %v618 = vrot.slane %v608, %v617
        %v619 = vlaneseq
        %v620 = vshrl.u32 %v619, 7
        %v621 = vsub.s32 0, %v620
        %v622 = vrot.slane %v612, %v621
        %v623 = vmul.f32 %v600, %v618
        %v624 = vmul.f32 %v601, %v622
        %v625 = vmul.f32 %v591, %v618
        %v626 = vmul.f32 %v593, %v622
        %v627 = vlaneseq
        %v628 = vshrl.u32 %v627, 7
        %v629 = vsub.s32 1, %v628
        %v630 = vrot.slane %v582, %v629
        %v631 = vlaneseq
        %v632 = vshrl.u32 %v631, 7
        %v633 = vsub.s32 5, %v632
        %v634 = vrot.slane %v582, %v633
        %v637 = vlaneseq
        %v638 = vshrl.u32 %v637, 7
        %v639 = vsub.s32 1, %v638
        %v640 = vrot.slane %v630, %v639
        %v641 = vlaneseq
        %v642 = vshrl.u32 %v641, 7
        %v643 = vsub.s32 1, %v642
        %v644 = vrot.slane %v634, %v643
        %v645 = vmul.f32 %v600, %v640
        %v646 = vmul.f32 %v601, %v644
        %v647 = vmul.f32 %v591, %v640
        %v648 = vmul.f32 %v593, %v644
        %v649 = vmul.f32 %v602, %v640
        %v650 = vmul.f32 %v603, %v644
        %vm657 = vcmask 1046528
        %v658 = vrot.slane %v645, 1
        %v659 = vrot.slane %v647, 1
        %v660 = vsel %vm657, %v658, %v659
        %v661 = vrot.slane %v646, 1
        %v662 = vrot.slane %v648, 1
        %v663 = vsel %vm657, %v661, %v662
        %v664 = vrot.slane %v649, 1
        %v665 = vsel %vm657, %v659, %v664
        %v666 = vrot.slane %v650, 1
        %v667 = vsel %vm657, %v662, %v666
        %v672 = vadd.f32 %v623, %v660
        %v673 = vadd.f32 %v624, %v663
        %v674 = vadd.f32 %v625, %v665
        %v675 = vadd.f32 %v626, %v667
        %v676 = vlaneseq
        %v677 = vshrl.u32 %v676, 7
        %v678 = vsub.s32 2, %v677
        %v679 = vrot.slane %v582, %v678
        %v680 = vlaneseq
        %v681 = vshrl.u32 %v680, 7
        %v682 = vsub.s32 6, %v681
        %v683 = vrot.slane %v582, %v682
        %v686 = vlaneseq
        %v687 = vshrl.u32 %v686, 7
        %v688 = vsub.s32 2, %v687
        %v689 = vrot.slane %v679, %v688
        %v690 = vlaneseq
        %v691 = vshrl.u32 %v690, 7
        %v692 = vsub.s32 2, %v691
        %v693 = vrot.slane %v683, %v692
        %v694 = vmul.f32 %v600, %v689
        %v695 = vmul.f32 %v601, %v693
        %v696 = vmul.f32 %v591, %v689
        %v697 = vmul.f32 %v593, %v693
        %v698 = vmul.f32 %v602, %v689
        %v699 = vmul.f32 %v603, %v693
        %vm706 = vcmask 1045504
        %v707 = vrot.slane %v694, 2
        %v708 = vrot.slane %v696, 2
        %v709 = vsel %vm706, %v707, %v708
        %v710 = vrot.slane %v695, 2
        %v711 = vrot.slane %v697, 2
        %v712 = vsel %vm706, %v710, %v711
        %v713 = vrot.slane %v698, 2
        %v714 = vsel %vm706, %v708, %v713
        %v715 = vrot.slane %v699, 2
        %v716 = vsel %vm706, %v711, %v715
        %v721 = vadd.f32 %v672, %v709
        %v722 = vadd.f32 %v673, %v712
        %v723 = vadd.f32 %v674, %v714
        %v724 = vadd.f32 %v675, %v716
        %vm725 = vcmp.ge.f32.partialorder %v721, 0.0
        %vm726 = vcmp.ge.f32.partialorder %v722, 0.0
        %vm727 = vcmp.ge.f32.partialorder %v723, 0.0
        %vm728 = vcmp.ge.f32.partialorder %v724, 0.0
        %s729 = sld [smem:[#allocation3 + $0x80]]
        %v730 = vstv %s729
        %v731 = vmul.f32 %v730, %v721
        %v732 = vmul.f32 %v730, %v722
        %v733 = vmul.f32 %v730, %v723
        %v734 = vmul.f32 %v730, %v724
        %v735 = vsel %vm725, %v721, %v731
        %v736 = vsel %vm726, %v722, %v732
        %v737 = vsel %vm727, %v723, %v733
        %v738 = vsel %vm728, %v724, %v734
        %v739 = vadd.f32 %v735, %v737
        %v740 = vrot.slane %v739, 4
        %v741 = vadd.f32 %v739, %v740
        %v742 = vrot.slane %v741, 2
        %v743 = vadd.f32 %v741, %v742
        %v744 = vrot.slane %v743, 1
        %v745 = vadd.f32 %v743, %v744
        %v746 = vadd.f32 %v736, %v738
        %v747 = vrot.slane %v746, 4
        %v748 = vadd.f32 %v746, %v747
        %v749 = vrot.slane %v748, 2
        %v750 = vadd.f32 %v748, %v749
        %v751 = vrot.slane %v750, 1
        %v752 = vadd.f32 %v750, %v751
        %v753 = vmul.f32 %v735, %v735
        %v754 = vmul.f32 %v736, %v736
        %v755 = vmul.f32 %v737, %v737
        %v756 = vmul.f32 %v738, %v738
        %v757 = vadd.f32 %v753, %v755
        %v758 = vrot.slane %v757, 4
        %v759 = vadd.f32 %v757, %v758
        %v760 = vrot.slane %v759, 2
        %v761 = vadd.f32 %v759, %v760
        %v762 = vrot.slane %v761, 1
        %v763 = vadd.f32 %v761, %v762
        %v764 = vadd.f32 %v754, %v756
        %v765 = vrot.slane %v764, 4
        %v766 = vadd.f32 %v764, %v765
        %v767 = vrot.slane %v766, 2
        %v768 = vadd.f32 %v766, %v767
        %v769 = vrot.slane %v768, 1
        %v770 = vadd.f32 %v768, %v769
        %v771 = vadd.f32 %v745, %v752
        %772 = vadd.xlane.f32.xlu0 %v771
        %v773 = vpop.xlane.xlu0 %772
        %v774 = vadd.f32 %v763, %v770
        %775 = vadd.xlane.f32.xlu0 %v774
        %v776 = vpop.xlane.xlu0 %775
        %v777 = vmul.f32 %v773, 0.00024414063
        %v778 = vmul.f32 %v776, 0.00024414063
        %v779 = vmul.f32 %v777, %v777
        %v780 = vsub.f32 %v778, %v779
        %v781 = vmax.f32 %v780, 0.0
        %v782 = vadd.f32 %v781, 1e-08
        %v783 = vrsqrt.pop %v782
        %v784 = vpack.c.bf16 %v737, %v735
        %v785 = vpack.c.bf16 %v738, %v736
        %v786 = vld [vmem:[%s6] sm:$0xf]
        %v787 = vld [vmem:[%s6 + $0x4] sm:$0xf]
        %v788 = vld [vmem:[%s6 + $0x8] sm:$0xf]
        %v789 = vld [vmem:[%s6 + $0xc] sm:$0xf]
        %v790 = vld [vmem:[%s6 + $0x10] sm:$0xf]
        %v791 = vld [vmem:[%s6 + $0x14] sm:$0xf]
        %v792 = vld [vmem:[%s6 + $0x18] sm:$0xf]
        %v793 = vld [vmem:[%s6 + $0x1c] sm:$0xf]
        %v794 = vld [vmem:[%s6 + $0x20] sm:$0xf]
        %v795 = vld [vmem:[%s6 + $0x24] sm:$0xf]
        %v796 = vld [vmem:[%s6 + $0x28] sm:$0xf]
        %v797 = vld [vmem:[%s6 + $0x2c] sm:$0xf]
        %v798 = vld [vmem:[%s6 + $0x30] sm:$0xf]
        %v799 = vld [vmem:[%s6 + $0x34] sm:$0xf]
        %v800 = vld [vmem:[%s6 + $0x38] sm:$0xf]
        %v801 = vld [vmem:[%s6 + $0x3c] sm:$0xf]
        %v802 = vld [vmem:[%s6 + $0x40] sm:$0xf]
        %v803 = vld [vmem:[%s6 + $0x44] sm:$0xf]
        %v804 = vld [vmem:[%s6 + $0x48] sm:$0xf]
        %v805 = vld [vmem:[%s6 + $0x4c] sm:$0xf]
        %v806 = vld [vmem:[%s6 + $0x50] sm:$0xf]
        %v807 = vld [vmem:[%s6 + $0x54] sm:$0xf]
        %v808 = vld [vmem:[%s6 + $0x58] sm:$0xf]
        %v809 = vld [vmem:[%s6 + $0x5c] sm:$0xf]
        %v810 = vld [vmem:[%s6 + $0x60] sm:$0xf]
        %v811 = vld [vmem:[%s6 + $0x64] sm:$0xf]
        %v812 = vld [vmem:[%s6 + $0x68] sm:$0xf]
        %v813 = vld [vmem:[%s6 + $0x6c] sm:$0xf]
        %v814 = vld [vmem:[%s6 + $0x70] sm:$0xf]
        %v815 = vld [vmem:[%s6 + $0x74] sm:$0xf]
        %v816 = vld [vmem:[%s6 + $0x78] sm:$0xf]
        %v817 = vld [vmem:[%s6 + $0x7c] sm:$0xf]
        %v850 = vunpack.c.l.b16 %v786
        %v851 = vunpack.c.l.b16 %v787
        %v852 = vunpack.c.l.b16 %v788
        %v853 = vunpack.c.l.b16 %v789
        %v854 = vunpack.c.l.b16 %v790
        %v855 = vunpack.c.l.b16 %v791
        %v856 = vunpack.c.l.b16 %v792
        %v857 = vunpack.c.l.b16 %v793
        %v858 = vunpack.c.l.b16 %v794
        %v859 = vunpack.c.l.b16 %v795
        %v860 = vunpack.c.l.b16 %v796
        %v861 = vunpack.c.l.b16 %v797
        %v862 = vunpack.c.l.b16 %v798
        %v863 = vunpack.c.l.b16 %v799
        %v864 = vunpack.c.l.b16 %v800
        %v865 = vunpack.c.l.b16 %v801
        %v866 = vunpack.c.l.b16 %v802
        %v867 = vunpack.c.l.b16 %v803
        %v868 = vunpack.c.l.b16 %v804
        %v869 = vunpack.c.l.b16 %v805
        %v870 = vunpack.c.l.b16 %v806
        %v871 = vunpack.c.l.b16 %v807
        %v872 = vunpack.c.l.b16 %v808
        %v873 = vunpack.c.l.b16 %v809
        %v874 = vunpack.c.l.b16 %v810
        %v875 = vunpack.c.l.b16 %v811
        %v876 = vunpack.c.l.b16 %v812
        %v877 = vunpack.c.l.b16 %v813
        %v878 = vunpack.c.l.b16 %v814
        %v879 = vunpack.c.l.b16 %v815
        %v880 = vunpack.c.l.b16 %v816
        %v881 = vunpack.c.l.b16 %v817
        %v882 = vpack.c.b16 %v851, %v850
        %v883 = vpack.c.b16 %v853, %v852
        %v884 = vpack.c.b16 %v855, %v854
        %v885 = vpack.c.b16 %v857, %v856
        %v886 = vpack.c.b16 %v859, %v858
        %v887 = vpack.c.b16 %v861, %v860
        %v888 = vpack.c.b16 %v863, %v862
        %v889 = vpack.c.b16 %v865, %v864
        %v890 = vpack.c.b16 %v867, %v866
        %v891 = vpack.c.b16 %v869, %v868
        %v892 = vpack.c.b16 %v871, %v870
        %v893 = vpack.c.b16 %v873, %v872
        %v894 = vpack.c.b16 %v875, %v874
        %v895 = vpack.c.b16 %v877, %v876
        %v896 = vpack.c.b16 %v879, %v878
        %v897 = vpack.c.b16 %v881, %v880
        %914 = vmatprep.subr.bf16.mxu0 0
        %915 = vmatpush1.bf16.msra.mxu0 %v889
        %916 = vmatprep.subr.bf16.mxu0 0
        %917 = vmatpush1.bf16.msra.mxu0 %v888
        %918 = vmatprep.subr.bf16.mxu0 0
        %919 = vmatpush1.bf16.msra.mxu0 %v887
        %920 = vmatprep.subr.bf16.mxu0 0
        %921 = vmatpush1.bf16.msra.mxu0 %v886
        %922 = vmatprep.subr.bf16.mxu0 0
        %923 = vmatpush1.bf16.msra.mxu0 %v885
        %924 = vmatprep.subr.bf16.mxu0 0
        %925 = vmatpush1.bf16.msra.mxu0 %v884
        %926 = vmatprep.subr.bf16.mxu0 0
        %927 = vmatpush1.bf16.msra.mxu0 %v883
        %928 = vmatprep.subr.bf16.mxu0 0
        %929 = vmatpush1.bf16.msra.mxu0 %v882
        %930 = vmatprep.subr.bf16.mxu0 0
        %931 = vmatpush2.bf16.msra.mxu0 %v897
        %932 = vmatprep.subr.bf16.mxu0 0
        %933 = vmatpush2.bf16.msra.mxu0 %v896
        %934 = vmatprep.subr.bf16.mxu0 0
        %935 = vmatpush2.bf16.msra.mxu0 %v895
        %936 = vmatprep.subr.bf16.mxu0 0
        %937 = vmatpush2.bf16.msra.mxu0 %v894
        %938 = vmatprep.subr.bf16.mxu0 0
        %939 = vmatpush2.bf16.msra.mxu0 %v893
        %940 = vmatprep.subr.bf16.mxu0 0
        %941 = vmatpush2.bf16.msra.mxu0 %v892
        %942 = vmatprep.subr.bf16.mxu0 0
        %943 = vmatpush2.bf16.msra.mxu0 %v891
        %944 = vmatprep.subr.bf16.mxu0 0
        %945 = vmatpush2.bf16.msra.mxu0 %v890
        %946 = vmatprep.mubr.bf16.mxu0 %v785
        %947 = vmatmul.mubr.bf16.gmra.mxu0 %v784
        %v948 = vpop.f32.mrf.mxu0
        %v949 = vadd.f32 0.0, %v948
        %v950 = vpop.f32.mrf.mxu0
        %v951 = vpop.f32.mrf.mxu0
        %v952 = vadd.f32 0.0, %v951
        %v953 = vpop.f32.mrf.mxu0
        %954 = vdwg.mxu0
        %v955 = vld [vmem:[%s8] sm:$0x1]
        %v956 = vmul.f32 %v777, %v783
        %v957 = vld [vmem:[%s7] sm:$0x1]
        %v958 = vmul.f32 %v956, %v957
        %v959 = vsub.f32 %v955, %v958
        %v960 = vmul.f32 %v949, %v783
        %v961 = vmul.f32 %v952, %v783
        %v963 = vlaneseq
        %v964 = vshrl.u32 %v963, 7
        %v965 = vsub.s32 0, %v964
        %v966 = vrot.slane %v959, %v965
        %v968 = vadd.f32 %v960, %v966
        %v969 = vadd.f32 %v961, %v966
        %v970 = vadd.f32 %v346, %v968
        %v971 = vadd.f32 %v347, %v969
        %v972 = vpack.c.bf16 %v971, %v970
        %s973 = scalar_lea.vmem %s2, 128
        %v974 = vld [vmem:[%s973] sm:$0xff]
        %v975 = vld [vmem:[%s973 + $0x8] sm:$0xff]
        %v976 = vld [vmem:[%s973 + $0x10] sm:$0xff]
        %v977 = vld [vmem:[%s973 + $0x18] sm:$0xff]
        %v978 = vld [vmem:[%s973 + $0x20] sm:$0xff]
        %v979 = vld [vmem:[%s973 + $0x28] sm:$0xff]
        %v980 = vld [vmem:[%s973 + $0x30] sm:$0xff]
        %v981 = vld [vmem:[%s973 + $0x38] sm:$0xff]
        %v982 = vld [vmem:[%s973 + $0x40] sm:$0xff]
        %v983 = vld [vmem:[%s973 + $0x48] sm:$0xff]
        %v984 = vld [vmem:[%s973 + $0x50] sm:$0xff]
        %v985 = vld [vmem:[%s973 + $0x58] sm:$0xff]
        %v986 = vld [vmem:[%s973 + $0x60] sm:$0xff]
        %v987 = vld [vmem:[%s973 + $0x68] sm:$0xff]
        %v988 = vld [vmem:[%s973 + $0x70] sm:$0xff]
        %v989 = vld [vmem:[%s973 + $0x78] sm:$0xff]
        %v1006 = vunpack.c.l.b16 %v974
        %v1007 = vunpack.c.h.b16 %v974
        %v1008 = vunpack.c.l.b16 %v975
        %v1009 = vunpack.c.h.b16 %v975
        %v1010 = vunpack.c.l.b16 %v976
        %v1011 = vunpack.c.h.b16 %v976
        %v1012 = vunpack.c.l.b16 %v977
        %v1013 = vunpack.c.h.b16 %v977
        %v1014 = vunpack.c.l.b16 %v978
        %v1015 = vunpack.c.h.b16 %v978
        %v1016 = vunpack.c.l.b16 %v979
        %v1017 = vunpack.c.h.b16 %v979
        %v1018 = vunpack.c.l.b16 %v980
        %v1019 = vunpack.c.h.b16 %v980
        %v1020 = vunpack.c.l.b16 %v981
        %v1021 = vunpack.c.h.b16 %v981
        %v1022 = vunpack.c.l.b16 %v982
        %v1023 = vunpack.c.h.b16 %v982
        %v1024 = vunpack.c.l.b16 %v983
        %v1025 = vunpack.c.h.b16 %v983
        %v1026 = vunpack.c.l.b16 %v984
        %v1027 = vunpack.c.h.b16 %v984
        %v1028 = vunpack.c.l.b16 %v985
        %v1029 = vunpack.c.h.b16 %v985
        %v1030 = vunpack.c.l.b16 %v986
        %v1031 = vunpack.c.h.b16 %v986
        %v1032 = vunpack.c.l.b16 %v987
        %v1033 = vunpack.c.h.b16 %v987
        %v1034 = vunpack.c.l.b16 %v988
        %v1035 = vunpack.c.h.b16 %v988
        %v1036 = vunpack.c.l.b16 %v989
        %v1037 = vunpack.c.h.b16 %v989
        %v1038 = vpack.c.b16 %v1008, %v1006
        %v1039 = vpack.c.b16 %v1009, %v1007
        %v1040 = vpack.c.b16 %v1012, %v1010
        %v1041 = vpack.c.b16 %v1013, %v1011
        %v1042 = vpack.c.b16 %v1016, %v1014
        %v1043 = vpack.c.b16 %v1017, %v1015
        %v1044 = vpack.c.b16 %v1020, %v1018
        %v1045 = vpack.c.b16 %v1021, %v1019
        %v1046 = vpack.c.b16 %v1024, %v1022
        %v1047 = vpack.c.b16 %v1025, %v1023
        %v1048 = vpack.c.b16 %v1028, %v1026
        %v1049 = vpack.c.b16 %v1029, %v1027
        %v1050 = vpack.c.b16 %v1032, %v1030
        %v1051 = vpack.c.b16 %v1033, %v1031
        %v1052 = vpack.c.b16 %v1036, %v1034
        %v1053 = vpack.c.b16 %v1037, %v1035
        %1070 = vmatprep.subr.bf16.mxu0 %v1053
        %1071 = vmatpush1.bf16.msra.mxu0 %v1052
        %1072 = vmatprep.subr.bf16.mxu0 %v1051
        %1073 = vmatpush1.bf16.msra.mxu0 %v1050
        %1074 = vmatprep.subr.bf16.mxu0 %v1049
        %1075 = vmatpush1.bf16.msra.mxu0 %v1048
        %1076 = vmatprep.subr.bf16.mxu0 %v1047
        %1077 = vmatpush1.bf16.msra.mxu0 %v1046
        %1078 = vmatprep.subr.bf16.mxu0 %v1045
        %1079 = vmatpush1.bf16.msra.mxu0 %v1044
        %1080 = vmatprep.subr.bf16.mxu0 %v1043
        %1081 = vmatpush1.bf16.msra.mxu0 %v1042
        %1082 = vmatprep.subr.bf16.mxu0 %v1041
        %1083 = vmatpush1.bf16.msra.mxu0 %v1040
        %1084 = vmatprep.subr.bf16.mxu0 %v1039
        %1085 = vmatpush1.bf16.msra.mxu0 %v1038
        %1086 = vmatprep.subr.bf16.mxu0 0
        %1087 = vmatpush2.bf16.msra.mxu0 0
        %1088 = vmatprep.subr.bf16.mxu0 0
        %1089 = vmatpush2.bf16.msra.mxu0 0
        %1090 = vmatprep.subr.bf16.mxu0 0
        %1091 = vmatpush2.bf16.msra.mxu0 0
        %1092 = vmatprep.subr.bf16.mxu0 0
        %1093 = vmatpush2.bf16.msra.mxu0 0
        %1094 = vmatprep.subr.bf16.mxu0 0
        %1095 = vmatpush2.bf16.msra.mxu0 0
        %1096 = vmatprep.subr.bf16.mxu0 0
        %1097 = vmatpush2.bf16.msra.mxu0 0
        %1098 = vmatprep.subr.bf16.mxu0 0
        %1099 = vmatpush2.bf16.msra.mxu0 0
        %1100 = vmatprep.subr.bf16.mxu0 0
        %1101 = vmatpush2.bf16.msra.mxu0 0
        %1102 = vmatprep.mubr.bf16.mxu0 0
        %1103 = vmatmul.mubr.bf16.gmra.mxu0 %v972
        %v1104 = vpop.f32.mrf.mxu0
        %v1105 = vadd.f32 0.0, %v1104
        %v1106 = vpop.f32.mrf.mxu0
        %v1107 = vadd.f32 0.0, %v1106
        %v1108 = vpop.f32.mrf.mxu0
        %v1109 = vadd.f32 0.0, %v1108
        %v1110 = vpop.f32.mrf.mxu0
        %v1111 = vadd.f32 0.0, %v1110
        %1112 = vdwg.mxu0
        %vm1113 = vcmp.ge.f32.partialorder %v1105, 0.0
        %vm1114 = vcmp.ge.f32.partialorder %v1107, 0.0
        %vm1115 = vcmp.ge.f32.partialorder %v1109, 0.0
        %vm1116 = vcmp.ge.f32.partialorder %v1111, 0.0
        %s1117 = sld [smem:[#allocation3 + $0x1]]
        %v1118 = vstv %s1117
        %v1119 = vmul.f32 %v1118, %v1105
        %v1120 = vmul.f32 %v1118, %v1107
        %v1121 = vmul.f32 %v1118, %v1109
        %v1122 = vmul.f32 %v1118, %v1111
        %v1123 = vsel %vm1113, %v1105, %v1119
        %v1124 = vsel %vm1114, %v1107, %v1120
        %v1125 = vsel %vm1115, %v1109, %v1121
        %v1126 = vsel %vm1116, %v1111, %v1122
        %v1127 = vadd.f32 %v1123, %v1125
        %v1128 = vrot.slane %v1127, 4
        %v1129 = vadd.f32 %v1127, %v1128
        %v1130 = vrot.slane %v1129, 2
        %v1131 = vadd.f32 %v1129, %v1130
        %v1132 = vrot.slane %v1131, 1
        %v1133 = vadd.f32 %v1131, %v1132
        %v1134 = vadd.f32 %v1124, %v1126
        %v1135 = vrot.slane %v1134, 4
        %v1136 = vadd.f32 %v1134, %v1135
        %v1137 = vrot.slane %v1136, 2
        %v1138 = vadd.f32 %v1136, %v1137
        %v1139 = vrot.slane %v1138, 1
        %v1140 = vadd.f32 %v1138, %v1139
        %v1141 = vmul.f32 %v1123, %v1123
        %v1142 = vmul.f32 %v1124, %v1124
        %v1143 = vmul.f32 %v1125, %v1125
        %v1144 = vmul.f32 %v1126, %v1126
        %v1145 = vadd.f32 %v1141, %v1143
        %v1146 = vrot.slane %v1145, 4
        %v1147 = vadd.f32 %v1145, %v1146
        %v1148 = vrot.slane %v1147, 2
        %v1149 = vadd.f32 %v1147, %v1148
        %v1150 = vrot.slane %v1149, 1
        %v1151 = vadd.f32 %v1149, %v1150
        %v1152 = vadd.f32 %v1142, %v1144
        %v1153 = vrot.slane %v1152, 4
        %v1154 = vadd.f32 %v1152, %v1153
        %v1155 = vrot.slane %v1154, 2
        %v1156 = vadd.f32 %v1154, %v1155
        %v1157 = vrot.slane %v1156, 1
        %v1158 = vadd.f32 %v1156, %v1157
        %v1159 = vadd.f32 %v1133, %v1140
        %1160 = vadd.xlane.f32.xlu0 %v1159
        %v1161 = vpop.xlane.xlu0 %1160
        %v1162 = vadd.f32 %v1151, %v1158
        %1163 = vadd.xlane.f32.xlu0 %v1162
        %v1164 = vpop.xlane.xlu0 %1163
        %v1165 = vmul.f32 %v1161, 0.00024414063
        %v1166 = vmul.f32 %v1164, 0.00024414063
        %v1167 = vmul.f32 %v1165, %v1165
        %v1168 = vsub.f32 %v1166, %v1167
        %v1169 = vmax.f32 %v1168, 0.0
        %v1170 = vadd.f32 %v1169, 1e-08
        %v1171 = vrsqrt.pop %v1170
        %s1172 = scalar_lea.vmem %s3, 2
        %v1173 = vld [vmem:[%s1172] sm:$0x3]
        %v1174 = vmul.f32 %v1173, %v1171
        %s1175 = scalar_lea.vmem %s4, 2
        %v1176 = vld [vmem:[%s1175] sm:$0x3]
        %v1177 = vmul.f32 %v1165, %v1174
        %v1178 = vsub.f32 %v1176, %v1177
        %v1180 = vlaneseq
        %v1181 = vshrl.u32 %v1180, 7
        %v1182 = vsub.s32 0, %v1181
        %v1183 = vrot.slane %v1174, %v1182
        %v1184 = vlaneseq
        %v1185 = vshrl.u32 %v1184, 7
        %v1186 = vsub.s32 1, %v1185
        %v1187 = vrot.slane %v1174, %v1186
        %v1190 = vmul.f32 %v1123, %v1183
        %v1191 = vmul.f32 %v1124, %v1187
        %v1192 = vmul.f32 %v1125, %v1183
        %v1193 = vmul.f32 %v1126, %v1187
        %v1195 = vlaneseq
        %v1196 = vshrl.u32 %v1195, 7
        %v1197 = vsub.s32 0, %v1196
        %v1198 = vrot.slane %v1178, %v1197
        %v1199 = vlaneseq
        %v1200 = vshrl.u32 %v1199, 7
        %v1201 = vsub.s32 1, %v1200
        %v1202 = vrot.slane %v1178, %v1201
        %v1205 = vadd.f32 %v1190, %v1198
        %v1206 = vadd.f32 %v1191, %v1202
        %v1207 = vadd.f32 %v1192, %v1198
        %v1208 = vadd.f32 %v1193, %v1202
        %s1209 = scalar_lea.vmem %s5, 8
        %v1210 = vld [vmem:[%s1209] sm:$0x77]
        %vm1215 = vcmask 1041408
        %v1216 = vrot.slane %v1205, 6
        %v1217 = vrot.slane %v1206, 6
        %v1218 = vrot.slane %v1207, 6
        %v1219 = vsel %vm1215, %v1216, %v1218
        %v1220 = vrot.slane %v1208, 6
        %v1221 = vsel %vm1215, %v1217, %v1220
        %v1228 = vsel %vm1215, 0.0, %v1216
        %v1229 = vsel %vm1215, 0.0, %v1217
        %v1230 = vsel %vm1215, %v1218, 0.0
        %v1231 = vsel %vm1215, %v1220, 0.0
        %v1233 = vlaneseq
        %v1234 = vshrl.u32 %v1233, 7
        %v1235 = vsub.s32 0, %v1234
        %v1236 = vrot.slane %v1210, %v1235
        %v1237 = vlaneseq
        %v1238 = vshrl.u32 %v1237, 7
        %v1239 = vsub.s32 4, %v1238
        %v1240 = vrot.slane %v1210, %v1239
        %v1243 = vlaneseq
        %v1244 = vshrl.u32 %v1243, 7
        %v1245 = vsub.s32 0, %v1244
        %v1246 = vrot.slane %v1236, %v1245
        %v1247 = vlaneseq
        %v1248 = vshrl.u32 %v1247, 7
        %v1249 = vsub.s32 0, %v1248
        %v1250 = vrot.slane %v1240, %v1249
        %v1251 = vmul.f32 %v1228, %v1246
        %v1252 = vmul.f32 %v1229, %v1250
        %v1253 = vmul.f32 %v1219, %v1246
        %v1254 = vmul.f32 %v1221, %v1250
        %v1255 = vlaneseq
        %v1256 = vshrl.u32 %v1255, 7
        %v1257 = vsub.s32 1, %v1256
        %v1258 = vrot.slane %v1210, %v1257
        %v1259 = vlaneseq
        %v1260 = vshrl.u32 %v1259, 7
        %v1261 = vsub.s32 5, %v1260
        %v1262 = vrot.slane %v1210, %v1261
        %v1265 = vlaneseq
        %v1266 = vshrl.u32 %v1265, 7
        %v1267 = vsub.s32 1, %v1266
        %v1268 = vrot.slane %v1258, %v1267
        %v1269 = vlaneseq
        %v1270 = vshrl.u32 %v1269, 7
        %v1271 = vsub.s32 1, %v1270
        %v1272 = vrot.slane %v1262, %v1271
        %v1273 = vmul.f32 %v1228, %v1268
        %v1274 = vmul.f32 %v1229, %v1272
        %v1275 = vmul.f32 %v1219, %v1268
        %v1276 = vmul.f32 %v1221, %v1272
        %v1277 = vmul.f32 %v1230, %v1268
        %v1278 = vmul.f32 %v1231, %v1272
        %v1285 = vrot.slane %v1273, 2
        %v1286 = vrot.slane %v1275, 2
        %v1287 = vsel %vm706, %v1285, %v1286
        %v1288 = vrot.slane %v1274, 2
        %v1289 = vrot.slane %v1276, 2
        %v1290 = vsel %vm706, %v1288, %v1289
        %v1291 = vrot.slane %v1277, 2
        %v1292 = vsel %vm706, %v1286, %v1291
        %v1293 = vrot.slane %v1278, 2
        %v1294 = vsel %vm706, %v1289, %v1293
        %v1299 = vadd.f32 %v1251, %v1287
        %v1300 = vadd.f32 %v1252, %v1290
        %v1301 = vadd.f32 %v1253, %v1292
        %v1302 = vadd.f32 %v1254, %v1294
        %v1303 = vlaneseq
        %v1304 = vshrl.u32 %v1303, 7
        %v1305 = vsub.s32 2, %v1304
        %v1306 = vrot.slane %v1210, %v1305
        %v1307 = vlaneseq
        %v1308 = vshrl.u32 %v1307, 7
        %v1309 = vsub.s32 6, %v1308
        %v1310 = vrot.slane %v1210, %v1309
        %v1313 = vlaneseq
        %v1314 = vshrl.u32 %v1313, 7
        %v1315 = vsub.s32 2, %v1314
        %v1316 = vrot.slane %v1306, %v1315
        %v1317 = vlaneseq
        %v1318 = vshrl.u32 %v1317, 7
        %v1319 = vsub.s32 2, %v1318
        %v1320 = vrot.slane %v1310, %v1319
        %v1321 = vmul.f32 %v1228, %v1316
        %v1322 = vmul.f32 %v1229, %v1320
        %v1323 = vmul.f32 %v1219, %v1316
        %v1324 = vmul.f32 %v1221, %v1320
        %v1325 = vmul.f32 %v1230, %v1316
        %v1326 = vmul.f32 %v1231, %v1320
        %vm1333 = vcmask 1043456
        %v1334 = vrot.slane %v1321, 4
        %v1335 = vrot.slane %v1323, 4
        %v1336 = vsel %vm1333, %v1334, %v1335
        %v1337 = vrot.slane %v1322, 4
        %v1338 = vrot.slane %v1324, 4
        %v1339 = vsel %vm1333, %v1337, %v1338
        %v1340 = vrot.slane %v1325, 4
        %v1341 = vsel %vm1333, %v1335, %v1340
        %v1342 = vrot.slane %v1326, 4
        %v1343 = vsel %vm1333, %v1338, %v1342
        %v1348 = vadd.f32 %v1299, %v1336
        %v1349 = vadd.f32 %v1300, %v1339
        %v1350 = vadd.f32 %v1301, %v1341
        %v1351 = vadd.f32 %v1302, %v1343
        %vm1352 = vcmp.ge.f32.partialorder %v1348, 0.0
        %vm1353 = vcmp.ge.f32.partialorder %v1349, 0.0
        %vm1354 = vcmp.ge.f32.partialorder %v1350, 0.0
        %vm1355 = vcmp.ge.f32.partialorder %v1351, 0.0
        %s1356 = sld [smem:[#allocation3 + $0x81]]
        %v1357 = vstv %s1356
        %v1358 = vmul.f32 %v1357, %v1348
        %v1359 = vmul.f32 %v1357, %v1349
        %v1360 = vmul.f32 %v1357, %v1350
        %v1361 = vmul.f32 %v1357, %v1351
        %v1362 = vsel %vm1352, %v1348, %v1358
        %v1363 = vsel %vm1353, %v1349, %v1359
        %v1364 = vsel %vm1354, %v1350, %v1360
        %v1365 = vsel %vm1355, %v1351, %v1361
        %v1366 = vadd.f32 %v1362, %v1364
        %v1367 = vrot.slane %v1366, 4
        %v1368 = vadd.f32 %v1366, %v1367
        %v1369 = vrot.slane %v1368, 2
        %v1370 = vadd.f32 %v1368, %v1369
        %v1371 = vrot.slane %v1370, 1
        %v1372 = vadd.f32 %v1370, %v1371
        %v1373 = vadd.f32 %v1363, %v1365
        %v1374 = vrot.slane %v1373, 4
        %v1375 = vadd.f32 %v1373, %v1374
        %v1376 = vrot.slane %v1375, 2
        %v1377 = vadd.f32 %v1375, %v1376
        %v1378 = vrot.slane %v1377, 1
        %v1379 = vadd.f32 %v1377, %v1378
        %v1380 = vmul.f32 %v1362, %v1362
        %v1381 = vmul.f32 %v1363, %v1363
        %v1382 = vmul.f32 %v1364, %v1364
        %v1383 = vmul.f32 %v1365, %v1365
        %v1384 = vadd.f32 %v1380, %v1382
        %v1385 = vrot.slane %v1384, 4
        %v1386 = vadd.f32 %v1384, %v1385
        %v1387 = vrot.slane %v1386, 2
        %v1388 = vadd.f32 %v1386, %v1387
        %v1389 = vrot.slane %v1388, 1
        %v1390 = vadd.f32 %v1388, %v1389
        %v1391 = vadd.f32 %v1381, %v1383
        %v1392 = vrot.slane %v1391, 4
        %v1393 = vadd.f32 %v1391, %v1392
        %v1394 = vrot.slane %v1393, 2
        %v1395 = vadd.f32 %v1393, %v1394
        %v1396 = vrot.slane %v1395, 1
        %v1397 = vadd.f32 %v1395, %v1396
        %v1398 = vadd.f32 %v1372, %v1379
        %1399 = vadd.xlane.f32.xlu0 %v1398
        %v1400 = vpop.xlane.xlu0 %1399
        %v1401 = vadd.f32 %v1390, %v1397
        %1402 = vadd.xlane.f32.xlu0 %v1401
        %v1403 = vpop.xlane.xlu0 %1402
        %v1404 = vmul.f32 %v1400, 0.00024414063
        %v1405 = vmul.f32 %v1403, 0.00024414063
        %v1406 = vmul.f32 %v1404, %v1404
        %v1407 = vsub.f32 %v1405, %v1406
        %v1408 = vmax.f32 %v1407, 0.0
        %v1409 = vadd.f32 %v1408, 1e-08
        %v1410 = vrsqrt.pop %v1409
        %v1411 = vpack.c.bf16 %v1364, %v1362
        %v1412 = vpack.c.bf16 %v1365, %v1363
        %s1413 = scalar_lea.vmem %s6, 128
        %v1414 = vld [vmem:[%s1413] sm:$0xf]
        %v1415 = vld [vmem:[%s1413 + $0x4] sm:$0xf]
        %v1416 = vld [vmem:[%s1413 + $0x8] sm:$0xf]
        %v1417 = vld [vmem:[%s1413 + $0xc] sm:$0xf]
        %v1418 = vld [vmem:[%s1413 + $0x10] sm:$0xf]
        %v1419 = vld [vmem:[%s1413 + $0x14] sm:$0xf]
        %v1420 = vld [vmem:[%s1413 + $0x18] sm:$0xf]
        %v1421 = vld [vmem:[%s1413 + $0x1c] sm:$0xf]
        %v1422 = vld [vmem:[%s1413 + $0x20] sm:$0xf]
        %v1423 = vld [vmem:[%s1413 + $0x24] sm:$0xf]
        %v1424 = vld [vmem:[%s1413 + $0x28] sm:$0xf]
        %v1425 = vld [vmem:[%s1413 + $0x2c] sm:$0xf]
        %v1426 = vld [vmem:[%s1413 + $0x30] sm:$0xf]
        %v1427 = vld [vmem:[%s1413 + $0x34] sm:$0xf]
        %v1428 = vld [vmem:[%s1413 + $0x38] sm:$0xf]
        %v1429 = vld [vmem:[%s1413 + $0x3c] sm:$0xf]
        %v1430 = vld [vmem:[%s1413 + $0x40] sm:$0xf]
        %v1431 = vld [vmem:[%s1413 + $0x44] sm:$0xf]
        %v1432 = vld [vmem:[%s1413 + $0x48] sm:$0xf]
        %v1433 = vld [vmem:[%s1413 + $0x4c] sm:$0xf]
        %v1434 = vld [vmem:[%s1413 + $0x50] sm:$0xf]
        %v1435 = vld [vmem:[%s1413 + $0x54] sm:$0xf]
        %v1436 = vld [vmem:[%s1413 + $0x58] sm:$0xf]
        %v1437 = vld [vmem:[%s1413 + $0x5c] sm:$0xf]
        %v1438 = vld [vmem:[%s1413 + $0x60] sm:$0xf]
        %v1439 = vld [vmem:[%s1413 + $0x64] sm:$0xf]
        %v1440 = vld [vmem:[%s1413 + $0x68] sm:$0xf]
        %v1441 = vld [vmem:[%s1413 + $0x6c] sm:$0xf]
        %v1442 = vld [vmem:[%s1413 + $0x70] sm:$0xf]
        %v1443 = vld [vmem:[%s1413 + $0x74] sm:$0xf]
        %v1444 = vld [vmem:[%s1413 + $0x78] sm:$0xf]
        %v1445 = vld [vmem:[%s1413 + $0x7c] sm:$0xf]
        %v1478 = vunpack.c.l.b16 %v1414
        %v1479 = vunpack.c.l.b16 %v1415
        %v1480 = vunpack.c.l.b16 %v1416
        %v1481 = vunpack.c.l.b16 %v1417
        %v1482 = vunpack.c.l.b16 %v1418
        %v1483 = vunpack.c.l.b16 %v1419
        %v1484 = vunpack.c.l.b16 %v1420
        %v1485 = vunpack.c.l.b16 %v1421
        %v1486 = vunpack.c.l.b16 %v1422
        %v1487 = vunpack.c.l.b16 %v1423
        %v1488 = vunpack.c.l.b16 %v1424
        %v1489 = vunpack.c.l.b16 %v1425
        %v1490 = vunpack.c.l.b16 %v1426
        %v1491 = vunpack.c.l.b16 %v1427
        %v1492 = vunpack.c.l.b16 %v1428
        %v1493 = vunpack.c.l.b16 %v1429
        %v1494 = vunpack.c.l.b16 %v1430
        %v1495 = vunpack.c.l.b16 %v1431
        %v1496 = vunpack.c.l.b16 %v1432
        %v1497 = vunpack.c.l.b16 %v1433
        %v1498 = vunpack.c.l.b16 %v1434
        %v1499 = vunpack.c.l.b16 %v1435
        %v1500 = vunpack.c.l.b16 %v1436
        %v1501 = vunpack.c.l.b16 %v1437
        %v1502 = vunpack.c.l.b16 %v1438
        %v1503 = vunpack.c.l.b16 %v1439
        %v1504 = vunpack.c.l.b16 %v1440
        %v1505 = vunpack.c.l.b16 %v1441
        %v1506 = vunpack.c.l.b16 %v1442
        %v1507 = vunpack.c.l.b16 %v1443
        %v1508 = vunpack.c.l.b16 %v1444
        %v1509 = vunpack.c.l.b16 %v1445
        %v1510 = vpack.c.b16 %v1479, %v1478
        %v1511 = vpack.c.b16 %v1481, %v1480
        %v1512 = vpack.c.b16 %v1483, %v1482
        %v1513 = vpack.c.b16 %v1485, %v1484
        %v1514 = vpack.c.b16 %v1487, %v1486
        %v1515 = vpack.c.b16 %v1489, %v1488
        %v1516 = vpack.c.b16 %v1491, %v1490
        %v1517 = vpack.c.b16 %v1493, %v1492
        %v1518 = vpack.c.b16 %v1495, %v1494
        %v1519 = vpack.c.b16 %v1497, %v1496
        %v1520 = vpack.c.b16 %v1499, %v1498
        %v1521 = vpack.c.b16 %v1501, %v1500
        %v1522 = vpack.c.b16 %v1503, %v1502
        %v1523 = vpack.c.b16 %v1505, %v1504
        %v1524 = vpack.c.b16 %v1507, %v1506
        %v1525 = vpack.c.b16 %v1509, %v1508
        %1542 = vmatprep.subr.bf16.mxu0 0
        %1543 = vmatpush1.bf16.msra.mxu0 %v1517
        %1544 = vmatprep.subr.bf16.mxu0 0
        %1545 = vmatpush1.bf16.msra.mxu0 %v1516
        %1546 = vmatprep.subr.bf16.mxu0 0
        %1547 = vmatpush1.bf16.msra.mxu0 %v1515
        %1548 = vmatprep.subr.bf16.mxu0 0
        %1549 = vmatpush1.bf16.msra.mxu0 %v1514
        %1550 = vmatprep.subr.bf16.mxu0 0
        %1551 = vmatpush1.bf16.msra.mxu0 %v1513
        %1552 = vmatprep.subr.bf16.mxu0 0
        %1553 = vmatpush1.bf16.msra.mxu0 %v1512
        %1554 = vmatprep.subr.bf16.mxu0 0
        %1555 = vmatpush1.bf16.msra.mxu0 %v1511
        %1556 = vmatprep.subr.bf16.mxu0 0
        %1557 = vmatpush1.bf16.msra.mxu0 %v1510
        %1558 = vmatprep.subr.bf16.mxu0 0
        %1559 = vmatpush2.bf16.msra.mxu0 %v1525
        %1560 = vmatprep.subr.bf16.mxu0 0
        %1561 = vmatpush2.bf16.msra.mxu0 %v1524
        %1562 = vmatprep.subr.bf16.mxu0 0
        %1563 = vmatpush2.bf16.msra.mxu0 %v1523
        %1564 = vmatprep.subr.bf16.mxu0 0
        %1565 = vmatpush2.bf16.msra.mxu0 %v1522
        %1566 = vmatprep.subr.bf16.mxu0 0
        %1567 = vmatpush2.bf16.msra.mxu0 %v1521
        %1568 = vmatprep.subr.bf16.mxu0 0
        %1569 = vmatpush2.bf16.msra.mxu0 %v1520
        %1570 = vmatprep.subr.bf16.mxu0 0
        %1571 = vmatpush2.bf16.msra.mxu0 %v1519
        %1572 = vmatprep.subr.bf16.mxu0 0
        %1573 = vmatpush2.bf16.msra.mxu0 %v1518
        %1574 = vmatprep.mubr.bf16.mxu0 %v1412
        %1575 = vmatmul.mubr.bf16.gmra.mxu0 %v1411
        %v1576 = vpop.f32.mrf.mxu0
        %v1577 = vadd.f32 0.0, %v1576
        %v1578 = vpop.f32.mrf.mxu0
        %v1579 = vpop.f32.mrf.mxu0
        %v1580 = vadd.f32 0.0, %v1579
        %v1581 = vpop.f32.mrf.mxu0
        %1582 = vdwg.mxu0
        %s1583 = scalar_lea.vmem %s8, 1
        %v1584 = vld [vmem:[%s1583] sm:$0x1]
        %v1585 = vmul.f32 %v1404, %v1410
        %s1586 = scalar_lea.vmem %s7, 1
        %v1587 = vld [vmem:[%s1586] sm:$0x1]
        %v1588 = vmul.f32 %v1585, %v1587
        %v1589 = vsub.f32 %v1584, %v1588
        %v1590 = vmul.f32 %v1577, %v1410
        %v1591 = vmul.f32 %v1580, %v1410
        %v1593 = vlaneseq
        %v1594 = vshrl.u32 %v1593, 7
        %v1595 = vsub.s32 0, %v1594
        %v1596 = vrot.slane %v1589, %v1595
        %v1598 = vadd.f32 %v1590, %v1596
        %v1599 = vadd.f32 %v1591, %v1596
        %v1600 = vadd.f32 %v970, %v1598
        %v1601 = vadd.f32 %v971, %v1599
        %v1602 = vpack.c.bf16 %v1601, %v1600
        %s1603 = scalar_lea.vmem %s2, 256
        %v1604 = vld [vmem:[%s1603] sm:$0xff]
        %v1605 = vld [vmem:[%s1603 + $0x8] sm:$0xff]
        %v1606 = vld [vmem:[%s1603 + $0x10] sm:$0xff]
        %v1607 = vld [vmem:[%s1603 + $0x18] sm:$0xff]
        %v1608 = vld [vmem:[%s1603 + $0x20] sm:$0xff]
        %v1609 = vld [vmem:[%s1603 + $0x28] sm:$0xff]
        %v1610 = vld [vmem:[%s1603 + $0x30] sm:$0xff]
        %v1611 = vld [vmem:[%s1603 + $0x38] sm:$0xff]
        %v1612 = vld [vmem:[%s1603 + $0x40] sm:$0xff]
        %v1613 = vld [vmem:[%s1603 + $0x48] sm:$0xff]
        %v1614 = vld [vmem:[%s1603 + $0x50] sm:$0xff]
        %v1615 = vld [vmem:[%s1603 + $0x58] sm:$0xff]
        %v1616 = vld [vmem:[%s1603 + $0x60] sm:$0xff]
        %v1617 = vld [vmem:[%s1603 + $0x68] sm:$0xff]
        %v1618 = vld [vmem:[%s1603 + $0x70] sm:$0xff]
        %v1619 = vld [vmem:[%s1603 + $0x78] sm:$0xff]
        %v1636 = vunpack.c.l.b16 %v1604
        %v1637 = vunpack.c.h.b16 %v1604
        %v1638 = vunpack.c.l.b16 %v1605
        %v1639 = vunpack.c.h.b16 %v1605
        %v1640 = vunpack.c.l.b16 %v1606
        %v1641 = vunpack.c.h.b16 %v1606
        %v1642 = vunpack.c.l.b16 %v1607
        %v1643 = vunpack.c.h.b16 %v1607
        %v1644 = vunpack.c.l.b16 %v1608
        %v1645 = vunpack.c.h.b16 %v1608
        %v1646 = vunpack.c.l.b16 %v1609
        %v1647 = vunpack.c.h.b16 %v1609
        %v1648 = vunpack.c.l.b16 %v1610
        %v1649 = vunpack.c.h.b16 %v1610
        %v1650 = vunpack.c.l.b16 %v1611
        %v1651 = vunpack.c.h.b16 %v1611
        %v1652 = vunpack.c.l.b16 %v1612
        %v1653 = vunpack.c.h.b16 %v1612
        %v1654 = vunpack.c.l.b16 %v1613
        %v1655 = vunpack.c.h.b16 %v1613
        %v1656 = vunpack.c.l.b16 %v1614
        %v1657 = vunpack.c.h.b16 %v1614
        %v1658 = vunpack.c.l.b16 %v1615
        %v1659 = vunpack.c.h.b16 %v1615
        %v1660 = vunpack.c.l.b16 %v1616
        %v1661 = vunpack.c.h.b16 %v1616
        %v1662 = vunpack.c.l.b16 %v1617
        %v1663 = vunpack.c.h.b16 %v1617
        %v1664 = vunpack.c.l.b16 %v1618
        %v1665 = vunpack.c.h.b16 %v1618
        %v1666 = vunpack.c.l.b16 %v1619
        %v1667 = vunpack.c.h.b16 %v1619
        %v1668 = vpack.c.b16 %v1638, %v1636
        %v1669 = vpack.c.b16 %v1639, %v1637
        %v1670 = vpack.c.b16 %v1642, %v1640
        %v1671 = vpack.c.b16 %v1643, %v1641
        %v1672 = vpack.c.b16 %v1646, %v1644
        %v1673 = vpack.c.b16 %v1647, %v1645
        %v1674 = vpack.c.b16 %v1650, %v1648
        %v1675 = vpack.c.b16 %v1651, %v1649
        %v1676 = vpack.c.b16 %v1654, %v1652
        %v1677 = vpack.c.b16 %v1655, %v1653
        %v1678 = vpack.c.b16 %v1658, %v1656
        %v1679 = vpack.c.b16 %v1659, %v1657
        %v1680 = vpack.c.b16 %v1662, %v1660
        %v1681 = vpack.c.b16 %v1663, %v1661
        %v1682 = vpack.c.b16 %v1666, %v1664
        %v1683 = vpack.c.b16 %v1667, %v1665
        %1700 = vmatprep.subr.bf16.mxu0 %v1683
        %1701 = vmatpush1.bf16.msra.mxu0 %v1682
        %1702 = vmatprep.subr.bf16.mxu0 %v1681
        %1703 = vmatpush1.bf16.msra.mxu0 %v1680
        %1704 = vmatprep.subr.bf16.mxu0 %v1679
        %1705 = vmatpush1.bf16.msra.mxu0 %v1678
        %1706 = vmatprep.subr.bf16.mxu0 %v1677
        %1707 = vmatpush1.bf16.msra.mxu0 %v1676
        %1708 = vmatprep.subr.bf16.mxu0 %v1675
        %1709 = vmatpush1.bf16.msra.mxu0 %v1674
        %1710 = vmatprep.subr.bf16.mxu0 %v1673
        %1711 = vmatpush1.bf16.msra.mxu0 %v1672
        %1712 = vmatprep.subr.bf16.mxu0 %v1671
        %1713 = vmatpush1.bf16.msra.mxu0 %v1670
        %1714 = vmatprep.subr.bf16.mxu0 %v1669
        %1715 = vmatpush1.bf16.msra.mxu0 %v1668
        %1716 = vmatprep.subr.bf16.mxu0 0
        %1717 = vmatpush2.bf16.msra.mxu0 0
        %1718 = vmatprep.subr.bf16.mxu0 0
        %1719 = vmatpush2.bf16.msra.mxu0 0
        %1720 = vmatprep.subr.bf16.mxu0 0
        %1721 = vmatpush2.bf16.msra.mxu0 0
        %1722 = vmatprep.subr.bf16.mxu0 0
        %1723 = vmatpush2.bf16.msra.mxu0 0
        %1724 = vmatprep.subr.bf16.mxu0 0
        %1725 = vmatpush2.bf16.msra.mxu0 0
        %1726 = vmatprep.subr.bf16.mxu0 0
        %1727 = vmatpush2.bf16.msra.mxu0 0
        %1728 = vmatprep.subr.bf16.mxu0 0
        %1729 = vmatpush2.bf16.msra.mxu0 0
        %1730 = vmatprep.subr.bf16.mxu0 0
        %1731 = vmatpush2.bf16.msra.mxu0 0
        %1732 = vmatprep.mubr.bf16.mxu0 0
        %1733 = vmatmul.mubr.bf16.gmra.mxu0 %v1602
        %v1734 = vpop.f32.mrf.mxu0
        %v1735 = vadd.f32 0.0, %v1734
        %v1736 = vpop.f32.mrf.mxu0
        %v1737 = vadd.f32 0.0, %v1736
        %v1738 = vpop.f32.mrf.mxu0
        %v1739 = vadd.f32 0.0, %v1738
        %v1740 = vpop.f32.mrf.mxu0
        %v1741 = vadd.f32 0.0, %v1740
        %1742 = vdwg.mxu0
        %vm1743 = vcmp.ge.f32.partialorder %v1735, 0.0
        %vm1744 = vcmp.ge.f32.partialorder %v1737, 0.0
        %vm1745 = vcmp.ge.f32.partialorder %v1739, 0.0
        %vm1746 = vcmp.ge.f32.partialorder %v1741, 0.0
        %s1747 = sld [smem:[#allocation3 + $0x2]]
        %v1748 = vstv %s1747
        %v1749 = vmul.f32 %v1748, %v1735
        %v1750 = vmul.f32 %v1748, %v1737
        %v1751 = vmul.f32 %v1748, %v1739
        %v1752 = vmul.f32 %v1748, %v1741
        %v1753 = vsel %vm1743, %v1735, %v1749
        %v1754 = vsel %vm1744, %v1737, %v1750
        %v1755 = vsel %vm1745, %v1739, %v1751
        %v1756 = vsel %vm1746, %v1741, %v1752
        %v1757 = vadd.f32 %v1753, %v1755
        %v1758 = vrot.slane %v1757, 4
        %v1759 = vadd.f32 %v1757, %v1758
        %v1760 = vrot.slane %v1759, 2
        %v1761 = vadd.f32 %v1759, %v1760
        %v1762 = vrot.slane %v1761, 1
        %v1763 = vadd.f32 %v1761, %v1762
        %v1764 = vadd.f32 %v1754, %v1756
        %v1765 = vrot.slane %v1764, 4
        %v1766 = vadd.f32 %v1764, %v1765
        %v1767 = vrot.slane %v1766, 2
        %v1768 = vadd.f32 %v1766, %v1767
        %v1769 = vrot.slane %v1768, 1
        %v1770 = vadd.f32 %v1768, %v1769
        %v1771 = vmul.f32 %v1753, %v1753
        %v1772 = vmul.f32 %v1754, %v1754
        %v1773 = vmul.f32 %v1755, %v1755
        %v1774 = vmul.f32 %v1756, %v1756
        %v1775 = vadd.f32 %v1771, %v1773
        %v1776 = vrot.slane %v1775, 4
        %v1777 = vadd.f32 %v1775, %v1776
        %v1778 = vrot.slane %v1777, 2
        %v1779 = vadd.f32 %v1777, %v1778
        %v1780 = vrot.slane %v1779, 1
        %v1781 = vadd.f32 %v1779, %v1780
        %v1782 = vadd.f32 %v1772, %v1774
        %v1783 = vrot.slane %v1782, 4
        %v1784 = vadd.f32 %v1782, %v1783
        %v1785 = vrot.slane %v1784, 2
        %v1786 = vadd.f32 %v1784, %v1785
        %v1787 = vrot.slane %v1786, 1
        %v1788 = vadd.f32 %v1786, %v1787
        %v1789 = vadd.f32 %v1763, %v1770
        %1790 = vadd.xlane.f32.xlu0 %v1789
        %v1791 = vpop.xlane.xlu0 %1790
        %v1792 = vadd.f32 %v1781, %v1788
        %1793 = vadd.xlane.f32.xlu0 %v1792
        %v1794 = vpop.xlane.xlu0 %1793
        %v1795 = vmul.f32 %v1791, 0.00024414063
        %v1796 = vmul.f32 %v1794, 0.00024414063
        %v1797 = vmul.f32 %v1795, %v1795
        %v1798 = vsub.f32 %v1796, %v1797
        %v1799 = vmax.f32 %v1798, 0.0
        %v1800 = vadd.f32 %v1799, 1e-08
        %v1801 = vrsqrt.pop %v1800
        %s1802 = scalar_lea.vmem %s3, 4
        %v1803 = vld [vmem:[%s1802] sm:$0x3]
        %v1804 = vmul.f32 %v1803, %v1801
        %s1805 = scalar_lea.vmem %s4, 4
        %v1806 = vld [vmem:[%s1805] sm:$0x3]
        %v1807 = vmul.f32 %v1795, %v1804
        %v1808 = vsub.f32 %v1806, %v1807
        %v1810 = vlaneseq
        %v1811 = vshrl.u32 %v1810, 7
        %v1812 = vsub.s32 0, %v1811
        %v1813 = vrot.slane %v1804, %v1812
        %v1814 = vlaneseq
        %v1815 = vshrl.u32 %v1814, 7
        %v1816 = vsub.s32 1, %v1815
        %v1817 = vrot.slane %v1804, %v1816
        %v1820 = vmul.f32 %v1753, %v1813
        %v1821 = vmul.f32 %v1754, %v1817
        %v1822 = vmul.f32 %v1755, %v1813
        %v1823 = vmul.f32 %v1756, %v1817
        %v1825 = vlaneseq
        %v1826 = vshrl.u32 %v1825, 7
        %v1827 = vsub.s32 0, %v1826
        %v1828 = vrot.slane %v1808, %v1827
        %v1829 = vlaneseq
        %v1830 = vshrl.u32 %v1829, 7
        %v1831 = vsub.s32 1, %v1830
        %v1832 = vrot.slane %v1808, %v1831
        %v1835 = vadd.f32 %v1820, %v1828
        %v1836 = vadd.f32 %v1821, %v1832
        %v1837 = vadd.f32 %v1822, %v1828
        %v1838 = vadd.f32 %v1823, %v1832
        %s1839 = scalar_lea.vmem %s5, 16
        %v1840 = vld [vmem:[%s1839] sm:$0x77]
        %v1845 = vrot.slane %v1835, 4
        %v1846 = vrot.slane %v1836, 4
        %v1847 = vrot.slane %v1837, 4
        %v1848 = vsel %vm1333, %v1845, %v1847
        %v1849 = vrot.slane %v1838, 4
        %v1850 = vsel %vm1333, %v1846, %v1849
        %v1857 = vsel %vm1333, 0.0, %v1845
        %v1858 = vsel %vm1333, 0.0, %v1846
        %v1859 = vsel %vm1333, %v1847, 0.0
        %v1860 = vsel %vm1333, %v1849, 0.0
        %v1862 = vlaneseq
        %v1863 = vshrl.u32 %v1862, 7
        %v1864 = vsub.s32 0, %v1863
        %v1865 = vrot.slane %v1840, %v1864
        %v1866 = vlaneseq
        %v1867 = vshrl.u32 %v1866, 7
        %v1868 = vsub.s32 4, %v1867
        %v1869 = vrot.slane %v1840, %v1868
        %v1872 = vlaneseq
        %v1873 = vshrl.u32 %v1872, 7
        %v1874 = vsub.s32 0, %v1873
        %v1875 = vrot.slane %v1865, %v1874
        %v1876 = vlaneseq
        %v1877 = vshrl.u32 %v1876, 7
        %v1878 = vsub.s32 0, %v1877
        %v1879 = vrot.slane %v1869, %v1878
        %v1880 = vmul.f32 %v1857, %v1875
        %v1881 = vmul.f32 %v1858, %v1879
        %v1882 = vmul.f32 %v1848, %v1875
        %v1883 = vmul.f32 %v1850, %v1879
        %v1884 = vlaneseq
        %v1885 = vshrl.u32 %v1884, 7
        %v1886 = vsub.s32 1, %v1885
        %v1887 = vrot.slane %v1840, %v1886
        %v1888 = vlaneseq
        %v1889 = vshrl.u32 %v1888, 7
        %v1890 = vsub.s32 5, %v1889
        %v1891 = vrot.slane %v1840, %v1890
        %v1894 = vlaneseq
        %v1895 = vshrl.u32 %v1894, 7
        %v1896 = vsub.s32 1, %v1895
        %v1897 = vrot.slane %v1887, %v1896
        %v1898 = vlaneseq
        %v1899 = vshrl.u32 %v1898, 7
        %v1900 = vsub.s32 1, %v1899
        %v1901 = vrot.slane %v1891, %v1900
        %v1902 = vmul.f32 %v1857, %v1897
        %v1903 = vmul.f32 %v1858, %v1901
        %v1904 = vmul.f32 %v1848, %v1897
        %v1905 = vmul.f32 %v1850, %v1901
        %v1906 = vmul.f32 %v1859, %v1897
        %v1907 = vmul.f32 %v1860, %v1901
        %v1914 = vrot.slane %v1902, 4
        %v1915 = vrot.slane %v1904, 4
        %v1916 = vsel %vm1333, %v1914, %v1915
        %v1917 = vrot.slane %v1903, 4
        %v1918 = vrot.slane %v1905, 4
        %v1919 = vsel %vm1333, %v1917, %v1918
        %v1920 = vrot.slane %v1906, 4
        %v1921 = vsel %vm1333, %v1915, %v1920
        %v1922 = vrot.slane %v1907, 4
        %v1923 = vsel %vm1333, %v1918, %v1922
        %v1928 = vadd.f32 %v1880, %v1916
        %v1929 = vadd.f32 %v1881, %v1919
        %v1930 = vadd.f32 %v1882, %v1921
        %v1931 = vadd.f32 %v1883, %v1923
        %v1932 = vlaneseq
        %v1933 = vshrl.u32 %v1932, 7
        %v1934 = vsub.s32 2, %v1933
        %v1935 = vrot.slane %v1840, %v1934
        %v1936 = vlaneseq
        %v1937 = vshrl.u32 %v1936, 7
        %v1938 = vsub.s32 6, %v1937
        %v1939 = vrot.slane %v1840, %v1938
        %v1942 = vlaneseq
        %v1943 = vshrl.u32 %v1942, 7
        %v1944 = vsub.s32 2, %v1943
        %v1945 = vrot.slane %v1935, %v1944
        %v1946 = vlaneseq
        %v1947 = vshrl.u32 %v1946, 7
        %v1948 = vsub.s32 2, %v1947
        %v1949 = vrot.slane %v1939, %v1948
        %v1950 = vmul.f32 %v1848, %v1945
        %v1951 = vmul.f32 %v1850, %v1949
        %v1952 = vmul.f32 %v1859, %v1945
        %v1953 = vmul.f32 %v1860, %v1949
        %v1954 = vadd.f32 %v1928, %v1950
        %v1955 = vadd.f32 %v1929, %v1951
        %v1956 = vadd.f32 %v1930, %v1952
        %v1957 = vadd.f32 %v1931, %v1953
        %vm1958 = vcmp.ge.f32.partialorder %v1954, 0.0
        %vm1959 = vcmp.ge.f32.partialorder %v1955, 0.0
        %vm1960 = vcmp.ge.f32.partialorder %v1956, 0.0
        %vm1961 = vcmp.ge.f32.partialorder %v1957, 0.0
        %s1962 = sld [smem:[#allocation3 + $0x82]]
        %v1963 = vstv %s1962
        %v1964 = vmul.f32 %v1963, %v1954
        %v1965 = vmul.f32 %v1963, %v1955
        %v1966 = vmul.f32 %v1963, %v1956
        %v1967 = vmul.f32 %v1963, %v1957
        %v1968 = vsel %vm1958, %v1954, %v1964
        %v1969 = vsel %vm1959, %v1955, %v1965
        %v1970 = vsel %vm1960, %v1956, %v1966
        %v1971 = vsel %vm1961, %v1957, %v1967
        %v1972 = vadd.f32 %v1968, %v1970
        %v1973 = vrot.slane %v1972, 4
        %v1974 = vadd.f32 %v1972, %v1973
        %v1975 = vrot.slane %v1974, 2
        %v1976 = vadd.f32 %v1974, %v1975
        %v1977 = vrot.slane %v1976, 1
        %v1978 = vadd.f32 %v1976, %v1977
        %v1979 = vadd.f32 %v1969, %v1971
        %v1980 = vrot.slane %v1979, 4
        %v1981 = vadd.f32 %v1979, %v1980
        %v1982 = vrot.slane %v1981, 2
        %v1983 = vadd.f32 %v1981, %v1982
        %v1984 = vrot.slane %v1983, 1
        %v1985 = vadd.f32 %v1983, %v1984
        %v1986 = vmul.f32 %v1968, %v1968
        %v1987 = vmul.f32 %v1969, %v1969
        %v1988 = vmul.f32 %v1970, %v1970
        %v1989 = vmul.f32 %v1971, %v1971
        %v1990 = vadd.f32 %v1986, %v1988
        %v1991 = vrot.slane %v1990, 4
        %v1992 = vadd.f32 %v1990, %v1991
        %v1993 = vrot.slane %v1992, 2
        %v1994 = vadd.f32 %v1992, %v1993
        %v1995 = vrot.slane %v1994, 1
        %v1996 = vadd.f32 %v1994, %v1995
        %v1997 = vadd.f32 %v1987, %v1989
        %v1998 = vrot.slane %v1997, 4
        %v1999 = vadd.f32 %v1997, %v1998
        %v2000 = vrot.slane %v1999, 2
        %v2001 = vadd.f32 %v1999, %v2000
        %v2002 = vrot.slane %v2001, 1
        %v2003 = vadd.f32 %v2001, %v2002
        %v2004 = vadd.f32 %v1978, %v1985
        %2005 = vadd.xlane.f32.xlu0 %v2004
        %v2006 = vpop.xlane.xlu0 %2005
        %v2007 = vadd.f32 %v1996, %v2003
        %2008 = vadd.xlane.f32.xlu0 %v2007
        %v2009 = vpop.xlane.xlu0 %2008
        %v2010 = vmul.f32 %v2006, 0.00024414063
        %v2011 = vmul.f32 %v2009, 0.00024414063
        %v2012 = vmul.f32 %v2010, %v2010
        %v2013 = vsub.f32 %v2011, %v2012
        %v2014 = vmax.f32 %v2013, 0.0
        %v2015 = vadd.f32 %v2014, 1e-08
        %v2016 = vrsqrt.pop %v2015
        %v2017 = vpack.c.bf16 %v1970, %v1968
        %v2018 = vpack.c.bf16 %v1971, %v1969
        %s2019 = scalar_lea.vmem %s6, 256
        %v2020 = vld [vmem:[%s2019] sm:$0xf]
        %v2021 = vld [vmem:[%s2019 + $0x4] sm:$0xf]
        %v2022 = vld [vmem:[%s2019 + $0x8] sm:$0xf]
        %v2023 = vld [vmem:[%s2019 + $0xc] sm:$0xf]
        %v2024 = vld [vmem:[%s2019 + $0x10] sm:$0xf]
        %v2025 = vld [vmem:[%s2019 + $0x14] sm:$0xf]
        %v2026 = vld [vmem:[%s2019 + $0x18] sm:$0xf]
        %v2027 = vld [vmem:[%s2019 + $0x1c] sm:$0xf]
        %v2028 = vld [vmem:[%s2019 + $0x20] sm:$0xf]
        %v2029 = vld [vmem:[%s2019 + $0x24] sm:$0xf]
        %v2030 = vld [vmem:[%s2019 + $0x28] sm:$0xf]
        %v2031 = vld [vmem:[%s2019 + $0x2c] sm:$0xf]
        %v2032 = vld [vmem:[%s2019 + $0x30] sm:$0xf]
        %v2033 = vld [vmem:[%s2019 + $0x34] sm:$0xf]
        %v2034 = vld [vmem:[%s2019 + $0x38] sm:$0xf]
        %v2035 = vld [vmem:[%s2019 + $0x3c] sm:$0xf]
        %v2036 = vld [vmem:[%s2019 + $0x40] sm:$0xf]
        %v2037 = vld [vmem:[%s2019 + $0x44] sm:$0xf]
        %v2038 = vld [vmem:[%s2019 + $0x48] sm:$0xf]
        %v2039 = vld [vmem:[%s2019 + $0x4c] sm:$0xf]
        %v2040 = vld [vmem:[%s2019 + $0x50] sm:$0xf]
        %v2041 = vld [vmem:[%s2019 + $0x54] sm:$0xf]
        %v2042 = vld [vmem:[%s2019 + $0x58] sm:$0xf]
        %v2043 = vld [vmem:[%s2019 + $0x5c] sm:$0xf]
        %v2044 = vld [vmem:[%s2019 + $0x60] sm:$0xf]
        %v2045 = vld [vmem:[%s2019 + $0x64] sm:$0xf]
        %v2046 = vld [vmem:[%s2019 + $0x68] sm:$0xf]
        %v2047 = vld [vmem:[%s2019 + $0x6c] sm:$0xf]
        %v2048 = vld [vmem:[%s2019 + $0x70] sm:$0xf]
        %v2049 = vld [vmem:[%s2019 + $0x74] sm:$0xf]
        %v2050 = vld [vmem:[%s2019 + $0x78] sm:$0xf]
        %v2051 = vld [vmem:[%s2019 + $0x7c] sm:$0xf]
        %v2084 = vunpack.c.l.b16 %v2020
        %v2085 = vunpack.c.l.b16 %v2021
        %v2086 = vunpack.c.l.b16 %v2022
        %v2087 = vunpack.c.l.b16 %v2023
        %v2088 = vunpack.c.l.b16 %v2024
        %v2089 = vunpack.c.l.b16 %v2025
        %v2090 = vunpack.c.l.b16 %v2026
        %v2091 = vunpack.c.l.b16 %v2027
        %v2092 = vunpack.c.l.b16 %v2028
        %v2093 = vunpack.c.l.b16 %v2029
        %v2094 = vunpack.c.l.b16 %v2030
        %v2095 = vunpack.c.l.b16 %v2031
        %v2096 = vunpack.c.l.b16 %v2032
        %v2097 = vunpack.c.l.b16 %v2033
        %v2098 = vunpack.c.l.b16 %v2034
        %v2099 = vunpack.c.l.b16 %v2035
        %v2100 = vunpack.c.l.b16 %v2036
        %v2101 = vunpack.c.l.b16 %v2037
        %v2102 = vunpack.c.l.b16 %v2038
        %v2103 = vunpack.c.l.b16 %v2039
        %v2104 = vunpack.c.l.b16 %v2040
        %v2105 = vunpack.c.l.b16 %v2041
        %v2106 = vunpack.c.l.b16 %v2042
        %v2107 = vunpack.c.l.b16 %v2043
        %v2108 = vunpack.c.l.b16 %v2044
        %v2109 = vunpack.c.l.b16 %v2045
        %v2110 = vunpack.c.l.b16 %v2046
        %v2111 = vunpack.c.l.b16 %v2047
        %v2112 = vunpack.c.l.b16 %v2048
        %v2113 = vunpack.c.l.b16 %v2049
        %v2114 = vunpack.c.l.b16 %v2050
        %v2115 = vunpack.c.l.b16 %v2051
        %v2116 = vpack.c.b16 %v2085, %v2084
        %v2117 = vpack.c.b16 %v2087, %v2086
        %v2118 = vpack.c.b16 %v2089, %v2088
        %v2119 = vpack.c.b16 %v2091, %v2090
        %v2120 = vpack.c.b16 %v2093, %v2092
        %v2121 = vpack.c.b16 %v2095, %v2094
        %v2122 = vpack.c.b16 %v2097, %v2096
        %v2123 = vpack.c.b16 %v2099, %v2098
        %v2124 = vpack.c.b16 %v2101, %v2100
        %v2125 = vpack.c.b16 %v2103, %v2102
        %v2126 = vpack.c.b16 %v2105, %v2104
        %v2127 = vpack.c.b16 %v2107, %v2106
        %v2128 = vpack.c.b16 %v2109, %v2108
        %v2129 = vpack.c.b16 %v2111, %v2110
        %v2130 = vpack.c.b16 %v2113, %v2112
        %v2131 = vpack.c.b16 %v2115, %v2114
        %2148 = vmatprep.subr.bf16.mxu0 0
        %2149 = vmatpush1.bf16.msra.mxu0 %v2123
        %2150 = vmatprep.subr.bf16.mxu0 0
        %2151 = vmatpush1.bf16.msra.mxu0 %v2122
        %2152 = vmatprep.subr.bf16.mxu0 0
        %2153 = vmatpush1.bf16.msra.mxu0 %v2121
        %2154 = vmatprep.subr.bf16.mxu0 0
        %2155 = vmatpush1.bf16.msra.mxu0 %v2120
        %2156 = vmatprep.subr.bf16.mxu0 0
        %2157 = vmatpush1.bf16.msra.mxu0 %v2119
        %2158 = vmatprep.subr.bf16.mxu0 0
        %2159 = vmatpush1.bf16.msra.mxu0 %v2118
        %2160 = vmatprep.subr.bf16.mxu0 0
        %2161 = vmatpush1.bf16.msra.mxu0 %v2117
        %2162 = vmatprep.subr.bf16.mxu0 0
        %2163 = vmatpush1.bf16.msra.mxu0 %v2116
        %2164 = vmatprep.subr.bf16.mxu0 0
        %2165 = vmatpush2.bf16.msra.mxu0 %v2131
        %2166 = vmatprep.subr.bf16.mxu0 0
        %2167 = vmatpush2.bf16.msra.mxu0 %v2130
        %2168 = vmatprep.subr.bf16.mxu0 0
        %2169 = vmatpush2.bf16.msra.mxu0 %v2129
        %2170 = vmatprep.subr.bf16.mxu0 0
        %2171 = vmatpush2.bf16.msra.mxu0 %v2128
        %2172 = vmatprep.subr.bf16.mxu0 0
        %2173 = vmatpush2.bf16.msra.mxu0 %v2127
        %2174 = vmatprep.subr.bf16.mxu0 0
        %2175 = vmatpush2.bf16.msra.mxu0 %v2126
        %2176 = vmatprep.subr.bf16.mxu0 0
        %2177 = vmatpush2.bf16.msra.mxu0 %v2125
        %2178 = vmatprep.subr.bf16.mxu0 0
        %2179 = vmatpush2.bf16.msra.mxu0 %v2124
        %2180 = vmatprep.mubr.bf16.mxu0 %v2018
        %2181 = vmatmul.mubr.bf16.gmra.mxu0 %v2017
        %v2182 = vpop.f32.mrf.mxu0
        %v2183 = vadd.f32 0.0, %v2182
        %v2184 = vpop.f32.mrf.mxu0
        %v2185 = vpop.f32.mrf.mxu0
        %v2186 = vadd.f32 0.0, %v2185
        %v2187 = vpop.f32.mrf.mxu0
        %2188 = vdwg.mxu0
        %s2189 = scalar_lea.vmem %s8, 2
        %v2190 = vld [vmem:[%s2189] sm:$0x1]
        %v2191 = vmul.f32 %v2010, %v2016
        %s2192 = scalar_lea.vmem %s7, 2
        %v2193 = vld [vmem:[%s2192] sm:$0x1]
        %v2194 = vmul.f32 %v2191, %v2193
        %v2195 = vsub.f32 %v2190, %v2194
        %v2196 = vmul.f32 %v2183, %v2016
        %v2197 = vmul.f32 %v2186, %v2016
        %v2199 = vlaneseq
        %v2200 = vshrl.u32 %v2199, 7
        %v2201 = vsub.s32 0, %v2200
        %v2202 = vrot.slane %v2195, %v2201
        %v2204 = vadd.f32 %v2196, %v2202
        %v2205 = vadd.f32 %v2197, %v2202
        %v2206 = vadd.f32 %v1600, %v2204
        %v2207 = vadd.f32 %v1601, %v2205
        %v2208 = vpack.c.bf16 %v2207, %v2206
        %s2209 = scalar_lea.vmem %s2, 384
        %v2210 = vld [vmem:[%s2209] sm:$0xff]
        %v2211 = vld [vmem:[%s2209 + $0x8] sm:$0xff]
        %v2212 = vld [vmem:[%s2209 + $0x10] sm:$0xff]
        %v2213 = vld [vmem:[%s2209 + $0x18] sm:$0xff]
        %v2214 = vld [vmem:[%s2209 + $0x20] sm:$0xff]
        %v2215 = vld [vmem:[%s2209 + $0x28] sm:$0xff]
        %v2216 = vld [vmem:[%s2209 + $0x30] sm:$0xff]
        %v2217 = vld [vmem:[%s2209 + $0x38] sm:$0xff]
        %v2218 = vld [vmem:[%s2209 + $0x40] sm:$0xff]
        %v2219 = vld [vmem:[%s2209 + $0x48] sm:$0xff]
        %v2220 = vld [vmem:[%s2209 + $0x50] sm:$0xff]
        %v2221 = vld [vmem:[%s2209 + $0x58] sm:$0xff]
        %v2222 = vld [vmem:[%s2209 + $0x60] sm:$0xff]
        %v2223 = vld [vmem:[%s2209 + $0x68] sm:$0xff]
        %v2224 = vld [vmem:[%s2209 + $0x70] sm:$0xff]
        %v2225 = vld [vmem:[%s2209 + $0x78] sm:$0xff]
        %v2242 = vunpack.c.l.b16 %v2210
        %v2243 = vunpack.c.h.b16 %v2210
        %v2244 = vunpack.c.l.b16 %v2211
        %v2245 = vunpack.c.h.b16 %v2211
        %v2246 = vunpack.c.l.b16 %v2212
        %v2247 = vunpack.c.h.b16 %v2212
        %v2248 = vunpack.c.l.b16 %v2213
        %v2249 = vunpack.c.h.b16 %v2213
        %v2250 = vunpack.c.l.b16 %v2214
        %v2251 = vunpack.c.h.b16 %v2214
        %v2252 = vunpack.c.l.b16 %v2215
        %v2253 = vunpack.c.h.b16 %v2215
        %v2254 = vunpack.c.l.b16 %v2216
        %v2255 = vunpack.c.h.b16 %v2216
        %v2256 = vunpack.c.l.b16 %v2217
        %v2257 = vunpack.c.h.b16 %v2217
        %v2258 = vunpack.c.l.b16 %v2218
        %v2259 = vunpack.c.h.b16 %v2218
        %v2260 = vunpack.c.l.b16 %v2219
        %v2261 = vunpack.c.h.b16 %v2219
        %v2262 = vunpack.c.l.b16 %v2220
        %v2263 = vunpack.c.h.b16 %v2220
        %v2264 = vunpack.c.l.b16 %v2221
        %v2265 = vunpack.c.h.b16 %v2221
        %v2266 = vunpack.c.l.b16 %v2222
        %v2267 = vunpack.c.h.b16 %v2222
        %v2268 = vunpack.c.l.b16 %v2223
        %v2269 = vunpack.c.h.b16 %v2223
        %v2270 = vunpack.c.l.b16 %v2224
        %v2271 = vunpack.c.h.b16 %v2224
        %v2272 = vunpack.c.l.b16 %v2225
        %v2273 = vunpack.c.h.b16 %v2225
        %v2274 = vpack.c.b16 %v2244, %v2242
        %v2275 = vpack.c.b16 %v2245, %v2243
        %v2276 = vpack.c.b16 %v2248, %v2246
        %v2277 = vpack.c.b16 %v2249, %v2247
        %v2278 = vpack.c.b16 %v2252, %v2250
        %v2279 = vpack.c.b16 %v2253, %v2251
        %v2280 = vpack.c.b16 %v2256, %v2254
        %v2281 = vpack.c.b16 %v2257, %v2255
        %v2282 = vpack.c.b16 %v2260, %v2258
        %v2283 = vpack.c.b16 %v2261, %v2259
        %v2284 = vpack.c.b16 %v2264, %v2262
        %v2285 = vpack.c.b16 %v2265, %v2263
        %v2286 = vpack.c.b16 %v2268, %v2266
        %v2287 = vpack.c.b16 %v2269, %v2267
        %v2288 = vpack.c.b16 %v2272, %v2270
        %v2289 = vpack.c.b16 %v2273, %v2271
        %2306 = vmatprep.subr.bf16.mxu0 %v2289
        %2307 = vmatpush1.bf16.msra.mxu0 %v2288
        %2308 = vmatprep.subr.bf16.mxu0 %v2287
        %2309 = vmatpush1.bf16.msra.mxu0 %v2286
        %2310 = vmatprep.subr.bf16.mxu0 %v2285
        %2311 = vmatpush1.bf16.msra.mxu0 %v2284
        %2312 = vmatprep.subr.bf16.mxu0 %v2283
        %2313 = vmatpush1.bf16.msra.mxu0 %v2282
        %2314 = vmatprep.subr.bf16.mxu0 %v2281
        %2315 = vmatpush1.bf16.msra.mxu0 %v2280
        %2316 = vmatprep.subr.bf16.mxu0 %v2279
        %2317 = vmatpush1.bf16.msra.mxu0 %v2278
        %2318 = vmatprep.subr.bf16.mxu0 %v2277
        %2319 = vmatpush1.bf16.msra.mxu0 %v2276
        %2320 = vmatprep.subr.bf16.mxu0 %v2275
        %2321 = vmatpush1.bf16.msra.mxu0 %v2274
        %2322 = vmatprep.subr.bf16.mxu0 0
        %2323 = vmatpush2.bf16.msra.mxu0 0
        %2324 = vmatprep.subr.bf16.mxu0 0
        %2325 = vmatpush2.bf16.msra.mxu0 0
        %2326 = vmatprep.subr.bf16.mxu0 0
        %2327 = vmatpush2.bf16.msra.mxu0 0
        %2328 = vmatprep.subr.bf16.mxu0 0
        %2329 = vmatpush2.bf16.msra.mxu0 0
        %2330 = vmatprep.subr.bf16.mxu0 0
        %2331 = vmatpush2.bf16.msra.mxu0 0
        %2332 = vmatprep.subr.bf16.mxu0 0
        %2333 = vmatpush2.bf16.msra.mxu0 0
        %2334 = vmatprep.subr.bf16.mxu0 0
        %2335 = vmatpush2.bf16.msra.mxu0 0
        %2336 = vmatprep.subr.bf16.mxu0 0
        %2337 = vmatpush2.bf16.msra.mxu0 0
        %2338 = vmatprep.mubr.bf16.mxu0 0
        %2339 = vmatmul.mubr.bf16.gmra.mxu0 %v2208
        %v2340 = vpop.f32.mrf.mxu0
        %v2341 = vadd.f32 0.0, %v2340
        %v2342 = vpop.f32.mrf.mxu0
        %v2343 = vadd.f32 0.0, %v2342
        %v2344 = vpop.f32.mrf.mxu0
        %v2345 = vadd.f32 0.0, %v2344
        %v2346 = vpop.f32.mrf.mxu0
        %v2347 = vadd.f32 0.0, %v2346
        %2348 = vdwg.mxu0
        %vm2349 = vcmp.ge.f32.partialorder %v2341, 0.0
        %vm2350 = vcmp.ge.f32.partialorder %v2343, 0.0
        %vm2351 = vcmp.ge.f32.partialorder %v2345, 0.0
        %vm2352 = vcmp.ge.f32.partialorder %v2347, 0.0
        %s2353 = sld [smem:[#allocation3 + $0x3]]
        %v2354 = vstv %s2353
        %v2355 = vmul.f32 %v2354, %v2341
        %v2356 = vmul.f32 %v2354, %v2343
        %v2357 = vmul.f32 %v2354, %v2345
        %v2358 = vmul.f32 %v2354, %v2347
        %v2359 = vsel %vm2349, %v2341, %v2355
        %v2360 = vsel %vm2350, %v2343, %v2356
        %v2361 = vsel %vm2351, %v2345, %v2357
        %v2362 = vsel %vm2352, %v2347, %v2358
        %v2363 = vadd.f32 %v2359, %v2361
        %v2364 = vrot.slane %v2363, 4
        %v2365 = vadd.f32 %v2363, %v2364
        %v2366 = vrot.slane %v2365, 2
        %v2367 = vadd.f32 %v2365, %v2366
        %v2368 = vrot.slane %v2367, 1
        %v2369 = vadd.f32 %v2367, %v2368
        %v2370 = vadd.f32 %v2360, %v2362
        %v2371 = vrot.slane %v2370, 4
        %v2372 = vadd.f32 %v2370, %v2371
        %v2373 = vrot.slane %v2372, 2
        %v2374 = vadd.f32 %v2372, %v2373
        %v2375 = vrot.slane %v2374, 1
        %v2376 = vadd.f32 %v2374, %v2375
        %v2377 = vmul.f32 %v2359, %v2359
        %v2378 = vmul.f32 %v2360, %v2360
        %v2379 = vmul.f32 %v2361, %v2361
        %v2380 = vmul.f32 %v2362, %v2362
        %v2381 = vadd.f32 %v2377, %v2379
        %v2382 = vrot.slane %v2381, 4
        %v2383 = vadd.f32 %v2381, %v2382
        %v2384 = vrot.slane %v2383, 2
        %v2385 = vadd.f32 %v2383, %v2384
        %v2386 = vrot.slane %v2385, 1
        %v2387 = vadd.f32 %v2385, %v2386
        %v2388 = vadd.f32 %v2378, %v2380
        %v2389 = vrot.slane %v2388, 4
        %v2390 = vadd.f32 %v2388, %v2389
        %v2391 = vrot.slane %v2390, 2
        %v2392 = vadd.f32 %v2390, %v2391
        %v2393 = vrot.slane %v2392, 1
        %v2394 = vadd.f32 %v2392, %v2393
        %v2395 = vadd.f32 %v2369, %v2376
        %2396 = vadd.xlane.f32.xlu0 %v2395
        %v2397 = vpop.xlane.xlu0 %2396
        %v2398 = vadd.f32 %v2387, %v2394
        %2399 = vadd.xlane.f32.xlu0 %v2398
        %v2400 = vpop.xlane.xlu0 %2399
        %v2401 = vmul.f32 %v2397, 0.00024414063
        %v2402 = vmul.f32 %v2400, 0.00024414063
        %v2403 = vmul.f32 %v2401, %v2401
        %v2404 = vsub.f32 %v2402, %v2403
        %v2405 = vmax.f32 %v2404, 0.0
        %v2406 = vadd.f32 %v2405, 1e-08
        %v2407 = vrsqrt.pop %v2406
        %s2408 = scalar_lea.vmem %s3, 6
        %v2409 = vld [vmem:[%s2408] sm:$0x3]
        %v2410 = vmul.f32 %v2409, %v2407
        %s2411 = scalar_lea.vmem %s4, 6
        %v2412 = vld [vmem:[%s2411] sm:$0x3]
        %v2413 = vmul.f32 %v2401, %v2410
        %v2414 = vsub.f32 %v2412, %v2413
        %v2416 = vlaneseq
        %v2417 = vshrl.u32 %v2416, 7
        %v2418 = vsub.s32 0, %v2417
        %v2419 = vrot.slane %v2410, %v2418
        %v2420 = vlaneseq
        %v2421 = vshrl.u32 %v2420, 7
        %v2422 = vsub.s32 1, %v2421
        %v2423 = vrot.slane %v2410, %v2422
        %v2426 = vmul.f32 %v2359, %v2419
        %v2427 = vmul.f32 %v2360, %v2423
        %v2428 = vmul.f32 %v2361, %v2419
        %v2429 = vmul.f32 %v2362, %v2423
        %v2431 = vlaneseq
        %v2432 = vshrl.u32 %v2431, 7
        %v2433 = vsub.s32 0, %v2432
        %v2434 = vrot.slane %v2414, %v2433
        %v2435 = vlaneseq
        %v2436 = vshrl.u32 %v2435, 7
        %v2437 = vsub.s32 1, %v2436
        %v2438 = vrot.slane %v2414, %v2437
        %v2441 = vadd.f32 %v2426, %v2434
        %v2442 = vadd.f32 %v2427, %v2438
        %v2443 = vadd.f32 %v2428, %v2434
        %v2444 = vadd.f32 %v2429, %v2438
        %s2445 = scalar_lea.vmem %s5, 24
        %v2446 = vld [vmem:[%s2445] sm:$0x77]
        %v2448 = vlaneseq
        %v2449 = vshrl.u32 %v2448, 7
        %v2450 = vsub.s32 0, %v2449
        %v2451 = vrot.slane %v2446, %v2450
        %v2452 = vlaneseq
        %v2453 = vshrl.u32 %v2452, 7
        %v2454 = vsub.s32 4, %v2453
        %v2455 = vrot.slane %v2446, %v2454
        %v2458 = vlaneseq
        %v2459 = vshrl.u32 %v2458, 7
        %v2460 = vsub.s32 0, %v2459
        %v2461 = vrot.slane %v2451, %v2460
        %v2462 = vlaneseq
        %v2463 = vshrl.u32 %v2462, 7
        %v2464 = vsub.s32 0, %v2463
        %v2465 = vrot.slane %v2455, %v2464
        %v2466 = vmul.f32 %v2461, 0.0
        %v2467 = vmul.f32 %v2465, 0.0
        %v2468 = vmul.f32 %v2441, %v2461
        %v2469 = vmul.f32 %v2442, %v2465
        %v2470 = vlaneseq
        %v2471 = vshrl.u32 %v2470, 7
        %v2472 = vsub.s32 1, %v2471
        %v2473 = vrot.slane %v2446, %v2472
        %v2474 = vlaneseq
        %v2475 = vshrl.u32 %v2474, 7
        %v2476 = vsub.s32 5, %v2475
        %v2477 = vrot.slane %v2446, %v2476
        %v2480 = vlaneseq
        %v2481 = vshrl.u32 %v2480, 7
        %v2482 = vsub.s32 1, %v2481
        %v2483 = vrot.slane %v2473, %v2482
        %v2484 = vlaneseq
        %v2485 = vshrl.u32 %v2484, 7
        %v2486 = vsub.s32 1, %v2485
        %v2487 = vrot.slane %v2477, %v2486
        %v2488 = vmul.f32 %v2441, %v2483
        %v2489 = vmul.f32 %v2442, %v2487
        %v2490 = vmul.f32 %v2443, %v2483
        %v2491 = vmul.f32 %v2444, %v2487
        %v2492 = vadd.f32 %v2466, %v2488
        %v2493 = vadd.f32 %v2467, %v2489
        %v2494 = vadd.f32 %v2468, %v2490
        %v2495 = vadd.f32 %v2469, %v2491
        %v2496 = vlaneseq
        %v2497 = vshrl.u32 %v2496, 7
        %v2498 = vsub.s32 2, %v2497
        %v2499 = vrot.slane %v2446, %v2498
        %v2500 = vlaneseq
        %v2501 = vshrl.u32 %v2500, 7
        %v2502 = vsub.s32 6, %v2501
        %v2503 = vrot.slane %v2446, %v2502
        %v2506 = vlaneseq
        %v2507 = vshrl.u32 %v2506, 7
        %v2508 = vsub.s32 2, %v2507
        %v2509 = vrot.slane %v2499, %v2508
        %v2510 = vlaneseq
        %v2511 = vshrl.u32 %v2510, 7
        %v2512 = vsub.s32 2, %v2511
        %v2513 = vrot.slane %v2503, %v2512
        %v2514 = vmul.f32 %v2443, %v2509
        %v2515 = vmul.f32 %v2444, %v2513
        %v2516 = vmul.f32 %v2509, 0.0
        %v2517 = vmul.f32 %v2513, 0.0
        %v2518 = vadd.f32 %v2492, %v2514
        %v2519 = vadd.f32 %v2493, %v2515
        %v2520 = vadd.f32 %v2494, %v2516
        %v2521 = vadd.f32 %v2495, %v2517
        %vm2522 = vcmp.ge.f32.partialorder %v2518, 0.0
        %vm2523 = vcmp.ge.f32.partialorder %v2519, 0.0
        %vm2524 = vcmp.ge.f32.partialorder %v2520, 0.0
        %vm2525 = vcmp.ge.f32.partialorder %v2521, 0.0
        %s2526 = sld [smem:[#allocation3 + $0x83]]
        %v2527 = vstv %s2526
        %v2528 = vmul.f32 %v2527, %v2518
        %v2529 = vmul.f32 %v2527, %v2519
        %v2530 = vmul.f32 %v2527, %v2520
        %v2531 = vmul.f32 %v2527, %v2521
        %v2532 = vsel %vm2522, %v2518, %v2528
        %v2533 = vsel %vm2523, %v2519, %v2529
        %v2534 = vsel %vm2524, %v2520, %v2530
        %v2535 = vsel %vm2525, %v2521, %v2531
        %v2536 = vadd.f32 %v2532, %v2534
        %v2537 = vrot.slane %v2536, 4
        %v2538 = vadd.f32 %v2536, %v2537
        %v2539 = vrot.slane %v2538, 2
        %v2540 = vadd.f32 %v2538, %v2539
        %v2541 = vrot.slane %v2540, 1
        %v2542 = vadd.f32 %v2540, %v2541
        %v2543 = vadd.f32 %v2533, %v2535
        %v2544 = vrot.slane %v2543, 4
        %v2545 = vadd.f32 %v2543, %v2544
        %v2546 = vrot.slane %v2545, 2
        %v2547 = vadd.f32 %v2545, %v2546
        %v2548 = vrot.slane %v2547, 1
        %v2549 = vadd.f32 %v2547, %v2548
        %v2550 = vmul.f32 %v2532, %v2532
        %v2551 = vmul.f32 %v2533, %v2533
        %v2552 = vmul.f32 %v2534, %v2534
        %v2553 = vmul.f32 %v2535, %v2535
        %v2554 = vadd.f32 %v2550, %v2552
        %v2555 = vrot.slane %v2554, 4
        %v2556 = vadd.f32 %v2554, %v2555
        %v2557 = vrot.slane %v2556, 2
        %v2558 = vadd.f32 %v2556, %v2557
        %v2559 = vrot.slane %v2558, 1
        %v2560 = vadd.f32 %v2558, %v2559
        %v2561 = vadd.f32 %v2551, %v2553
        %v2562 = vrot.slane %v2561, 4
        %v2563 = vadd.f32 %v2561, %v2562
        %v2564 = vrot.slane %v2563, 2
        %v2565 = vadd.f32 %v2563, %v2564
        %v2566 = vrot.slane %v2565, 1
        %v2567 = vadd.f32 %v2565, %v2566
        %v2568 = vadd.f32 %v2542, %v2549
        %2569 = vadd.xlane.f32.xlu0 %v2568
        %v2570 = vpop.xlane.xlu0 %2569
        %v2571 = vadd.f32 %v2560, %v2567
        %2572 = vadd.xlane.f32.xlu0 %v2571
        %v2573 = vpop.xlane.xlu0 %2572
        %v2574 = vmul.f32 %v2570, 0.00024414063
        %v2575 = vmul.f32 %v2573, 0.00024414063
        %v2576 = vmul.f32 %v2574, %v2574
        %v2577 = vsub.f32 %v2575, %v2576
        %v2578 = vmax.f32 %v2577, 0.0
        %v2579 = vadd.f32 %v2578, 1e-08
        %v2580 = vrsqrt.pop %v2579
        %v2581 = vpack.c.bf16 %v2534, %v2532
        %v2582 = vpack.c.bf16 %v2535, %v2533
        %s2583 = scalar_lea.vmem %s6, 384
        %v2584 = vld [vmem:[%s2583] sm:$0xf]
        %v2585 = vld [vmem:[%s2583 + $0x4] sm:$0xf]
        %v2586 = vld [vmem:[%s2583 + $0x8] sm:$0xf]
        %v2587 = vld [vmem:[%s2583 + $0xc] sm:$0xf]
        %v2588 = vld [vmem:[%s2583 + $0x10] sm:$0xf]
        %v2589 = vld [vmem:[%s2583 + $0x14] sm:$0xf]
        %v2590 = vld [vmem:[%s2583 + $0x18] sm:$0xf]
        %v2591 = vld [vmem:[%s2583 + $0x1c] sm:$0xf]
        %v2592 = vld [vmem:[%s2583 + $0x20] sm:$0xf]
        %v2593 = vld [vmem:[%s2583 + $0x24] sm:$0xf]
        %v2594 = vld [vmem:[%s2583 + $0x28] sm:$0xf]
        %v2595 = vld [vmem:[%s2583 + $0x2c] sm:$0xf]
        %v2596 = vld [vmem:[%s2583 + $0x30] sm:$0xf]
        %v2597 = vld [vmem:[%s2583 + $0x34] sm:$0xf]
        %v2598 = vld [vmem:[%s2583 + $0x38] sm:$0xf]
        %v2599 = vld [vmem:[%s2583 + $0x3c] sm:$0xf]
        %v2600 = vld [vmem:[%s2583 + $0x40] sm:$0xf]
        %v2601 = vld [vmem:[%s2583 + $0x44] sm:$0xf]
        %v2602 = vld [vmem:[%s2583 + $0x48] sm:$0xf]
        %v2603 = vld [vmem:[%s2583 + $0x4c] sm:$0xf]
        %v2604 = vld [vmem:[%s2583 + $0x50] sm:$0xf]
        %v2605 = vld [vmem:[%s2583 + $0x54] sm:$0xf]
        %v2606 = vld [vmem:[%s2583 + $0x58] sm:$0xf]
        %v2607 = vld [vmem:[%s2583 + $0x5c] sm:$0xf]
        %v2608 = vld [vmem:[%s2583 + $0x60] sm:$0xf]
        %v2609 = vld [vmem:[%s2583 + $0x64] sm:$0xf]
        %v2610 = vld [vmem:[%s2583 + $0x68] sm:$0xf]
        %v2611 = vld [vmem:[%s2583 + $0x6c] sm:$0xf]
        %v2612 = vld [vmem:[%s2583 + $0x70] sm:$0xf]
        %v2613 = vld [vmem:[%s2583 + $0x74] sm:$0xf]
        %v2614 = vld [vmem:[%s2583 + $0x78] sm:$0xf]
        %v2615 = vld [vmem:[%s2583 + $0x7c] sm:$0xf]
        %v2648 = vunpack.c.l.b16 %v2584
        %v2649 = vunpack.c.l.b16 %v2585
        %v2650 = vunpack.c.l.b16 %v2586
        %v2651 = vunpack.c.l.b16 %v2587
        %v2652 = vunpack.c.l.b16 %v2588
        %v2653 = vunpack.c.l.b16 %v2589
        %v2654 = vunpack.c.l.b16 %v2590
        %v2655 = vunpack.c.l.b16 %v2591
        %v2656 = vunpack.c.l.b16 %v2592
        %v2657 = vunpack.c.l.b16 %v2593
        %v2658 = vunpack.c.l.b16 %v2594
        %v2659 = vunpack.c.l.b16 %v2595
        %v2660 = vunpack.c.l.b16 %v2596
        %v2661 = vunpack.c.l.b16 %v2597
        %v2662 = vunpack.c.l.b16 %v2598
        %v2663 = vunpack.c.l.b16 %v2599
        %v2664 = vunpack.c.l.b16 %v2600
        %v2665 = vunpack.c.l.b16 %v2601
        %v2666 = vunpack.c.l.b16 %v2602
        %v2667 = vunpack.c.l.b16 %v2603
        %v2668 = vunpack.c.l.b16 %v2604
        %v2669 = vunpack.c.l.b16 %v2605
        %v2670 = vunpack.c.l.b16 %v2606
        %v2671 = vunpack.c.l.b16 %v2607
        %v2672 = vunpack.c.l.b16 %v2608
        %v2673 = vunpack.c.l.b16 %v2609
        %v2674 = vunpack.c.l.b16 %v2610
        %v2675 = vunpack.c.l.b16 %v2611
        %v2676 = vunpack.c.l.b16 %v2612
        %v2677 = vunpack.c.l.b16 %v2613
        %v2678 = vunpack.c.l.b16 %v2614
        %v2679 = vunpack.c.l.b16 %v2615
        %v2680 = vpack.c.b16 %v2649, %v2648
        %v2681 = vpack.c.b16 %v2651, %v2650
        %v2682 = vpack.c.b16 %v2653, %v2652
        %v2683 = vpack.c.b16 %v2655, %v2654
        %v2684 = vpack.c.b16 %v2657, %v2656
        %v2685 = vpack.c.b16 %v2659, %v2658
        %v2686 = vpack.c.b16 %v2661, %v2660
        %v2687 = vpack.c.b16 %v2663, %v2662
        %v2688 = vpack.c.b16 %v2665, %v2664
        %v2689 = vpack.c.b16 %v2667, %v2666
        %v2690 = vpack.c.b16 %v2669, %v2668
        %v2691 = vpack.c.b16 %v2671, %v2670
        %v2692 = vpack.c.b16 %v2673, %v2672
        %v2693 = vpack.c.b16 %v2675, %v2674
        %v2694 = vpack.c.b16 %v2677, %v2676
        %v2695 = vpack.c.b16 %v2679, %v2678
        %2712 = vmatprep.subr.bf16.mxu0 0
        %2713 = vmatpush1.bf16.msra.mxu0 %v2687
        %2714 = vmatprep.subr.bf16.mxu0 0
        %2715 = vmatpush1.bf16.msra.mxu0 %v2686
        %2716 = vmatprep.subr.bf16.mxu0 0
        %2717 = vmatpush1.bf16.msra.mxu0 %v2685
        %2718 = vmatprep.subr.bf16.mxu0 0
        %2719 = vmatpush1.bf16.msra.mxu0 %v2684
        %2720 = vmatprep.subr.bf16.mxu0 0
        %2721 = vmatpush1.bf16.msra.mxu0 %v2683
        %2722 = vmatprep.subr.bf16.mxu0 0
        %2723 = vmatpush1.bf16.msra.mxu0 %v2682
        %2724 = vmatprep.subr.bf16.mxu0 0
        %2725 = vmatpush1.bf16.msra.mxu0 %v2681
        %2726 = vmatprep.subr.bf16.mxu0 0
        %2727 = vmatpush1.bf16.msra.mxu0 %v2680
        %2728 = vmatprep.subr.bf16.mxu0 0
        %2729 = vmatpush2.bf16.msra.mxu0 %v2695
        %2730 = vmatprep.subr.bf16.mxu0 0
        %2731 = vmatpush2.bf16.msra.mxu0 %v2694
        %2732 = vmatprep.subr.bf16.mxu0 0
        %2733 = vmatpush2.bf16.msra.mxu0 %v2693
        %2734 = vmatprep.subr.bf16.mxu0 0
        %2735 = vmatpush2.bf16.msra.mxu0 %v2692
        %2736 = vmatprep.subr.bf16.mxu0 0
        %2737 = vmatpush2.bf16.msra.mxu0 %v2691
        %2738 = vmatprep.subr.bf16.mxu0 0
        %2739 = vmatpush2.bf16.msra.mxu0 %v2690
        %2740 = vmatprep.subr.bf16.mxu0 0
        %2741 = vmatpush2.bf16.msra.mxu0 %v2689
        %2742 = vmatprep.subr.bf16.mxu0 0
        %2743 = vmatpush2.bf16.msra.mxu0 %v2688
        %2744 = vmatprep.mubr.bf16.mxu0 %v2582
        %2745 = vmatmul.mubr.bf16.gmra.mxu0 %v2581
        %v2746 = vpop.f32.mrf.mxu0
        %v2747 = vadd.f32 0.0, %v2746
        %v2748 = vpop.f32.mrf.mxu0
        %v2749 = vpop.f32.mrf.mxu0
        %v2750 = vadd.f32 0.0, %v2749
        %v2751 = vpop.f32.mrf.mxu0
        %2752 = vdwg.mxu0
        %s2753 = scalar_lea.vmem %s8, 3
        %v2754 = vld [vmem:[%s2753] sm:$0x1]
        %v2755 = vmul.f32 %v2574, %v2580
        %s2756 = scalar_lea.vmem %s7, 3
        %v2757 = vld [vmem:[%s2756] sm:$0x1]
        %v2758 = vmul.f32 %v2755, %v2757
        %v2759 = vsub.f32 %v2754, %v2758
        %v2760 = vmul.f32 %v2747, %v2580
        %v2761 = vmul.f32 %v2750, %v2580
        %v2763 = vlaneseq
        %v2764 = vshrl.u32 %v2763, 7
        %v2765 = vsub.s32 0, %v2764
        %v2766 = vrot.slane %v2759, %v2765
        %v2768 = vadd.f32 %v2760, %v2766
        %v2769 = vadd.f32 %v2761, %v2766
        %v2770 = vadd.f32 %v2206, %v2768
        %v2771 = vadd.f32 %v2207, %v2769
        %2772 = vst [vmem:[#allocation2] sm:$0xff] %v2770
        %2773 = vst [vmem:[#allocation2 + $0x8] sm:$0xff] %v2771
        %v2774 = vld [vmem:[#allocation2] ss:$4 sm:$0xf]
        %s2775 = scalar_lea.vmem [#allocation2], 1
        %v2776 = vld [vmem:[%s2775] ss:$4 sm:$0xf]
        %v2777 = vadd.f32 %v2774, %v2776
        %s2778 = scalar_lea.vmem [#allocation2], 2
        %v2779 = vld [vmem:[%s2778] ss:$4 sm:$0xf]
        %v2780 = vadd.f32 %v2777, %v2779
        %s2781 = scalar_lea.vmem [#allocation2], 3
        %v2782 = vld [vmem:[%s2781] ss:$4 sm:$0xf]
        %v2783 = vadd.f32 %v2780, %v2782
        %v2784 = vmul.f32 %v2783, 0.25
        %2785 = vst [vmem:[%s339] sm:$0xf] %v2784
        %s2786 = sand.u32 %s226, 1
        %s2787 = scalar_lea.sflag [#allocation4], %s2786
        %s2788 = sand.u32 %s226, 1
        %s2789 = smul.addr %s2788, 4
        %s2790 = scalar_lea.vmem [#allocation6], %s2789
        // Predicated region
        $region61: #{audio_net.3} parent=55 // pred_check
          %p2791 = pneg %p236
        $region62: #{audio_net.3} parent=55 // pred_check_branch
          %2793 = sbr.rel (%p2791) target = $region64
        $region63: #{audio_net.3} parent=55 // pred_region
          %s2795 = ssub.s32 64, 64
          %2796 = vsyncadd %s2787, %s2795
          %s2797 = smul.addr %s24, 64
          %s2798 = scalar_lea.hbm %s9, %s2797
          %s2800 = sshll.u32 %s2790, 4
          %s2801 = int_to_ptr.vmem [resolvable:$true] %s2800
          %2803 = dma.vmem_to_hbm [thread:$0]  %s2801, 64, %s2798, %s2787
        $region64: #{audio_net.3} parent=55 // pred_fallthru
          _
      $region56: #{audio_net.3} parent=5 // pred_fallthru
        _
      %p2804 = scmp.le.s32.totalorder 2, %s19
      // Predicated region
      $region65: #{audio_net.3} parent=5 // pred_check
        %p2805 = pneg %p2804
      $region66: #{audio_net.3} parent=5 // pred_check_branch
        %2807 = sbr.rel (%p2805) target = $region68
      $region67: #{audio_net.3} parent=5 // pred_region
        %s2808 = ssub.s32 %s19, 2
        // Predicated region
        $region69: #{audio_net.3} parent=67 // pred_check
          %p2809 = pneg %p242
        $region70: #{audio_net.3} parent=67 // pred_check_branch
          %2811 = sbr.rel (%p2809) target = $region72
        $region71: #{audio_net.3} parent=67 // pred_region
          %s2812 = sand.u32 %s227, 1
          %s2813 = scalar_lea.sflag [#allocation4], %s2812
          %s2814 = sand.u32 %s227, 1
          %s2815 = smul.addr %s2814, 4
          %s2816 = scalar_lea.vmem [#allocation6], %s2815
          %2817 = dma.done %s2813, 64
        $region72: #{audio_net.3} parent=67 // pred_fallthru
          _
      $region68: #{audio_net.3} parent=5 // pred_fallthru
        _
    $region6: #{audio_net.3} parent=1 // loop_footer
      %s23 = sadd.s32 1, %s19
    $region7: #{audio_net.3} parent=1 // loop_footer_branch
      %18 = sbr.rel target = $region3
    $region8: #{audio_net.3} parent=1 // loop_exit
      _
    %2818 = vsyncpa [#allocation4], 1
    %s2819 = scalar_lea.sflag [#allocation4], 1
    %2820 = vsyncpa %s2819, 1
    %2821 = vsyncpa [#allocation5], 1
    %s2822 = scalar_lea.sflag [#allocation5], 1
    %2823 = vsyncpa %s2822, 1

// kernel: audio_net.2
$region0: #{audio_net.2}
  #allocation0 [shape = 'u32[]', space=smem, size = 0x4, offset = 0x4, fixed_abs, tag = 'smem constant byte address 0x4 - core index']
  #allocation1 [shape = 'u32[144,128]{1,0:T(1,128)}', space=vmem, size = 0x12000, scoped, tag = 'internal scratch']
  #allocation2 [shape = 'f32[64,128]{1,0:T(8,128)}', space=vmem, size = 0x8000, scoped, tag = 'scratch operand']
  %s0 = inlined_call_operand.vmem [shape: f32[2,4], index: 0, kind: input, shape index: {}]
  %s1 = inlined_call_operand.vmem [shape: bf16[2,65,8], index: 1, kind: input, shape index: {}]
  %s2 = inlined_call_operand.vmem [shape: bf16[8,128], index: 2, kind: input, shape index: {}]
  %s3 = inlined_call_operand.vmem [shape: bf16[8,128], index: 3, kind: input, shape index: {}]
  %s4 = inlined_call_operand.vmem [shape: f32[1,128], index: 4, kind: input, shape index: {}]
  %s5 = inlined_call_operand.vmem [shape: f32[1,128], index: 5, kind: input, shape index: {}]
  %s6 = inlined_call_operand.vmem [shape: bf16[4,128,256], index: 6, kind: input, shape index: {}]
  %s7 = inlined_call_operand.vmem [shape: f32[4,1,256], index: 7, kind: input, shape index: {}]
  %s8 = inlined_call_operand.vmem [shape: f32[4,1,256], index: 8, kind: input, shape index: {}]
  %s9 = inlined_call_operand.vmem [shape: f32[4,3,256], index: 9, kind: input, shape index: {}]
  %s10 = inlined_call_operand.vmem [shape: bf16[4,256,128], index: 10, kind: input, shape index: {}]
  %s11 = inlined_call_operand.vmem [shape: f32[4,1,128], index: 11, kind: input, shape index: {}]
  %s12 = inlined_call_operand.vmem [shape: f32[4,1,128], index: 12, kind: input, shape index: {}]
  %s13 = inlined_call_operand.vmem [shape: f32[2,16,128], index: 13, kind: output, shape index: {}]
  %s14 = sld [smem:[#allocation0]]
  $region89: #{audio_net.2} parent=0
    _
  %s16 = ssub.s32 1, %s14
  %s17 = scalar_select 0, %s16, %s14
  $region1: #{audio_net.2} parent=0
    #allocation3 [shape = 'u8[1024]{0}', space=smem, size = 0x400, scoped, tag = 'input window, operand 0, single buffered']
    #allocation4 [shape = 's32[2]{0}', space=sflag, size = 0x8, scoped, tag = 'scoped memory for audio_net.2']
    %18 = vsyncpa [#allocation4], 0
    loop: start=0, step=1, limit=4
    $region2: #{audio_net.2} parent=1 // loop_pre_header
      _
    $region3: #{audio_net.2} parent=1 // loop_header
      %s20 = sphi 0, %s24
      %p21 = scmp.ge.s32.totalorder %s20, 4
      %s28 = sphi 0, %s28
      %s30 = sphi 0, %s28
      %s31 = sphi 0, %s30
      %s45 = sphi 0, %s31
      %s51 = sphi 0, %s53
      %s54 = sphi 0, %s51
      %s55 = sphi 0, %s54
      %s71 = sphi 0, %s55
      %s75 = sphi 0, %s75
      %s77 = sphi 0, %s75
      %s78 = sphi 0, %s77
      %s92 = sphi 0, %s78
      %s96 = sphi 0, %s96
      %s98 = sphi 0, %s96
      %s99 = sphi 0, %s98
      %s113 = sphi 0, %s99
      %s117 = sphi 0, %s117
      %s119 = sphi 0, %s117
      %s120 = sphi 0, %s119
      %s134 = sphi 0, %s120
      %s138 = sphi 0, %s138
      %s140 = sphi 0, %s138
      %s141 = sphi 0, %s140
      %s155 = sphi 0, %s141
      %s159 = sphi 0, %s159
      %s161 = sphi 0, %s159
      %s162 = sphi 0, %s161
      %s176 = sphi 0, %s162
      %s180 = sphi 0, %s180
      %s182 = sphi 0, %s180
      %s183 = sphi 0, %s182
      %s197 = sphi 0, %s183
      %s201 = sphi 0, %s201
      %s203 = sphi 0, %s201
      %s204 = sphi 0, %s203
      %s218 = sphi 0, %s204
      %s222 = sphi 0, %s222
      %s224 = sphi 0, %s222
      %s225 = sphi 0, %s224
      %s239 = sphi 0, %s225
      %s243 = sphi 0, %s243
      %s245 = sphi 0, %s243
      %s246 = sphi 0, %s245
      %s260 = sphi 0, %s246
      %s264 = sphi 0, %s264
      %s266 = sphi 0, %s264
      %s267 = sphi 0, %s266
      %s281 = sphi 0, %s267
      %s285 = sphi 0, %s285
      %s287 = sphi 0, %s285
      %s288 = sphi 0, %s287
      %s302 = sphi 0, %s288
      %s308 = sphi 0, %s310
      %s311 = sphi 0, %s308
      %s312 = sphi 0, %s311
      %s328 = sphi 0, %s312
    $region4: #{audio_net.2} parent=1 // loop_header_branch
      %23 = sbr.rel (%p21) target = $region8
    $region5: #{audio_net.2} parent=1 // loop_body
      %s25 = ssub.s32 %s20, 1
      %s26 = ssub.s32 %s20, 2
      %s27 = sadd.s32 %s20, 1
      %s29 = sadd.s32 %s28, 1
      %p32 = scmp.eq.s32.totalorder %s20, 1
      %p33 = scmp.ne.s32.totalorder %s28, %s30
      %p34 = scmp.eq.s32.totalorder %s20, 0
      %p35 = por %p33, %p34
      %p36 = scmp.ne.s32.totalorder %s28, %s30
      %p37 = scmp.eq.s32.totalorder %s25, 1
      %p38 = por %p36, %p37
      %p39 = scmp.ne.s32.totalorder %s30, %s31
      %p40 = scmp.eq.s32.totalorder %s25, 0
      %p41 = por %p39, %p40
      %p42 = scmp.ne.s32.totalorder %s30, %s31
      %p43 = scmp.eq.s32.totalorder %s26, 1
      %p44 = por %p42, %p43
      %p46 = scmp.ne.s32.totalorder %s31, %s45
      %p47 = scmp.eq.s32.totalorder %s26, 0
      %p48 = por %p46, %p47
      %s49 = ssub.s32 %s20, %s27
      %p50 = scmp.eq.s32.totalorder %s49, 0
      %s52 = sadd.s32 %s51, 1
      %s53 = scalar_select %p50, %s51, %s52
      %p56 = pneg %p50
      %p57 = scmp.eq.s32.totalorder %s20, 1
      %p58 = por %p56, %p57
      %p59 = scmp.ne.s32.totalorder %s51, %s54
      %p60 = scmp.eq.s32.totalorder %s20, 0
      %p61 = por %p59, %p60
      %p62 = scmp.ne.s32.totalorder %s51, %s54
      %p63 = scmp.eq.s32.totalorder %s25, 1
      %p64 = por %p62, %p63
      %p65 = scmp.ne.s32.totalorder %s54, %s55
      %p66 = scmp.eq.s32.totalorder %s25, 0
      %p67 = por %p65, %p66
      %p68 = scmp.ne.s32.totalorder %s54, %s55
      %p69 = scmp.eq.s32.totalorder %s26, 1
      %p70 = por %p68, %p69
      %p72 = scmp.ne.s32.totalorder %s55, %s71
      %p73 = scmp.eq.s32.totalorder %s26, 0
      %p74 = por %p72, %p73
      %s76 = sadd.s32 %s75, 1
      %p79 = scmp.eq.s32.totalorder %s20, 1
      %p80 = scmp.ne.s32.totalorder %s75, %s77
      %p81 = scmp.eq.s32.totalorder %s20, 0
      %p82 = por %p80, %p81
      %p83 = scmp.ne.s32.totalorder %s75, %s77
      %p84 = scmp.eq.s32.totalorder %s25, 1
      %p85 = por %p83, %p84
      %p86 = scmp.ne.s32.totalorder %s77, %s78
      %p87 = scmp.eq.s32.totalorder %s25, 0
      %p88 = por %p86, %p87
      %p89 = scmp.ne.s32.totalorder %s77, %s78
      %p90 = scmp.eq.s32.totalorder %s26, 1
      %p91 = por %p89, %p90
      %p93 = scmp.ne.s32.totalorder %s78, %s92
      %p94 = scmp.eq.s32.totalorder %s26, 0
      %p95 = por %p93, %p94
      %s97 = sadd.s32 %s96, 1
      %p100 = scmp.eq.s32.totalorder %s20, 1
      %p101 = scmp.ne.s32.totalorder %s96, %s98
      %p102 = scmp.eq.s32.totalorder %s20, 0
      %p103 = por %p101, %p102
      %p104 = scmp.ne.s32.totalorder %s96, %s98
      %p105 = scmp.eq.s32.totalorder %s25, 1
      %p106 = por %p104, %p105
      %p107 = scmp.ne.s32.totalorder %s98, %s99
      %p108 = scmp.eq.s32.totalorder %s25, 0
      %p109 = por %p107, %p108
      %p110 = scmp.ne.s32.totalorder %s98, %s99
      %p111 = scmp.eq.s32.totalorder %s26, 1
      %p112 = por %p110, %p111
      %p114 = scmp.ne.s32.totalorder %s99, %s113
      %p115 = scmp.eq.s32.totalorder %s26, 0
      %p116 = por %p114, %p115
      %s118 = sadd.s32 %s117, 1
      %p121 = scmp.eq.s32.totalorder %s20, 1
      %p122 = scmp.ne.s32.totalorder %s117, %s119
      %p123 = scmp.eq.s32.totalorder %s20, 0
      %p124 = por %p122, %p123
      %p125 = scmp.ne.s32.totalorder %s117, %s119
      %p126 = scmp.eq.s32.totalorder %s25, 1
      %p127 = por %p125, %p126
      %p128 = scmp.ne.s32.totalorder %s119, %s120
      %p129 = scmp.eq.s32.totalorder %s25, 0
      %p130 = por %p128, %p129
      %p131 = scmp.ne.s32.totalorder %s119, %s120
      %p132 = scmp.eq.s32.totalorder %s26, 1
      %p133 = por %p131, %p132
      %p135 = scmp.ne.s32.totalorder %s120, %s134
      %p136 = scmp.eq.s32.totalorder %s26, 0
      %p137 = por %p135, %p136
      %s139 = sadd.s32 %s138, 1
      %p142 = scmp.eq.s32.totalorder %s20, 1
      %p143 = scmp.ne.s32.totalorder %s138, %s140
      %p144 = scmp.eq.s32.totalorder %s20, 0
      %p145 = por %p143, %p144
      %p146 = scmp.ne.s32.totalorder %s138, %s140
      %p147 = scmp.eq.s32.totalorder %s25, 1
      %p148 = por %p146, %p147
      %p149 = scmp.ne.s32.totalorder %s140, %s141
      %p150 = scmp.eq.s32.totalorder %s25, 0
      %p151 = por %p149, %p150
      %p152 = scmp.ne.s32.totalorder %s140, %s141
      %p153 = scmp.eq.s32.totalorder %s26, 1
      %p154 = por %p152, %p153
      %p156 = scmp.ne.s32.totalorder %s141, %s155
      %p157 = scmp.eq.s32.totalorder %s26, 0
      %p158 = por %p156, %p157
      %s160 = sadd.s32 %s159, 1
      %p163 = scmp.eq.s32.totalorder %s20, 1
      %p164 = scmp.ne.s32.totalorder %s159, %s161
      %p165 = scmp.eq.s32.totalorder %s20, 0
      %p166 = por %p164, %p165
      %p167 = scmp.ne.s32.totalorder %s159, %s161
      %p168 = scmp.eq.s32.totalorder %s25, 1
      %p169 = por %p167, %p168
      %p170 = scmp.ne.s32.totalorder %s161, %s162
      %p171 = scmp.eq.s32.totalorder %s25, 0
      %p172 = por %p170, %p171
      %p173 = scmp.ne.s32.totalorder %s161, %s162
      %p174 = scmp.eq.s32.totalorder %s26, 1
      %p175 = por %p173, %p174
      %p177 = scmp.ne.s32.totalorder %s162, %s176
      %p178 = scmp.eq.s32.totalorder %s26, 0
      %p179 = por %p177, %p178
      %s181 = sadd.s32 %s180, 1
      %p184 = scmp.eq.s32.totalorder %s20, 1
      %p185 = scmp.ne.s32.totalorder %s180, %s182
      %p186 = scmp.eq.s32.totalorder %s20, 0
      %p187 = por %p185, %p186
      %p188 = scmp.ne.s32.totalorder %s180, %s182
      %p189 = scmp.eq.s32.totalorder %s25, 1
      %p190 = por %p188, %p189
      %p191 = scmp.ne.s32.totalorder %s182, %s183
      %p192 = scmp.eq.s32.totalorder %s25, 0
      %p193 = por %p191, %p192
      %p194 = scmp.ne.s32.totalorder %s182, %s183
      %p195 = scmp.eq.s32.totalorder %s26, 1
      %p196 = por %p194, %p195
      %p198 = scmp.ne.s32.totalorder %s183, %s197
      %p199 = scmp.eq.s32.totalorder %s26, 0
      %p200 = por %p198, %p199
      %s202 = sadd.s32 %s201, 1
      %p205 = scmp.eq.s32.totalorder %s20, 1
      %p206 = scmp.ne.s32.totalorder %s201, %s203
      %p207 = scmp.eq.s32.totalorder %s20, 0
      %p208 = por %p206, %p207
      %p209 = scmp.ne.s32.totalorder %s201, %s203
      %p210 = scmp.eq.s32.totalorder %s25, 1
      %p211 = por %p209, %p210
      %p212 = scmp.ne.s32.totalorder %s203, %s204
      %p213 = scmp.eq.s32.totalorder %s25, 0
      %p214 = por %p212, %p213
      %p215 = scmp.ne.s32.totalorder %s203, %s204
      %p216 = scmp.eq.s32.totalorder %s26, 1
      %p217 = por %p215, %p216
      %p219 = scmp.ne.s32.totalorder %s204, %s218
      %p220 = scmp.eq.s32.totalorder %s26, 0
      %p221 = por %p219, %p220
      %s223 = sadd.s32 %s222, 1
      %p226 = scmp.eq.s32.totalorder %s20, 1
      %p227 = scmp.ne.s32.totalorder %s222, %s224
      %p228 = scmp.eq.s32.totalorder %s20, 0
      %p229 = por %p227, %p228
      %p230 = scmp.ne.s32.totalorder %s222, %s224
      %p231 = scmp.eq.s32.totalorder %s25, 1
      %p232 = por %p230, %p231
      %p233 = scmp.ne.s32.totalorder %s224, %s225
      %p234 = scmp.eq.s32.totalorder %s25, 0
      %p235 = por %p233, %p234
      %p236 = scmp.ne.s32.totalorder %s224, %s225
      %p237 = scmp.eq.s32.totalorder %s26, 1
      %p238 = por %p236, %p237
      %p240 = scmp.ne.s32.totalorder %s225, %s239
      %p241 = scmp.eq.s32.totalorder %s26, 0
      %p242 = por %p240, %p241
      %s244 = sadd.s32 %s243, 1
      %p247 = scmp.eq.s32.totalorder %s20, 1
      %p248 = scmp.ne.s32.totalorder %s243, %s245
      %p249 = scmp.eq.s32.totalorder %s20, 0
      %p250 = por %p248, %p249
      %p251 = scmp.ne.s32.totalorder %s243, %s245
      %p252 = scmp.eq.s32.totalorder %s25, 1
      %p253 = por %p251, %p252
      %p254 = scmp.ne.s32.totalorder %s245, %s246
      %p255 = scmp.eq.s32.totalorder %s25, 0
      %p256 = por %p254, %p255
      %p257 = scmp.ne.s32.totalorder %s245, %s246
      %p258 = scmp.eq.s32.totalorder %s26, 1
      %p259 = por %p257, %p258
      %p261 = scmp.ne.s32.totalorder %s246, %s260
      %p262 = scmp.eq.s32.totalorder %s26, 0
      %p263 = por %p261, %p262
      %s265 = sadd.s32 %s264, 1
      %p268 = scmp.eq.s32.totalorder %s20, 1
      %p269 = scmp.ne.s32.totalorder %s264, %s266
      %p270 = scmp.eq.s32.totalorder %s20, 0
      %p271 = por %p269, %p270
      %p272 = scmp.ne.s32.totalorder %s264, %s266
      %p273 = scmp.eq.s32.totalorder %s25, 1
      %p274 = por %p272, %p273
      %p275 = scmp.ne.s32.totalorder %s266, %s267
      %p276 = scmp.eq.s32.totalorder %s25, 0
      %p277 = por %p275, %p276
      %p278 = scmp.ne.s32.totalorder %s266, %s267
      %p279 = scmp.eq.s32.totalorder %s26, 1
      %p280 = por %p278, %p279
      %p282 = scmp.ne.s32.totalorder %s267, %s281
      %p283 = scmp.eq.s32.totalorder %s26, 0
      %p284 = por %p282, %p283
      %s286 = sadd.s32 %s285, 1
      %p289 = scmp.eq.s32.totalorder %s20, 1
      %p290 = scmp.ne.s32.totalorder %s285, %s287
      %p291 = scmp.eq.s32.totalorder %s20, 0
      %p292 = por %p290, %p291
      %p293 = scmp.ne.s32.totalorder %s285, %s287
      %p294 = scmp.eq.s32.totalorder %s25, 1
      %p295 = por %p293, %p294
      %p296 = scmp.ne.s32.totalorder %s287, %s288
      %p297 = scmp.eq.s32.totalorder %s25, 0
      %p298 = por %p296, %p297
      %p299 = scmp.ne.s32.totalorder %s287, %s288
      %p300 = scmp.eq.s32.totalorder %s26, 1
      %p301 = por %p299, %p300
      %p303 = scmp.ne.s32.totalorder %s288, %s302
      %p304 = scmp.eq.s32.totalorder %s26, 0
      %p305 = por %p303, %p304
      %s306 = ssub.s32 %s20, %s27
      %p307 = scmp.eq.s32.totalorder %s306, 0
      %s309 = sadd.s32 %s308, 1
      %s310 = scalar_select %p307, %s308, %s309
      %p313 = pneg %p307
      %p314 = scmp.eq.s32.totalorder %s20, 1
      %p315 = por %p313, %p314
      %p316 = scmp.ne.s32.totalorder %s308, %s311
      %p317 = scmp.eq.s32.totalorder %s20, 0
      %p318 = por %p316, %p317
      %p319 = scmp.ne.s32.totalorder %s308, %s311
      %p320 = scmp.eq.s32.totalorder %s25, 1
      %p321 = por %p319, %p320
      %p322 = scmp.ne.s32.totalorder %s311, %s312
      %p323 = scmp.eq.s32.totalorder %s25, 0
      %p324 = por %p322, %p323
      %p325 = scmp.ne.s32.totalorder %s311, %s312
      %p326 = scmp.eq.s32.totalorder %s26, 1
      %p327 = por %p325, %p326
      %p329 = scmp.ne.s32.totalorder %s312, %s328
      %p330 = scmp.eq.s32.totalorder %s26, 0
      %p331 = por %p329, %p330
      %p332 = scmp.le.s32.totalorder 1, %s20
      %p333 = scmp.lt.s32.totalorder %s20, 3
      %p334 = pnand %p332, %p333
      %p335 = pneg %p334
      // Predicated region
      $region9: #{audio_net.2} parent=5 // pred_check
        _
      $region10: #{audio_net.2} parent=5 // pred_check_branch
        %337 = sbr.rel (%p334) target = $region12
      $region11: #{audio_net.2} parent=5 // pred_region
        %s338 = ssub.s32 %s20, 1
        // Predicated region
        $region13: #{audio_net.2} parent=11 // pred_check
          %p339 = pneg %p41
        $region14: #{audio_net.2} parent=11 // pred_check_branch
          %341 = sbr.rel (%p339) target = $region16
        $region15: #{audio_net.2} parent=11 // pred_region
          %s343 = ssub.s32 32, 32
          %344 = vsyncadd [#allocation4], %s343
          %s346 = sshll.u32 %s0, 4
          %s347 = int_to_ptr.vmem [resolvable:$true] %s346
          %349 = dma.vmem_to_smem %s347, 32, [#allocation3], [#allocation4]
        $region16: #{audio_net.2} parent=11 // pred_fallthru
          _
        // Predicated region
        $region17: #{audio_net.2} parent=11 // pred_check
          %p350 = pneg %p88
        $region18: #{audio_net.2} parent=11 // pred_check_branch
          %352 = sbr.rel (%p350) target = $region20
        $region19: #{audio_net.2} parent=11 // pred_region
          _
        $region20: #{audio_net.2} parent=11 // pred_fallthru
          _
        // Predicated region
        $region21: #{audio_net.2} parent=11 // pred_check
          %p353 = pneg %p109
        $region22: #{audio_net.2} parent=11 // pred_check_branch
          %355 = sbr.rel (%p353) target = $region24
        $region23: #{audio_net.2} parent=11 // pred_region
          _
        $region24: #{audio_net.2} parent=11 // pred_fallthru
          _
        // Predicated region
        $region25: #{audio_net.2} parent=11 // pred_check
          %p356 = pneg %p130
        $region26: #{audio_net.2} parent=11 // pred_check_branch
          %358 = sbr.rel (%p356) target = $region28
        $region27: #{audio_net.2} parent=11 // pred_region
          _
        $region28: #{audio_net.2} parent=11 // pred_fallthru
          _
        // Predicated region
        $region29: #{audio_net.2} parent=11 // pred_check
          %p359 = pneg %p151
        $region30: #{audio_net.2} parent=11 // pred_check_branch
          %361 = sbr.rel (%p359) target = $region32
        $region31: #{audio_net.2} parent=11 // pred_region
          _
        $region32: #{audio_net.2} parent=11 // pred_fallthru
          _
        // Predicated region
        $region33: #{audio_net.2} parent=11 // pred_check
          %p362 = pneg %p172
        $region34: #{audio_net.2} parent=11 // pred_check_branch
          %364 = sbr.rel (%p362) target = $region36
        $region35: #{audio_net.2} parent=11 // pred_region
          _
        $region36: #{audio_net.2} parent=11 // pred_fallthru
          _
        // Predicated region
        $region37: #{audio_net.2} parent=11 // pred_check
          %p365 = pneg %p193
        $region38: #{audio_net.2} parent=11 // pred_check_branch
          %367 = sbr.rel (%p365) target = $region40
        $region39: #{audio_net.2} parent=11 // pred_region
          _
        $region40: #{audio_net.2} parent=11 // pred_fallthru
          _
        // Predicated region
        $region41: #{audio_net.2} parent=11 // pred_check
          %p368 = pneg %p214
        $region42: #{audio_net.2} parent=11 // pred_check_branch
          %370 = sbr.rel (%p368) target = $region44
        $region43: #{audio_net.2} parent=11 // pred_region
          _
        $region44: #{audio_net.2} parent=11 // pred_fallthru
          _
        // Predicated region
        $region45: #{audio_net.2} parent=11 // pred_check
          %p371 = pneg %p235
        $region46: #{audio_net.2} parent=11 // pred_check_branch
          %373 = sbr.rel (%p371) target = $region48
        $region47: #{audio_net.2} parent=11 // pred_region
          _
        $region48: #{audio_net.2} parent=11 // pred_fallthru
          _
        // Predicated region
        $region49: #{audio_net.2} parent=11 // pred_check
          %p374 = pneg %p256
        $region50: #{audio_net.2} parent=11 // pred_check_branch
          %376 = sbr.rel (%p374) target = $region52
        $region51: #{audio_net.2} parent=11 // pred_region
          _
        $region52: #{audio_net.2} parent=11 // pred_fallthru
          _
        // Predicated region
        $region53: #{audio_net.2} parent=11 // pred_check
          %p377 = pneg %p277
        $region54: #{audio_net.2} parent=11 // pred_check_branch
          %379 = sbr.rel (%p377) target = $region56
        $region55: #{audio_net.2} parent=11 // pred_region
          _
        $region56: #{audio_net.2} parent=11 // pred_fallthru
          _
        // Predicated region
        $region57: #{audio_net.2} parent=11 // pred_check
          %p380 = pneg %p298
        $region58: #{audio_net.2} parent=11 // pred_check_branch
          %382 = sbr.rel (%p380) target = $region60
        $region59: #{audio_net.2} parent=11 // pred_region
          _
        $region60: #{audio_net.2} parent=11 // pred_fallthru
          _
      $region12: #{audio_net.2} parent=5 // pred_fallthru
        _
      %p383 = scmp.lt.s32.totalorder %s20, 2
      // Predicated region
      $region61: #{audio_net.2} parent=5 // pred_check
        %p384 = pneg %p383
      $region62: #{audio_net.2} parent=5 // pred_check_branch
        %386 = sbr.rel (%p384) target = $region64
      $region63: #{audio_net.2} parent=5 // pred_region
        // Predicated region
        $region65: #{audio_net.2} parent=63 // pred_check
          %p387 = pneg %p61
        $region66: #{audio_net.2} parent=63 // pred_check_branch
          %389 = sbr.rel (%p387) target = $region68
        $region67: #{audio_net.2} parent=63 // pred_region
          %p390 = scmp.lt.s32.totalorder %s20, 1
          %s391 = scalar_select %p390, %s20, 1
          %s392 = smul.addr %s391, 9
          %s393 = smul.addr %s392, 4
          %s394 = scalar_lea.vmem %s1, %s393
        $region68: #{audio_net.2} parent=63 // pred_fallthru
          _
      $region64: #{audio_net.2} parent=5 // pred_fallthru
        _
      %p395 = scmp.le.s32.totalorder 1, %s20
      %p396 = scmp.lt.s32.totalorder %s20, 3
      %p397 = pnand %p395, %p396
      %p398 = pneg %p397
      // Predicated region
      $region69: #{audio_net.2} parent=5 // pred_check
        _
      $region70: #{audio_net.2} parent=5 // pred_check_branch
        %400 = sbr.rel (%p397) target = $region72
      $region71: #{audio_net.2} parent=5 // pred_region
        %s401 = ssub.s32 %s20, 1
        // Predicated region
        $region73: #{audio_net.2} parent=71 // pred_check
          %p402 = pneg %p41
        $region74: #{audio_net.2} parent=71 // pred_check_branch
          %404 = sbr.rel (%p402) target = $region76
        $region75: #{audio_net.2} parent=71 // pred_region
          %405 = dma.done [#allocation4], 32
        $region76: #{audio_net.2} parent=71 // pred_fallthru
          _
        %406 = sfence
        %p407 = pneg %p41
        %p408 = pneg %p38
        %p409 = scmp.lt.s32.totalorder %s25, 1
        %s410 = scalar_select %p409, %s25, 1
        %s411 = smul.addr %s410, 9
        %s412 = smul.addr %s411, 4
        %s413 = scalar_lea.vmem %s1, %s412
        %p414 = pneg %p67
        %p415 = pneg %p64
        %p416 = pneg %p88
        %p417 = pneg %p85
        %p418 = pneg %p109
        %p419 = pneg %p106
        %p420 = pneg %p130
        %p421 = pneg %p127
        %p422 = pneg %p151
        %p423 = pneg %p148
        %p424 = pneg %p172
        %p425 = pneg %p169
        %p426 = pneg %p193
        %p427 = pneg %p190
        %p428 = pneg %p214
        %p429 = pneg %p211
        %p430 = pneg %p235
        %p431 = pneg %p232
        %p432 = pneg %p256
        %p433 = pneg %p253
        %p434 = pneg %p277
        %p435 = pneg %p274
        %p436 = pneg %p298
        %p437 = pneg %p295
        %p438 = pneg %p324
        %p439 = pneg %p321
        %p440 = scmp.lt.s32.totalorder %s25, 1
        %s441 = scalar_select %p440, %s25, 1
        %s442 = smul.addr %s441, 2
        %s443 = smul.addr %s442, 8
        %s444 = scalar_lea.vmem %s13, %s443
        %p445 = scmp.lt.s32.totalorder %s25, 1
        %s446 = scalar_select %p445, %s25, 1
        %s447 = smul.addr %s446, 9
        %s448 = smul.addr %s447, 4
        %s449 = scalar_lea.vmem %s1, %s448
        %p450 = scmp.lt.s32.totalorder %s25, 1
        %s451 = scalar_select %p450, %s25, 1
        %s452 = smul.addr %s451, 2
        %s453 = smul.addr %s452, 8
        %s454 = scalar_lea.vmem %s13, %s453
        %v456 = vld [vmem:[%s449] sm:$0xf]
        %v457 = vld [vmem:[%s449 + $0x4] sm:$0xf]
        %v458 = vld [vmem:[%s449 + $0x8] sm:$0xf]
        %v459 = vld [vmem:[%s449 + $0xc] sm:$0xf]
        %v460 = vld [vmem:[%s449 + $0x10] sm:$0xf]
        %v461 = vld [vmem:[%s449 + $0x14] sm:$0xf]
        %v462 = vld [vmem:[%s449 + $0x18] sm:$0xf]
        %v463 = vld [vmem:[%s449 + $0x1c] sm:$0xf]
        %v464 = vld [vmem:[%s449 + $0x20] sm:$0x1]
        %v465 = vld [vmem:[%s2] sm:$0xf]
        %v466 = vld [vmem:[%s3] sm:$0xf]
        %v476 = vunpack.c.l.b16 %v456
        %v477 = vunpack.c.l.b16 %v457
        %v478 = vunpack.c.l.b16 %v458
        %v479 = vunpack.c.l.b16 %v459
        %v480 = vunpack.c.l.b16 %v460
        %v481 = vunpack.c.l.b16 %v461
        %v482 = vunpack.c.l.b16 %v462
        %v483 = vunpack.c.l.b16 %v463
        %v484 = vunpack.c.l.b16 %v464
        %v485 = vpack.c.b16 %v477, %v476
        %v486 = vpack.c.b16 %v479, %v478
        %v487 = vpack.c.b16 %v481, %v480
        %v488 = vpack.c.b16 %v483, %v482
        %v489 = vpack.c.b16 %v484, %v484
        %vm490 = vsmask.f32 7424
        %v492 = vshrl.u32 %v485, 16
        %v494 = vshll.u32 %v485, 16
        %v496 = vrot.slane %v494, 1
        %v497 = vor.u32 %v492, %v496
        %v499 = vshll.u32 %v486, 16
        %v501 = vrot.slane %v499, 1
        %v502 = vsel %vm490, %v497, %v501
        %v503 = vshrl.u32 %v486, 16
        %v505 = vor.u32 %v503, %v501
        %v507 = vshll.u32 %v487, 16
        %v509 = vrot.slane %v507, 1
        %v510 = vsel %vm490, %v505, %v509
        %v511 = vshrl.u32 %v487, 16
        %v513 = vor.u32 %v511, %v509
        %v515 = vshll.u32 %v488, 16
        %v517 = vrot.slane %v515, 1
        %v518 = vsel %vm490, %v513, %v517
        %v519 = vshrl.u32 %v488, 16
        %v521 = vor.u32 %v519, %v517
        %v523 = vshll.u32 %v489, 16
        %v525 = vrot.slane %v523, 1
        %v526 = vsel %vm490, %v521, %v525
        %vm527 = vcmask 64512
        %v529 = vsel %vm527, %v502, 0
        %v532 = vsel %vm527, %v510, 0
        %v535 = vsel %vm527, %v518, 0
        %v538 = vsel %vm527, %v526, 0
        %vm540 = vcmask 1043456
        %v542 = vsel %vm540, %v466, 0
        %544 = vmatprep.subr.bf16.mxu0 0
        %545 = vmatpush1.bf16.msra.mxu0 0
        %546 = vmatprep.subr.bf16.mxu0 0
        %547 = vmatpush1.bf16.msra.mxu0 0
        %548 = vmatprep.subr.bf16.mxu0 0
        %549 = vmatpush1.bf16.msra.mxu0 0
        %550 = vmatprep.subr.bf16.mxu0 0
        %551 = vmatpush1.bf16.msra.mxu0 0
        %552 = vmatprep.subr.bf16.mxu0 0
        %553 = vmatpush1.bf16.msra.mxu0 0
        %554 = vmatprep.subr.bf16.mxu0 0
        %555 = vmatpush1.bf16.msra.mxu0 0
        %556 = vmatprep.subr.bf16.mxu0 0
        %557 = vmatpush1.bf16.msra.mxu0 0
        %558 = vmatprep.subr.bf16.mxu0 0
        %559 = vmatpush1.bf16.msra.mxu0 %v542
        %560 = vmatprep.subr.bf16.mxu0 0
        %561 = vmatpush2.bf16.msra.mxu0 0
        %562 = vmatprep.subr.bf16.mxu0 0
        %563 = vmatpush2.bf16.msra.mxu0 0
        %564 = vmatprep.subr.bf16.mxu0 0
        %565 = vmatpush2.bf16.msra.mxu0 0
        %566 = vmatprep.subr.bf16.mxu0 0
        %567 = vmatpush2.bf16.msra.mxu0 0
        %568 = vmatprep.subr.bf16.mxu0 0
        %569 = vmatpush2.bf16.msra.mxu0 0
        %570 = vmatprep.subr.bf16.mxu0 0
        %571 = vmatpush2.bf16.msra.mxu0 0
        %572 = vmatprep.subr.bf16.mxu0 0
        %573 = vmatpush2.bf16.msra.mxu0 0
        %574 = vmatprep.subr.bf16.mxu0 0
        %575 = vmatpush2.bf16.msra.mxu0 0
        %576 = vmatprep.mubr.bf16.mxu0 0
        %577 = vmatmul.mubr.bf16.gmra.mxu0 %v529
        %v578 = vpop.f32.mrf.mxu0
        %v579 = vadd.f32 0.0, %v578
        %v580 = vpop.f32.mrf.mxu0
        %v581 = vpop.f32.mrf.mxu0
        %v582 = vadd.f32 0.0, %v581
        %v583 = vpop.f32.mrf.mxu0
        %584 = vmatprep.mubr.bf16.mxu0 0
        %585 = vmatmul.mubr.bf16.gmra.mxu0 %v532
        %v586 = vpop.f32.mrf.mxu0
        %v587 = vadd.f32 0.0, %v586
        %v588 = vpop.f32.mrf.mxu0
        %v589 = vpop.f32.mrf.mxu0
        %v590 = vadd.f32 0.0, %v589
        %v591 = vpop.f32.mrf.mxu0
        %592 = vmatprep.mubr.bf16.mxu0 0
        %593 = vmatmul.mubr.bf16.gmra.mxu0 %v535
        %v594 = vpop.f32.mrf.mxu0
        %v595 = vadd.f32 0.0, %v594
        %v596 = vpop.f32.mrf.mxu0
        %v597 = vpop.f32.mrf.mxu0
        %v598 = vadd.f32 0.0, %v597
        %v599 = vpop.f32.mrf.mxu0
        %600 = vmatprep.mubr.bf16.mxu0 0
        %601 = vmatmul.mubr.bf16.gmra.mxu0 %v538
        %v602 = vpop.f32.mrf.mxu0
        %v603 = vadd.f32 0.0, %v602
        %v604 = vpop.f32.mrf.mxu0
        %v605 = vpop.f32.mrf.mxu0
        %v606 = vadd.f32 0.0, %v605
        %v607 = vpop.f32.mrf.mxu0
        %608 = vdwg.mxu0
        %v609 = vsel %vm527, %v485, 0
        %v611 = vsel %vm527, %v486, 0
        %v613 = vsel %vm527, %v487, 0
        %v615 = vsel %vm527, %v488, 0
        %v618 = vsel %vm540, %v465, 0
        %620 = vmatprep.subr.bf16.mxu0 0
        %621 = vmatpush1.bf16.msra.mxu0 0
        %622 = vmatprep.subr.bf16.mxu0 0
        %623 = vmatpush1.bf16.msra.mxu0 0
        %624 = vmatprep.subr.bf16.mxu0 0
        %625 = vmatpush1.bf16.msra.mxu0 0
        %626 = vmatprep.subr.bf16.mxu0 0
        %627 = vmatpush1.bf16.msra.mxu0 0
        %628 = vmatprep.subr.bf16.mxu0 0
        %629 = vmatpush1.bf16.msra.mxu0 0
        %630 = vmatprep.subr.bf16.mxu0 0
        %631 = vmatpush1.bf16.msra.mxu0 0
        %632 = vmatprep.subr.bf16.mxu0 0
        %633 = vmatpush1.bf16.msra.mxu0 0
        %634 = vmatprep.subr.bf16.mxu0 0
        %635 = vmatpush1.bf16.msra.mxu0 %v618
        %636 = vmatprep.subr.bf16.mxu0 0
        %637 = vmatpush2.bf16.msra.mxu0 0
        %638 = vmatprep.subr.bf16.mxu0 0
        %639 = vmatpush2.bf16.msra.mxu0 0
        %640 = vmatprep.subr.bf16.mxu0 0
        %641 = vmatpush2.bf16.msra.mxu0 0
        %642 = vmatprep.subr.bf16.mxu0 0
        %643 = vmatpush2.bf16.msra.mxu0 0
        %644 = vmatprep.subr.bf16.mxu0 0
        %645 = vmatpush2.bf16.msra.mxu0 0
        %646 = vmatprep.subr.bf16.mxu0 0
        %647 = vmatpush2.bf16.msra.mxu0 0
        %648 = vmatprep.subr.bf16.mxu0 0
        %649 = vmatpush2.bf16.msra.mxu0 0
        %650 = vmatprep.subr.bf16.mxu0 0
        %651 = vmatpush2.bf16.msra.mxu0 0
        %652 = vmatprep.mubr.bf16.mxu0 0
        %653 = vmatmul.mubr.bf16.gmra.mxu0 %v609
        %v654 = vpop.f32.mrf.mxu0
        %v655 = vadd.f32 %v579, %v654
        %v656 = vpop.f32.mrf.mxu0
        %v657 = vpop.f32.mrf.mxu0
        %v658 = vadd.f32 %v582, %v657
        %v659 = vpop.f32.mrf.mxu0
        %660 = vmatprep.mubr.bf16.mxu0 0
        %661 = vmatmul.mubr.bf16.gmra.mxu0 %v611
        %v662 = vpop.f32.mrf.mxu0
        %v663 = vadd.f32 %v587, %v662
        %v664 = vpop.f32.mrf.mxu0
        %v665 = vpop.f32.mrf.mxu0
        %v666 = vadd.f32 %v590, %v665
        %v667 = vpop.f32.mrf.mxu0
        %668 = vmatprep.mubr.bf16.mxu0 0
        %669 = vmatmul.mubr.bf16.gmra.mxu0 %v613
        %v670 = vpop.f32.mrf.mxu0
        %v671 = vadd.f32 %v595, %v670
        %v672 = vpop.f32.mrf.mxu0
        %v673 = vpop.f32.mrf.mxu0
        %v674 = vadd.f32 %v598, %v673
        %v675 = vpop.f32.mrf.mxu0
        %676 = vmatprep.mubr.bf16.mxu0 0
        %677 = vmatmul.mubr.bf16.gmra.mxu0 %v615
        %v678 = vpop.f32.mrf.mxu0
        %v679 = vadd.f32 %v603, %v678
        %v680 = vpop.f32.mrf.mxu0
        %v681 = vpop.f32.mrf.mxu0
        %v682 = vadd.f32 %v606, %v681
        %v683 = vpop.f32.mrf.mxu0
        %684 = vdwg.mxu0
        %v685 = vmax.f32 %v655, 0.0
        %v686 = vmax.f32 %v658, 0.0
        %v687 = vmax.f32 %v663, 0.0
        %v688 = vmax.f32 %v666, 0.0
        %v689 = vmax.f32 %v671, 0.0
        %v690 = vmax.f32 %v674, 0.0
        %v691 = vmax.f32 %v679, 0.0
        %v692 = vmax.f32 %v682, 0.0
        %693 = vadd.xlane.f32.xlu0 %v685
        %v694 = vpop.xlane.xlu0 %693
        %695 = vadd.xlane.f32.xlu0 %v686
        %v696 = vpop.xlane.xlu0 %695
        %697 = vadd.xlane.f32.xlu0 %v687
        %v698 = vpop.xlane.xlu0 %697
        %699 = vadd.xlane.f32.xlu0 %v688
        %v700 = vpop.xlane.xlu0 %699
        %701 = vadd.xlane.f32.xlu0 %v689
        %v702 = vpop.xlane.xlu0 %701
        %703 = vadd.xlane.f32.xlu0 %v690
        %v704 = vpop.xlane.xlu0 %703
        %705 = vadd.xlane.f32.xlu0 %v691
        %v706 = vpop.xlane.xlu0 %705
        %707 = vadd.xlane.f32.xlu0 %v692
        %v708 = vpop.xlane.xlu0 %707
        %v709 = vmul.f32 %v685, %v685
        %v710 = vmul.f32 %v686, %v686
        %v711 = vmul.f32 %v687, %v687
        %v712 = vmul.f32 %v688, %v688
        %v713 = vmul.f32 %v689, %v689
        %v714 = vmul.f32 %v690, %v690
        %v715 = vmul.f32 %v691, %v691
        %v716 = vmul.f32 %v692, %v692
        %717 = vadd.xlane.f32.xlu0 %v709
        %v718 = vpop.xlane.xlu0 %717
        %719 = vadd.xlane.f32.xlu0 %v710
        %v720 = vpop.xlane.xlu0 %719
        %721 = vadd.xlane.f32.xlu0 %v711
        %v722 = vpop.xlane.xlu0 %721
        %723 = vadd.xlane.f32.xlu0 %v712
        %v724 = vpop.xlane.xlu0 %723
        %725 = vadd.xlane.f32.xlu0 %v713
        %v726 = vpop.xlane.xlu0 %725
        %727 = vadd.xlane.f32.xlu0 %v714
        %v728 = vpop.xlane.xlu0 %727
        %729 = vadd.xlane.f32.xlu0 %v715
        %v730 = vpop.xlane.xlu0 %729
        %731 = vadd.xlane.f32.xlu0 %v716
        %v732 = vpop.xlane.xlu0 %731
        %v733 = vmul.f32 %v694, 0.0078125
        %v734 = vmul.f32 %v696, 0.0078125
        %v735 = vmul.f32 %v698, 0.0078125
        %v736 = vmul.f32 %v700, 0.0078125
        %v737 = vmul.f32 %v702, 0.0078125
        %v738 = vmul.f32 %v704, 0.0078125
        %v739 = vmul.f32 %v706, 0.0078125
        %v740 = vmul.f32 %v708, 0.0078125
        %v741 = vmul.f32 %v718, 0.0078125
        %v742 = vmul.f32 %v720, 0.0078125
        %v743 = vmul.f32 %v722, 0.0078125
        %v744 = vmul.f32 %v724, 0.0078125
        %v745 = vmul.f32 %v726, 0.0078125
        %v746 = vmul.f32 %v728, 0.0078125
        %v747 = vmul.f32 %v730, 0.0078125
        %v748 = vmul.f32 %v732, 0.0078125
        %v749 = vmul.f32 %v733, %v733
        %v750 = vmul.f32 %v734, %v734
        %v751 = vmul.f32 %v735, %v735
        %v752 = vmul.f32 %v736, %v736
        %v753 = vmul.f32 %v737, %v737
        %v754 = vmul.f32 %v738, %v738
        %v755 = vmul.f32 %v739, %v739
        %v756 = vmul.f32 %v740, %v740
        %v757 = vsub.f32 %v741, %v749
        %v758 = vsub.f32 %v742, %v750
        %v759 = vsub.f32 %v743, %v751
        %v760 = vsub.f32 %v744, %v752
        %v761 = vsub.f32 %v745, %v753
        %v762 = vsub.f32 %v746, %v754
        %v763 = vsub.f32 %v747, %v755
        %v764 = vsub.f32 %v748, %v756
        %v765 = vmax.f32 %v757, 0.0
        %v766 = vmax.f32 %v758, 0.0
        %v767 = vmax.f32 %v759, 0.0
        %v768 = vmax.f32 %v760, 0.0
        %v769 = vmax.f32 %v761, 0.0
        %v770 = vmax.f32 %v762, 0.0
        %v771 = vmax.f32 %v763, 0.0
        %v772 = vmax.f32 %v764, 0.0
        %v773 = vadd.f32 %v765, 1e-05
        %v774 = vadd.f32 %v766, 1e-05
        %v775 = vadd.f32 %v767, 1e-05
        %v776 = vadd.f32 %v768, 1e-05
        %v777 = vadd.f32 %v769, 1e-05
        %v778 = vadd.f32 %v770, 1e-05
        %v779 = vadd.f32 %v771, 1e-05
        %v780 = vadd.f32 %v772, 1e-05
        %v781 = vrsqrt.pop %v773
        %v782 = vrsqrt.pop %v774
        %v783 = vrsqrt.pop %v775
        %v784 = vrsqrt.pop %v776
        %v785 = vrsqrt.pop %v777
        %v786 = vrsqrt.pop %v778
        %v787 = vrsqrt.pop %v779
        %v788 = vrsqrt.pop %v780
        %v789 = vsub.f32 %v685, %v733
        %v790 = vsub.f32 %v686, %v734
        %v791 = vsub.f32 %v687, %v735
        %v792 = vsub.f32 %v688, %v736
        %v793 = vsub.f32 %v689, %v737
        %v794 = vsub.f32 %v690, %v738
        %v795 = vsub.f32 %v691, %v739
        %v796 = vsub.f32 %v692, %v740
        %v797 = vmul.f32 %v789, %v781
        %v798 = vmul.f32 %v790, %v782
        %v799 = vmul.f32 %v791, %v783
        %v800 = vmul.f32 %v792, %v784
        %v801 = vmul.f32 %v793, %v785
        %v802 = vmul.f32 %v794, %v786
        %v803 = vmul.f32 %v795, %v787
        %v804 = vmul.f32 %v796, %v788
        %v805 = vld [vmem:[%s4] sm:$0x1]
        %v807 = vlaneseq
        %v808 = vshrl.u32 %v807, 7
        %v809 = vsub.s32 0, %v808
        %v810 = vrot.slane %v805, %v809
        %v812 = vmul.f32 %v797, %v810
        %v813 = vmul.f32 %v798, %v810
        %v814 = vmul.f32 %v799, %v810
        %v815 = vmul.f32 %v800, %v810
        %v816 = vmul.f32 %v801, %v810
        %v817 = vmul.f32 %v802, %v810
        %v818 = vmul.f32 %v803, %v810
        %v819 = vmul.f32 %v804, %v810
        %v820 = vld [vmem:[%s5] sm:$0x1]
        %v822 = vlaneseq
        %v823 = vshrl.u32 %v822, 7
        %v824 = vsub.s32 0, %v823
        %v825 = vrot.slane %v820, %v824
        %v827 = vadd.f32 %v812, %v825
        %v828 = vadd.f32 %v813, %v825
        %v829 = vadd.f32 %v814, %v825
        %v830 = vadd.f32 %v815, %v825
        %v831 = vadd.f32 %v816, %v825
        %v832 = vadd.f32 %v817, %v825
        %v833 = vadd.f32 %v818, %v825
        %v834 = vadd.f32 %v819, %v825
        %v835 = vpack.c.bf16 %v828, %v827
        %v836 = vpack.c.bf16 %v830, %v829
        %v837 = vpack.c.bf16 %v832, %v831
        %v838 = vpack.c.bf16 %v834, %v833
        %v839 = vld [vmem:[%s6] sm:$0xff]
        %v840 = vld [vmem:[%s6 + $0x8] sm:$0xff]
        %v841 = vld [vmem:[%s6 + $0x10] sm:$0xff]
        %v842 = vld [vmem:[%s6 + $0x18] sm:$0xff]
        %v843 = vld [vmem:[%s6 + $0x20] sm:$0xff]
        %v844 = vld [vmem:[%s6 + $0x28] sm:$0xff]
        %v845 = vld [vmem:[%s6 + $0x30] sm:$0xff]
        %v846 = vld [vmem:[%s6 + $0x38] sm:$0xff]
        %v847 = vld [vmem:[%s6 + $0x40] sm:$0xff]
        %v848 = vld [vmem:[%s6 + $0x48] sm:$0xff]
        %v849 = vld [vmem:[%s6 + $0x50] sm:$0xff]
        %v850 = vld [vmem:[%s6 + $0x58] sm:$0xff]
        %v851 = vld [vmem:[%s6 + $0x60] sm:$0xff]
        %v852 = vld [vmem:[%s6 + $0x68] sm:$0xff]
        %v853 = vld [vmem:[%s6 + $0x70] sm:$0xff]
        %v854 = vld [vmem:[%s6 + $0x78] sm:$0xff]
        %v871 = vunpack.c.l.b16 %v839
        %v872 = vunpack.c.h.b16 %v839
        %v873 = vunpack.c.l.b16 %v840
        %v874 = vunpack.c.h.b16 %v840
        %v875 = vunpack.c.l.b16 %v841
        %v876 = vunpack.c.h.b16 %v841
        %v877 = vunpack.c.l.b16 %v842
        %v878 = vunpack.c.h.b16 %v842
        %v879 = vunpack.c.l.b16 %v843
        %v880 = vunpack.c.h.b16 %v843
        %v881 = vunpack.c.l.b16 %v844
        %v882 = vunpack.c.h.b16 %v844
        %v883 = vunpack.c.l.b16 %v845
        %v884 = vunpack.c.h.b16 %v845
        %v885 = vunpack.c.l.b16 %v846
        %v886 = vunpack.c.h.b16 %v846
        %v887 = vunpack.c.l.b16 %v847
        %v888 = vunpack.c.h.b16 %v847
        %v889 = vunpack.c.l.b16 %v848
        %v890 = vunpack.c.h.b16 %v848
        %v891 = vunpack.c.l.b16 %v849
        %v892 = vunpack.c.h.b16 %v849
        %v893 = vunpack.c.l.b16 %v850
        %v894 = vunpack.c.h.b16 %v850
        %v895 = vunpack.c.l.b16 %v851
        %v896 = vunpack.c.h.b16 %v851
        %v897 = vunpack.c.l.b16 %v852
        %v898 = vunpack.c.h.b16 %v852
        %v899 = vunpack.c.l.b16 %v853
        %v900 = vunpack.c.h.b16 %v853
        %v901 = vunpack.c.l.b16 %v854
        %v902 = vunpack.c.h.b16 %v854
        %v903 = vpack.c.b16 %v873, %v871
        %v904 = vpack.c.b16 %v874, %v872
        %v905 = vpack.c.b16 %v877, %v875
        %v906 = vpack.c.b16 %v878, %v876
        %v907 = vpack.c.b16 %v881, %v879
        %v908 = vpack.c.b16 %v882, %v880
        %v909 = vpack.c.b16 %v885, %v883
        %v910 = vpack.c.b16 %v886, %v884
        %v911 = vpack.c.b16 %v889, %v887
        %v912 = vpack.c.b16 %v890, %v888
        %v913 = vpack.c.b16 %v893, %v891
        %v914 = vpack.c.b16 %v894, %v892
        %v915 = vpack.c.b16 %v897, %v895
        %v916 = vpack.c.b16 %v898, %v896
        %v917 = vpack.c.b16 %v901, %v899
        %v918 = vpack.c.b16 %v902, %v900
        %935 = vmatprep.subr.bf16.mxu0 %v918
        %936 = vmatpush1.bf16.msra.mxu0 %v917
        %937 = vmatprep.subr.bf16.mxu0 %v916
        %938 = vmatpush1.bf16.msra.mxu0 %v915
        %939 = vmatprep.subr.bf16.mxu0 %v914
        %940 = vmatpush1.bf16.msra.mxu0 %v913
        %941 = vmatprep.subr.bf16.mxu0 %v912
        %942 = vmatpush1.bf16.msra.mxu0 %v911
        %943 = vmatprep.subr.bf16.mxu0 %v910
        %944 = vmatpush1.bf16.msra.mxu0 %v909
        %945 = vmatprep.subr.bf16.mxu0 %v908
        %946 = vmatpush1.bf16.msra.mxu0 %v907
        %947 = vmatprep.subr.bf16.mxu0 %v906
        %948 = vmatpush1.bf16.msra.mxu0 %v905
        %949 = vmatprep.subr.bf16.mxu0 %v904
        %950 = vmatpush1.bf16.msra.mxu0 %v903
        %951 = vmatprep.subr.bf16.mxu0 0
        %952 = vmatpush2.bf16.msra.mxu0 0
        %953 = vmatprep.subr.bf16.mxu0 0
        %954 = vmatpush2.bf16.msra.mxu0 0
        %955 = vmatprep.subr.bf16.mxu0 0
        %956 = vmatpush2.bf16.msra.mxu0 0
        %957 = vmatprep.subr.bf16.mxu0 0
        %958 = vmatpush2.bf16.msra.mxu0 0
        %959 = vmatprep.subr.bf16.mxu0 0
        %960 = vmatpush2.bf16.msra.mxu0 0
        %961 = vmatprep.subr.bf16.mxu0 0
        %962 = vmatpush2.bf16.msra.mxu0 0
        %963 = vmatprep.subr.bf16.mxu0 0
        %964 = vmatpush2.bf16.msra.mxu0 0
        %965 = vmatprep.subr.bf16.mxu0 0
        %966 = vmatpush2.bf16.msra.mxu0 0
        %967 = vmatprep.mubr.bf16.mxu0 0
        %968 = vmatmul.mubr.bf16.gmra.mxu0 %v835
        %v969 = vpop.f32.mrf.mxu0
        %v970 = vadd.f32 0.0, %v969
        %v971 = vpop.f32.mrf.mxu0
        %v972 = vadd.f32 0.0, %v971
        %v973 = vpop.f32.mrf.mxu0
        %v974 = vadd.f32 0.0, %v973
        %v975 = vpop.f32.mrf.mxu0
        %v976 = vadd.f32 0.0, %v975
        %977 = vmatprep.mubr.bf16.mxu0 0
        %978 = vmatmul.mubr.bf16.gmra.mxu0 %v836
        %v979 = vpop.f32.mrf.mxu0
        %v980 = vadd.f32 0.0, %v979
        %v981 = vpop.f32.mrf.mxu0
        %v982 = vadd.f32 0.0, %v981
        %v983 = vpop.f32.mrf.mxu0
        %v984 = vadd.f32 0.0, %v983
        %v985 = vpop.f32.mrf.mxu0
        %v986 = vadd.f32 0.0, %v985
        %987 = vmatprep.mubr.bf16.mxu0 0
        %988 = vmatmul.mubr.bf16.gmra.mxu0 %v837
        %v989 = vpop.f32.mrf.mxu0
        %v990 = vadd.f32 0.0, %v989
        %v991 = vpop.f32.mrf.mxu0
        %v992 = vadd.f32 0.0, %v991
        %v993 = vpop.f32.mrf.mxu0
        %v994 = vadd.f32 0.0, %v993
        %v995 = vpop.f32.mrf.mxu0
        %v996 = vadd.f32 0.0, %v995
        %997 = vmatprep.mubr.bf16.mxu0 0
        %998 = vmatmul.mubr.bf16.gmra.mxu0 %v838
        %v999 = vpop.f32.mrf.mxu0
        %v1000 = vadd.f32 0.0, %v999
        %v1001 = vpop.f32.mrf.mxu0
        %v1002 = vadd.f32 0.0, %v1001
        %v1003 = vpop.f32.mrf.mxu0
        %v1004 = vadd.f32 0.0, %v1003
        %v1005 = vpop.f32.mrf.mxu0
        %v1006 = vadd.f32 0.0, %v1005
        %1007 = vdwg.mxu0
        %vm1008 = vcmp.ge.f32.partialorder %v970, 0.0
        %vm1009 = vcmp.ge.f32.partialorder %v972, 0.0
        %vm1010 = vcmp.ge.f32.partialorder %v974, 0.0
        %vm1011 = vcmp.ge.f32.partialorder %v976, 0.0
        %vm1012 = vcmp.ge.f32.partialorder %v980, 0.0
        %vm1013 = vcmp.ge.f32.partialorder %v982, 0.0
        %vm1014 = vcmp.ge.f32.partialorder %v984, 0.0
        %vm1015 = vcmp.ge.f32.partialorder %v986, 0.0
        %vm1016 = vcmp.ge.f32.partialorder %v990, 0.0
        %vm1017 = vcmp.ge.f32.partialorder %v992, 0.0
        %vm1018 = vcmp.ge.f32.partialorder %v994, 0.0
        %vm1019 = vcmp.ge.f32.partialorder %v996, 0.0
        %vm1020 = vcmp.ge.f32.partialorder %v1000, 0.0
        %vm1021 = vcmp.ge.f32.partialorder %v1002, 0.0
        %vm1022 = vcmp.ge.f32.partialorder %v1004, 0.0
        %vm1023 = vcmp.ge.f32.partialorder %v1006, 0.0
        %s1024 = sld [smem:[#allocation3]]
        %v1025 = vstv %s1024
        %v1026 = vmul.f32 %v1025, %v970
        %v1027 = vmul.f32 %v1025, %v972
        %v1028 = vmul.f32 %v1025, %v974
        %v1029 = vmul.f32 %v1025, %v976
        %v1030 = vmul.f32 %v1025, %v980
        %v1031 = vmul.f32 %v1025, %v982
        %v1032 = vmul.f32 %v1025, %v984
        %v1033 = vmul.f32 %v1025, %v986
        %v1034 = vmul.f32 %v1025, %v990
        %v1035 = vmul.f32 %v1025, %v992
        %v1036 = vmul.f32 %v1025, %v994
        %v1037 = vmul.f32 %v1025, %v996
        %v1038 = vmul.f32 %v1025, %v1000
        %v1039 = vmul.f32 %v1025, %v1002
        %v1040 = vmul.f32 %v1025, %v1004
        %v1041 = vmul.f32 %v1025, %v1006
        %v1042 = vsel %vm1008, %v970, %v1026
        %v1043 = vsel %vm1009, %v972, %v1027
        %v1044 = vsel %vm1010, %v974, %v1028
        %v1045 = vsel %vm1011, %v976, %v1029
        %v1046 = vsel %vm1012, %v980, %v1030
        %v1047 = vsel %vm1013, %v982, %v1031
        %v1048 = vsel %vm1014, %v984, %v1032
        %v1049 = vsel %vm1015, %v986, %v1033
        %v1050 = vsel %vm1016, %v990, %v1034
        %v1051 = vsel %vm1017, %v992, %v1035
        %v1052 = vsel %vm1018, %v994, %v1036
        %v1053 = vsel %vm1019, %v996, %v1037
        %v1054 = vsel %vm1020, %v1000, %v1038
        %v1055 = vsel %vm1021, %v1002, %v1039
        %v1056 = vsel %vm1022, %v1004, %v1040
        %v1057 = vsel %vm1023, %v1006, %v1041
        %v1058 = vadd.f32 %v1042, %v1044
        %v1059 = vadd.f32 %v1058, %v1046
        %v1060 = vadd.f32 %v1059, %v1048
        %v1061 = vadd.f32 %v1060, %v1050
        %v1062 = vadd.f32 %v1061, %v1052
        %v1063 = vadd.f32 %v1062, %v1054
        %v1064 = vadd.f32 %v1063, %v1056
        %v1065 = vrot.slane %v1064, 4
        %v1066 = vadd.f32 %v1064, %v1065
        %v1067 = vrot.slane %v1066, 2
        %v1068 = vadd.f32 %v1066, %v1067
        %v1069 = vrot.slane %v1068, 1
        %v1070 = vadd.f32 %v1068, %v1069
        %v1071 = vadd.f32 %v1043, %v1045
        %v1072 = vadd.f32 %v1071, %v1047
        %v1073 = vadd.f32 %v1072, %v1049
        %v1074 = vadd.f32 %v1073, %v1051
        %v1075 = vadd.f32 %v1074, %v1053
        %v1076 = vadd.f32 %v1075, %v1055
        %v1077 = vadd.f32 %v1076, %v1057
        %v1078 = vrot.slane %v1077, 4
        %v1079 = vadd.f32 %v1077, %v1078
        %v1080 = vrot.slane %v1079, 2
        %v1081 = vadd.f32 %v1079, %v1080
        %v1082 = vrot.slane %v1081, 1
        %v1083 = vadd.f32 %v1081, %v1082
        %v1084 = vmul.f32 %v1042, %v1042
        %v1085 = vmul.f32 %v1043, %v1043
        %v1086 = vmul.f32 %v1044, %v1044
        %v1087 = vmul.f32 %v1045, %v1045
        %v1088 = vmul.f32 %v1046, %v1046
        %v1089 = vmul.f32 %v1047, %v1047
        %v1090 = vmul.f32 %v1048, %v1048
        %v1091 = vmul.f32 %v1049, %v1049
        %v1092 = vmul.f32 %v1050, %v1050
        %v1093 = vmul.f32 %v1051, %v1051
        %v1094 = vmul.f32 %v1052, %v1052
        %v1095 = vmul.f32 %v1053, %v1053
        %v1096 = vmul.f32 %v1054, %v1054
        %v1097 = vmul.f32 %v1055, %v1055
        %v1098 = vmul.f32 %v1056, %v1056
        %v1099 = vmul.f32 %v1057, %v1057
        %v1100 = vadd.f32 %v1084, %v1086
        %v1101 = vadd.f32 %v1100, %v1088
        %v1102 = vadd.f32 %v1101, %v1090
        %v1103 = vadd.f32 %v1102, %v1092
        %v1104 = vadd.f32 %v1103, %v1094
        %v1105 = vadd.f32 %v1104, %v1096
        %v1106 = vadd.f32 %v1105, %v1098
        %v1107 = vrot.slane %v1106, 4
        %v1108 = vadd.f32 %v1106, %v1107
        %v1109 = vrot.slane %v1108, 2
        %v1110 = vadd.f32 %v1108, %v1109
        %v1111 = vrot.slane %v1110, 1
        %v1112 = vadd.f32 %v1110, %v1111
        %v1113 = vadd.f32 %v1085, %v1087
        %v1114 = vadd.f32 %v1113, %v1089
        %v1115 = vadd.f32 %v1114, %v1091
        %v1116 = vadd.f32 %v1115, %v1093
        %v1117 = vadd.f32 %v1116, %v1095
        %v1118 = vadd.f32 %v1117, %v1097
        %v1119 = vadd.f32 %v1118, %v1099
        %v1120 = vrot.slane %v1119, 4
        %v1121 = vadd.f32 %v1119, %v1120
        %v1122 = vrot.slane %v1121, 2
        %v1123 = vadd.f32 %v1121, %v1122
        %v1124 = vrot.slane %v1123, 1
        %v1125 = vadd.f32 %v1123, %v1124
        %v1126 = vadd.f32 %v1070, %v1083
        %1127 = vadd.xlane.f32.xlu0 %v1126
        %v1128 = vpop.xlane.xlu0 %1127
        %v1129 = vadd.f32 %v1112, %v1125
        %1130 = vadd.xlane.f32.xlu0 %v1129
        %v1131 = vpop.xlane.xlu0 %1130
        %v1132 = vmul.f32 %v1128, 6.1035156e-05
        %v1133 = vmul.f32 %v1131, 6.1035156e-05
        %v1134 = vmul.f32 %v1132, %v1132
        %v1135 = vsub.f32 %v1133, %v1134
        %v1136 = vmax.f32 %v1135, 0.0
        %v1137 = vadd.f32 %v1136, 1e-08
        %v1138 = vrsqrt.pop %v1137
        %v1139 = vld [vmem:[%s7] sm:$0x3]
        %v1140 = vmul.f32 %v1139, %v1138
        %v1141 = vld [vmem:[%s8] sm:$0x3]
        %v1142 = vmul.f32 %v1132, %v1140
        %v1143 = vsub.f32 %v1141, %v1142
        %v1145 = vlaneseq
        %v1146 = vshrl.u32 %v1145, 7
        %v1147 = vsub.s32 0, %v1146
        %v1148 = vrot.slane %v1140, %v1147
        %v1149 = vlaneseq
        %v1150 = vshrl.u32 %v1149, 7
        %v1151 = vsub.s32 1, %v1150
        %v1152 = vrot.slane %v1140, %v1151
        %v1155 = vmul.f32 %v1042, %v1148
        %v1156 = vmul.f32 %v1043, %v1152
        %v1157 = vmul.f32 %v1044, %v1148
        %v1158 = vmul.f32 %v1045, %v1152
        %v1159 = vmul.f32 %v1046, %v1148
        %v1160 = vmul.f32 %v1047, %v1152
        %v1161 = vmul.f32 %v1048, %v1148
        %v1162 = vmul.f32 %v1049, %v1152
        %v1163 = vmul.f32 %v1050, %v1148
        %v1164 = vmul.f32 %v1051, %v1152
        %v1165 = vmul.f32 %v1052, %v1148
        %v1166 = vmul.f32 %v1053, %v1152
        %v1167 = vmul.f32 %v1054, %v1148
        %v1168 = vmul.f32 %v1055, %v1152
        %v1169 = vmul.f32 %v1056, %v1148
        %v1170 = vmul.f32 %v1057, %v1152
        %v1172 = vlaneseq
        %v1173 = vshrl.u32 %v1172, 7
        %v1174 = vsub.s32 0, %v1173
        %v1175 = vrot.slane %v1143, %v1174
        %v1176 = vlaneseq
        %v1177 = vshrl.u32 %v1176, 7
        %v1178 = vsub.s32 1, %v1177
        %v1179 = vrot.slane %v1143, %v1178
        %v1182 = vadd.f32 %v1155, %v1175
        %v1183 = vadd.f32 %v1156, %v1179
        %v1184 = vadd.f32 %v1157, %v1175
        %v1185 = vadd.f32 %v1158, %v1179
        %v1186 = vadd.f32 %v1159, %v1175
        %v1187 = vadd.f32 %v1160, %v1179
        %v1188 = vadd.f32 %v1161, %v1175
        %v1189 = vadd.f32 %v1162, %v1179
        %v1190 = vadd.f32 %v1163, %v1175
        %v1191 = vadd.f32 %v1164, %v1179
        %v1192 = vadd.f32 %v1165, %v1175
        %v1193 = vadd.f32 %v1166, %v1179
        %v1194 = vadd.f32 %v1167, %v1175
        %v1195 = vadd.f32 %v1168, %v1179
        %v1196 = vadd.f32 %v1169, %v1175
        %v1197 = vadd.f32 %v1170, %v1179
        %v1198 = vld [vmem:[%s9] sm:$0x77]
        %vm1215 = vcmask 1040384
        %v1216 = vrot.slane %v1182, 7
        %v1217 = vrot.slane %v1183, 7
        %v1218 = vrot.slane %v1184, 7
        %v1219 = vsel %vm1215, %v1216, %v1218
        %v1220 = vrot.slane %v1185, 7
        %v1221 = vsel %vm1215, %v1217, %v1220
        %v1222 = vrot.slane %v1186, 7
        %v1223 = vsel %vm1215, %v1218, %v1222
        %v1224 = vrot.slane %v1187, 7
        %v1225 = vsel %vm1215, %v1220, %v1224
        %v1226 = vrot.slane %v1188, 7
        %v1227 = vsel %vm1215, %v1222, %v1226
        %v1228 = vrot.slane %v1189, 7
        %v1229 = vsel %vm1215, %v1224, %v1228
        %v1230 = vrot.slane %v1190, 7
        %v1231 = vsel %vm1215, %v1226, %v1230
        %v1232 = vrot.slane %v1191, 7
        %v1233 = vsel %vm1215, %v1228, %v1232
        %v1234 = vrot.slane %v1192, 7
        %v1235 = vsel %vm1215, %v1230, %v1234
        %v1236 = vrot.slane %v1193, 7
        %v1237 = vsel %vm1215, %v1232, %v1236
        %v1238 = vrot.slane %v1194, 7
        %v1239 = vsel %vm1215, %v1234, %v1238
        %v1240 = vrot.slane %v1195, 7
        %v1241 = vsel %vm1215, %v1236, %v1240
        %v1242 = vrot.slane %v1196, 7
        %v1243 = vsel %vm1215, %v1238, %v1242
        %v1244 = vrot.slane %v1197, 7
        %v1245 = vsel %vm1215, %v1240, %v1244
        %v1264 = vsel %vm1215, 0.0, %v1216
        %v1265 = vsel %vm1215, 0.0, %v1217
        %v1266 = vsel %vm1215, %v1242, 0.0
        %v1267 = vsel %vm1215, %v1244, 0.0
        %v1269 = vlaneseq
        %v1270 = vshrl.u32 %v1269, 7
        %v1271 = vsub.s32 0, %v1270
        %v1272 = vrot.slane %v1198, %v1271
        %v1273 = vlaneseq
        %v1274 = vshrl.u32 %v1273, 7
        %v1275 = vsub.s32 4, %v1274
        %v1276 = vrot.slane %v1198, %v1275
        %v1279 = vlaneseq
        %v1280 = vshrl.u32 %v1279, 7
        %v1281 = vsub.s32 0, %v1280
        %v1282 = vrot.slane %v1272, %v1281
        %v1283 = vlaneseq
        %v1284 = vshrl.u32 %v1283, 7
        %v1285 = vsub.s32 0, %v1284
        %v1286 = vrot.slane %v1276, %v1285
        %v1287 = vmul.f32 %v1264, %v1282
        %v1288 = vmul.f32 %v1265, %v1286
        %v1289 = vmul.f32 %v1219, %v1282
        %v1290 = vmul.f32 %v1221, %v1286
        %v1291 = vmul.f32 %v1223, %v1282
        %v1292 = vmul.f32 %v1225, %v1286
        %v1293 = vmul.f32 %v1227, %v1282
        %v1294 = vmul.f32 %v1229, %v1286
        %v1295 = vmul.f32 %v1231, %v1282
        %v1296 = vmul.f32 %v1233, %v1286
        %v1297 = vmul.f32 %v1235, %v1282
        %v1298 = vmul.f32 %v1237, %v1286
        %v1299 = vmul.f32 %v1239, %v1282
        %v1300 = vmul.f32 %v1241, %v1286
        %v1301 = vmul.f32 %v1243, %v1282
        %v1302 = vmul.f32 %v1245, %v1286
        %v1303 = vlaneseq
        %v1304 = vshrl.u32 %v1303, 7
        %v1305 = vsub.s32 1, %v1304
        %v1306 = vrot.slane %v1198, %v1305
        %v1307 = vlaneseq
        %v1308 = vshrl.u32 %v1307, 7
        %v1309 = vsub.s32 5, %v1308
        %v1310 = vrot.slane %v1198, %v1309
        %v1313 = vlaneseq
        %v1314 = vshrl.u32 %v1313, 7
        %v1315 = vsub.s32 1, %v1314
        %v1316 = vrot.slane %v1306, %v1315
        %v1317 = vlaneseq
        %v1318 = vshrl.u32 %v1317, 7
        %v1319 = vsub.s32 1, %v1318
        %v1320 = vrot.slane %v1310, %v1319
        %v1321 = vmul.f32 %v1264, %v1316
        %v1322 = vmul.f32 %v1265, %v1320
        %v1323 = vmul.f32 %v1219, %v1316
        %v1324 = vmul.f32 %v1221, %v1320
        %v1325 = vmul.f32 %v1223, %v1316
        %v1326 = vmul.f32 %v1225, %v1320
        %v1327 = vmul.f32 %v1227, %v1316
        %v1328 = vmul.f32 %v1229, %v1320
        %v1329 = vmul.f32 %v1231, %v1316
        %v1330 = vmul.f32 %v1233, %v1320
        %v1331 = vmul.f32 %v1235, %v1316
        %v1332 = vmul.f32 %v1237, %v1320
        %v1333 = vmul.f32 %v1239, %v1316
        %v1334 = vmul.f32 %v1241, %v1320
        %v1335 = vmul.f32 %v1243, %v1316
        %v1336 = vmul.f32 %v1245, %v1320
        %v1337 = vmul.f32 %v1266, %v1316
        %v1338 = vmul.f32 %v1267, %v1320
        %vm1357 = vcmask 1046528
        %v1358 = vrot.slane %v1321, 1
        %v1359 = vrot.slane %v1323, 1
        %v1360 = vsel %vm1357, %v1358, %v1359
        %v1361 = vrot.slane %v1322, 1
        %v1362 = vrot.slane %v1324, 1
        %v1363 = vsel %vm1357, %v1361, %v1362
        %v1364 = vrot.slane %v1325, 1
        %v1365 = vsel %vm1357, %v1359, %v1364
        %v1366 = vrot.slane %v1326, 1
        %v1367 = vsel %vm1357, %v1362, %v1366
        %v1368 = vrot.slane %v1327, 1
        %v1369 = vsel %vm1357, %v1364, %v1368
        %v1370 = vrot.slane %v1328, 1
        %v1371 = vsel %vm1357, %v1366, %v1370
        %v1372 = vrot.slane %v1329, 1
        %v1373 = vsel %vm1357, %v1368, %v1372
        %v1374 = vrot.slane %v1330, 1
        %v1375 = vsel %vm1357, %v1370, %v1374
        %v1376 = vrot.slane %v1331, 1
        %v1377 = vsel %vm1357, %v1372, %v1376
        %v1378 = vrot.slane %v1332, 1
        %v1379 = vsel %vm1357, %v1374, %v1378
        %v1380 = vrot.slane %v1333, 1
        %v1381 = vsel %vm1357, %v1376, %v1380
        %v1382 = vrot.slane %v1334, 1
        %v1383 = vsel %vm1357, %v1378, %v1382
        %v1384 = vrot.slane %v1335, 1
        %v1385 = vsel %vm1357, %v1380, %v1384
        %v1386 = vrot.slane %v1336, 1
        %v1387 = vsel %vm1357, %v1382, %v1386
        %v1388 = vrot.slane %v1337, 1
        %v1389 = vsel %vm1357, %v1384, %v1388
        %v1390 = vrot.slane %v1338, 1
        %v1391 = vsel %vm1357, %v1386, %v1390
        %v1408 = vadd.f32 %v1287, %v1360
        %v1409 = vadd.f32 %v1288, %v1363
        %v1410 = vadd.f32 %v1289, %v1365
        %v1411 = vadd.f32 %v1290, %v1367
        %v1412 = vadd.f32 %v1291, %v1369
        %v1413 = vadd.f32 %v1292, %v1371
        %v1414 = vadd.f32 %v1293, %v1373
        %v1415 = vadd.f32 %v1294, %v1375
        %v1416 = vadd.f32 %v1295, %v1377
        %v1417 = vadd.f32 %v1296, %v1379
        %v1418 = vadd.f32 %v1297, %v1381
        %v1419 = vadd.f32 %v1298, %v1383
        %v1420 = vadd.f32 %v1299, %v1385
        %v1421 = vadd.f32 %v1300, %v1387
        %v1422 = vadd.f32 %v1301, %v1389
        %v1423 = vadd.f32 %v1302, %v1391
        %v1424 = vlaneseq
        %v1425 = vshrl.u32 %v1424, 7
        %v1426 = vsub.s32 2, %v1425
        %v1427 = vrot.slane %v1198, %v1426
        %v1428 = vlaneseq
        %v1429 = vshrl.u32 %v1428, 7
        %v1430 = vsub.s32 6, %v1429
        %v1431 = vrot.slane %v1198, %v1430
        %v1434 = vlaneseq
        %v1435 = vshrl.u32 %v1434, 7
        %v1436 = vsub.s32 2, %v1435
        %v1437 = vrot.slane %v1427, %v1436
        %v1438 = vlaneseq
        %v1439 = vshrl.u32 %v1438, 7
        %v1440 = vsub.s32 2, %v1439
        %v1441 = vrot.slane %v1431, %v1440
        %v1442 = vmul.f32 %v1264, %v1437
        %v1443 = vmul.f32 %v1265, %v1441
        %v1444 = vmul.f32 %v1219, %v1437
        %v1445 = vmul.f32 %v1221, %v1441
        %v1446 = vmul.f32 %v1223, %v1437
        %v1447 = vmul.f32 %v1225, %v1441
        %v1448 = vmul.f32 %v1227, %v1437
        %v1449 = vmul.f32 %v1229, %v1441
        %v1450 = vmul.f32 %v1231, %v1437
        %v1451 = vmul.f32 %v1233, %v1441
        %v1452 = vmul.f32 %v1235, %v1437
        %v1453 = vmul.f32 %v1237, %v1441
        %v1454 = vmul.f32 %v1239, %v1437
        %v1455 = vmul.f32 %v1241, %v1441
        %v1456 = vmul.f32 %v1243, %v1437
        %v1457 = vmul.f32 %v1245, %v1441
        %v1458 = vmul.f32 %v1266, %v1437
        %v1459 = vmul.f32 %v1267, %v1441
        %vm1478 = vcmask 1045504
        %v1479 = vrot.slane %v1442, 2
        %v1480 = vrot.slane %v1444, 2
        %v1481 = vsel %vm1478, %v1479, %v1480
        %v1482 = vrot.slane %v1443, 2
        %v1483 = vrot.slane %v1445, 2
        %v1484 = vsel %vm1478, %v1482, %v1483
        %v1485 = vrot.slane %v1446, 2
        %v1486 = vsel %vm1478, %v1480, %v1485
        %v1487 = vrot.slane %v1447, 2
        %v1488 = vsel %vm1478, %v1483, %v1487
        %v1489 = vrot.slane %v1448, 2
        %v1490 = vsel %vm1478, %v1485, %v1489
        %v1491 = vrot.slane %v1449, 2
        %v1492 = vsel %vm1478, %v1487, %v1491
        %v1493 = vrot.slane %v1450, 2
        %v1494 = vsel %vm1478, %v1489, %v1493
        %v1495 = vrot.slane %v1451, 2
        %v1496 = vsel %vm1478, %v1491, %v1495
        %v1497 = vrot.slane %v1452, 2
        %v1498 = vsel %vm1478, %v1493, %v1497
        %v1499 = vrot.slane %v1453, 2
        %v1500 = vsel %vm1478, %v1495, %v1499
        %v1501 = vrot.slane %v1454, 2
        %v1502 = vsel %vm1478, %v1497, %v1501
        %v1503 = vrot.slane %v1455, 2
        %v1504 = vsel %vm1478, %v1499, %v1503
        %v1505 = vrot.slane %v1456, 2
        %v1506 = vsel %vm1478, %v1501, %v1505
        %v1507 = vrot.slane %v1457, 2
        %v1508 = vsel %vm1478, %v1503, %v1507
        %v1509 = vrot.slane %v1458, 2
        %v1510 = vsel %vm1478, %v1505, %v1509
        %v1511 = vrot.slane %v1459, 2
        %v1512 = vsel %vm1478, %v1507, %v1511
        %v1529 = vadd.f32 %v1408, %v1481
        %v1530 = vadd.f32 %v1409, %v1484
        %v1531 = vadd.f32 %v1410, %v1486
        %v1532 = vadd.f32 %v1411, %v1488
        %v1533 = vadd.f32 %v1412, %v1490
        %v1534 = vadd.f32 %v1413, %v1492
        %v1535 = vadd.f32 %v1414, %v1494
        %v1536 = vadd.f32 %v1415, %v1496
        %v1537 = vadd.f32 %v1416, %v1498
        %v1538 = vadd.f32 %v1417, %v1500
        %v1539 = vadd.f32 %v1418, %v1502
        %v1540 = vadd.f32 %v1419, %v1504
        %v1541 = vadd.f32 %v1420, %v1506
        %v1542 = vadd.f32 %v1421, %v1508
        %v1543 = vadd.f32 %v1422, %v1510
        %v1544 = vadd.f32 %v1423, %v1512
        %vm1545 = vcmp.ge.f32.partialorder %v1529, 0.0
        %vm1546 = vcmp.ge.f32.partialorder %v1530, 0.0
        %vm1547 = vcmp.ge.f32.partialorder %v1531, 0.0
        %vm1548 = vcmp.ge.f32.partialorder %v1532, 0.0
        %vm1549 = vcmp.ge.f32.partialorder %v1533, 0.0
        %vm1550 = vcmp.ge.f32.partialorder %v1534, 0.0
        %vm1551 = vcmp.ge.f32.partialorder %v1535, 0.0
        %vm1552 = vcmp.ge.f32.partialorder %v1536, 0.0
        %vm1553 = vcmp.ge.f32.partialorder %v1537, 0.0
        %vm1554 = vcmp.ge.f32.partialorder %v1538, 0.0
        %vm1555 = vcmp.ge.f32.partialorder %v1539, 0.0
        %vm1556 = vcmp.ge.f32.partialorder %v1540, 0.0
        %vm1557 = vcmp.ge.f32.partialorder %v1541, 0.0
        %vm1558 = vcmp.ge.f32.partialorder %v1542, 0.0
        %vm1559 = vcmp.ge.f32.partialorder %v1543, 0.0
        %vm1560 = vcmp.ge.f32.partialorder %v1544, 0.0
        %s1561 = sld [smem:[#allocation3 + $0x80]]
        %v1562 = vstv %s1561
        %v1563 = vmul.f32 %v1562, %v1529
        %v1564 = vmul.f32 %v1562, %v1530
        %v1565 = vmul.f32 %v1562, %v1531
        %v1566 = vmul.f32 %v1562, %v1532
        %v1567 = vmul.f32 %v1562, %v1533
        %v1568 = vmul.f32 %v1562, %v1534
        %v1569 = vmul.f32 %v1562, %v1535
        %v1570 = vmul.f32 %v1562, %v1536
        %v1571 = vmul.f32 %v1562, %v1537
        %v1572 = vmul.f32 %v1562, %v1538
        %v1573 = vmul.f32 %v1562, %v1539
        %v1574 = vmul.f32 %v1562, %v1540
        %v1575 = vmul.f32 %v1562, %v1541
        %v1576 = vmul.f32 %v1562, %v1542
        %v1577 = vmul.f32 %v1562, %v1543
        %v1578 = vmul.f32 %v1562, %v1544
        %v1579 = vsel %vm1545, %v1529, %v1563
        %v1580 = vsel %vm1546, %v1530, %v1564
        %v1581 = vsel %vm1547, %v1531, %v1565
        %v1582 = vsel %vm1548, %v1532, %v1566
        %v1583 = vsel %vm1549, %v1533, %v1567
        %v1584 = vsel %vm1550, %v1534, %v1568
        %v1585 = vsel %vm1551, %v1535, %v1569
        %v1586 = vsel %vm1552, %v1536, %v1570
        %v1587 = vsel %vm1553, %v1537, %v1571
        %v1588 = vsel %vm1554, %v1538, %v1572
        %v1589 = vsel %vm1555, %v1539, %v1573
        %v1590 = vsel %vm1556, %v1540, %v1574
        %v1591 = vsel %vm1557, %v1541, %v1575
        %v1592 = vsel %vm1558, %v1542, %v1576
        %v1593 = vsel %vm1559, %v1543, %v1577
        %v1594 = vsel %vm1560, %v1544, %v1578
        %v1595 = vadd.f32 %v1579, %v1581
        %v1596 = vadd.f32 %v1595, %v1583
        %v1597 = vadd.f32 %v1596, %v1585
        %v1598 = vadd.f32 %v1597, %v1587
        %v1599 = vadd.f32 %v1598, %v1589
        %v1600 = vadd.f32 %v1599, %v1591
        %v1601 = vadd.f32 %v1600, %v1593
        %v1602 = vrot.slane %v1601, 4
        %v1603 = vadd.f32 %v1601, %v1602
        %v1604 = vrot.slane %v1603, 2
        %v1605 = vadd.f32 %v1603, %v1604
        %v1606 = vrot.slane %v1605, 1
        %v1607 = vadd.f32 %v1605, %v1606
        %v1608 = vadd.f32 %v1580, %v1582
        %v1609 = vadd.f32 %v1608, %v1584
        %v1610 = vadd.f32 %v1609, %v1586
        %v1611 = vadd.f32 %v1610, %v1588
        %v1612 = vadd.f32 %v1611, %v1590
        %v1613 = vadd.f32 %v1612, %v1592
        %v1614 = vadd.f32 %v1613, %v1594
        %v1615 = vrot.slane %v1614, 4
        %v1616 = vadd.f32 %v1614, %v1615
        %v1617 = vrot.slane %v1616, 2
        %v1618 = vadd.f32 %v1616, %v1617
        %v1619 = vrot.slane %v1618, 1
        %v1620 = vadd.f32 %v1618, %v1619
        %v1621 = vmul.f32 %v1579, %v1579
        %v1622 = vmul.f32 %v1580, %v1580
        %v1623 = vmul.f32 %v1581, %v1581
        %v1624 = vmul.f32 %v1582, %v1582
        %v1625 = vmul.f32 %v1583, %v1583
        %v1626 = vmul.f32 %v1584, %v1584
        %v1627 = vmul.f32 %v1585, %v1585
        %v1628 = vmul.f32 %v1586, %v1586
        %v1629 = vmul.f32 %v1587, %v1587
        %v1630 = vmul.f32 %v1588, %v1588
        %v1631 = vmul.f32 %v1589, %v1589
        %v1632 = vmul.f32 %v1590, %v1590
        %v1633 = vmul.f32 %v1591, %v1591
        %v1634 = vmul.f32 %v1592, %v1592
        %v1635 = vmul.f32 %v1593, %v1593
        %v1636 = vmul.f32 %v1594, %v1594
        %v1637 = vadd.f32 %v1621, %v1623
        %v1638 = vadd.f32 %v1637, %v1625
        %v1639 = vadd.f32 %v1638, %v1627
        %v1640 = vadd.f32 %v1639, %v1629
        %v1641 = vadd.f32 %v1640, %v1631
        %v1642 = vadd.f32 %v1641, %v1633
        %v1643 = vadd.f32 %v1642, %v1635
        %v1644 = vrot.slane %v1643, 4
        %v1645 = vadd.f32 %v1643, %v1644
        %v1646 = vrot.slane %v1645, 2
        %v1647 = vadd.f32 %v1645, %v1646
        %v1648 = vrot.slane %v1647, 1
        %v1649 = vadd.f32 %v1647, %v1648
        %v1650 = vadd.f32 %v1622, %v1624
        %v1651 = vadd.f32 %v1650, %v1626
        %v1652 = vadd.f32 %v1651, %v1628
        %v1653 = vadd.f32 %v1652, %v1630
        %v1654 = vadd.f32 %v1653, %v1632
        %v1655 = vadd.f32 %v1654, %v1634
        %v1656 = vadd.f32 %v1655, %v1636
        %v1657 = vrot.slane %v1656, 4
        %v1658 = vadd.f32 %v1656, %v1657
        %v1659 = vrot.slane %v1658, 2
        %v1660 = vadd.f32 %v1658, %v1659
        %v1661 = vrot.slane %v1660, 1
        %v1662 = vadd.f32 %v1660, %v1661
        %v1663 = vadd.f32 %v1607, %v1620
        %1664 = vadd.xlane.f32.xlu0 %v1663
        %v1665 = vpop.xlane.xlu0 %1664
        %v1666 = vadd.f32 %v1649, %v1662
        %1667 = vadd.xlane.f32.xlu0 %v1666
        %v1668 = vpop.xlane.xlu0 %1667
        %v1669 = vmul.f32 %v1665, 6.1035156e-05
        %v1670 = vmul.f32 %v1668, 6.1035156e-05
        %v1671 = vmul.f32 %v1669, %v1669
        %v1672 = vsub.f32 %v1670, %v1671
        %v1673 = vmax.f32 %v1672, 0.0
        %v1674 = vadd.f32 %v1673, 1e-08
        %v1675 = vrsqrt.pop %v1674
        %v1676 = vpack.c.bf16 %v1581, %v1579
        %v1677 = vpack.c.bf16 %v1582, %v1580
        %v1678 = vpack.c.bf16 %v1585, %v1583
        %v1679 = vpack.c.bf16 %v1586, %v1584
        %v1680 = vpack.c.bf16 %v1589, %v1587
        %v1681 = vpack.c.bf16 %v1590, %v1588
        %v1682 = vpack.c.bf16 %v1593, %v1591
        %v1683 = vpack.c.bf16 %v1594, %v1592
        %v1684 = vld [vmem:[%s10] sm:$0xf]
        %v1685 = vld [vmem:[%s10 + $0x4] sm:$0xf]
        %v1686 = vld [vmem:[%s10 + $0x8] sm:$0xf]
        %v1687 = vld [vmem:[%s10 + $0xc] sm:$0xf]
        %v1688 = vld [vmem:[%s10 + $0x10] sm:$0xf]
        %v1689 = vld [vmem:[%s10 + $0x14] sm:$0xf]
        %v1690 = vld [vmem:[%s10 + $0x18] sm:$0xf]
        %v1691 = vld [vmem:[%s10 + $0x1c] sm:$0xf]
        %v1692 = vld [vmem:[%s10 + $0x20] sm:$0xf]
        %v1693 = vld [vmem:[%s10 + $0x24] sm:$0xf]
        %v1694 = vld [vmem:[%s10 + $0x28] sm:$0xf]
        %v1695 = vld [vmem:[%s10 + $0x2c] sm:$0xf]
        %v1696 = vld [vmem:[%s10 + $0x30] sm:$0xf]
        %v1697 = vld [vmem:[%s10 + $0x34] sm:$0xf]
        %v1698 = vld [vmem:[%s10 + $0x38] sm:$0xf]
        %v1699 = vld [vmem:[%s10 + $0x3c] sm:$0xf]
        %v1700 = vld [vmem:[%s10 + $0x40] sm:$0xf]
        %v1701 = vld [vmem:[%s10 + $0x44] sm:$0xf]
        %v1702 = vld [vmem:[%s10 + $0x48] sm:$0xf]
        %v1703 = vld [vmem:[%s10 + $0x4c] sm:$0xf]
        %v1704 = vld [vmem:[%s10 + $0x50] sm:$0xf]
        %v1705 = vld [vmem:[%s10 + $0x54] sm:$0xf]
        %v1706 = vld [vmem:[%s10 + $0x58] sm:$0xf]
        %v1707 = vld [vmem:[%s10 + $0x5c] sm:$0xf]
        %v1708 = vld [vmem:[%s10 + $0x60] sm:$0xf]
        %v1709 = vld [vmem:[%s10 + $0x64] sm:$0xf]
        %v1710 = vld [vmem:[%s10 + $0x68] sm:$0xf]
        %v1711 = vld [vmem:[%s10 + $0x6c] sm:$0xf]
        %v1712 = vld [vmem:[%s10 + $0x70] sm:$0xf]
        %v1713 = vld [vmem:[%s10 + $0x74] sm:$0xf]
        %v1714 = vld [vmem:[%s10 + $0x78] sm:$0xf]
        %v1715 = vld [vmem:[%s10 + $0x7c] sm:$0xf]
        %v1748 = vunpack.c.l.b16 %v1684
        %v1749 = vunpack.c.l.b16 %v1685
        %v1750 = vunpack.c.l.b16 %v1686
        %v1751 = vunpack.c.l.b16 %v1687
        %v1752 = vunpack.c.l.b16 %v1688
        %v1753 = vunpack.c.l.b16 %v1689
        %v1754 = vunpack.c.l.b16 %v1690
        %v1755 = vunpack.c.l.b16 %v1691
        %v1756 = vunpack.c.l.b16 %v1692
        %v1757 = vunpack.c.l.b16 %v1693
        %v1758 = vunpack.c.l.b16 %v1694
        %v1759 = vunpack.c.l.b16 %v1695
        %v1760 = vunpack.c.l.b16 %v1696
        %v1761 = vunpack.c.l.b16 %v1697
        %v1762 = vunpack.c.l.b16 %v1698
        %v1763 = vunpack.c.l.b16 %v1699
        %v1764 = vunpack.c.l.b16 %v1700
        %v1765 = vunpack.c.l.b16 %v1701
        %v1766 = vunpack.c.l.b16 %v1702
        %v1767 = vunpack.c.l.b16 %v1703
        %v1768 = vunpack.c.l.b16 %v1704
        %v1769 = vunpack.c.l.b16 %v1705
        %v1770 = vunpack.c.l.b16 %v1706
        %v1771 = vunpack.c.l.b16 %v1707
        %v1772 = vunpack.c.l.b16 %v1708
        %v1773 = vunpack.c.l.b16 %v1709
        %v1774 = vunpack.c.l.b16 %v1710
        %v1775 = vunpack.c.l.b16 %v1711
        %v1776 = vunpack.c.l.b16 %v1712
        %v1777 = vunpack.c.l.b16 %v1713
        %v1778 = vunpack.c.l.b16 %v1714
        %v1779 = vunpack.c.l.b16 %v1715
        %v1780 = vpack.c.b16 %v1749, %v1748
        %v1781 = vpack.c.b16 %v1751, %v1750
        %v1782 = vpack.c.b16 %v1753, %v1752
        %v1783 = vpack.c.b16 %v1755, %v1754
        %v1784 = vpack.c.b16 %v1757, %v1756
        %v1785 = vpack.c.b16 %v1759, %v1758
        %v1786 = vpack.c.b16 %v1761, %v1760
        %v1787 = vpack.c.b16 %v1763, %v1762
        %v1788 = vpack.c.b16 %v1765, %v1764
        %v1789 = vpack.c.b16 %v1767, %v1766
        %v1790 = vpack.c.b16 %v1769, %v1768
        %v1791 = vpack.c.b16 %v1771, %v1770
        %v1792 = vpack.c.b16 %v1773, %v1772
        %v1793 = vpack.c.b16 %v1775, %v1774
        %v1794 = vpack.c.b16 %v1777, %v1776
        %v1795 = vpack.c.b16 %v1779, %v1778
        %1812 = vmatprep.subr.bf16.mxu0 0
        %1813 = vmatpush1.bf16.msra.mxu0 %v1787
        %1814 = vmatprep.subr.bf16.mxu0 0
        %1815 = vmatpush1.bf16.msra.mxu0 %v1786
        %1816 = vmatprep.subr.bf16.mxu0 0
        %1817 = vmatpush1.bf16.msra.mxu0 %v1785
        %1818 = vmatprep.subr.bf16.mxu0 0
        %1819 = vmatpush1.bf16.msra.mxu0 %v1784
        %1820 = vmatprep.subr.bf16.mxu0 0
        %1821 = vmatpush1.bf16.msra.mxu0 %v1783
        %1822 = vmatprep.subr.bf16.mxu0 0
        %1823 = vmatpush1.bf16.msra.mxu0 %v1782
        %1824 = vmatprep.subr.bf16.mxu0 0
        %1825 = vmatpush1.bf16.msra.mxu0 %v1781
        %1826 = vmatprep.subr.bf16.mxu0 0
        %1827 = vmatpush1.bf16.msra.mxu0 %v1780
        %1828 = vmatprep.subr.bf16.mxu0 0
        %1829 = vmatpush2.bf16.msra.mxu0 %v1795
        %1830 = vmatprep.subr.bf16.mxu0 0
        %1831 = vmatpush2.bf16.msra.mxu0 %v1794
        %1832 = vmatprep.subr.bf16.mxu0 0
        %1833 = vmatpush2.bf16.msra.mxu0 %v1793
        %1834 = vmatprep.subr.bf16.mxu0 0
        %1835 = vmatpush2.bf16.msra.mxu0 %v1792
        %1836 = vmatprep.subr.bf16.mxu0 0
        %1837 = vmatpush2.bf16.msra.mxu0 %v1791
        %1838 = vmatprep.subr.bf16.mxu0 0
        %1839 = vmatpush2.bf16.msra.mxu0 %v1790
        %1840 = vmatprep.subr.bf16.mxu0 0
        %1841 = vmatpush2.bf16.msra.mxu0 %v1789
        %1842 = vmatprep.subr.bf16.mxu0 0
        %1843 = vmatpush2.bf16.msra.mxu0 %v1788
        %1844 = vmatprep.mubr.bf16.mxu0 %v1677
        %1845 = vmatmul.mubr.bf16.gmra.mxu0 %v1676
        %v1846 = vpop.f32.mrf.mxu0
        %v1847 = vadd.f32 0.0, %v1846
        %v1848 = vpop.f32.mrf.mxu0
        %v1849 = vpop.f32.mrf.mxu0
        %v1850 = vadd.f32 0.0, %v1849
        %v1851 = vpop.f32.mrf.mxu0
        %1852 = vmatprep.mubr.bf16.mxu0 %v1679
        %1853 = vmatmul.mubr.bf16.gmra.mxu0 %v1678
        %v1854 = vpop.f32.mrf.mxu0
        %v1855 = vadd.f32 0.0, %v1854
        %v1856 = vpop.f32.mrf.mxu0
        %v1857 = vpop.f32.mrf.mxu0
        %v1858 = vadd.f32 0.0, %v1857
        %v1859 = vpop.f32.mrf.mxu0
        %1860 = vmatprep.mubr.bf16.mxu0 %v1681
        %1861 = vmatmul.mubr.bf16.gmra.mxu0 %v1680
        %v1862 = vpop.f32.mrf.mxu0
        %v1863 = vadd.f32 0.0, %v1862
        %v1864 = vpop.f32.mrf.mxu0
        %v1865 = vpop.f32.mrf.mxu0
        %v1866 = vadd.f32 0.0, %v1865
        %v1867 = vpop.f32.mrf.mxu0
        %1868 = vmatprep.mubr.bf16.mxu0 %v1683
        %1869 = vmatmul.mubr.bf16.gmra.mxu0 %v1682
        %v1870 = vpop.f32.mrf.mxu0
        %v1871 = vadd.f32 0.0, %v1870
        %v1872 = vpop.f32.mrf.mxu0
        %v1873 = vpop.f32.mrf.mxu0
        %v1874 = vadd.f32 0.0, %v1873
        %v1875 = vpop.f32.mrf.mxu0
        %1876 = vdwg.mxu0
        %v1877 = vld [vmem:[%s12] sm:$0x1]
        %v1878 = vmul.f32 %v1669, %v1675
        %v1879 = vld [vmem:[%s11] sm:$0x1]
        %v1880 = vmul.f32 %v1878, %v1879
        %v1881 = vsub.f32 %v1877, %v1880
        %v1882 = vmul.f32 %v1847, %v1675
        %v1883 = vmul.f32 %v1850, %v1675
        %v1884 = vmul.f32 %v1855, %v1675
        %v1885 = vmul.f32 %v1858, %v1675
        %v1886 = vmul.f32 %v1863, %v1675
        %v1887 = vmul.f32 %v1866, %v1675
        %v1888 = vmul.f32 %v1871, %v1675
        %v1889 = vmul.f32 %v1874, %v1675
        %v1891 = vlaneseq
        %v1892 = vshrl.u32 %v1891, 7
        %v1893 = vsub.s32 0, %v1892
        %v1894 = vrot.slane %v1881, %v1893
        %v1896 = vadd.f32 %v1882, %v1894
        %v1897 = vadd.f32 %v1883, %v1894
        %v1898 = vadd.f32 %v1884, %v1894
        %v1899 = vadd.f32 %v1885, %v1894
        %v1900 = vadd.f32 %v1886, %v1894
        %v1901 = vadd.f32 %v1887, %v1894
        %v1902 = vadd.f32 %v1888, %v1894
        %v1903 = vadd.f32 %v1889, %v1894
        %v1904 = vadd.f32 %v827, %v1896
        %v1905 = vadd.f32 %v828, %v1897
        %v1906 = vadd.f32 %v829, %v1898
        %v1907 = vadd.f32 %v830, %v1899
        %v1908 = vadd.f32 %v831, %v1900
        %v1909 = vadd.f32 %v832, %v1901
        %v1910 = vadd.f32 %v833, %v1902
        %v1911 = vadd.f32 %v834, %v1903
        %v1912 = vpack.c.bf16 %v1905, %v1904
        %v1913 = vpack.c.bf16 %v1907, %v1906
        %v1914 = vpack.c.bf16 %v1909, %v1908
        %v1915 = vpack.c.bf16 %v1911, %v1910
        %s1916 = scalar_lea.vmem %s6, 128
        %v1917 = vld [vmem:[%s1916] sm:$0xff]
        %v1918 = vld [vmem:[%s1916 + $0x8] sm:$0xff]
        %v1919 = vld [vmem:[%s1916 + $0x10] sm:$0xff]
        %v1920 = vld [vmem:[%s1916 + $0x18] sm:$0xff]
        %v1921 = vld [vmem:[%s1916 + $0x20] sm:$0xff]
        %v1922 = vld [vmem:[%s1916 + $0x28] sm:$0xff]
        %v1923 = vld [vmem:[%s1916 + $0x30] sm:$0xff]
        %v1924 = vld [vmem:[%s1916 + $0x38] sm:$0xff]
        %v1925 = vld [vmem:[%s1916 + $0x40] sm:$0xff]
        %v1926 = vld [vmem:[%s1916 + $0x48] sm:$0xff]
        %v1927 = vld [vmem:[%s1916 + $0x50] sm:$0xff]
        %v1928 = vld [vmem:[%s1916 + $0x58] sm:$0xff]
        %v1929 = vld [vmem:[%s1916 + $0x60] sm:$0xff]
        %v1930 = vld [vmem:[%s1916 + $0x68] sm:$0xff]
        %v1931 = vld [vmem:[%s1916 + $0x70] sm:$0xff]
        %v1932 = vld [vmem:[%s1916 + $0x78] sm:$0xff]
        %v1949 = vunpack.c.l.b16 %v1917
        %v1950 = vunpack.c.h.b16 %v1917
        %v1951 = vunpack.c.l.b16 %v1918
        %v1952 = vunpack.c.h.b16 %v1918
        %v1953 = vunpack.c.l.b16 %v1919
        %v1954 = vunpack.c.h.b16 %v1919
        %v1955 = vunpack.c.l.b16 %v1920
        %v1956 = vunpack.c.h.b16 %v1920
        %v1957 = vunpack.c.l.b16 %v1921
        %v1958 = vunpack.c.h.b16 %v1921
        %v1959 = vunpack.c.l.b16 %v1922
        %v1960 = vunpack.c.h.b16 %v1922
        %v1961 = vunpack.c.l.b16 %v1923
        %v1962 = vunpack.c.h.b16 %v1923
        %v1963 = vunpack.c.l.b16 %v1924
        %v1964 = vunpack.c.h.b16 %v1924
        %v1965 = vunpack.c.l.b16 %v1925
        %v1966 = vunpack.c.h.b16 %v1925
        %v1967 = vunpack.c.l.b16 %v1926
        %v1968 = vunpack.c.h.b16 %v1926
        %v1969 = vunpack.c.l.b16 %v1927
        %v1970 = vunpack.c.h.b16 %v1927
        %v1971 = vunpack.c.l.b16 %v1928
        %v1972 = vunpack.c.h.b16 %v1928
        %v1973 = vunpack.c.l.b16 %v1929
        %v1974 = vunpack.c.h.b16 %v1929
        %v1975 = vunpack.c.l.b16 %v1930
        %v1976 = vunpack.c.h.b16 %v1930
        %v1977 = vunpack.c.l.b16 %v1931
        %v1978 = vunpack.c.h.b16 %v1931
        %v1979 = vunpack.c.l.b16 %v1932
        %v1980 = vunpack.c.h.b16 %v1932
        %v1981 = vpack.c.b16 %v1951, %v1949
        %v1982 = vpack.c.b16 %v1952, %v1950
        %v1983 = vpack.c.b16 %v1955, %v1953
        %v1984 = vpack.c.b16 %v1956, %v1954
        %v1985 = vpack.c.b16 %v1959, %v1957
        %v1986 = vpack.c.b16 %v1960, %v1958
        %v1987 = vpack.c.b16 %v1963, %v1961
        %v1988 = vpack.c.b16 %v1964, %v1962
        %v1989 = vpack.c.b16 %v1967, %v1965
        %v1990 = vpack.c.b16 %v1968, %v1966
        %v1991 = vpack.c.b16 %v1971, %v1969
        %v1992 = vpack.c.b16 %v1972, %v1970
        %v1993 = vpack.c.b16 %v1975, %v1973
        %v1994 = vpack.c.b16 %v1976, %v1974
        %v1995 = vpack.c.b16 %v1979, %v1977
        %v1996 = vpack.c.b16 %v1980, %v1978
        %2013 = vmatprep.subr.bf16.mxu0 %v1996
        %2014 = vmatpush1.bf16.msra.mxu0 %v1995
        %2015 = vmatprep.subr.bf16.mxu0 %v1994
        %2016 = vmatpush1.bf16.msra.mxu0 %v1993
        %2017 = vmatprep.subr.bf16.mxu0 %v1992
        %2018 = vmatpush1.bf16.msra.mxu0 %v1991
        %2019 = vmatprep.subr.bf16.mxu0 %v1990
        %2020 = vmatpush1.bf16.msra.mxu0 %v1989
        %2021 = vmatprep.subr.bf16.mxu0 %v1988
        %2022 = vmatpush1.bf16.msra.mxu0 %v1987
        %2023 = vmatprep.subr.bf16.mxu0 %v1986
        %2024 = vmatpush1.bf16.msra.mxu0 %v1985
        %2025 = vmatprep.subr.bf16.mxu0 %v1984
        %2026 = vmatpush1.bf16.msra.mxu0 %v1983
        %2027 = vmatprep.subr.bf16.mxu0 %v1982
        %2028 = vmatpush1.bf16.msra.mxu0 %v1981
        %2029 = vmatprep.subr.bf16.mxu0 0
        %2030 = vmatpush2.bf16.msra.mxu0 0
        %2031 = vmatprep.subr.bf16.mxu0 0
        %2032 = vmatpush2.bf16.msra.mxu0 0
        %2033 = vmatprep.subr.bf16.mxu0 0
        %2034 = vmatpush2.bf16.msra.mxu0 0
        %2035 = vmatprep.subr.bf16.mxu0 0
        %2036 = vmatpush2.bf16.msra.mxu0 0
        %2037 = vmatprep.subr.bf16.mxu0 0
        %2038 = vmatpush2.bf16.msra.mxu0 0
        %2039 = vmatprep.subr.bf16.mxu0 0
        %2040 = vmatpush2.bf16.msra.mxu0 0
        %2041 = vmatprep.subr.bf16.mxu0 0
        %2042 = vmatpush2.bf16.msra.mxu0 0
        %2043 = vmatprep.subr.bf16.mxu0 0
        %2044 = vmatpush2.bf16.msra.mxu0 0
        %2045 = vmatprep.mubr.bf16.mxu0 0
        %2046 = vmatmul.mubr.bf16.gmra.mxu0 %v1912
        %v2047 = vpop.f32.mrf.mxu0
        %v2048 = vadd.f32 0.0, %v2047
        %v2049 = vpop.f32.mrf.mxu0
        %v2050 = vadd.f32 0.0, %v2049
        %v2051 = vpop.f32.mrf.mxu0
        %v2052 = vadd.f32 0.0, %v2051
        %v2053 = vpop.f32.mrf.mxu0
        %v2054 = vadd.f32 0.0, %v2053
        %2055 = vmatprep.mubr.bf16.mxu0 0
        %2056 = vmatmul.mubr.bf16.gmra.mxu0 %v1913
        %v2057 = vpop.f32.mrf.mxu0
        %v2058 = vadd.f32 0.0, %v2057
        %v2059 = vpop.f32.mrf.mxu0
        %v2060 = vadd.f32 0.0, %v2059
        %v2061 = vpop.f32.mrf.mxu0
        %v2062 = vadd.f32 0.0, %v2061
        %v2063 = vpop.f32.mrf.mxu0
        %v2064 = vadd.f32 0.0, %v2063
        %2065 = vmatprep.mubr.bf16.mxu0 0
        %2066 = vmatmul.mubr.bf16.gmra.mxu0 %v1914
        %v2067 = vpop.f32.mrf.mxu0
        %v2068 = vadd.f32 0.0, %v2067
        %v2069 = vpop.f32.mrf.mxu0
        %v2070 = vadd.f32 0.0, %v2069
        %v2071 = vpop.f32.mrf.mxu0
        %v2072 = vadd.f32 0.0, %v2071
        %v2073 = vpop.f32.mrf.mxu0
        %v2074 = vadd.f32 0.0, %v2073
        %2075 = vmatprep.mubr.bf16.mxu0 0
        %2076 = vmatmul.mubr.bf16.gmra.mxu0 %v1915
        %v2077 = vpop.f32.mrf.mxu0
        %v2078 = vadd.f32 0.0, %v2077
        %v2079 = vpop.f32.mrf.mxu0
        %v2080 = vadd.f32 0.0, %v2079
        %v2081 = vpop.f32.mrf.mxu0
        %v2082 = vadd.f32 0.0, %v2081
        %v2083 = vpop.f32.mrf.mxu0
        %v2084 = vadd.f32 0.0, %v2083
        %2085 = vdwg.mxu0
        %vm2086 = vcmp.ge.f32.partialorder %v2048, 0.0
        %vm2087 = vcmp.ge.f32.partialorder %v2050, 0.0
        %vm2088 = vcmp.ge.f32.partialorder %v2052, 0.0
        %vm2089 = vcmp.ge.f32.partialorder %v2054, 0.0
        %vm2090 = vcmp.ge.f32.partialorder %v2058, 0.0
        %vm2091 = vcmp.ge.f32.partialorder %v2060, 0.0
        %vm2092 = vcmp.ge.f32.partialorder %v2062, 0.0
        %vm2093 = vcmp.ge.f32.partialorder %v2064, 0.0
        %vm2094 = vcmp.ge.f32.partialorder %v2068, 0.0
        %vm2095 = vcmp.ge.f32.partialorder %v2070, 0.0
        %vm2096 = vcmp.ge.f32.partialorder %v2072, 0.0
        %vm2097 = vcmp.ge.f32.partialorder %v2074, 0.0
        %vm2098 = vcmp.ge.f32.partialorder %v2078, 0.0
        %vm2099 = vcmp.ge.f32.partialorder %v2080, 0.0
        %vm2100 = vcmp.ge.f32.partialorder %v2082, 0.0
        %vm2101 = vcmp.ge.f32.partialorder %v2084, 0.0
        %s2102 = sld [smem:[#allocation3 + $0x1]]
        %v2103 = vstv %s2102
        %v2104 = vmul.f32 %v2103, %v2048
        %v2105 = vmul.f32 %v2103, %v2050
        %v2106 = vmul.f32 %v2103, %v2052
        %v2107 = vmul.f32 %v2103, %v2054
        %v2108 = vmul.f32 %v2103, %v2058
        %v2109 = vmul.f32 %v2103, %v2060
        %v2110 = vmul.f32 %v2103, %v2062
        %v2111 = vmul.f32 %v2103, %v2064
        %v2112 = vmul.f32 %v2103, %v2068
        %v2113 = vmul.f32 %v2103, %v2070
        %v2114 = vmul.f32 %v2103, %v2072
        %v2115 = vmul.f32 %v2103, %v2074
        %v2116 = vmul.f32 %v2103, %v2078
        %v2117 = vmul.f32 %v2103, %v2080
        %v2118 = vmul.f32 %v2103, %v2082
        %v2119 = vmul.f32 %v2103, %v2084
        %v2120 = vsel %vm2086, %v2048, %v2104
        %v2121 = vsel %vm2087, %v2050, %v2105
        %v2122 = vsel %vm2088, %v2052, %v2106
        %v2123 = vsel %vm2089, %v2054, %v2107
        %v2124 = vsel %vm2090, %v2058, %v2108
        %v2125 = vsel %vm2091, %v2060, %v2109
        %v2126 = vsel %vm2092, %v2062, %v2110
        %v2127 = vsel %vm2093, %v2064, %v2111
        %v2128 = vsel %vm2094, %v2068, %v2112
        %v2129 = vsel %vm2095, %v2070, %v2113
        %v2130 = vsel %vm2096, %v2072, %v2114
        %v2131 = vsel %vm2097, %v2074, %v2115
        %v2132 = vsel %vm2098, %v2078, %v2116
        %v2133 = vsel %vm2099, %v2080, %v2117
        %v2134 = vsel %vm2100, %v2082, %v2118
        %v2135 = vsel %vm2101, %v2084, %v2119
        %v2136 = vadd.f32 %v2120, %v2122
        %v2137 = vadd.f32 %v2136, %v2124
        %v2138 = vadd.f32 %v2137, %v2126
        %v2139 = vadd.f32 %v2138, %v2128
        %v2140 = vadd.f32 %v2139, %v2130
        %v2141 = vadd.f32 %v2140, %v2132
        %v2142 = vadd.f32 %v2141, %v2134
        %v2143 = vrot.slane %v2142, 4
        %v2144 = vadd.f32 %v2142, %v2143
        %v2145 = vrot.slane %v2144, 2
        %v2146 = vadd.f32 %v2144, %v2145
        %v2147 = vrot.slane %v2146, 1
        %v2148 = vadd.f32 %v2146, %v2147
        %v2149 = vadd.f32 %v2121, %v2123
        %v2150 = vadd.f32 %v2149, %v2125
        %v2151 = vadd.f32 %v2150, %v2127
        %v2152 = vadd.f32 %v2151, %v2129
        %v2153 = vadd.f32 %v2152, %v2131
        %v2154 = vadd.f32 %v2153, %v2133
        %v2155 = vadd.f32 %v2154, %v2135
        %v2156 = vrot.slane %v2155, 4
        %v2157 = vadd.f32 %v2155, %v2156
        %v2158 = vrot.slane %v2157, 2
        %v2159 = vadd.f32 %v2157, %v2158
        %v2160 = vrot.slane %v2159, 1
        %v2161 = vadd.f32 %v2159, %v2160
        %v2162 = vmul.f32 %v2120, %v2120
        %v2163 = vmul.f32 %v2121, %v2121
        %v2164 = vmul.f32 %v2122, %v2122
        %v2165 = vmul.f32 %v2123, %v2123
        %v2166 = vmul.f32 %v2124, %v2124
        %v2167 = vmul.f32 %v2125, %v2125
        %v2168 = vmul.f32 %v2126, %v2126
        %v2169 = vmul.f32 %v2127, %v2127
        %v2170 = vmul.f32 %v2128, %v2128
        %v2171 = vmul.f32 %v2129, %v2129
        %v2172 = vmul.f32 %v2130, %v2130
        %v2173 = vmul.f32 %v2131, %v2131
        %v2174 = vmul.f32 %v2132, %v2132
        %v2175 = vmul.f32 %v2133, %v2133
        %v2176 = vmul.f32 %v2134, %v2134
        %v2177 = vmul.f32 %v2135, %v2135
        %v2178 = vadd.f32 %v2162, %v2164
        %v2179 = vadd.f32 %v2178, %v2166
        %v2180 = vadd.f32 %v2179, %v2168
        %v2181 = vadd.f32 %v2180, %v2170
        %v2182 = vadd.f32 %v2181, %v2172
        %v2183 = vadd.f32 %v2182, %v2174
        %v2184 = vadd.f32 %v2183, %v2176
        %v2185 = vrot.slane %v2184, 4
        %v2186 = vadd.f32 %v2184, %v2185
        %v2187 = vrot.slane %v2186, 2
        %v2188 = vadd.f32 %v2186, %v2187
        %v2189 = vrot.slane %v2188, 1
        %v2190 = vadd.f32 %v2188, %v2189
        %v2191 = vadd.f32 %v2163, %v2165
        %v2192 = vadd.f32 %v2191, %v2167
        %v2193 = vadd.f32 %v2192, %v2169
        %v2194 = vadd.f32 %v2193, %v2171
        %v2195 = vadd.f32 %v2194, %v2173
        %v2196 = vadd.f32 %v2195, %v2175
        %v2197 = vadd.f32 %v2196, %v2177
        %v2198 = vrot.slane %v2197, 4
        %v2199 = vadd.f32 %v2197, %v2198
        %v2200 = vrot.slane %v2199, 2
        %v2201 = vadd.f32 %v2199, %v2200
        %v2202 = vrot.slane %v2201, 1
        %v2203 = vadd.f32 %v2201, %v2202
        %v2204 = vadd.f32 %v2148, %v2161
        %2205 = vadd.xlane.f32.xlu0 %v2204
        %v2206 = vpop.xlane.xlu0 %2205
        %v2207 = vadd.f32 %v2190, %v2203
        %2208 = vadd.xlane.f32.xlu0 %v2207
        %v2209 = vpop.xlane.xlu0 %2208
        %v2210 = vmul.f32 %v2206, 6.1035156e-05
        %v2211 = vmul.f32 %v2209, 6.1035156e-05
        %v2212 = vmul.f32 %v2210, %v2210
        %v2213 = vsub.f32 %v2211, %v2212
        %v2214 = vmax.f32 %v2213, 0.0
        %v2215 = vadd.f32 %v2214, 1e-08
        %v2216 = vrsqrt.pop %v2215
        %s2217 = scalar_lea.vmem %s7, 2
        %v2218 = vld [vmem:[%s2217] sm:$0x3]
        %v2219 = vmul.f32 %v2218, %v2216
        %s2220 = scalar_lea.vmem %s8, 2
        %v2221 = vld [vmem:[%s2220] sm:$0x3]
        %v2222 = vmul.f32 %v2210, %v2219
        %v2223 = vsub.f32 %v2221, %v2222
        %v2225 = vlaneseq
        %v2226 = vshrl.u32 %v2225, 7
        %v2227 = vsub.s32 0, %v2226
        %v2228 = vrot.slane %v2219, %v2227
        %v2229 = vlaneseq
        %v2230 = vshrl.u32 %v2229, 7
        %v2231 = vsub.s32 1, %v2230
        %v2232 = vrot.slane %v2219, %v2231
        %v2235 = vmul.f32 %v2120, %v2228
        %v2236 = vmul.f32 %v2121, %v2232
        %v2237 = vmul.f32 %v2122, %v2228
        %v2238 = vmul.f32 %v2123, %v2232
        %v2239 = vmul.f32 %v2124, %v2228
        %v2240 = vmul.f32 %v2125, %v2232
        %v2241 = vmul.f32 %v2126, %v2228
        %v2242 = vmul.f32 %v2127, %v2232
        %v2243 = vmul.f32 %v2128, %v2228
        %v2244 = vmul.f32 %v2129, %v2232
        %v2245 = vmul.f32 %v2130, %v2228
        %v2246 = vmul.f32 %v2131, %v2232
        %v2247 = vmul.f32 %v2132, %v2228
        %v2248 = vmul.f32 %v2133, %v2232
        %v2249 = vmul.f32 %v2134, %v2228
        %v2250 = vmul.f32 %v2135, %v2232
        %v2252 = vlaneseq
        %v2253 = vshrl.u32 %v2252, 7
        %v2254 = vsub.s32 0, %v2253
        %v2255 = vrot.slane %v2223, %v2254
        %v2256 = vlaneseq
        %v2257 = vshrl.u32 %v2256, 7
        %v2258 = vsub.s32 1, %v2257
        %v2259 = vrot.slane %v2223, %v2258
        %v2262 = vadd.f32 %v2235, %v2255
        %v2263 = vadd.f32 %v2236, %v2259
        %v2264 = vadd.f32 %v2237, %v2255
        %v2265 = vadd.f32 %v2238, %v2259
        %v2266 = vadd.f32 %v2239, %v2255
        %v2267 = vadd.f32 %v2240, %v2259
        %v2268 = vadd.f32 %v2241, %v2255
        %v2269 = vadd.f32 %v2242, %v2259
        %v2270 = vadd.f32 %v2243, %v2255
        %v2271 = vadd.f32 %v2244, %v2259
        %v2272 = vadd.f32 %v2245, %v2255
        %v2273 = vadd.f32 %v2246, %v2259
        %v2274 = vadd.f32 %v2247, %v2255
        %v2275 = vadd.f32 %v2248, %v2259
        %v2276 = vadd.f32 %v2249, %v2255
        %v2277 = vadd.f32 %v2250, %v2259
        %s2278 = scalar_lea.vmem %s9, 8
        %v2279 = vld [vmem:[%s2278] sm:$0x77]
        %vm2296 = vcmask 1041408
        %v2297 = vrot.slane %v2262, 6
        %v2298 = vrot.slane %v2263, 6
        %v2299 = vrot.slane %v2264, 6
        %v2300 = vsel %vm2296, %v2297, %v2299
        %v2301 = vrot.slane %v2265, 6
        %v2302 = vsel %vm2296, %v2298, %v2301
        %v2303 = vrot.slane %v2266, 6
        %v2304 = vsel %vm2296, %v2299, %v2303
        %v2305 = vrot.slane %v2267, 6
        %v2306 = vsel %vm2296, %v2301, %v2305
        %v2307 = vrot.slane %v2268, 6
        %v2308 = vsel %vm2296, %v2303, %v2307
        %v2309 = vrot.slane %v2269, 6
        %v2310 = vsel %vm2296, %v2305, %v2309
        %v2311 = vrot.slane %v2270, 6
        %v2312 = vsel %vm2296, %v2307, %v2311
        %v2313 = vrot.slane %v2271, 6
        %v2314 = vsel %vm2296, %v2309, %v2313
        %v2315 = vrot.slane %v2272, 6
        %v2316 = vsel %vm2296, %v2311, %v2315
        %v2317 = vrot.slane %v2273, 6
        %v2318 = vsel %vm2296, %v2313, %v2317
        %v2319 = vrot.slane %v2274, 6
        %v2320 = vsel %vm2296, %v2315, %v2319
        %v2321 = vrot.slane %v2275, 6
        %v2322 = vsel %vm2296, %v2317, %v2321
        %v2323 = vrot.slane %v2276, 6
        %v2324 = vsel %vm2296, %v2319, %v2323
        %v2325 = vrot.slane %v2277, 6
        %v2326 = vsel %vm2296, %v2321, %v2325
        %v2345 = vsel %vm2296, 0.0, %v2297
        %v2346 = vsel %vm2296, 0.0, %v2298
        %v2347 = vsel %vm2296, %v2323, 0.0
        %v2348 = vsel %vm2296, %v2325, 0.0
        %v2350 = vlaneseq
        %v2351 = vshrl.u32 %v2350, 7
        %v2352 = vsub.s32 0, %v2351
        %v2353 = vrot.slane %v2279, %v2352
        %v2354 = vlaneseq
        %v2355 = vshrl.u32 %v2354, 7
        %v2356 = vsub.s32 4, %v2355
        %v2357 = vrot.slane %v2279, %v2356
        %v2360 = vlaneseq
        %v2361 = vshrl.u32 %v2360, 7
        %v2362 = vsub.s32 0, %v2361
        %v2363 = vrot.slane %v2353, %v2362
        %v2364 = vlaneseq
        %v2365 = vshrl.u32 %v2364, 7
        %v2366 = vsub.s32 0, %v2365
        %v2367 = vrot.slane %v2357, %v2366
        %v2368 = vmul.f32 %v2345, %v2363
        %v2369 = vmul.f32 %v2346, %v2367
        %v2370 = vmul.f32 %v2300, %v2363
        %v2371 = vmul.f32 %v2302, %v2367
        %v2372 = vmul.f32 %v2304, %v2363
        %v2373 = vmul.f32 %v2306, %v2367
        %v2374 = vmul.f32 %v2308, %v2363
        %v2375 = vmul.f32 %v2310, %v2367
        %v2376 = vmul.f32 %v2312, %v2363
        %v2377 = vmul.f32 %v2314, %v2367
        %v2378 = vmul.f32 %v2316, %v2363
        %v2379 = vmul.f32 %v2318, %v2367
        %v2380 = vmul.f32 %v2320, %v2363
        %v2381 = vmul.f32 %v2322, %v2367
        %v2382 = vmul.f32 %v2324, %v2363
        %v2383 = vmul.f32 %v2326, %v2367
        %v2384 = vlaneseq
        %v2385 = vshrl.u32 %v2384, 7
        %v2386 = vsub.s32 1, %v2385
        %v2387 = vrot.slane %v2279, %v2386
        %v2388 = vlaneseq
        %v2389 = vshrl.u32 %v2388, 7
        %v2390 = vsub.s32 5, %v2389
        %v2391 = vrot.slane %v2279, %v2390
        %v2394 = vlaneseq
        %v2395 = vshrl.u32 %v2394, 7
        %v2396 = vsub.s32 1, %v2395
        %v2397 = vrot.slane %v2387, %v2396
        %v2398 = vlaneseq
        %v2399 = vshrl.u32 %v2398, 7
        %v2400 = vsub.s32 1, %v2399
        %v2401 = vrot.slane %v2391, %v2400
        %v2402 = vmul.f32 %v2345, %v2397
        %v2403 = vmul.f32 %v2346, %v2401
        %v2404 = vmul.f32 %v2300, %v2397
        %v2405 = vmul.f32 %v2302, %v2401
        %v2406 = vmul.f32 %v2304, %v2397
        %v2407 = vmul.f32 %v2306, %v2401
        %v2408 = vmul.f32 %v2308, %v2397
        %v2409 = vmul.f32 %v2310, %v2401
        %v2410 = vmul.f32 %v2312, %v2397
        %v2411 = vmul.f32 %v2314, %v2401
        %v2412 = vmul.f32 %v2316, %v2397
        %v2413 = vmul.f32 %v2318, %v2401
        %v2414 = vmul.f32 %v2320, %v2397
        %v2415 = vmul.f32 %v2322, %v2401
        %v2416 = vmul.f32 %v2324, %v2397
        %v2417 = vmul.f32 %v2326, %v2401
        %v2418 = vmul.f32 %v2347, %v2397
        %v2419 = vmul.f32 %v2348, %v2401
        %v2438 = vrot.slane %v2402, 2
        %v2439 = vrot.slane %v2404, 2
        %v2440 = vsel %vm1478, %v2438, %v2439
        %v2441 = vrot.slane %v2403, 2
        %v2442 = vrot.slane %v2405, 2
        %v2443 = vsel %vm1478, %v2441, %v2442
        %v2444 = vrot.slane %v2406, 2
        %v2445 = vsel %vm1478, %v2439, %v2444
        %v2446 = vrot.slane %v2407, 2
        %v2447 = vsel %vm1478, %v2442, %v2446
        %v2448 = vrot.slane %v2408, 2
        %v2449 = vsel %vm1478, %v2444, %v2448
        %v2450 = vrot.slane %v2409, 2
        %v2451 = vsel %vm1478, %v2446, %v2450
        %v2452 = vrot.slane %v2410, 2
        %v2453 = vsel %vm1478, %v2448, %v2452
        %v2454 = vrot.slane %v2411, 2
        %v2455 = vsel %vm1478, %v2450, %v2454
        %v2456 = vrot.slane %v2412, 2
        %v2457 = vsel %vm1478, %v2452, %v2456
        %v2458 = vrot.slane %v2413, 2
        %v2459 = vsel %vm1478, %v2454, %v2458
        %v2460 = vrot.slane %v2414, 2
        %v2461 = vsel %vm1478, %v2456, %v2460
        %v2462 = vrot.slane %v2415, 2
        %v2463 = vsel %vm1478, %v2458, %v2462
        %v2464 = vrot.slane %v2416, 2
        %v2465 = vsel %vm1478, %v2460, %v2464
        %v2466 = vrot.slane %v2417, 2
        %v2467 = vsel %vm1478, %v2462, %v2466
        %v2468 = vrot.slane %v2418, 2
        %v2469 = vsel %vm1478, %v2464, %v2468
        %v2470 = vrot.slane %v2419, 2
        %v2471 = vsel %vm1478, %v2466, %v2470
        %v2488 = vadd.f32 %v2368, %v2440
        %v2489 = vadd.f32 %v2369, %v2443
        %v2490 = vadd.f32 %v2370, %v2445
        %v2491 = vadd.f32 %v2371, %v2447
        %v2492 = vadd.f32 %v2372, %v2449
        %v2493 = vadd.f32 %v2373, %v2451
        %v2494 = vadd.f32 %v2374, %v2453
        %v2495 = vadd.f32 %v2375, %v2455
        %v2496 = vadd.f32 %v2376, %v2457
        %v2497 = vadd.f32 %v2377, %v2459
        %v2498 = vadd.f32 %v2378, %v2461
        %v2499 = vadd.f32 %v2379, %v2463
        %v2500 = vadd.f32 %v2380, %v2465
        %v2501 = vadd.f32 %v2381, %v2467
        %v2502 = vadd.f32 %v2382, %v2469
        %v2503 = vadd.f32 %v2383, %v2471
        %v2504 = vlaneseq
        %v2505 = vshrl.u32 %v2504, 7
        %v2506 = vsub.s32 2, %v2505
        %v2507 = vrot.slane %v2279, %v2506
        %v2508 = vlaneseq
        %v2509 = vshrl.u32 %v2508, 7
        %v2510 = vsub.s32 6, %v2509
        %v2511 = vrot.slane %v2279, %v2510
        %v2514 = vlaneseq
        %v2515 = vshrl.u32 %v2514, 7
        %v2516 = vsub.s32 2, %v2515
        %v2517 = vrot.slane %v2507, %v2516
        %v2518 = vlaneseq
        %v2519 = vshrl.u32 %v2518, 7
        %v2520 = vsub.s32 2, %v2519
        %v2521 = vrot.slane %v2511, %v2520
        %v2522 = vmul.f32 %v2345, %v2517
        %v2523 = vmul.f32 %v2346, %v2521
        %v2524 = vmul.f32 %v2300, %v2517
        %v2525 = vmul.f32 %v2302, %v2521
        %v2526 = vmul.f32 %v2304, %v2517
        %v2527 = vmul.f32 %v2306, %v2521
        %v2528 = vmul.f32 %v2308, %v2517
        %v2529 = vmul.f32 %v2310, %v2521
        %v2530 = vmul.f32 %v2312, %v2517
        %v2531 = vmul.f32 %v2314, %v2521
        %v2532 = vmul.f32 %v2316, %v2517
        %v2533 = vmul.f32 %v2318, %v2521
        %v2534 = vmul.f32 %v2320, %v2517
        %v2535 = vmul.f32 %v2322, %v2521
        %v2536 = vmul.f32 %v2324, %v2517
        %v2537 = vmul.f32 %v2326, %v2521
        %v2538 = vmul.f32 %v2347, %v2517
        %v2539 = vmul.f32 %v2348, %v2521
        %v2558 = vrot.slane %v2522, 4
        %v2559 = vrot.slane %v2524, 4
        %v2560 = vsel %vm540, %v2558, %v2559
        %v2561 = vrot.slane %v2523, 4
        %v2562 = vrot.slane %v2525, 4
        %v2563 = vsel %vm540, %v2561, %v2562
        %v2564 = vrot.slane %v2526, 4
        %v2565 = vsel %vm540, %v2559, %v2564
        %v2566 = vrot.slane %v2527, 4
        %v2567 = vsel %vm540, %v2562, %v2566
        %v2568 = vrot.slane %v2528, 4
        %v2569 = vsel %vm540, %v2564, %v2568
        %v2570 = vrot.slane %v2529, 4
        %v2571 = vsel %vm540, %v2566, %v2570
        %v2572 = vrot.slane %v2530, 4
        %v2573 = vsel %vm540, %v2568, %v2572
        %v2574 = vrot.slane %v2531, 4
        %v2575 = vsel %vm540, %v2570, %v2574
        %v2576 = vrot.slane %v2532, 4
        %v2577 = vsel %vm540, %v2572, %v2576
        %v2578 = vrot.slane %v2533, 4
        %v2579 = vsel %vm540, %v2574, %v2578
        %v2580 = vrot.slane %v2534, 4
        %v2581 = vsel %vm540, %v2576, %v2580
        %v2582 = vrot.slane %v2535, 4
        %v2583 = vsel %vm540, %v2578, %v2582
        %v2584 = vrot.slane %v2536, 4
        %v2585 = vsel %vm540, %v2580, %v2584
        %v2586 = vrot.slane %v2537, 4
        %v2587 = vsel %vm540, %v2582, %v2586
        %v2588 = vrot.slane %v2538, 4
        %v2589 = vsel %vm540, %v2584, %v2588
        %v2590 = vrot.slane %v2539, 4
        %v2591 = vsel %vm540, %v2586, %v2590
        %v2608 = vadd.f32 %v2488, %v2560
        %v2609 = vadd.f32 %v2489, %v2563
        %v2610 = vadd.f32 %v2490, %v2565
        %v2611 = vadd.f32 %v2491, %v2567
        %v2612 = vadd.f32 %v2492, %v2569
        %v2613 = vadd.f32 %v2493, %v2571
        %v2614 = vadd.f32 %v2494, %v2573
        %v2615 = vadd.f32 %v2495, %v2575
        %v2616 = vadd.f32 %v2496, %v2577
        %v2617 = vadd.f32 %v2497, %v2579
        %v2618 = vadd.f32 %v2498, %v2581
        %v2619 = vadd.f32 %v2499, %v2583
        %v2620 = vadd.f32 %v2500, %v2585
        %v2621 = vadd.f32 %v2501, %v2587
        %v2622 = vadd.f32 %v2502, %v2589
        %v2623 = vadd.f32 %v2503, %v2591
        %vm2624 = vcmp.ge.f32.partialorder %v2608, 0.0
        %vm2625 = vcmp.ge.f32.partialorder %v2609, 0.0
        %vm2626 = vcmp.ge.f32.partialorder %v2610, 0.0
        %vm2627 = vcmp.ge.f32.partialorder %v2611, 0.0
        %vm2628 = vcmp.ge.f32.partialorder %v2612, 0.0
        %vm2629 = vcmp.ge.f32.partialorder %v2613, 0.0
        %vm2630 = vcmp.ge.f32.partialorder %v2614, 0.0
        %vm2631 = vcmp.ge.f32.partialorder %v2615, 0.0
        %vm2632 = vcmp.ge.f32.partialorder %v2616, 0.0
        %vm2633 = vcmp.ge.f32.partialorder %v2617, 0.0
        %vm2634 = vcmp.ge.f32.partialorder %v2618, 0.0
        %vm2635 = vcmp.ge.f32.partialorder %v2619, 0.0
        %vm2636 = vcmp.ge.f32.partialorder %v2620, 0.0
        %vm2637 = vcmp.ge.f32.partialorder %v2621, 0.0
        %vm2638 = vcmp.ge.f32.partialorder %v2622, 0.0
        %vm2639 = vcmp.ge.f32.partialorder %v2623, 0.0
        %s2640 = sld [smem:[#allocation3 + $0x81]]
        %v2641 = vstv %s2640
        %v2642 = vmul.f32 %v2641, %v2608
        %v2643 = vmul.f32 %v2641, %v2609
        %v2644 = vmul.f32 %v2641, %v2610
        %v2645 = vmul.f32 %v2641, %v2611
        %v2646 = vmul.f32 %v2641, %v2612
        %v2647 = vmul.f32 %v2641, %v2613
        %v2648 = vmul.f32 %v2641, %v2614
        %v2649 = vmul.f32 %v2641, %v2615
        %v2650 = vmul.f32 %v2641, %v2616
        %v2651 = vmul.f32 %v2641, %v2617
        %v2652 = vmul.f32 %v2641, %v2618
        %v2653 = vmul.f32 %v2641, %v2619
        %v2654 = vmul.f32 %v2641, %v2620
        %v2655 = vmul.f32 %v2641, %v2621
        %v2656 = vmul.f32 %v2641, %v2622
        %v2657 = vmul.f32 %v2641, %v2623
        %v2658 = vsel %vm2624, %v2608, %v2642
        %v2659 = vsel %vm2625, %v2609, %v2643
        %v2660 = vsel %vm2626, %v2610, %v2644
        %v2661 = vsel %vm2627, %v2611, %v2645
        %v2662 = vsel %vm2628, %v2612, %v2646
        %v2663 = vsel %vm2629, %v2613, %v2647
        %v2664 = vsel %vm2630, %v2614, %v2648
        %v2665 = vsel %vm2631, %v2615, %v2649
        %v2666 = vsel %vm2632, %v2616, %v2650
        %v2667 = vsel %vm2633, %v2617, %v2651
        %v2668 = vsel %vm2634, %v2618, %v2652
        %v2669 = vsel %vm2635, %v2619, %v2653
        %v2670 = vsel %vm2636, %v2620, %v2654
        %v2671 = vsel %vm2637, %v2621, %v2655
        %v2672 = vsel %vm2638, %v2622, %v2656
        %v2673 = vsel %vm2639, %v2623, %v2657
        %v2674 = vadd.f32 %v2658, %v2660
        %v2675 = vadd.f32 %v2674, %v2662
        %v2676 = vadd.f32 %v2675, %v2664
        %v2677 = vadd.f32 %v2676, %v2666
        %v2678 = vadd.f32 %v2677, %v2668
        %v2679 = vadd.f32 %v2678, %v2670
        %v2680 = vadd.f32 %v2679, %v2672
        %v2681 = vrot.slane %v2680, 4
        %v2682 = vadd.f32 %v2680, %v2681
        %v2683 = vrot.slane %v2682, 2
        %v2684 = vadd.f32 %v2682, %v2683
        %v2685 = vrot.slane %v2684, 1
        %v2686 = vadd.f32 %v2684, %v2685
        %v2687 = vadd.f32 %v2659, %v2661
        %v2688 = vadd.f32 %v2687, %v2663
        %v2689 = vadd.f32 %v2688, %v2665
        %v2690 = vadd.f32 %v2689, %v2667
        %v2691 = vadd.f32 %v2690, %v2669
        %v2692 = vadd.f32 %v2691, %v2671
        %v2693 = vadd.f32 %v2692, %v2673
        %v2694 = vrot.slane %v2693, 4
        %v2695 = vadd.f32 %v2693, %v2694
        %v2696 = vrot.slane %v2695, 2
        %v2697 = vadd.f32 %v2695, %v2696
        %v2698 = vrot.slane %v2697, 1
        %v2699 = vadd.f32 %v2697, %v2698
        %v2700 = vmul.f32 %v2658, %v2658
        %v2701 = vmul.f32 %v2659, %v2659
        %v2702 = vmul.f32 %v2660, %v2660
        %v2703 = vmul.f32 %v2661, %v2661
        %v2704 = vmul.f32 %v2662, %v2662
        %v2705 = vmul.f32 %v2663, %v2663
        %v2706 = vmul.f32 %v2664, %v2664
        %v2707 = vmul.f32 %v2665, %v2665
        %v2708 = vmul.f32 %v2666, %v2666
        %v2709 = vmul.f32 %v2667, %v2667
        %v2710 = vmul.f32 %v2668, %v2668
        %v2711 = vmul.f32 %v2669, %v2669
        %v2712 = vmul.f32 %v2670, %v2670
        %v2713 = vmul.f32 %v2671, %v2671
        %v2714 = vmul.f32 %v2672, %v2672
        %v2715 = vmul.f32 %v2673, %v2673
        %v2716 = vadd.f32 %v2700, %v2702
        %v2717 = vadd.f32 %v2716, %v2704
        %v2718 = vadd.f32 %v2717, %v2706
        %v2719 = vadd.f32 %v2718, %v2708
        %v2720 = vadd.f32 %v2719, %v2710
        %v2721 = vadd.f32 %v2720, %v2712
        %v2722 = vadd.f32 %v2721, %v2714
        %v2723 = vrot.slane %v2722, 4
        %v2724 = vadd.f32 %v2722, %v2723
        %v2725 = vrot.slane %v2724, 2
        %v2726 = vadd.f32 %v2724, %v2725
        %v2727 = vrot.slane %v2726, 1
        %v2728 = vadd.f32 %v2726, %v2727
        %v2729 = vadd.f32 %v2701, %v2703
        %v2730 = vadd.f32 %v2729, %v2705
        %v2731 = vadd.f32 %v2730, %v2707
        %v2732 = vadd.f32 %v2731, %v2709
        %v2733 = vadd.f32 %v2732, %v2711
        %v2734 = vadd.f32 %v2733, %v2713
        %v2735 = vadd.f32 %v2734, %v2715
        %v2736 = vrot.slane %v2735, 4
        %v2737 = vadd.f32 %v2735, %v2736
        %v2738 = vrot.slane %v2737, 2
        %v2739 = vadd.f32 %v2737, %v2738
        %v2740 = vrot.slane %v2739, 1
        %v2741 = vadd.f32 %v2739, %v2740
        %v2742 = vadd.f32 %v2686, %v2699
        %2743 = vadd.xlane.f32.xlu0 %v2742
        %v2744 = vpop.xlane.xlu0 %2743
        %v2745 = vadd.f32 %v2728, %v2741
        %2746 = vadd.xlane.f32.xlu0 %v2745
        %v2747 = vpop.xlane.xlu0 %2746
        %v2748 = vmul.f32 %v2744, 6.1035156e-05
        %v2749 = vmul.f32 %v2747, 6.1035156e-05
        %v2750 = vmul.f32 %v2748, %v2748
        %v2751 = vsub.f32 %v2749, %v2750
        %v2752 = vmax.f32 %v2751, 0.0
        %v2753 = vadd.f32 %v2752, 1e-08
        %v2754 = vrsqrt.pop %v2753
        %v2755 = vpack.c.bf16 %v2660, %v2658
        %v2756 = vpack.c.bf16 %v2661, %v2659
        %v2757 = vpack.c.bf16 %v2664, %v2662
        %v2758 = vpack.c.bf16 %v2665, %v2663
        %v2759 = vpack.c.bf16 %v2668, %v2666
        %v2760 = vpack.c.bf16 %v2669, %v2667
        %v2761 = vpack.c.bf16 %v2672, %v2670
        %v2762 = vpack.c.bf16 %v2673, %v2671
        %s2763 = scalar_lea.vmem %s10, 128
        %v2764 = vld [vmem:[%s2763] sm:$0xf]
        %v2765 = vld [vmem:[%s2763 + $0x4] sm:$0xf]
        %v2766 = vld [vmem:[%s2763 + $0x8] sm:$0xf]
        %v2767 = vld [vmem:[%s2763 + $0xc] sm:$0xf]
        %v2768 = vld [vmem:[%s2763 + $0x10] sm:$0xf]
        %v2769 = vld [vmem:[%s2763 + $0x14] sm:$0xf]
        %v2770 = vld [vmem:[%s2763 + $0x18] sm:$0xf]
        %v2771 = vld [vmem:[%s2763 + $0x1c] sm:$0xf]
        %v2772 = vld [vmem:[%s2763 + $0x20] sm:$0xf]
        %v2773 = vld [vmem:[%s2763 + $0x24] sm:$0xf]
        %v2774 = vld [vmem:[%s2763 + $0x28] sm:$0xf]
        %v2775 = vld [vmem:[%s2763 + $0x2c] sm:$0xf]
        %v2776 = vld [vmem:[%s2763 + $0x30] sm:$0xf]
        %v2777 = vld [vmem:[%s2763 + $0x34] sm:$0xf]
        %v2778 = vld [vmem:[%s2763 + $0x38] sm:$0xf]
        %v2779 = vld [vmem:[%s2763 + $0x3c] sm:$0xf]
        %v2780 = vld [vmem:[%s2763 + $0x40] sm:$0xf]
        %v2781 = vld [vmem:[%s2763 + $0x44] sm:$0xf]
        %v2782 = vld [vmem:[%s2763 + $0x48] sm:$0xf]
        %v2783 = vld [vmem:[%s2763 + $0x4c] sm:$0xf]
        %v2784 = vld [vmem:[%s2763 + $0x50] sm:$0xf]
        %v2785 = vld [vmem:[%s2763 + $0x54] sm:$0xf]
        %v2786 = vld [vmem:[%s2763 + $0x58] sm:$0xf]
        %v2787 = vld [vmem:[%s2763 + $0x5c] sm:$0xf]
        %v2788 = vld [vmem:[%s2763 + $0x60] sm:$0xf]
        %v2789 = vld [vmem:[%s2763 + $0x64] sm:$0xf]
        %v2790 = vld [vmem:[%s2763 + $0x68] sm:$0xf]
        %v2791 = vld [vmem:[%s2763 + $0x6c] sm:$0xf]
        %v2792 = vld [vmem:[%s2763 + $0x70] sm:$0xf]
        %v2793 = vld [vmem:[%s2763 + $0x74] sm:$0xf]
        %v2794 = vld [vmem:[%s2763 + $0x78] sm:$0xf]
        %v2795 = vld [vmem:[%s2763 + $0x7c] sm:$0xf]
        %v2828 = vunpack.c.l.b16 %v2764
        %v2829 = vunpack.c.l.b16 %v2765
        %v2830 = vunpack.c.l.b16 %v2766
        %v2831 = vunpack.c.l.b16 %v2767
        %v2832 = vunpack.c.l.b16 %v2768
        %v2833 = vunpack.c.l.b16 %v2769
        %v2834 = vunpack.c.l.b16 %v2770
        %v2835 = vunpack.c.l.b16 %v2771
        %v2836 = vunpack.c.l.b16 %v2772
        %v2837 = vunpack.c.l.b16 %v2773
        %v2838 = vunpack.c.l.b16 %v2774
        %v2839 = vunpack.c.l.b16 %v2775
        %v2840 = vunpack.c.l.b16 %v2776
        %v2841 = vunpack.c.l.b16 %v2777
        %v2842 = vunpack.c.l.b16 %v2778
        %v2843 = vunpack.c.l.b16 %v2779
        %v2844 = vunpack.c.l.b16 %v2780
        %v2845 = vunpack.c.l.b16 %v2781
        %v2846 = vunpack.c.l.b16 %v2782
        %v2847 = vunpack.c.l.b16 %v2783
        %v2848 = vunpack.c.l.b16 %v2784
        %v2849 = vunpack.c.l.b16 %v2785
        %v2850 = vunpack.c.l.b16 %v2786
        %v2851 = vunpack.c.l.b16 %v2787
        %v2852 = vunpack.c.l.b16 %v2788
        %v2853 = vunpack.c.l.b16 %v2789
        %v2854 = vunpack.c.l.b16 %v2790
        %v2855 = vunpack.c.l.b16 %v2791
        %v2856 = vunpack.c.l.b16 %v2792
        %v2857 = vunpack.c.l.b16 %v2793
        %v2858 = vunpack.c.l.b16 %v2794
        %v2859 = vunpack.c.l.b16 %v2795
        %v2860 = vpack.c.b16 %v2829, %v2828
        %v2861 = vpack.c.b16 %v2831, %v2830
        %v2862 = vpack.c.b16 %v2833, %v2832
        %v2863 = vpack.c.b16 %v2835, %v2834
        %v2864 = vpack.c.b16 %v2837, %v2836
        %v2865 = vpack.c.b16 %v2839, %v2838
        %v2866 = vpack.c.b16 %v2841, %v2840
        %v2867 = vpack.c.b16 %v2843, %v2842
        %v2868 = vpack.c.b16 %v2845, %v2844
        %v2869 = vpack.c.b16 %v2847, %v2846
        %v2870 = vpack.c.b16 %v2849, %v2848
        %v2871 = vpack.c.b16 %v2851, %v2850
        %v2872 = vpack.c.b16 %v2853, %v2852
        %v2873 = vpack.c.b16 %v2855, %v2854
        %v2874 = vpack.c.b16 %v2857, %v2856
        %v2875 = vpack.c.b16 %v2859, %v2858
        %2892 = vmatprep.subr.bf16.mxu0 0
        %2893 = vmatpush1.bf16.msra.mxu0 %v2867
        %2894 = vmatprep.subr.bf16.mxu0 0
        %2895 = vmatpush1.bf16.msra.mxu0 %v2866
        %2896 = vmatprep.subr.bf16.mxu0 0
        %2897 = vmatpush1.bf16.msra.mxu0 %v2865
        %2898 = vmatprep.subr.bf16.mxu0 0
        %2899 = vmatpush1.bf16.msra.mxu0 %v2864
        %2900 = vmatprep.subr.bf16.mxu0 0
        %2901 = vmatpush1.bf16.msra.mxu0 %v2863
        %2902 = vmatprep.subr.bf16.mxu0 0
        %2903 = vmatpush1.bf16.msra.mxu0 %v2862
        %2904 = vmatprep.subr.bf16.mxu0 0
        %2905 = vmatpush1.bf16.msra.mxu0 %v2861
        %2906 = vmatprep.subr.bf16.mxu0 0
        %2907 = vmatpush1.bf16.msra.mxu0 %v2860
        %2908 = vmatprep.subr.bf16.mxu0 0
        %2909 = vmatpush2.bf16.msra.mxu0 %v2875
        %2910 = vmatprep.subr.bf16.mxu0 0
        %2911 = vmatpush2.bf16.msra.mxu0 %v2874
        %2912 = vmatprep.subr.bf16.mxu0 0
        %2913 = vmatpush2.bf16.msra.mxu0 %v2873
        %2914 = vmatprep.subr.bf16.mxu0 0
        %2915 = vmatpush2.bf16.msra.mxu0 %v2872
        %2916 = vmatprep.subr.bf16.mxu0 0
        %2917 = vmatpush2.bf16.msra.mxu0 %v2871
        %2918 = vmatprep.subr.bf16.mxu0 0
        %2919 = vmatpush2.bf16.msra.mxu0 %v2870
        %2920 = vmatprep.subr.bf16.mxu0 0
        %2921 = vmatpush2.bf16.msra.mxu0 %v2869
        %2922 = vmatprep.subr.bf16.mxu0 0
        %2923 = vmatpush2.bf16.msra.mxu0 %v2868
        %2924 = vmatprep.mubr.bf16.mxu0 %v2756
        %2925 = vmatmul.mubr.bf16.gmra.mxu0 %v2755
        %v2926 = vpop.f32.mrf.mxu0
        %v2927 = vadd.f32 0.0, %v2926
        %v2928 = vpop.f32.mrf.mxu0
        %v2929 = vpop.f32.mrf.mxu0
        %v2930 = vadd.f32 0.0, %v2929
        %v2931 = vpop.f32.mrf.mxu0
        %2932 = vmatprep.mubr.bf16.mxu0 %v2758
        %2933 = vmatmul.mubr.bf16.gmra.mxu0 %v2757
        %v2934 = vpop.f32.mrf.mxu0
        %v2935 = vadd.f32 0.0, %v2934
        %v2936 = vpop.f32.mrf.mxu0
        %v2937 = vpop.f32.mrf.mxu0
        %v2938 = vadd.f32 0.0, %v2937
        %v2939 = vpop.f32.mrf.mxu0
        %2940 = vmatprep.mubr.bf16.mxu0 %v2760
        %2941 = vmatmul.mubr.bf16.gmra.mxu0 %v2759
        %v2942 = vpop.f32.mrf.mxu0
        %v2943 = vadd.f32 0.0, %v2942
        %v2944 = vpop.f32.mrf.mxu0
        %v2945 = vpop.f32.mrf.mxu0
        %v2946 = vadd.f32 0.0, %v2945
        %v2947 = vpop.f32.mrf.mxu0
        %2948 = vmatprep.mubr.bf16.mxu0 %v2762
        %2949 = vmatmul.mubr.bf16.gmra.mxu0 %v2761
        %v2950 = vpop.f32.mrf.mxu0
        %v2951 = vadd.f32 0.0, %v2950
        %v2952 = vpop.f32.mrf.mxu0
        %v2953 = vpop.f32.mrf.mxu0
        %v2954 = vadd.f32 0.0, %v2953
        %v2955 = vpop.f32.mrf.mxu0
        %2956 = vdwg.mxu0
        %s2957 = scalar_lea.vmem %s12, 1
        %v2958 = vld [vmem:[%s2957] sm:$0x1]
        %v2959 = vmul.f32 %v2748, %v2754
        %s2960 = scalar_lea.vmem %s11, 1
        %v2961 = vld [vmem:[%s2960] sm:$0x1]
        %v2962 = vmul.f32 %v2959, %v2961
        %v2963 = vsub.f32 %v2958, %v2962
        %v2964 = vmul.f32 %v2927, %v2754
        %v2965 = vmul.f32 %v2930, %v2754
        %v2966 = vmul.f32 %v2935, %v2754
        %v2967 = vmul.f32 %v2938, %v2754
        %v2968 = vmul.f32 %v2943, %v2754
        %v2969 = vmul.f32 %v2946, %v2754
        %v2970 = vmul.f32 %v2951, %v2754
        %v2971 = vmul.f32 %v2954, %v2754
        %v2973 = vlaneseq
        %v2974 = vshrl.u32 %v2973, 7
        %v2975 = vsub.s32 0, %v2974
        %v2976 = vrot.slane %v2963, %v2975
        %v2978 = vadd.f32 %v2964, %v2976
        %v2979 = vadd.f32 %v2965, %v2976
        %v2980 = vadd.f32 %v2966, %v2976
        %v2981 = vadd.f32 %v2967, %v2976
        %v2982 = vadd.f32 %v2968, %v2976
        %v2983 = vadd.f32 %v2969, %v2976
        %v2984 = vadd.f32 %v2970, %v2976
        %v2985 = vadd.f32 %v2971, %v2976
        %v2986 = vadd.f32 %v1904, %v2978
        %v2987 = vadd.f32 %v1905, %v2979
        %v2988 = vadd.f32 %v1906, %v2980
        %v2989 = vadd.f32 %v1907, %v2981
        %v2990 = vadd.f32 %v1908, %v2982
        %v2991 = vadd.f32 %v1909, %v2983
        %v2992 = vadd.f32 %v1910, %v2984
        %v2993 = vadd.f32 %v1911, %v2985
        %v2994 = vpack.c.bf16 %v2987, %v2986
        %v2995 = vpack.c.bf16 %v2989, %v2988
        %v2996 = vpack.c.bf16 %v2991, %v2990
        %v2997 = vpack.c.bf16 %v2993, %v2992
        %s2998 = scalar_lea.vmem %s6, 256
        %v2999 = vld [vmem:[%s2998] sm:$0xff]
        %v3000 = vld [vmem:[%s2998 + $0x8] sm:$0xff]
        %v3001 = vld [vmem:[%s2998 + $0x10] sm:$0xff]
        %v3002 = vld [vmem:[%s2998 + $0x18] sm:$0xff]
        %v3003 = vld [vmem:[%s2998 + $0x20] sm:$0xff]
        %v3004 = vld [vmem:[%s2998 + $0x28] sm:$0xff]
        %v3005 = vld [vmem:[%s2998 + $0x30] sm:$0xff]
        %v3006 = vld [vmem:[%s2998 + $0x38] sm:$0xff]
        %v3007 = vld [vmem:[%s2998 + $0x40] sm:$0xff]
        %v3008 = vld [vmem:[%s2998 + $0x48] sm:$0xff]
        %v3009 = vld [vmem:[%s2998 + $0x50] sm:$0xff]
        %v3010 = vld [vmem:[%s2998 + $0x58] sm:$0xff]
        %v3011 = vld [vmem:[%s2998 + $0x60] sm:$0xff]
        %v3012 = vld [vmem:[%s2998 + $0x68] sm:$0xff]
        %v3013 = vld [vmem:[%s2998 + $0x70] sm:$0xff]
        %v3014 = vld [vmem:[%s2998 + $0x78] sm:$0xff]
        %v3031 = vunpack.c.l.b16 %v2999
        %v3032 = vunpack.c.h.b16 %v2999
        %v3033 = vunpack.c.l.b16 %v3000
        %v3034 = vunpack.c.h.b16 %v3000
        %v3035 = vunpack.c.l.b16 %v3001
        %v3036 = vunpack.c.h.b16 %v3001
        %v3037 = vunpack.c.l.b16 %v3002
        %v3038 = vunpack.c.h.b16 %v3002
        %v3039 = vunpack.c.l.b16 %v3003
        %v3040 = vunpack.c.h.b16 %v3003
        %v3041 = vunpack.c.l.b16 %v3004
        %v3042 = vunpack.c.h.b16 %v3004
        %v3043 = vunpack.c.l.b16 %v3005
        %v3044 = vunpack.c.h.b16 %v3005
        %v3045 = vunpack.c.l.b16 %v3006
        %v3046 = vunpack.c.h.b16 %v3006
        %v3047 = vunpack.c.l.b16 %v3007
        %v3048 = vunpack.c.h.b16 %v3007
        %v3049 = vunpack.c.l.b16 %v3008
        %v3050 = vunpack.c.h.b16 %v3008
        %v3051 = vunpack.c.l.b16 %v3009
        %v3052 = vunpack.c.h.b16 %v3009
        %v3053 = vunpack.c.l.b16 %v3010
        %v3054 = vunpack.c.h.b16 %v3010
        %v3055 = vunpack.c.l.b16 %v3011
        %v3056 = vunpack.c.h.b16 %v3011
        %v3057 = vunpack.c.l.b16 %v3012
        %v3058 = vunpack.c.h.b16 %v3012
        %v3059 = vunpack.c.l.b16 %v3013
        %v3060 = vunpack.c.h.b16 %v3013
        %v3061 = vunpack.c.l.b16 %v3014
        %v3062 = vunpack.c.h.b16 %v3014
        %v3063 = vpack.c.b16 %v3033, %v3031
        %v3064 = vpack.c.b16 %v3034, %v3032
        %v3065 = vpack.c.b16 %v3037, %v3035
        %v3066 = vpack.c.b16 %v3038, %v3036
        %v3067 = vpack.c.b16 %v3041, %v3039
        %v3068 = vpack.c.b16 %v3042, %v3040
        %v3069 = vpack.c.b16 %v3045, %v3043
        %v3070 = vpack.c.b16 %v3046, %v3044
        %v3071 = vpack.c.b16 %v3049, %v3047
        %v3072 = vpack.c.b16 %v3050, %v3048
        %v3073 = vpack.c.b16 %v3053, %v3051
        %v3074 = vpack.c.b16 %v3054, %v3052
        %v3075 = vpack.c.b16 %v3057, %v3055
        %v3076 = vpack.c.b16 %v3058, %v3056
        %v3077 = vpack.c.b16 %v3061, %v3059
        %v3078 = vpack.c.b16 %v3062, %v3060
        %3095 = vmatprep.subr.bf16.mxu0 %v3078
        %3096 = vmatpush1.bf16.msra.mxu0 %v3077
        %3097 = vmatprep.subr.bf16.mxu0 %v3076
        %3098 = vmatpush1.bf16.msra.mxu0 %v3075
        %3099 = vmatprep.subr.bf16.mxu0 %v3074
        %3100 = vmatpush1.bf16.msra.mxu0 %v3073
        %3101 = vmatprep.subr.bf16.mxu0 %v3072
        %3102 = vmatpush1.bf16.msra.mxu0 %v3071
        %3103 = vmatprep.subr.bf16.mxu0 %v3070
        %3104 = vmatpush1.bf16.msra.mxu0 %v3069
        %3105 = vmatprep.subr.bf16.mxu0 %v3068
        %3106 = vmatpush1.bf16.msra.mxu0 %v3067
        %3107 = vmatprep.subr.bf16.mxu0 %v3066
        %3108 = vmatpush1.bf16.msra.mxu0 %v3065
        %3109 = vmatprep.subr.bf16.mxu0 %v3064
        %3110 = vmatpush1.bf16.msra.mxu0 %v3063
        %3111 = vmatprep.subr.bf16.mxu0 0
        %3112 = vmatpush2.bf16.msra.mxu0 0
        %3113 = vmatprep.subr.bf16.mxu0 0
        %3114 = vmatpush2.bf16.msra.mxu0 0
        %3115 = vmatprep.subr.bf16.mxu0 0
        %3116 = vmatpush2.bf16.msra.mxu0 0
        %3117 = vmatprep.subr.bf16.mxu0 0
        %3118 = vmatpush2.bf16.msra.mxu0 0
        %3119 = vmatprep.subr.bf16.mxu0 0
        %3120 = vmatpush2.bf16.msra.mxu0 0
        %3121 = vmatprep.subr.bf16.mxu0 0
        %3122 = vmatpush2.bf16.msra.mxu0 0
        %3123 = vmatprep.subr.bf16.mxu0 0
        %3124 = vmatpush2.bf16.msra.mxu0 0
        %3125 = vmatprep.subr.bf16.mxu0 0
        %3126 = vmatpush2.bf16.msra.mxu0 0
        %3127 = vmatprep.mubr.bf16.mxu0 0
        %3128 = vmatmul.mubr.bf16.gmra.mxu0 %v2994
        %v3129 = vpop.f32.mrf.mxu0
        %v3130 = vadd.f32 0.0, %v3129
        %v3131 = vpop.f32.mrf.mxu0
        %v3132 = vadd.f32 0.0, %v3131
        %v3133 = vpop.f32.mrf.mxu0
        %v3134 = vadd.f32 0.0, %v3133
        %v3135 = vpop.f32.mrf.mxu0
        %v3136 = vadd.f32 0.0, %v3135
        %3137 = vmatprep.mubr.bf16.mxu0 0
        %3138 = vmatmul.mubr.bf16.gmra.mxu0 %v2995
        %v3139 = vpop.f32.mrf.mxu0
        %v3140 = vadd.f32 0.0, %v3139
        %v3141 = vpop.f32.mrf.mxu0
        %v3142 = vadd.f32 0.0, %v3141
        %v3143 = vpop.f32.mrf.mxu0
        %v3144 = vadd.f32 0.0, %v3143
        %v3145 = vpop.f32.mrf.mxu0
        %v3146 = vadd.f32 0.0, %v3145
        %3147 = vmatprep.mubr.bf16.mxu0 0
        %3148 = vmatmul.mubr.bf16.gmra.mxu0 %v2996
        %v3149 = vpop.f32.mrf.mxu0
        %v3150 = vadd.f32 0.0, %v3149
        %v3151 = vpop.f32.mrf.mxu0
        %v3152 = vadd.f32 0.0, %v3151
        %v3153 = vpop.f32.mrf.mxu0
        %v3154 = vadd.f32 0.0, %v3153
        %v3155 = vpop.f32.mrf.mxu0
        %v3156 = vadd.f32 0.0, %v3155
        %3157 = vmatprep.mubr.bf16.mxu0 0
        %3158 = vmatmul.mubr.bf16.gmra.mxu0 %v2997
        %v3159 = vpop.f32.mrf.mxu0
        %v3160 = vadd.f32 0.0, %v3159
        %v3161 = vpop.f32.mrf.mxu0
        %v3162 = vadd.f32 0.0, %v3161
        %v3163 = vpop.f32.mrf.mxu0
        %v3164 = vadd.f32 0.0, %v3163
        %v3165 = vpop.f32.mrf.mxu0
        %v3166 = vadd.f32 0.0, %v3165
        %3167 = vdwg.mxu0
        %vm3168 = vcmp.ge.f32.partialorder %v3130, 0.0
        %vm3169 = vcmp.ge.f32.partialorder %v3132, 0.0
        %vm3170 = vcmp.ge.f32.partialorder %v3134, 0.0
        %vm3171 = vcmp.ge.f32.partialorder %v3136, 0.0
        %vm3172 = vcmp.ge.f32.partialorder %v3140, 0.0
        %vm3173 = vcmp.ge.f32.partialorder %v3142, 0.0
        %vm3174 = vcmp.ge.f32.partialorder %v3144, 0.0
        %vm3175 = vcmp.ge.f32.partialorder %v3146, 0.0
        %vm3176 = vcmp.ge.f32.partialorder %v3150, 0.0
        %vm3177 = vcmp.ge.f32.partialorder %v3152, 0.0
        %vm3178 = vcmp.ge.f32.partialorder %v3154, 0.0
        %vm3179 = vcmp.ge.f32.partialorder %v3156, 0.0
        %vm3180 = vcmp.ge.f32.partialorder %v3160, 0.0
        %vm3181 = vcmp.ge.f32.partialorder %v3162, 0.0
        %vm3182 = vcmp.ge.f32.partialorder %v3164, 0.0
        %vm3183 = vcmp.ge.f32.partialorder %v3166, 0.0
        %s3184 = sld [smem:[#allocation3 + $0x2]]
        %v3185 = vstv %s3184
        %v3186 = vmul.f32 %v3185, %v3130
        %v3187 = vmul.f32 %v3185, %v3132
        %v3188 = vmul.f32 %v3185, %v3134
        %v3189 = vmul.f32 %v3185, %v3136
        %v3190 = vmul.f32 %v3185, %v3140
        %v3191 = vmul.f32 %v3185, %v3142
        %v3192 = vmul.f32 %v3185, %v3144
        %v3193 = vmul.f32 %v3185, %v3146
        %v3194 = vmul.f32 %v3185, %v3150
        %v3195 = vmul.f32 %v3185, %v3152
        %v3196 = vmul.f32 %v3185, %v3154
        %v3197 = vmul.f32 %v3185, %v3156
        %v3198 = vmul.f32 %v3185, %v3160
        %v3199 = vmul.f32 %v3185, %v3162
        %v3200 = vmul.f32 %v3185, %v3164
        %v3201 = vmul.f32 %v3185, %v3166
        %v3202 = vsel %vm3168, %v3130, %v3186
        %v3203 = vsel %vm3169, %v3132, %v3187
        %v3204 = vsel %vm3170, %v3134, %v3188
        %v3205 = vsel %vm3171, %v3136, %v3189
        %v3206 = vsel %vm3172, %v3140, %v3190
        %v3207 = vsel %vm3173, %v3142, %v3191
        %v3208 = vsel %vm3174, %v3144, %v3192
        %v3209 = vsel %vm3175, %v3146, %v3193
        %v3210 = vsel %vm3176, %v3150, %v3194
        %v3211 = vsel %vm3177, %v3152, %v3195
        %v3212 = vsel %vm3178, %v3154, %v3196
        %v3213 = vsel %vm3179, %v3156, %v3197
        %v3214 = vsel %vm3180, %v3160, %v3198
        %v3215 = vsel %vm3181, %v3162, %v3199
        %v3216 = vsel %vm3182, %v3164, %v3200
        %v3217 = vsel %vm3183, %v3166, %v3201
        %v3218 = vadd.f32 %v3202, %v3204
        %v3219 = vadd.f32 %v3218, %v3206
        %v3220 = vadd.f32 %v3219, %v3208
        %v3221 = vadd.f32 %v3220, %v3210
        %v3222 = vadd.f32 %v3221, %v3212
        %v3223 = vadd.f32 %v3222, %v3214
        %v3224 = vadd.f32 %v3223, %v3216
        %v3225 = vrot.slane %v3224, 4
        %v3226 = vadd.f32 %v3224, %v3225
        %v3227 = vrot.slane %v3226, 2
        %v3228 = vadd.f32 %v3226, %v3227
        %v3229 = vrot.slane %v3228, 1
        %v3230 = vadd.f32 %v3228, %v3229
        %v3231 = vadd.f32 %v3203, %v3205
        %v3232 = vadd.f32 %v3231, %v3207
        %v3233 = vadd.f32 %v3232, %v3209
        %v3234 = vadd.f32 %v3233, %v3211
        %v3235 = vadd.f32 %v3234, %v3213
        %v3236 = vadd.f32 %v3235, %v3215
        %v3237 = vadd.f32 %v3236, %v3217
        %v3238 = vrot.slane %v3237, 4
        %v3239 = vadd.f32 %v3237, %v3238
        %v3240 = vrot.slane %v3239, 2
        %v3241 = vadd.f32 %v3239, %v3240
        %v3242 = vrot.slane %v3241, 1
        %v3243 = vadd.f32 %v3241, %v3242
        %v3244 = vmul.f32 %v3202, %v3202
        %v3245 = vmul.f32 %v3203, %v3203
        %v3246 = vmul.f32 %v3204, %v3204
        %v3247 = vmul.f32 %v3205, %v3205
        %v3248 = vmul.f32 %v3206, %v3206
        %v3249 = vmul.f32 %v3207, %v3207
        %v3250 = vmul.f32 %v3208, %v3208
        %v3251 = vmul.f32 %v3209, %v3209
        %v3252 = vmul.f32 %v3210, %v3210
        %v3253 = vmul.f32 %v3211, %v3211
        %v3254 = vmul.f32 %v3212, %v3212
        %v3255 = vmul.f32 %v3213, %v3213
        %v3256 = vmul.f32 %v3214, %v3214
        %v3257 = vmul.f32 %v3215, %v3215
        %v3258 = vmul.f32 %v3216, %v3216
        %v3259 = vmul.f32 %v3217, %v3217
        %v3260 = vadd.f32 %v3244, %v3246
        %v3261 = vadd.f32 %v3260, %v3248
        %v3262 = vadd.f32 %v3261, %v3250
        %v3263 = vadd.f32 %v3262, %v3252
        %v3264 = vadd.f32 %v3263, %v3254
        %v3265 = vadd.f32 %v3264, %v3256
        %v3266 = vadd.f32 %v3265, %v3258
        %v3267 = vrot.slane %v3266, 4
        %v3268 = vadd.f32 %v3266, %v3267
        %v3269 = vrot.slane %v3268, 2
        %v3270 = vadd.f32 %v3268, %v3269
        %v3271 = vrot.slane %v3270, 1
        %v3272 = vadd.f32 %v3270, %v3271
        %v3273 = vadd.f32 %v3245, %v3247
        %v3274 = vadd.f32 %v3273, %v3249
        %v3275 = vadd.f32 %v3274, %v3251
        %v3276 = vadd.f32 %v3275, %v3253
        %v3277 = vadd.f32 %v3276, %v3255
        %v3278 = vadd.f32 %v3277, %v3257
        %v3279 = vadd.f32 %v3278, %v3259
        %v3280 = vrot.slane %v3279, 4
        %v3281 = vadd.f32 %v3279, %v3280
        %v3282 = vrot.slane %v3281, 2
        %v3283 = vadd.f32 %v3281, %v3282
        %v3284 = vrot.slane %v3283, 1
        %v3285 = vadd.f32 %v3283, %v3284
        %v3286 = vadd.f32 %v3230, %v3243
        %3287 = vadd.xlane.f32.xlu0 %v3286
        %v3288 = vpop.xlane.xlu0 %3287
        %v3289 = vadd.f32 %v3272, %v3285
        %3290 = vadd.xlane.f32.xlu0 %v3289
        %v3291 = vpop.xlane.xlu0 %3290
        %v3292 = vmul.f32 %v3288, 6.1035156e-05
        %v3293 = vmul.f32 %v3291, 6.1035156e-05
        %v3294 = vmul.f32 %v3292, %v3292
        %v3295 = vsub.f32 %v3293, %v3294
        %v3296 = vmax.f32 %v3295, 0.0
        %v3297 = vadd.f32 %v3296, 1e-08
        %v3298 = vrsqrt.pop %v3297
        %s3299 = scalar_lea.vmem %s7, 4
        %v3300 = vld [vmem:[%s3299] sm:$0x3]
        %v3301 = vmul.f32 %v3300, %v3298
        %s3302 = scalar_lea.vmem %s8, 4
        %v3303 = vld [vmem:[%s3302] sm:$0x3]
        %v3304 = vmul.f32 %v3292, %v3301
        %v3305 = vsub.f32 %v3303, %v3304
        %v3307 = vlaneseq
        %v3308 = vshrl.u32 %v3307, 7
        %v3309 = vsub.s32 0, %v3308
        %v3310 = vrot.slane %v3301, %v3309
        %v3311 = vlaneseq
        %v3312 = vshrl.u32 %v3311, 7
        %v3313 = vsub.s32 1, %v3312
        %v3314 = vrot.slane %v3301, %v3313
        %v3317 = vmul.f32 %v3202, %v3310
        %v3318 = vmul.f32 %v3203, %v3314
        %v3319 = vmul.f32 %v3204, %v3310
        %v3320 = vmul.f32 %v3205, %v3314
        %v3321 = vmul.f32 %v3206, %v3310
        %v3322 = vmul.f32 %v3207, %v3314
        %v3323 = vmul.f32 %v3208, %v3310
        %v3324 = vmul.f32 %v3209, %v3314
        %v3325 = vmul.f32 %v3210, %v3310
        %v3326 = vmul.f32 %v3211, %v3314
        %v3327 = vmul.f32 %v3212, %v3310
        %v3328 = vmul.f32 %v3213, %v3314
        %v3329 = vmul.f32 %v3214, %v3310
        %v3330 = vmul.f32 %v3215, %v3314
        %v3331 = vmul.f32 %v3216, %v3310
        %v3332 = vmul.f32 %v3217, %v3314
        %v3334 = vlaneseq
        %v3335 = vshrl.u32 %v3334, 7
        %v3336 = vsub.s32 0, %v3335
        %v3337 = vrot.slane %v3305, %v3336
        %v3338 = vlaneseq
        %v3339 = vshrl.u32 %v3338, 7
        %v3340 = vsub.s32 1, %v3339
        %v3341 = vrot.slane %v3305, %v3340
        %v3344 = vadd.f32 %v3317, %v3337
        %v3345 = vadd.f32 %v3318, %v3341
        %v3346 = vadd.f32 %v3319, %v3337
        %v3347 = vadd.f32 %v3320, %v3341
        %v3348 = vadd.f32 %v3321, %v3337
        %v3349 = vadd.f32 %v3322, %v3341
        %v3350 = vadd.f32 %v3323, %v3337
        %v3351 = vadd.f32 %v3324, %v3341
        %v3352 = vadd.f32 %v3325, %v3337
        %v3353 = vadd.f32 %v3326, %v3341
        %v3354 = vadd.f32 %v3327, %v3337
        %v3355 = vadd.f32 %v3328, %v3341
        %v3356 = vadd.f32 %v3329, %v3337
        %v3357 = vadd.f32 %v3330, %v3341
        %v3358 = vadd.f32 %v3331, %v3337
        %v3359 = vadd.f32 %v3332, %v3341
        %s3360 = scalar_lea.vmem %s9, 16
        %v3361 = vld [vmem:[%s3360] sm:$0x77]
        %v3378 = vrot.slane %v3344, 4
        %v3379 = vrot.slane %v3345, 4
        %v3380 = vrot.slane %v3346, 4
        %v3381 = vsel %vm540, %v3378, %v3380
        %v3382 = vrot.slane %v3347, 4
        %v3383 = vsel %vm540, %v3379, %v3382
        %v3384 = vrot.slane %v3348, 4
        %v3385 = vsel %vm540, %v3380, %v3384
        %v3386 = vrot.slane %v3349, 4
        %v3387 = vsel %vm540, %v3382, %v3386
        %v3388 = vrot.slane %v3350, 4
        %v3389 = vsel %vm540, %v3384, %v3388
        %v3390 = vrot.slane %v3351, 4
        %v3391 = vsel %vm540, %v3386, %v3390
        %v3392 = vrot.slane %v3352, 4
        %v3393 = vsel %vm540, %v3388, %v3392
        %v3394 = vrot.slane %v3353, 4
        %v3395 = vsel %vm540, %v3390, %v3394
        %v3396 = vrot.slane %v3354, 4
        %v3397 = vsel %vm540, %v3392, %v3396
        %v3398 = vrot.slane %v3355, 4
        %v3399 = vsel %vm540, %v3394, %v3398
        %v3400 = vrot.slane %v3356, 4
        %v3401 = vsel %vm540, %v3396, %v3400
        %v3402 = vrot.slane %v3357, 4
        %v3403 = vsel %vm540, %v3398, %v3402
        %v3404 = vrot.slane %v3358, 4
        %v3405 = vsel %vm540, %v3400, %v3404
        %v3406 = vrot.slane %v3359, 4
        %v3407 = vsel %vm540, %v3402, %v3406
        %v3426 = vsel %vm540, 0.0, %v3378
        %v3427 = vsel %vm540, 0.0, %v3379
        %v3428 = vsel %vm540, %v3404, 0.0
        %v3429 = vsel %vm540, %v3406, 0.0
        %v3431 = vlaneseq
        %v3432 = vshrl.u32 %v3431, 7
        %v3433 = vsub.s32 0, %v3432
        %v3434 = vrot.slane %v3361, %v3433
        %v3435 = vlaneseq
        %v3436 = vshrl.u32 %v3435, 7
        %v3437 = vsub.s32 4, %v3436
        %v3438 = vrot.slane %v3361, %v3437
        %v3441 = vlaneseq
        %v3442 = vshrl.u32 %v3441, 7
        %v3443 = vsub.s32 0, %v3442
        %v3444 = vrot.slane %v3434, %v3443
        %v3445 = vlaneseq
        %v3446 = vshrl.u32 %v3445, 7
        %v3447 = vsub.s32 0, %v3446
        %v3448 = vrot.slane %v3438, %v3447
        %v3449 = vmul.f32 %v3426, %v3444
        %v3450 = vmul.f32 %v3427, %v3448
        %v3451 = vmul.f32 %v3381, %v3444
        %v3452 = vmul.f32 %v3383, %v3448
        %v3453 = vmul.f32 %v3385, %v3444
        %v3454 = vmul.f32 %v3387, %v3448
        %v3455 = vmul.f32 %v3389, %v3444
        %v3456 = vmul.f32 %v3391, %v3448
        %v3457 = vmul.f32 %v3393, %v3444
        %v3458 = vmul.f32 %v3395, %v3448
        %v3459 = vmul.f32 %v3397, %v3444
        %v3460 = vmul.f32 %v3399, %v3448
        %v3461 = vmul.f32 %v3401, %v3444
        %v3462 = vmul.f32 %v3403, %v3448
        %v3463 = vmul.f32 %v3405, %v3444
        %v3464 = vmul.f32 %v3407, %v3448
        %v3465 = vlaneseq
        %v3466 = vshrl.u32 %v3465, 7
        %v3467 = vsub.s32 1, %v3466
        %v3468 = vrot.slane %v3361, %v3467
        %v3469 = vlaneseq
        %v3470 = vshrl.u32 %v3469, 7
        %v3471 = vsub.s32 5, %v3470
        %v3472 = vrot.slane %v3361, %v3471
        %v3475 = vlaneseq
        %v3476 = vshrl.u32 %v3475, 7
        %v3477 = vsub.s32 1, %v3476
        %v3478 = vrot.slane %v3468, %v3477
        %v3479 = vlaneseq
        %v3480 = vshrl.u32 %v3479, 7
        %v3481 = vsub.s32 1, %v3480
        %v3482 = vrot.slane %v3472, %v3481
        %v3483 = vmul.f32 %v3426, %v3478
        %v3484 = vmul.f32 %v3427, %v3482
        %v3485 = vmul.f32 %v3381, %v3478
        %v3486 = vmul.f32 %v3383, %v3482
        %v3487 = vmul.f32 %v3385, %v3478
        %v3488 = vmul.f32 %v3387, %v3482
        %v3489 = vmul.f32 %v3389, %v3478
        %v3490 = vmul.f32 %v3391, %v3482
        %v3491 = vmul.f32 %v3393, %v3478
        %v3492 = vmul.f32 %v3395, %v3482
        %v3493 = vmul.f32 %v3397, %v3478
        %v3494 = vmul.f32 %v3399, %v3482
        %v3495 = vmul.f32 %v3401, %v3478
        %v3496 = vmul.f32 %v3403, %v3482
        %v3497 = vmul.f32 %v3405, %v3478
        %v3498 = vmul.f32 %v3407, %v3482
        %v3499 = vmul.f32 %v3428, %v3478
        %v3500 = vmul.f32 %v3429, %v3482
        %v3519 = vrot.slane %v3483, 4
        %v3520 = vrot.slane %v3485, 4
        %v3521 = vsel %vm540, %v3519, %v3520
        %v3522 = vrot.slane %v3484, 4
        %v3523 = vrot.slane %v3486, 4
        %v3524 = vsel %vm540, %v3522, %v3523
        %v3525 = vrot.slane %v3487, 4
        %v3526 = vsel %vm540, %v3520, %v3525
        %v3527 = vrot.slane %v3488, 4
        %v3528 = vsel %vm540, %v3523, %v3527
        %v3529 = vrot.slane %v3489, 4
        %v3530 = vsel %vm540, %v3525, %v3529
        %v3531 = vrot.slane %v3490, 4
        %v3532 = vsel %vm540, %v3527, %v3531
        %v3533 = vrot.slane %v3491, 4
        %v3534 = vsel %vm540, %v3529, %v3533
        %v3535 = vrot.slane %v3492, 4
        %v3536 = vsel %vm540, %v3531, %v3535
        %v3537 = vrot.slane %v3493, 4
        %v3538 = vsel %vm540, %v3533, %v3537
        %v3539 = vrot.slane %v3494, 4
        %v3540 = vsel %vm540, %v3535, %v3539
        %v3541 = vrot.slane %v3495, 4
        %v3542 = vsel %vm540, %v3537, %v3541
        %v3543 = vrot.slane %v3496, 4
        %v3544 = vsel %vm540, %v3539, %v3543
        %v3545 = vrot.slane %v3497, 4
        %v3546 = vsel %vm540, %v3541, %v3545
        %v3547 = vrot.slane %v3498, 4
        %v3548 = vsel %vm540, %v3543, %v3547
        %v3549 = vrot.slane %v3499, 4
        %v3550 = vsel %vm540, %v3545, %v3549
        %v3551 = vrot.slane %v3500, 4
        %v3552 = vsel %vm540, %v3547, %v3551
        %v3569 = vadd.f32 %v3449, %v3521
        %v3570 = vadd.f32 %v3450, %v3524
        %v3571 = vadd.f32 %v3451, %v3526
        %v3572 = vadd.f32 %v3452, %v3528
        %v3573 = vadd.f32 %v3453, %v3530
        %v3574 = vadd.f32 %v3454, %v3532
        %v3575 = vadd.f32 %v3455, %v3534
        %v3576 = vadd.f32 %v3456, %v3536
        %v3577 = vadd.f32 %v3457, %v3538
        %v3578 = vadd.f32 %v3458, %v3540
        %v3579 = vadd.f32 %v3459, %v3542
        %v3580 = vadd.f32 %v3460, %v3544
        %v3581 = vadd.f32 %v3461, %v3546
        %v3582 = vadd.f32 %v3462, %v3548
        %v3583 = vadd.f32 %v3463, %v3550
        %v3584 = vadd.f32 %v3464, %v3552
        %v3585 = vlaneseq
        %v3586 = vshrl.u32 %v3585, 7
        %v3587 = vsub.s32 2, %v3586
        %v3588 = vrot.slane %v3361, %v3587
        %v3589 = vlaneseq
        %v3590 = vshrl.u32 %v3589, 7
        %v3591 = vsub.s32 6, %v3590
        %v3592 = vrot.slane %v3361, %v3591
        %v3595 = vlaneseq
        %v3596 = vshrl.u32 %v3595, 7
        %v3597 = vsub.s32 2, %v3596
        %v3598 = vrot.slane %v3588, %v3597
        %v3599 = vlaneseq
        %v3600 = vshrl.u32 %v3599, 7
        %v3601 = vsub.s32 2, %v3600
        %v3602 = vrot.slane %v3592, %v3601
        %v3603 = vmul.f32 %v3381, %v3598
        %v3604 = vmul.f32 %v3383, %v3602
        %v3605 = vmul.f32 %v3385, %v3598
        %v3606 = vmul.f32 %v3387, %v3602
        %v3607 = vmul.f32 %v3389, %v3598
        %v3608 = vmul.f32 %v3391, %v3602
        %v3609 = vmul.f32 %v3393, %v3598
        %v3610 = vmul.f32 %v3395, %v3602
        %v3611 = vmul.f32 %v3397, %v3598
        %v3612 = vmul.f32 %v3399, %v3602
        %v3613 = vmul.f32 %v3401, %v3598
        %v3614 = vmul.f32 %v3403, %v3602
        %v3615 = vmul.f32 %v3405, %v3598
        %v3616 = vmul.f32 %v3407, %v3602
        %v3617 = vmul.f32 %v3428, %v3598
        %v3618 = vmul.f32 %v3429, %v3602
        %v3619 = vadd.f32 %v3569, %v3603
        %v3620 = vadd.f32 %v3570, %v3604
        %v3621 = vadd.f32 %v3571, %v3605
        %v3622 = vadd.f32 %v3572, %v3606
        %v3623 = vadd.f32 %v3573, %v3607
        %v3624 = vadd.f32 %v3574, %v3608
        %v3625 = vadd.f32 %v3575, %v3609
        %v3626 = vadd.f32 %v3576, %v3610
        %v3627 = vadd.f32 %v3577, %v3611
        %v3628 = vadd.f32 %v3578, %v3612
        %v3629 = vadd.f32 %v3579, %v3613
        %v3630 = vadd.f32 %v3580, %v3614
        %v3631 = vadd.f32 %v3581, %v3615
        %v3632 = vadd.f32 %v3582, %v3616
        %v3633 = vadd.f32 %v3583, %v3617
        %v3634 = vadd.f32 %v3584, %v3618
        %vm3635 = vcmp.ge.f32.partialorder %v3619, 0.0
        %vm3636 = vcmp.ge.f32.partialorder %v3620, 0.0
        %vm3637 = vcmp.ge.f32.partialorder %v3621, 0.0
        %vm3638 = vcmp.ge.f32.partialorder %v3622, 0.0
        %vm3639 = vcmp.ge.f32.partialorder %v3623, 0.0
        %vm3640 = vcmp.ge.f32.partialorder %v3624, 0.0
        %vm3641 = vcmp.ge.f32.partialorder %v3625, 0.0
        %vm3642 = vcmp.ge.f32.partialorder %v3626, 0.0
        %vm3643 = vcmp.ge.f32.partialorder %v3627, 0.0
        %vm3644 = vcmp.ge.f32.partialorder %v3628, 0.0
        %vm3645 = vcmp.ge.f32.partialorder %v3629, 0.0
        %vm3646 = vcmp.ge.f32.partialorder %v3630, 0.0
        %vm3647 = vcmp.ge.f32.partialorder %v3631, 0.0
        %vm3648 = vcmp.ge.f32.partialorder %v3632, 0.0
        %vm3649 = vcmp.ge.f32.partialorder %v3633, 0.0
        %vm3650 = vcmp.ge.f32.partialorder %v3634, 0.0
        %s3651 = sld [smem:[#allocation3 + $0x82]]
        %v3652 = vstv %s3651
        %v3653 = vmul.f32 %v3652, %v3619
        %v3654 = vmul.f32 %v3652, %v3620
        %v3655 = vmul.f32 %v3652, %v3621
        %v3656 = vmul.f32 %v3652, %v3622
        %v3657 = vmul.f32 %v3652, %v3623
        %v3658 = vmul.f32 %v3652, %v3624
        %v3659 = vmul.f32 %v3652, %v3625
        %v3660 = vmul.f32 %v3652, %v3626
        %v3661 = vmul.f32 %v3652, %v3627
        %v3662 = vmul.f32 %v3652, %v3628
        %v3663 = vmul.f32 %v3652, %v3629
        %v3664 = vmul.f32 %v3652, %v3630
        %v3665 = vmul.f32 %v3652, %v3631
        %v3666 = vmul.f32 %v3652, %v3632
        %v3667 = vmul.f32 %v3652, %v3633
        %v3668 = vmul.f32 %v3652, %v3634
        %v3669 = vsel %vm3635, %v3619, %v3653
        %v3670 = vsel %vm3636, %v3620, %v3654
        %v3671 = vsel %vm3637, %v3621, %v3655
        %v3672 = vsel %vm3638, %v3622, %v3656
        %v3673 = vsel %vm3639, %v3623, %v3657
        %v3674 = vsel %vm3640, %v3624, %v3658
        %v3675 = vsel %vm3641, %v3625, %v3659
        %v3676 = vsel %vm3642, %v3626, %v3660
        %v3677 = vsel %vm3643, %v3627, %v3661
        %v3678 = vsel %vm3644, %v3628, %v3662
        %v3679 = vsel %vm3645, %v3629, %v3663
        %v3680 = vsel %vm3646, %v3630, %v3664
        %v3681 = vsel %vm3647, %v3631, %v3665
        %v3682 = vsel %vm3648, %v3632, %v3666
        %v3683 = vsel %vm3649, %v3633, %v3667
        %v3684 = vsel %vm3650, %v3634, %v3668
        %v3685 = vadd.f32 %v3669, %v3671
        %v3686 = vadd.f32 %v3685, %v3673
        %v3687 = vadd.f32 %v3686, %v3675
        %v3688 = vadd.f32 %v3687, %v3677
        %v3689 = vadd.f32 %v3688, %v3679
        %v3690 = vadd.f32 %v3689, %v3681
        %v3691 = vadd.f32 %v3690, %v3683
        %v3692 = vrot.slane %v3691, 4
        %v3693 = vadd.f32 %v3691, %v3692
        %v3694 = vrot.slane %v3693, 2
        %v3695 = vadd.f32 %v3693, %v3694
        %v3696 = vrot.slane %v3695, 1
        %v3697 = vadd.f32 %v3695, %v3696
        %v3698 = vadd.f32 %v3670, %v3672
        %v3699 = vadd.f32 %v3698, %v3674
        %v3700 = vadd.f32 %v3699, %v3676
        %v3701 = vadd.f32 %v3700, %v3678
        %v3702 = vadd.f32 %v3701, %v3680
        %v3703 = vadd.f32 %v3702, %v3682
        %v3704 = vadd.f32 %v3703, %v3684
        %v3705 = vrot.slane %v3704, 4
        %v3706 = vadd.f32 %v3704, %v3705
        %v3707 = vrot.slane %v3706, 2
        %v3708 = vadd.f32 %v3706, %v3707
        %v3709 = vrot.slane %v3708, 1
        %v3710 = vadd.f32 %v3708, %v3709
        %v3711 = vmul.f32 %v3669, %v3669
        %v3712 = vmul.f32 %v3670, %v3670
        %v3713 = vmul.f32 %v3671, %v3671
        %v3714 = vmul.f32 %v3672, %v3672
        %v3715 = vmul.f32 %v3673, %v3673
        %v3716 = vmul.f32 %v3674, %v3674
        %v3717 = vmul.f32 %v3675, %v3675
        %v3718 = vmul.f32 %v3676, %v3676
        %v3719 = vmul.f32 %v3677, %v3677
        %v3720 = vmul.f32 %v3678, %v3678
        %v3721 = vmul.f32 %v3679, %v3679
        %v3722 = vmul.f32 %v3680, %v3680
        %v3723 = vmul.f32 %v3681, %v3681
        %v3724 = vmul.f32 %v3682, %v3682
        %v3725 = vmul.f32 %v3683, %v3683
        %v3726 = vmul.f32 %v3684, %v3684
        %v3727 = vadd.f32 %v3711, %v3713
        %v3728 = vadd.f32 %v3727, %v3715
        %v3729 = vadd.f32 %v3728, %v3717
        %v3730 = vadd.f32 %v3729, %v3719
        %v3731 = vadd.f32 %v3730, %v3721
        %v3732 = vadd.f32 %v3731, %v3723
        %v3733 = vadd.f32 %v3732, %v3725
        %v3734 = vrot.slane %v3733, 4
        %v3735 = vadd.f32 %v3733, %v3734
        %v3736 = vrot.slane %v3735, 2
        %v3737 = vadd.f32 %v3735, %v3736
        %v3738 = vrot.slane %v3737, 1
        %v3739 = vadd.f32 %v3737, %v3738
        %v3740 = vadd.f32 %v3712, %v3714
        %v3741 = vadd.f32 %v3740, %v3716
        %v3742 = vadd.f32 %v3741, %v3718
        %v3743 = vadd.f32 %v3742, %v3720
        %v3744 = vadd.f32 %v3743, %v3722
        %v3745 = vadd.f32 %v3744, %v3724
        %v3746 = vadd.f32 %v3745, %v3726
        %v3747 = vrot.slane %v3746, 4
        %v3748 = vadd.f32 %v3746, %v3747
        %v3749 = vrot.slane %v3748, 2
        %v3750 = vadd.f32 %v3748, %v3749
        %v3751 = vrot.slane %v3750, 1
        %v3752 = vadd.f32 %v3750, %v3751
        %v3753 = vadd.f32 %v3697, %v3710
        %3754 = vadd.xlane.f32.xlu0 %v3753
        %v3755 = vpop.xlane.xlu0 %3754
        %v3756 = vadd.f32 %v3739, %v3752
        %3757 = vadd.xlane.f32.xlu0 %v3756
        %v3758 = vpop.xlane.xlu0 %3757
        %v3759 = vmul.f32 %v3755, 6.1035156e-05
        %v3760 = vmul.f32 %v3758, 6.1035156e-05
        %v3761 = vmul.f32 %v3759, %v3759
        %v3762 = vsub.f32 %v3760, %v3761
        %v3763 = vmax.f32 %v3762, 0.0
        %v3764 = vadd.f32 %v3763, 1e-08
        %v3765 = vrsqrt.pop %v3764
        %v3766 = vpack.c.bf16 %v3671, %v3669
        %v3767 = vpack.c.bf16 %v3672, %v3670
        %v3768 = vpack.c.bf16 %v3675, %v3673
        %v3769 = vpack.c.bf16 %v3676, %v3674
        %v3770 = vpack.c.bf16 %v3679, %v3677
        %v3771 = vpack.c.bf16 %v3680, %v3678
        %v3772 = vpack.c.bf16 %v3683, %v3681
        %v3773 = vpack.c.bf16 %v3684, %v3682
        %s3774 = scalar_lea.vmem %s10, 256
        %v3775 = vld [vmem:[%s3774] sm:$0xf]
        %v3776 = vld [vmem:[%s3774 + $0x4] sm:$0xf]
        %v3777 = vld [vmem:[%s3774 + $0x8] sm:$0xf]
        %v3778 = vld [vmem:[%s3774 + $0xc] sm:$0xf]
        %v3779 = vld [vmem:[%s3774 + $0x10] sm:$0xf]
        %v3780 = vld [vmem:[%s3774 + $0x14] sm:$0xf]
        %v3781 = vld [vmem:[%s3774 + $0x18] sm:$0xf]
        %v3782 = vld [vmem:[%s3774 + $0x1c] sm:$0xf]
        %v3783 = vld [vmem:[%s3774 + $0x20] sm:$0xf]
        %v3784 = vld [vmem:[%s3774 + $0x24] sm:$0xf]
        %v3785 = vld [vmem:[%s3774 + $0x28] sm:$0xf]
        %v3786 = vld [vmem:[%s3774 + $0x2c] sm:$0xf]
        %v3787 = vld [vmem:[%s3774 + $0x30] sm:$0xf]
        %v3788 = vld [vmem:[%s3774 + $0x34] sm:$0xf]
        %v3789 = vld [vmem:[%s3774 + $0x38] sm:$0xf]
        %v3790 = vld [vmem:[%s3774 + $0x3c] sm:$0xf]
        %v3791 = vld [vmem:[%s3774 + $0x40] sm:$0xf]
        %v3792 = vld [vmem:[%s3774 + $0x44] sm:$0xf]
        %v3793 = vld [vmem:[%s3774 + $0x48] sm:$0xf]
        %v3794 = vld [vmem:[%s3774 + $0x4c] sm:$0xf]
        %v3795 = vld [vmem:[%s3774 + $0x50] sm:$0xf]
        %v3796 = vld [vmem:[%s3774 + $0x54] sm:$0xf]
        %v3797 = vld [vmem:[%s3774 + $0x58] sm:$0xf]
        %v3798 = vld [vmem:[%s3774 + $0x5c] sm:$0xf]
        %v3799 = vld [vmem:[%s3774 + $0x60] sm:$0xf]
        %v3800 = vld [vmem:[%s3774 + $0x64] sm:$0xf]
        %v3801 = vld [vmem:[%s3774 + $0x68] sm:$0xf]
        %v3802 = vld [vmem:[%s3774 + $0x6c] sm:$0xf]
        %v3803 = vld [vmem:[%s3774 + $0x70] sm:$0xf]
        %v3804 = vld [vmem:[%s3774 + $0x74] sm:$0xf]
        %v3805 = vld [vmem:[%s3774 + $0x78] sm:$0xf]
        %v3806 = vld [vmem:[%s3774 + $0x7c] sm:$0xf]
        %v3839 = vunpack.c.l.b16 %v3775
        %v3840 = vunpack.c.l.b16 %v3776
        %v3841 = vunpack.c.l.b16 %v3777
        %v3842 = vunpack.c.l.b16 %v3778
        %v3843 = vunpack.c.l.b16 %v3779
        %v3844 = vunpack.c.l.b16 %v3780
        %v3845 = vunpack.c.l.b16 %v3781
        %v3846 = vunpack.c.l.b16 %v3782
        %v3847 = vunpack.c.l.b16 %v3783
        %v3848 = vunpack.c.l.b16 %v3784
        %v3849 = vunpack.c.l.b16 %v3785
        %v3850 = vunpack.c.l.b16 %v3786
        %v3851 = vunpack.c.l.b16 %v3787
        %v3852 = vunpack.c.l.b16 %v3788
        %v3853 = vunpack.c.l.b16 %v3789
        %v3854 = vunpack.c.l.b16 %v3790
        %v3855 = vunpack.c.l.b16 %v3791
        %v3856 = vunpack.c.l.b16 %v3792
        %v3857 = vunpack.c.l.b16 %v3793
        %v3858 = vunpack.c.l.b16 %v3794
        %v3859 = vunpack.c.l.b16 %v3795
        %v3860 = vunpack.c.l.b16 %v3796
        %v3861 = vunpack.c.l.b16 %v3797
        %v3862 = vunpack.c.l.b16 %v3798
        %v3863 = vunpack.c.l.b16 %v3799
        %v3864 = vunpack.c.l.b16 %v3800
        %v3865 = vunpack.c.l.b16 %v3801
        %v3866 = vunpack.c.l.b16 %v3802
        %v3867 = vunpack.c.l.b16 %v3803
        %v3868 = vunpack.c.l.b16 %v3804
        %v3869 = vunpack.c.l.b16 %v3805
        %v3870 = vunpack.c.l.b16 %v3806
        %v3871 = vpack.c.b16 %v3840, %v3839
        %v3872 = vpack.c.b16 %v3842, %v3841
        %v3873 = vpack.c.b16 %v3844, %v3843
        %v3874 = vpack.c.b16 %v3846, %v3845
        %v3875 = vpack.c.b16 %v3848, %v3847
        %v3876 = vpack.c.b16 %v3850, %v3849
        %v3877 = vpack.c.b16 %v3852, %v3851
        %v3878 = vpack.c.b16 %v3854, %v3853
        %v3879 = vpack.c.b16 %v3856, %v3855
        %v3880 = vpack.c.b16 %v3858, %v3857
        %v3881 = vpack.c.b16 %v3860, %v3859
        %v3882 = vpack.c.b16 %v3862, %v3861
        %v3883 = vpack.c.b16 %v3864, %v3863
        %v3884 = vpack.c.b16 %v3866, %v3865
        %v3885 = vpack.c.b16 %v3868, %v3867
        %v3886 = vpack.c.b16 %v3870, %v3869
        %3903 = vmatprep.subr.bf16.mxu0 0
        %3904 = vmatpush1.bf16.msra.mxu0 %v3878
        %3905 = vmatprep.subr.bf16.mxu0 0
        %3906 = vmatpush1.bf16.msra.mxu0 %v3877
        %3907 = vmatprep.subr.bf16.mxu0 0
        %3908 = vmatpush1.bf16.msra.mxu0 %v3876
        %3909 = vmatprep.subr.bf16.mxu0 0
        %3910 = vmatpush1.bf16.msra.mxu0 %v3875
        %3911 = vmatprep.subr.bf16.mxu0 0
        %3912 = vmatpush1.bf16.msra.mxu0 %v3874
        %3913 = vmatprep.subr.bf16.mxu0 0
        %3914 = vmatpush1.bf16.msra.mxu0 %v3873
        %3915 = vmatprep.subr.bf16.mxu0 0
        %3916 = vmatpush1.bf16.msra.mxu0 %v3872
        %3917 = vmatprep.subr.bf16.mxu0 0
        %3918 = vmatpush1.bf16.msra.mxu0 %v3871
        %3919 = vmatprep.subr.bf16.mxu0 0
        %3920 = vmatpush2.bf16.msra.mxu0 %v3886
        %3921 = vmatprep.subr.bf16.mxu0 0
        %3922 = vmatpush2.bf16.msra.mxu0 %v3885
        %3923 = vmatprep.subr.bf16.mxu0 0
        %3924 = vmatpush2.bf16.msra.mxu0 %v3884
        %3925 = vmatprep.subr.bf16.mxu0 0
        %3926 = vmatpush2.bf16.msra.mxu0 %v3883
        %3927 = vmatprep.subr.bf16.mxu0 0
        %3928 = vmatpush2.bf16.msra.mxu0 %v3882
        %3929 = vmatprep.subr.bf16.mxu0 0
        %3930 = vmatpush2.bf16.msra.mxu0 %v3881
        %3931 = vmatprep.subr.bf16.mxu0 0
        %3932 = vmatpush2.bf16.msra.mxu0 %v3880
        %3933 = vmatprep.subr.bf16.mxu0 0
        %3934 = vmatpush2.bf16.msra.mxu0 %v3879
        %3935 = vmatprep.mubr.bf16.mxu0 %v3767
        %3936 = vmatmul.mubr.bf16.gmra.mxu0 %v3766
        %v3937 = vpop.f32.mrf.mxu0
        %v3938 = vadd.f32 0.0, %v3937
        %v3939 = vpop.f32.mrf.mxu0
        %v3940 = vpop.f32.mrf.mxu0
        %v3941 = vadd.f32 0.0, %v3940
        %v3942 = vpop.f32.mrf.mxu0
        %3943 = vmatprep.mubr.bf16.mxu0 %v3769
        %3944 = vmatmul.mubr.bf16.gmra.mxu0 %v3768
        %v3945 = vpop.f32.mrf.mxu0
        %v3946 = vadd.f32 0.0, %v3945
        %v3947 = vpop.f32.mrf.mxu0
        %v3948 = vpop.f32.mrf.mxu0
        %v3949 = vadd.f32 0.0, %v3948
        %v3950 = vpop.f32.mrf.mxu0
        %3951 = vmatprep.mubr.bf16.mxu0 %v3771
        %3952 = vmatmul.mubr.bf16.gmra.mxu0 %v3770
        %v3953 = vpop.f32.mrf.mxu0
        %v3954 = vadd.f32 0.0, %v3953
        %v3955 = vpop.f32.mrf.mxu0
        %v3956 = vpop.f32.mrf.mxu0
        %v3957 = vadd.f32 0.0, %v3956
        %v3958 = vpop.f32.mrf.mxu0
        %3959 = vmatprep.mubr.bf16.mxu0 %v3773
        %3960 = vmatmul.mubr.bf16.gmra.mxu0 %v3772
        %v3961 = vpop.f32.mrf.mxu0
        %v3962 = vadd.f32 0.0, %v3961
        %v3963 = vpop.f32.mrf.mxu0
        %v3964 = vpop.f32.mrf.mxu0
        %v3965 = vadd.f32 0.0, %v3964
        %v3966 = vpop.f32.mrf.mxu0
        %3967 = vdwg.mxu0
        %s3968 = scalar_lea.vmem %s12, 2
        %v3969 = vld [vmem:[%s3968] sm:$0x1]
        %v3970 = vmul.f32 %v3759, %v3765
        %s3971 = scalar_lea.vmem %s11, 2
        %v3972 = vld [vmem:[%s3971] sm:$0x1]
        %v3973 = vmul.f32 %v3970, %v3972
        %v3974 = vsub.f32 %v3969, %v3973
        %v3975 = vmul.f32 %v3938, %v3765
        %v3976 = vmul.f32 %v3941, %v3765
        %v3977 = vmul.f32 %v3946, %v3765
        %v3978 = vmul.f32 %v3949, %v3765
        %v3979 = vmul.f32 %v3954, %v3765
        %v3980 = vmul.f32 %v3957, %v3765
        %v3981 = vmul.f32 %v3962, %v3765
        %v3982 = vmul.f32 %v3965, %v3765
        %v3984 = vlaneseq
        %v3985 = vshrl.u32 %v3984, 7
        %v3986 = vsub.s32 0, %v3985
        %v3987 = vrot.slane %v3974, %v3986
        %v3989 = vadd.f32 %v3975, %v3987
        %v3990 = vadd.f32 %v3976, %v3987
        %v3991 = vadd.f32 %v3977, %v3987
        %v3992 = vadd.f32 %v3978, %v3987
        %v3993 = vadd.f32 %v3979, %v3987
        %v3994 = vadd.f32 %v3980, %v3987
        %v3995 = vadd.f32 %v3981, %v3987
        %v3996 = vadd.f32 %v3982, %v3987
        %v3997 = vadd.f32 %v2986, %v3989
        %v3998 = vadd.f32 %v2987, %v3990
        %v3999 = vadd.f32 %v2988, %v3991
        %v4000 = vadd.f32 %v2989, %v3992
        %v4001 = vadd.f32 %v2990, %v3993
        %v4002 = vadd.f32 %v2991, %v3994
        %v4003 = vadd.f32 %v2992, %v3995
        %v4004 = vadd.f32 %v2993, %v3996
        %v4005 = vpack.c.bf16 %v3998, %v3997
        %v4006 = vpack.c.bf16 %v4000, %v3999
        %v4007 = vpack.c.bf16 %v4002, %v4001
        %v4008 = vpack.c.bf16 %v4004, %v4003
        %s4009 = scalar_lea.vmem %s6, 384
        %v4010 = vld [vmem:[%s4009] sm:$0xff]
        %v4011 = vld [vmem:[%s4009 + $0x8] sm:$0xff]
        %v4012 = vld [vmem:[%s4009 + $0x10] sm:$0xff]
        %v4013 = vld [vmem:[%s4009 + $0x18] sm:$0xff]
        %v4014 = vld [vmem:[%s4009 + $0x20] sm:$0xff]
        %v4015 = vld [vmem:[%s4009 + $0x28] sm:$0xff]
        %v4016 = vld [vmem:[%s4009 + $0x30] sm:$0xff]
        %v4017 = vld [vmem:[%s4009 + $0x38] sm:$0xff]
        %v4018 = vld [vmem:[%s4009 + $0x40] sm:$0xff]
        %v4019 = vld [vmem:[%s4009 + $0x48] sm:$0xff]
        %v4020 = vld [vmem:[%s4009 + $0x50] sm:$0xff]
        %v4021 = vld [vmem:[%s4009 + $0x58] sm:$0xff]
        %v4022 = vld [vmem:[%s4009 + $0x60] sm:$0xff]
        %v4023 = vld [vmem:[%s4009 + $0x68] sm:$0xff]
        %v4024 = vld [vmem:[%s4009 + $0x70] sm:$0xff]
        %v4025 = vld [vmem:[%s4009 + $0x78] sm:$0xff]
        %v4042 = vunpack.c.l.b16 %v4010
        %v4043 = vunpack.c.h.b16 %v4010
        %v4044 = vunpack.c.l.b16 %v4011
        %v4045 = vunpack.c.h.b16 %v4011
        %v4046 = vunpack.c.l.b16 %v4012
        %v4047 = vunpack.c.h.b16 %v4012
        %v4048 = vunpack.c.l.b16 %v4013
        %v4049 = vunpack.c.h.b16 %v4013
        %v4050 = vunpack.c.l.b16 %v4014
        %v4051 = vunpack.c.h.b16 %v4014
        %v4052 = vunpack.c.l.b16 %v4015
        %v4053 = vunpack.c.h.b16 %v4015
        %v4054 = vunpack.c.l.b16 %v4016
        %v4055 = vunpack.c.h.b16 %v4016
        %v4056 = vunpack.c.l.b16 %v4017
        %v4057 = vunpack.c.h.b16 %v4017
        %v4058 = vunpack.c.l.b16 %v4018
        %v4059 = vunpack.c.h.b16 %v4018
        %v4060 = vunpack.c.l.b16 %v4019
        %v4061 = vunpack.c.h.b16 %v4019
        %v4062 = vunpack.c.l.b16 %v4020
        %v4063 = vunpack.c.h.b16 %v4020
        %v4064 = vunpack.c.l.b16 %v4021
        %v4065 = vunpack.c.h.b16 %v4021
        %v4066 = vunpack.c.l.b16 %v4022
        %v4067 = vunpack.c.h.b16 %v4022
        %v4068 = vunpack.c.l.b16 %v4023
        %v4069 = vunpack.c.h.b16 %v4023
        %v4070 = vunpack.c.l.b16 %v4024
        %v4071 = vunpack.c.h.b16 %v4024
        %v4072 = vunpack.c.l.b16 %v4025
        %v4073 = vunpack.c.h.b16 %v4025
        %v4074 = vpack.c.b16 %v4044, %v4042
        %v4075 = vpack.c.b16 %v4045, %v4043
        %v4076 = vpack.c.b16 %v4048, %v4046
        %v4077 = vpack.c.b16 %v4049, %v4047
        %v4078 = vpack.c.b16 %v4052, %v4050
        %v4079 = vpack.c.b16 %v4053, %v4051
        %v4080 = vpack.c.b16 %v4056, %v4054
        %v4081 = vpack.c.b16 %v4057, %v4055
        %v4082 = vpack.c.b16 %v4060, %v4058
        %v4083 = vpack.c.b16 %v4061, %v4059
        %v4084 = vpack.c.b16 %v4064, %v4062
        %v4085 = vpack.c.b16 %v4065, %v4063
        %v4086 = vpack.c.b16 %v4068, %v4066
        %v4087 = vpack.c.b16 %v4069, %v4067
        %v4088 = vpack.c.b16 %v4072, %v4070
        %v4089 = vpack.c.b16 %v4073, %v4071
        %4106 = vmatprep.subr.bf16.mxu0 %v4089
        %4107 = vmatpush1.bf16.msra.mxu0 %v4088
        %4108 = vmatprep.subr.bf16.mxu0 %v4087
        %4109 = vmatpush1.bf16.msra.mxu0 %v4086
        %4110 = vmatprep.subr.bf16.mxu0 %v4085
        %4111 = vmatpush1.bf16.msra.mxu0 %v4084
        %4112 = vmatprep.subr.bf16.mxu0 %v4083
        %4113 = vmatpush1.bf16.msra.mxu0 %v4082
        %4114 = vmatprep.subr.bf16.mxu0 %v4081
        %4115 = vmatpush1.bf16.msra.mxu0 %v4080
        %4116 = vmatprep.subr.bf16.mxu0 %v4079
        %4117 = vmatpush1.bf16.msra.mxu0 %v4078
        %4118 = vmatprep.subr.bf16.mxu0 %v4077
        %4119 = vmatpush1.bf16.msra.mxu0 %v4076
        %4120 = vmatprep.subr.bf16.mxu0 %v4075
        %4121 = vmatpush1.bf16.msra.mxu0 %v4074
        %4122 = vmatprep.subr.bf16.mxu0 0
        %4123 = vmatpush2.bf16.msra.mxu0 0
        %4124 = vmatprep.subr.bf16.mxu0 0
        %4125 = vmatpush2.bf16.msra.mxu0 0
        %4126 = vmatprep.subr.bf16.mxu0 0
        %4127 = vmatpush2.bf16.msra.mxu0 0
        %4128 = vmatprep.subr.bf16.mxu0 0
        %4129 = vmatpush2.bf16.msra.mxu0 0
        %4130 = vmatprep.subr.bf16.mxu0 0
        %4131 = vmatpush2.bf16.msra.mxu0 0
        %4132 = vmatprep.subr.bf16.mxu0 0
        %4133 = vmatpush2.bf16.msra.mxu0 0
        %4134 = vmatprep.subr.bf16.mxu0 0
        %4135 = vmatpush2.bf16.msra.mxu0 0
        %4136 = vmatprep.subr.bf16.mxu0 0
        %4137 = vmatpush2.bf16.msra.mxu0 0
        %4138 = vmatprep.mubr.bf16.mxu0 0
        %4139 = vmatmul.mubr.bf16.gmra.mxu0 %v4005
        %v4140 = vpop.f32.mrf.mxu0
        %v4141 = vadd.f32 0.0, %v4140
        %v4142 = vpop.f32.mrf.mxu0
        %v4143 = vadd.f32 0.0, %v4142
        %v4144 = vpop.f32.mrf.mxu0
        %v4145 = vadd.f32 0.0, %v4144
        %v4146 = vpop.f32.mrf.mxu0
        %v4147 = vadd.f32 0.0, %v4146
        %4148 = vmatprep.mubr.bf16.mxu0 0
        %4149 = vmatmul.mubr.bf16.gmra.mxu0 %v4006
        %v4150 = vpop.f32.mrf.mxu0
        %v4151 = vadd.f32 0.0, %v4150
        %v4152 = vpop.f32.mrf.mxu0
        %v4153 = vadd.f32 0.0, %v4152
        %v4154 = vpop.f32.mrf.mxu0
        %v4155 = vadd.f32 0.0, %v4154
        %v4156 = vpop.f32.mrf.mxu0
        %v4157 = vadd.f32 0.0, %v4156
        %4158 = vmatprep.mubr.bf16.mxu0 0
        %4159 = vmatmul.mubr.bf16.gmra.mxu0 %v4007
        %v4160 = vpop.f32.mrf.mxu0
        %v4161 = vadd.f32 0.0, %v4160
        %v4162 = vpop.f32.mrf.mxu0
        %v4163 = vadd.f32 0.0, %v4162
        %v4164 = vpop.f32.mrf.mxu0
        %v4165 = vadd.f32 0.0, %v4164
        %v4166 = vpop.f32.mrf.mxu0
        %v4167 = vadd.f32 0.0, %v4166
        %4168 = vmatprep.mubr.bf16.mxu0 0
        %4169 = vmatmul.mubr.bf16.gmra.mxu0 %v4008
        %v4170 = vpop.f32.mrf.mxu0
        %v4171 = vadd.f32 0.0, %v4170
        %v4172 = vpop.f32.mrf.mxu0
        %v4173 = vadd.f32 0.0, %v4172
        %v4174 = vpop.f32.mrf.mxu0
        %v4175 = vadd.f32 0.0, %v4174
        %v4176 = vpop.f32.mrf.mxu0
        %v4177 = vadd.f32 0.0, %v4176
        %4178 = vdwg.mxu0
        %vm4179 = vcmp.ge.f32.partialorder %v4141, 0.0
        %vm4180 = vcmp.ge.f32.partialorder %v4143, 0.0
        %vm4181 = vcmp.ge.f32.partialorder %v4145, 0.0
        %vm4182 = vcmp.ge.f32.partialorder %v4147, 0.0
        %vm4183 = vcmp.ge.f32.partialorder %v4151, 0.0
        %vm4184 = vcmp.ge.f32.partialorder %v4153, 0.0
        %vm4185 = vcmp.ge.f32.partialorder %v4155, 0.0
        %vm4186 = vcmp.ge.f32.partialorder %v4157, 0.0
        %vm4187 = vcmp.ge.f32.partialorder %v4161, 0.0
        %vm4188 = vcmp.ge.f32.partialorder %v4163, 0.0
        %vm4189 = vcmp.ge.f32.partialorder %v4165, 0.0
        %vm4190 = vcmp.ge.f32.partialorder %v4167, 0.0
        %vm4191 = vcmp.ge.f32.partialorder %v4171, 0.0
        %vm4192 = vcmp.ge.f32.partialorder %v4173, 0.0
        %vm4193 = vcmp.ge.f32.partialorder %v4175, 0.0
        %vm4194 = vcmp.ge.f32.partialorder %v4177, 0.0
        %s4195 = sld [smem:[#allocation3 + $0x3]]
        %v4196 = vstv %s4195
        %v4197 = vmul.f32 %v4196, %v4141
        %v4198 = vmul.f32 %v4196, %v4143
        %v4199 = vmul.f32 %v4196, %v4145
        %v4200 = vmul.f32 %v4196, %v4147
        %v4201 = vmul.f32 %v4196, %v4151
        %v4202 = vmul.f32 %v4196, %v4153
        %v4203 = vmul.f32 %v4196, %v4155
        %v4204 = vmul.f32 %v4196, %v4157
        %v4205 = vmul.f32 %v4196, %v4161
        %v4206 = vmul.f32 %v4196, %v4163
        %v4207 = vmul.f32 %v4196, %v4165
        %v4208 = vmul.f32 %v4196, %v4167
        %v4209 = vmul.f32 %v4196, %v4171
        %v4210 = vmul.f32 %v4196, %v4173
        %v4211 = vmul.f32 %v4196, %v4175
        %v4212 = vmul.f32 %v4196, %v4177
        %v4213 = vsel %vm4179, %v4141, %v4197
        %v4214 = vsel %vm4180, %v4143, %v4198
        %v4215 = vsel %vm4181, %v4145, %v4199
        %v4216 = vsel %vm4182, %v4147, %v4200
        %v4217 = vsel %vm4183, %v4151, %v4201
        %v4218 = vsel %vm4184, %v4153, %v4202
        %v4219 = vsel %vm4185, %v4155, %v4203
        %v4220 = vsel %vm4186, %v4157, %v4204
        %v4221 = vsel %vm4187, %v4161, %v4205
        %v4222 = vsel %vm4188, %v4163, %v4206
        %v4223 = vsel %vm4189, %v4165, %v4207
        %v4224 = vsel %vm4190, %v4167, %v4208
        %v4225 = vsel %vm4191, %v4171, %v4209
        %v4226 = vsel %vm4192, %v4173, %v4210
        %v4227 = vsel %vm4193, %v4175, %v4211
        %v4228 = vsel %vm4194, %v4177, %v4212
        %v4229 = vadd.f32 %v4213, %v4215
        %v4230 = vadd.f32 %v4229, %v4217
        %v4231 = vadd.f32 %v4230, %v4219
        %v4232 = vadd.f32 %v4231, %v4221
        %v4233 = vadd.f32 %v4232, %v4223
        %v4234 = vadd.f32 %v4233, %v4225
        %v4235 = vadd.f32 %v4234, %v4227
        %v4236 = vrot.slane %v4235, 4
        %v4237 = vadd.f32 %v4235, %v4236
        %v4238 = vrot.slane %v4237, 2
        %v4239 = vadd.f32 %v4237, %v4238
        %v4240 = vrot.slane %v4239, 1
        %v4241 = vadd.f32 %v4239, %v4240
        %v4242 = vadd.f32 %v4214, %v4216
        %v4243 = vadd.f32 %v4242, %v4218
        %v4244 = vadd.f32 %v4243, %v4220
        %v4245 = vadd.f32 %v4244, %v4222
        %v4246 = vadd.f32 %v4245, %v4224
        %v4247 = vadd.f32 %v4246, %v4226
        %v4248 = vadd.f32 %v4247, %v4228
        %v4249 = vrot.slane %v4248, 4
        %v4250 = vadd.f32 %v4248, %v4249
        %v4251 = vrot.slane %v4250, 2
        %v4252 = vadd.f32 %v4250, %v4251
        %v4253 = vrot.slane %v4252, 1
        %v4254 = vadd.f32 %v4252, %v4253
        %v4255 = vmul.f32 %v4213, %v4213
        %v4256 = vmul.f32 %v4214, %v4214
        %v4257 = vmul.f32 %v4215, %v4215
        %v4258 = vmul.f32 %v4216, %v4216
        %v4259 = vmul.f32 %v4217, %v4217
        %v4260 = vmul.f32 %v4218, %v4218
        %v4261 = vmul.f32 %v4219, %v4219
        %v4262 = vmul.f32 %v4220, %v4220
        %v4263 = vmul.f32 %v4221, %v4221
        %v4264 = vmul.f32 %v4222, %v4222
        %v4265 = vmul.f32 %v4223, %v4223
        %v4266 = vmul.f32 %v4224, %v4224
        %v4267 = vmul.f32 %v4225, %v4225
        %v4268 = vmul.f32 %v4226, %v4226
        %v4269 = vmul.f32 %v4227, %v4227
        %v4270 = vmul.f32 %v4228, %v4228
        %v4271 = vadd.f32 %v4255, %v4257
        %v4272 = vadd.f32 %v4271, %v4259
        %v4273 = vadd.f32 %v4272, %v4261
        %v4274 = vadd.f32 %v4273, %v4263
        %v4275 = vadd.f32 %v4274, %v4265
        %v4276 = vadd.f32 %v4275, %v4267
        %v4277 = vadd.f32 %v4276, %v4269
        %v4278 = vrot.slane %v4277, 4
        %v4279 = vadd.f32 %v4277, %v4278
        %v4280 = vrot.slane %v4279, 2
        %v4281 = vadd.f32 %v4279, %v4280
        %v4282 = vrot.slane %v4281, 1
        %v4283 = vadd.f32 %v4281, %v4282
        %v4284 = vadd.f32 %v4256, %v4258
        %v4285 = vadd.f32 %v4284, %v4260
        %v4286 = vadd.f32 %v4285, %v4262
        %v4287 = vadd.f32 %v4286, %v4264
        %v4288 = vadd.f32 %v4287, %v4266
        %v4289 = vadd.f32 %v4288, %v4268
        %v4290 = vadd.f32 %v4289, %v4270
        %v4291 = vrot.slane %v4290, 4
        %v4292 = vadd.f32 %v4290, %v4291
        %v4293 = vrot.slane %v4292, 2
        %v4294 = vadd.f32 %v4292, %v4293
        %v4295 = vrot.slane %v4294, 1
        %v4296 = vadd.f32 %v4294, %v4295
        %v4297 = vadd.f32 %v4241, %v4254
        %4298 = vadd.xlane.f32.xlu0 %v4297
        %v4299 = vpop.xlane.xlu0 %4298
        %v4300 = vadd.f32 %v4283, %v4296
        %4301 = vadd.xlane.f32.xlu0 %v4300
        %v4302 = vpop.xlane.xlu0 %4301
        %v4303 = vmul.f32 %v4299, 6.1035156e-05
        %v4304 = vmul.f32 %v4302, 6.1035156e-05
        %v4305 = vmul.f32 %v4303, %v4303
        %v4306 = vsub.f32 %v4304, %v4305
        %v4307 = vmax.f32 %v4306, 0.0
        %v4308 = vadd.f32 %v4307, 1e-08
        %v4309 = vrsqrt.pop %v4308
        %s4310 = scalar_lea.vmem %s7, 6
        %v4311 = vld [vmem:[%s4310] sm:$0x3]
        %v4312 = vmul.f32 %v4311, %v4309
        %s4313 = scalar_lea.vmem %s8, 6
        %v4314 = vld [vmem:[%s4313] sm:$0x3]
        %v4315 = vmul.f32 %v4303, %v4312
        %v4316 = vsub.f32 %v4314, %v4315
        %v4318 = vlaneseq
        %v4319 = vshrl.u32 %v4318, 7
        %v4320 = vsub.s32 0, %v4319
        %v4321 = vrot.slane %v4312, %v4320
        %v4322 = vlaneseq
        %v4323 = vshrl.u32 %v4322, 7
        %v4324 = vsub.s32 1, %v4323
        %v4325 = vrot.slane %v4312, %v4324
        %v4328 = vmul.f32 %v4213, %v4321
        %v4329 = vmul.f32 %v4214, %v4325
        %v4330 = vmul.f32 %v4215, %v4321
        %v4331 = vmul.f32 %v4216, %v4325
        %v4332 = vmul.f32 %v4217, %v4321
        %v4333 = vmul.f32 %v4218, %v4325
        %v4334 = vmul.f32 %v4219, %v4321
        %v4335 = vmul.f32 %v4220, %v4325
        %v4336 = vmul.f32 %v4221, %v4321
        %v4337 = vmul.f32 %v4222, %v4325
        %v4338 = vmul.f32 %v4223, %v4321
        %v4339 = vmul.f32 %v4224, %v4325
        %v4340 = vmul.f32 %v4225, %v4321
        %v4341 = vmul.f32 %v4226, %v4325
        %v4342 = vmul.f32 %v4227, %v4321
        %v4343 = vmul.f32 %v4228, %v4325
        %v4345 = vlaneseq
        %v4346 = vshrl.u32 %v4345, 7
        %v4347 = vsub.s32 0, %v4346
        %v4348 = vrot.slane %v4316, %v4347
        %v4349 = vlaneseq
        %v4350 = vshrl.u32 %v4349, 7
        %v4351 = vsub.s32 1, %v4350
        %v4352 = vrot.slane %v4316, %v4351
        %v4355 = vadd.f32 %v4328, %v4348
        %v4356 = vadd.f32 %v4329, %v4352
        %v4357 = vadd.f32 %v4330, %v4348
        %v4358 = vadd.f32 %v4331, %v4352
        %v4359 = vadd.f32 %v4332, %v4348
        %v4360 = vadd.f32 %v4333, %v4352
        %v4361 = vadd.f32 %v4334, %v4348
        %v4362 = vadd.f32 %v4335, %v4352
        %v4363 = vadd.f32 %v4336, %v4348
        %v4364 = vadd.f32 %v4337, %v4352
        %v4365 = vadd.f32 %v4338, %v4348
        %v4366 = vadd.f32 %v4339, %v4352
        %v4367 = vadd.f32 %v4340, %v4348
        %v4368 = vadd.f32 %v4341, %v4352
        %v4369 = vadd.f32 %v4342, %v4348
        %v4370 = vadd.f32 %v4343, %v4352
        %s4371 = scalar_lea.vmem %s9, 24
        %v4372 = vld [vmem:[%s4371] sm:$0x77]
        %v4374 = vlaneseq
        %v4375 = vshrl.u32 %v4374, 7
        %v4376 = vsub.s32 0, %v4375
        %v4377 = vrot.slane %v4372, %v4376
        %v4378 = vlaneseq
        %v4379 = vshrl.u32 %v4378, 7
        %v4380 = vsub.s32 4, %v4379
        %v4381 = vrot.slane %v4372, %v4380
        %v4384 = vlaneseq
        %v4385 = vshrl.u32 %v4384, 7
        %v4386 = vsub.s32 0, %v4385
        %v4387 = vrot.slane %v4377, %v4386
        %v4388 = vlaneseq
        %v4389 = vshrl.u32 %v4388, 7
        %v4390 = vsub.s32 0, %v4389
        %v4391 = vrot.slane %v4381, %v4390
        %v4392 = vmul.f32 %v4387, 0.0
        %v4393 = vmul.f32 %v4391, 0.0
        %v4394 = vmul.f32 %v4355, %v4387
        %v4395 = vmul.f32 %v4356, %v4391
        %v4396 = vmul.f32 %v4357, %v4387
        %v4397 = vmul.f32 %v4358, %v4391
        %v4398 = vmul.f32 %v4359, %v4387
        %v4399 = vmul.f32 %v4360, %v4391
        %v4400 = vmul.f32 %v4361, %v4387
        %v4401 = vmul.f32 %v4362, %v4391
        %v4402 = vmul.f32 %v4363, %v4387
        %v4403 = vmul.f32 %v4364, %v4391
        %v4404 = vmul.f32 %v4365, %v4387
        %v4405 = vmul.f32 %v4366, %v4391
        %v4406 = vmul.f32 %v4367, %v4387
        %v4407 = vmul.f32 %v4368, %v4391
        %v4408 = vlaneseq
        %v4409 = vshrl.u32 %v4408, 7
        %v4410 = vsub.s32 1, %v4409
        %v4411 = vrot.slane %v4372, %v4410
        %v4412 = vlaneseq
        %v4413 = vshrl.u32 %v4412, 7
        %v4414 = vsub.s32 5, %v4413
        %v4415 = vrot.slane %v4372, %v4414
        %v4418 = vlaneseq
        %v4419 = vshrl.u32 %v4418, 7
        %v4420 = vsub.s32 1, %v4419
        %v4421 = vrot.slane %v4411, %v4420
        %v4422 = vlaneseq
        %v4423 = vshrl.u32 %v4422, 7
        %v4424 = vsub.s32 1, %v4423
        %v4425 = vrot.slane %v4415, %v4424
        %v4426 = vmul.f32 %v4355, %v4421
        %v4427 = vmul.f32 %v4356, %v4425
        %v4428 = vmul.f32 %v4357, %v4421
        %v4429 = vmul.f32 %v4358, %v4425
        %v4430 = vmul.f32 %v4359, %v4421
        %v4431 = vmul.f32 %v4360, %v4425
        %v4432 = vmul.f32 %v4361, %v4421
        %v4433 = vmul.f32 %v4362, %v4425
        %v4434 = vmul.f32 %v4363, %v4421
        %v4435 = vmul.f32 %v4364, %v4425
        %v4436 = vmul.f32 %v4365, %v4421
        %v4437 = vmul.f32 %v4366, %v4425
        %v4438 = vmul.f32 %v4367, %v4421
        %v4439 = vmul.f32 %v4368, %v4425
        %v4440 = vmul.f32 %v4369, %v4421
        %v4441 = vmul.f32 %v4370, %v4425
        %v4442 = vadd.f32 %v4392, %v4426
        %v4443 = vadd.f32 %v4393, %v4427
        %v4444 = vadd.f32 %v4394, %v4428
        %v4445 = vadd.f32 %v4395, %v4429
        %v4446 = vadd.f32 %v4396, %v4430
        %v4447 = vadd.f32 %v4397, %v4431
        %v4448 = vadd.f32 %v4398, %v4432
        %v4449 = vadd.f32 %v4399, %v4433
        %v4450 = vadd.f32 %v4400, %v4434
        %v4451 = vadd.f32 %v4401, %v4435
        %v4452 = vadd.f32 %v4402, %v4436
        %v4453 = vadd.f32 %v4403, %v4437
        %v4454 = vadd.f32 %v4404, %v4438
        %v4455 = vadd.f32 %v4405, %v4439
        %v4456 = vadd.f32 %v4406, %v4440
        %v4457 = vadd.f32 %v4407, %v4441
        %v4458 = vlaneseq
        %v4459 = vshrl.u32 %v4458, 7
        %v4460 = vsub.s32 2, %v4459
        %v4461 = vrot.slane %v4372, %v4460
        %v4462 = vlaneseq
        %v4463 = vshrl.u32 %v4462, 7
        %v4464 = vsub.s32 6, %v4463
        %v4465 = vrot.slane %v4372, %v4464
        %v4468 = vlaneseq
        %v4469 = vshrl.u32 %v4468, 7
        %v4470 = vsub.s32 2, %v4469
        %v4471 = vrot.slane %v4461, %v4470
        %v4472 = vlaneseq
        %v4473 = vshrl.u32 %v4472, 7
        %v4474 = vsub.s32 2, %v4473
        %v4475 = vrot.slane %v4465, %v4474
        %v4476 = vmul.f32 %v4357, %v4471
        %v4477 = vmul.f32 %v4358, %v4475
        %v4478 = vmul.f32 %v4359, %v4471
        %v4479 = vmul.f32 %v4360, %v4475
        %v4480 = vmul.f32 %v4361, %v4471
        %v4481 = vmul.f32 %v4362, %v4475
        %v4482 = vmul.f32 %v4363, %v4471
        %v4483 = vmul.f32 %v4364, %v4475
        %v4484 = vmul.f32 %v4365, %v4471
        %v4485 = vmul.f32 %v4366, %v4475
        %v4486 = vmul.f32 %v4367, %v4471
        %v4487 = vmul.f32 %v4368, %v4475
        %v4488 = vmul.f32 %v4369, %v4471
        %v4489 = vmul.f32 %v4370, %v4475
        %v4490 = vmul.f32 %v4471, 0.0
        %v4491 = vmul.f32 %v4475, 0.0
        %v4492 = vadd.f32 %v4442, %v4476
        %v4493 = vadd.f32 %v4443, %v4477
        %v4494 = vadd.f32 %v4444, %v4478
        %v4495 = vadd.f32 %v4445, %v4479
        %v4496 = vadd.f32 %v4446, %v4480
        %v4497 = vadd.f32 %v4447, %v4481
        %v4498 = vadd.f32 %v4448, %v4482
        %v4499 = vadd.f32 %v4449, %v4483
        %v4500 = vadd.f32 %v4450, %v4484
        %v4501 = vadd.f32 %v4451, %v4485
        %v4502 = vadd.f32 %v4452, %v4486
        %v4503 = vadd.f32 %v4453, %v4487
        %v4504 = vadd.f32 %v4454, %v4488
        %v4505 = vadd.f32 %v4455, %v4489
        %v4506 = vadd.f32 %v4456, %v4490
        %v4507 = vadd.f32 %v4457, %v4491
        %vm4508 = vcmp.ge.f32.partialorder %v4492, 0.0
        %vm4509 = vcmp.ge.f32.partialorder %v4493, 0.0
        %vm4510 = vcmp.ge.f32.partialorder %v4494, 0.0
        %vm4511 = vcmp.ge.f32.partialorder %v4495, 0.0
        %vm4512 = vcmp.ge.f32.partialorder %v4496, 0.0
        %vm4513 = vcmp.ge.f32.partialorder %v4497, 0.0
        %vm4514 = vcmp.ge.f32.partialorder %v4498, 0.0
        %vm4515 = vcmp.ge.f32.partialorder %v4499, 0.0
        %vm4516 = vcmp.ge.f32.partialorder %v4500, 0.0
        %vm4517 = vcmp.ge.f32.partialorder %v4501, 0.0
        %vm4518 = vcmp.ge.f32.partialorder %v4502, 0.0
        %vm4519 = vcmp.ge.f32.partialorder %v4503, 0.0
        %vm4520 = vcmp.ge.f32.partialorder %v4504, 0.0
        %vm4521 = vcmp.ge.f32.partialorder %v4505, 0.0
        %vm4522 = vcmp.ge.f32.partialorder %v4506, 0.0
        %vm4523 = vcmp.ge.f32.partialorder %v4507, 0.0
        %s4524 = sld [smem:[#allocation3 + $0x83]]
        %v4525 = vstv %s4524
        %v4526 = vmul.f32 %v4525, %v4492
        %v4527 = vmul.f32 %v4525, %v4493
        %v4528 = vmul.f32 %v4525, %v4494
        %v4529 = vmul.f32 %v4525, %v4495
        %v4530 = vmul.f32 %v4525, %v4496
        %v4531 = vmul.f32 %v4525, %v4497
        %v4532 = vmul.f32 %v4525, %v4498
        %v4533 = vmul.f32 %v4525, %v4499
        %v4534 = vmul.f32 %v4525, %v4500
        %v4535 = vmul.f32 %v4525, %v4501
        %v4536 = vmul.f32 %v4525, %v4502
        %v4537 = vmul.f32 %v4525, %v4503
        %v4538 = vmul.f32 %v4525, %v4504
        %v4539 = vmul.f32 %v4525, %v4505
        %v4540 = vmul.f32 %v4525, %v4506
        %v4541 = vmul.f32 %v4525, %v4507
        %v4542 = vsel %vm4508, %v4492, %v4526
        %v4543 = vsel %vm4509, %v4493, %v4527
        %v4544 = vsel %vm4510, %v4494, %v4528
        %v4545 = vsel %vm4511, %v4495, %v4529
        %v4546 = vsel %vm4512, %v4496, %v4530
        %v4547 = vsel %vm4513, %v4497, %v4531
        %v4548 = vsel %vm4514, %v4498, %v4532
        %v4549 = vsel %vm4515, %v4499, %v4533
        %v4550 = vsel %vm4516, %v4500, %v4534
        %v4551 = vsel %vm4517, %v4501, %v4535
        %v4552 = vsel %vm4518, %v4502, %v4536
        %v4553 = vsel %vm4519, %v4503, %v4537
        %v4554 = vsel %vm4520, %v4504, %v4538
        %v4555 = vsel %vm4521, %v4505, %v4539
        %v4556 = vsel %vm4522, %v4506, %v4540
        %v4557 = vsel %vm4523, %v4507, %v4541
        %v4558 = vadd.f32 %v4542, %v4544
        %v4559 = vadd.f32 %v4558, %v4546
        %v4560 = vadd.f32 %v4559, %v4548
        %v4561 = vadd.f32 %v4560, %v4550
        %v4562 = vadd.f32 %v4561, %v4552
        %v4563 = vadd.f32 %v4562, %v4554
        %v4564 = vadd.f32 %v4563, %v4556
        %v4565 = vrot.slane %v4564, 4
        %v4566 = vadd.f32 %v4564, %v4565
        %v4567 = vrot.slane %v4566, 2
        %v4568 = vadd.f32 %v4566, %v4567
        %v4569 = vrot.slane %v4568, 1
        %v4570 = vadd.f32 %v4568, %v4569
        %v4571 = vadd.f32 %v4543, %v4545
        %v4572 = vadd.f32 %v4571, %v4547
        %v4573 = vadd.f32 %v4572, %v4549
        %v4574 = vadd.f32 %v4573, %v4551
        %v4575 = vadd.f32 %v4574, %v4553
        %v4576 = vadd.f32 %v4575, %v4555
        %v4577 = vadd.f32 %v4576, %v4557
        %v4578 = vrot.slane %v4577, 4
        %v4579 = vadd.f32 %v4577, %v4578
        %v4580 = vrot.slane %v4579, 2
        %v4581 = vadd.f32 %v4579, %v4580
        %v4582 = vrot.slane %v4581, 1
        %v4583 = vadd.f32 %v4581, %v4582
        %v4584 = vmul.f32 %v4542, %v4542
        %v4585 = vmul.f32 %v4543, %v4543
        %v4586 = vmul.f32 %v4544, %v4544
        %v4587 = vmul.f32 %v4545, %v4545
        %v4588 = vmul.f32 %v4546, %v4546
        %v4589 = vmul.f32 %v4547, %v4547
        %v4590 = vmul.f32 %v4548, %v4548
        %v4591 = vmul.f32 %v4549, %v4549
        %v4592 = vmul.f32 %v4550, %v4550
        %v4593 = vmul.f32 %v4551, %v4551
        %v4594 = vmul.f32 %v4552, %v4552
        %v4595 = vmul.f32 %v4553, %v4553
        %v4596 = vmul.f32 %v4554, %v4554
        %v4597 = vmul.f32 %v4555, %v4555
        %v4598 = vmul.f32 %v4556, %v4556
        %v4599 = vmul.f32 %v4557, %v4557
        %v4600 = vadd.f32 %v4584, %v4586
        %v4601 = vadd.f32 %v4600, %v4588
        %v4602 = vadd.f32 %v4601, %v4590
        %v4603 = vadd.f32 %v4602, %v4592
        %v4604 = vadd.f32 %v4603, %v4594
        %v4605 = vadd.f32 %v4604, %v4596
        %v4606 = vadd.f32 %v4605, %v4598
        %v4607 = vrot.slane %v4606, 4
        %v4608 = vadd.f32 %v4606, %v4607
        %v4609 = vrot.slane %v4608, 2
        %v4610 = vadd.f32 %v4608, %v4609
        %v4611 = vrot.slane %v4610, 1
        %v4612 = vadd.f32 %v4610, %v4611
        %v4613 = vadd.f32 %v4585, %v4587
        %v4614 = vadd.f32 %v4613, %v4589
        %v4615 = vadd.f32 %v4614, %v4591
        %v4616 = vadd.f32 %v4615, %v4593
        %v4617 = vadd.f32 %v4616, %v4595
        %v4618 = vadd.f32 %v4617, %v4597
        %v4619 = vadd.f32 %v4618, %v4599
        %v4620 = vrot.slane %v4619, 4
        %v4621 = vadd.f32 %v4619, %v4620
        %v4622 = vrot.slane %v4621, 2
        %v4623 = vadd.f32 %v4621, %v4622
        %v4624 = vrot.slane %v4623, 1
        %v4625 = vadd.f32 %v4623, %v4624
        %v4626 = vadd.f32 %v4570, %v4583
        %4627 = vadd.xlane.f32.xlu0 %v4626
        %v4628 = vpop.xlane.xlu0 %4627
        %v4629 = vadd.f32 %v4612, %v4625
        %4630 = vadd.xlane.f32.xlu0 %v4629
        %v4631 = vpop.xlane.xlu0 %4630
        %v4632 = vmul.f32 %v4628, 6.1035156e-05
        %v4633 = vmul.f32 %v4631, 6.1035156e-05
        %v4634 = vmul.f32 %v4632, %v4632
        %v4635 = vsub.f32 %v4633, %v4634
        %v4636 = vmax.f32 %v4635, 0.0
        %v4637 = vadd.f32 %v4636, 1e-08
        %v4638 = vrsqrt.pop %v4637
        %v4639 = vpack.c.bf16 %v4544, %v4542
        %v4640 = vpack.c.bf16 %v4545, %v4543
        %v4641 = vpack.c.bf16 %v4548, %v4546
        %v4642 = vpack.c.bf16 %v4549, %v4547
        %v4643 = vpack.c.bf16 %v4552, %v4550
        %v4644 = vpack.c.bf16 %v4553, %v4551
        %v4645 = vpack.c.bf16 %v4556, %v4554
        %v4646 = vpack.c.bf16 %v4557, %v4555
        %s4647 = scalar_lea.vmem %s10, 384
        %v4648 = vld [vmem:[%s4647] sm:$0xf]
        %v4649 = vld [vmem:[%s4647 + $0x4] sm:$0xf]
        %v4650 = vld [vmem:[%s4647 + $0x8] sm:$0xf]
        %v4651 = vld [vmem:[%s4647 + $0xc] sm:$0xf]
        %v4652 = vld [vmem:[%s4647 + $0x10] sm:$0xf]
        %v4653 = vld [vmem:[%s4647 + $0x14] sm:$0xf]
        %v4654 = vld [vmem:[%s4647 + $0x18] sm:$0xf]
        %v4655 = vld [vmem:[%s4647 + $0x1c] sm:$0xf]
        %v4656 = vld [vmem:[%s4647 + $0x20] sm:$0xf]
        %v4657 = vld [vmem:[%s4647 + $0x24] sm:$0xf]
        %v4658 = vld [vmem:[%s4647 + $0x28] sm:$0xf]
        %v4659 = vld [vmem:[%s4647 + $0x2c] sm:$0xf]
        %v4660 = vld [vmem:[%s4647 + $0x30] sm:$0xf]
        %v4661 = vld [vmem:[%s4647 + $0x34] sm:$0xf]
        %v4662 = vld [vmem:[%s4647 + $0x38] sm:$0xf]
        %v4663 = vld [vmem:[%s4647 + $0x3c] sm:$0xf]
        %v4664 = vld [vmem:[%s4647 + $0x40] sm:$0xf]
        %v4665 = vld [vmem:[%s4647 + $0x44] sm:$0xf]
        %v4666 = vld [vmem:[%s4647 + $0x48] sm:$0xf]
        %v4667 = vld [vmem:[%s4647 + $0x4c] sm:$0xf]
        %v4668 = vld [vmem:[%s4647 + $0x50] sm:$0xf]
        %v4669 = vld [vmem:[%s4647 + $0x54] sm:$0xf]
        %v4670 = vld [vmem:[%s4647 + $0x58] sm:$0xf]
        %v4671 = vld [vmem:[%s4647 + $0x5c] sm:$0xf]
        %v4672 = vld [vmem:[%s4647 + $0x60] sm:$0xf]
        %v4673 = vld [vmem:[%s4647 + $0x64] sm:$0xf]
        %v4674 = vld [vmem:[%s4647 + $0x68] sm:$0xf]
        %v4675 = vld [vmem:[%s4647 + $0x6c] sm:$0xf]
        %v4676 = vld [vmem:[%s4647 + $0x70] sm:$0xf]
        %v4677 = vld [vmem:[%s4647 + $0x74] sm:$0xf]
        %v4678 = vld [vmem:[%s4647 + $0x78] sm:$0xf]
        %v4679 = vld [vmem:[%s4647 + $0x7c] sm:$0xf]
        %v4712 = vunpack.c.l.b16 %v4648
        %v4713 = vunpack.c.l.b16 %v4649
        %v4714 = vunpack.c.l.b16 %v4650
        %v4715 = vunpack.c.l.b16 %v4651
        %v4716 = vunpack.c.l.b16 %v4652
        %v4717 = vunpack.c.l.b16 %v4653
        %v4718 = vunpack.c.l.b16 %v4654
        %v4719 = vunpack.c.l.b16 %v4655
        %v4720 = vunpack.c.l.b16 %v4656
        %v4721 = vunpack.c.l.b16 %v4657
        %v4722 = vunpack.c.l.b16 %v4658
        %v4723 = vunpack.c.l.b16 %v4659
        %v4724 = vunpack.c.l.b16 %v4660
        %v4725 = vunpack.c.l.b16 %v4661
        %v4726 = vunpack.c.l.b16 %v4662
        %v4727 = vunpack.c.l.b16 %v4663
        %v4728 = vunpack.c.l.b16 %v4664
        %v4729 = vunpack.c.l.b16 %v4665
        %v4730 = vunpack.c.l.b16 %v4666
        %v4731 = vunpack.c.l.b16 %v4667
        %v4732 = vunpack.c.l.b16 %v4668
        %v4733 = vunpack.c.l.b16 %v4669
        %v4734 = vunpack.c.l.b16 %v4670
        %v4735 = vunpack.c.l.b16 %v4671
        %v4736 = vunpack.c.l.b16 %v4672
        %v4737 = vunpack.c.l.b16 %v4673
        %v4738 = vunpack.c.l.b16 %v4674
        %v4739 = vunpack.c.l.b16 %v4675
        %v4740 = vunpack.c.l.b16 %v4676
        %v4741 = vunpack.c.l.b16 %v4677
        %v4742 = vunpack.c.l.b16 %v4678
        %v4743 = vunpack.c.l.b16 %v4679
        %v4744 = vpack.c.b16 %v4713, %v4712
        %v4745 = vpack.c.b16 %v4715, %v4714
        %v4746 = vpack.c.b16 %v4717, %v4716
        %v4747 = vpack.c.b16 %v4719, %v4718
        %v4748 = vpack.c.b16 %v4721, %v4720
        %v4749 = vpack.c.b16 %v4723, %v4722
        %v4750 = vpack.c.b16 %v4725, %v4724
        %v4751 = vpack.c.b16 %v4727, %v4726
        %v4752 = vpack.c.b16 %v4729, %v4728
        %v4753 = vpack.c.b16 %v4731, %v4730
        %v4754 = vpack.c.b16 %v4733, %v4732
        %v4755 = vpack.c.b16 %v4735, %v4734
        %v4756 = vpack.c.b16 %v4737, %v4736
        %v4757 = vpack.c.b16 %v4739, %v4738
        %v4758 = vpack.c.b16 %v4741, %v4740
        %v4759 = vpack.c.b16 %v4743, %v4742
        %4776 = vmatprep.subr.bf16.mxu0 0
        %4777 = vmatpush1.bf16.msra.mxu0 %v4751
        %4778 = vmatprep.subr.bf16.mxu0 0
        %4779 = vmatpush1.bf16.msra.mxu0 %v4750
        %4780 = vmatprep.subr.bf16.mxu0 0
        %4781 = vmatpush1.bf16.msra.mxu0 %v4749
        %4782 = vmatprep.subr.bf16.mxu0 0
        %4783 = vmatpush1.bf16.msra.mxu0 %v4748
        %4784 = vmatprep.subr.bf16.mxu0 0
        %4785 = vmatpush1.bf16.msra.mxu0 %v4747
        %4786 = vmatprep.subr.bf16.mxu0 0
        %4787 = vmatpush1.bf16.msra.mxu0 %v4746
        %4788 = vmatprep.subr.bf16.mxu0 0
        %4789 = vmatpush1.bf16.msra.mxu0 %v4745
        %4790 = vmatprep.subr.bf16.mxu0 0
        %4791 = vmatpush1.bf16.msra.mxu0 %v4744
        %4792 = vmatprep.subr.bf16.mxu0 0
        %4793 = vmatpush2.bf16.msra.mxu0 %v4759
        %4794 = vmatprep.subr.bf16.mxu0 0
        %4795 = vmatpush2.bf16.msra.mxu0 %v4758
        %4796 = vmatprep.subr.bf16.mxu0 0
        %4797 = vmatpush2.bf16.msra.mxu0 %v4757
        %4798 = vmatprep.subr.bf16.mxu0 0
        %4799 = vmatpush2.bf16.msra.mxu0 %v4756
        %4800 = vmatprep.subr.bf16.mxu0 0
        %4801 = vmatpush2.bf16.msra.mxu0 %v4755
        %4802 = vmatprep.subr.bf16.mxu0 0
        %4803 = vmatpush2.bf16.msra.mxu0 %v4754
        %4804 = vmatprep.subr.bf16.mxu0 0
        %4805 = vmatpush2.bf16.msra.mxu0 %v4753
        %4806 = vmatprep.subr.bf16.mxu0 0
        %4807 = vmatpush2.bf16.msra.mxu0 %v4752
        %4808 = vmatprep.mubr.bf16.mxu0 %v4640
        %4809 = vmatmul.mubr.bf16.gmra.mxu0 %v4639
        %v4810 = vpop.f32.mrf.mxu0
        %v4811 = vadd.f32 0.0, %v4810
        %v4812 = vpop.f32.mrf.mxu0
        %v4813 = vpop.f32.mrf.mxu0
        %v4814 = vadd.f32 0.0, %v4813
        %v4815 = vpop.f32.mrf.mxu0
        %4816 = vmatprep.mubr.bf16.mxu0 %v4642
        %4817 = vmatmul.mubr.bf16.gmra.mxu0 %v4641
        %v4818 = vpop.f32.mrf.mxu0
        %v4819 = vadd.f32 0.0, %v4818
        %v4820 = vpop.f32.mrf.mxu0
        %v4821 = vpop.f32.mrf.mxu0
        %v4822 = vadd.f32 0.0, %v4821
        %v4823 = vpop.f32.mrf.mxu0
        %4824 = vmatprep.mubr.bf16.mxu0 %v4644
        %4825 = vmatmul.mubr.bf16.gmra.mxu0 %v4643
        %v4826 = vpop.f32.mrf.mxu0
        %v4827 = vadd.f32 0.0, %v4826
        %v4828 = vpop.f32.mrf.mxu0
        %v4829 = vpop.f32.mrf.mxu0
        %v4830 = vadd.f32 0.0, %v4829
        %v4831 = vpop.f32.mrf.mxu0
        %4832 = vmatprep.mubr.bf16.mxu0 %v4646
        %4833 = vmatmul.mubr.bf16.gmra.mxu0 %v4645
        %v4834 = vpop.f32.mrf.mxu0
        %v4835 = vadd.f32 0.0, %v4834
        %v4836 = vpop.f32.mrf.mxu0
        %v4837 = vpop.f32.mrf.mxu0
        %v4838 = vadd.f32 0.0, %v4837
        %v4839 = vpop.f32.mrf.mxu0
        %4840 = vdwg.mxu0
        %s4841 = scalar_lea.vmem %s12, 3
        %v4842 = vld [vmem:[%s4841] sm:$0x1]
        %v4843 = vmul.f32 %v4632, %v4638
        %s4844 = scalar_lea.vmem %s11, 3
        %v4845 = vld [vmem:[%s4844] sm:$0x1]
        %v4846 = vmul.f32 %v4843, %v4845
        %v4847 = vsub.f32 %v4842, %v4846
        %v4848 = vmul.f32 %v4811, %v4638
        %v4849 = vmul.f32 %v4814, %v4638
        %v4850 = vmul.f32 %v4819, %v4638
        %v4851 = vmul.f32 %v4822, %v4638
        %v4852 = vmul.f32 %v4827, %v4638
        %v4853 = vmul.f32 %v4830, %v4638
        %v4854 = vmul.f32 %v4835, %v4638
        %v4855 = vmul.f32 %v4838, %v4638
        %v4857 = vlaneseq
        %v4858 = vshrl.u32 %v4857, 7
        %v4859 = vsub.s32 0, %v4858
        %v4860 = vrot.slane %v4847, %v4859
        %v4862 = vadd.f32 %v4848, %v4860
        %v4863 = vadd.f32 %v4849, %v4860
        %v4864 = vadd.f32 %v4850, %v4860
        %v4865 = vadd.f32 %v4851, %v4860
        %v4866 = vadd.f32 %v4852, %v4860
        %v4867 = vadd.f32 %v4853, %v4860
        %v4868 = vadd.f32 %v4854, %v4860
        %v4869 = vadd.f32 %v4855, %v4860
        %v4870 = vadd.f32 %v3997, %v4862
        %v4871 = vadd.f32 %v3998, %v4863
        %v4872 = vadd.f32 %v3999, %v4864
        %v4873 = vadd.f32 %v4000, %v4865
        %v4874 = vadd.f32 %v4001, %v4866
        %v4875 = vadd.f32 %v4002, %v4867
        %v4876 = vadd.f32 %v4003, %v4868
        %v4877 = vadd.f32 %v4004, %v4869
        %4878 = vst [vmem:[#allocation2] sm:$0xff] %v4870
        %4879 = vst [vmem:[#allocation2 + $0x8] sm:$0xff] %v4871
        %4880 = vst [vmem:[#allocation2 + $0x10] sm:$0xff] %v4872
        %4881 = vst [vmem:[#allocation2 + $0x18] sm:$0xff] %v4873
        %4882 = vst [vmem:[#allocation2 + $0x20] sm:$0xff] %v4874
        %4883 = vst [vmem:[#allocation2 + $0x28] sm:$0xff] %v4875
        %4884 = vst [vmem:[#allocation2 + $0x30] sm:$0xff] %v4876
        %4885 = vst [vmem:[#allocation2 + $0x38] sm:$0xff] %v4877
        %v4886 = vld [vmem:[#allocation2] ss:$4 sm:$0xff]
        %s4887 = scalar_lea.vmem [#allocation2], 32
        %v4888 = vld [vmem:[%s4887] ss:$4 sm:$0xff]
        %s4889 = scalar_lea.vmem [#allocation2], 1
        %v4890 = vld [vmem:[%s4889] ss:$4 sm:$0xff]
        %s4891 = scalar_lea.vmem [#allocation2], 33
        %v4892 = vld [vmem:[%s4891] ss:$4 sm:$0xff]
        %v4893 = vadd.f32 %v4886, %v4890
        %v4894 = vadd.f32 %v4888, %v4892
        %s4895 = scalar_lea.vmem [#allocation2], 2
        %v4896 = vld [vmem:[%s4895] ss:$4 sm:$0xff]
        %s4897 = scalar_lea.vmem [#allocation2], 34
        %v4898 = vld [vmem:[%s4897] ss:$4 sm:$0xff]
        %v4899 = vadd.f32 %v4893, %v4896
        %v4900 = vadd.f32 %v4894, %v4898
        %s4901 = scalar_lea.vmem [#allocation2], 3
        %v4902 = vld [vmem:[%s4901] ss:$4 sm:$0xff]
        %s4903 = scalar_lea.vmem [#allocation2], 35
        %v4904 = vld [vmem:[%s4903] ss:$4 sm:$0xff]
        %v4905 = vadd.f32 %v4899, %v4902
        %v4906 = vadd.f32 %v4900, %v4904
        %v4907 = vmul.f32 %v4905, 0.25
        %v4908 = vmul.f32 %v4906, 0.25
        %4909 = vst [vmem:[%s454] sm:$0xff] %v4907
        %4910 = vst [vmem:[%s454 + $0x8] sm:$0xff] %v4908
        %p4911 = scmp.lt.s32.totalorder %s25, 1
        %s4912 = scalar_select %p4911, %s25, 1
        %s4913 = smul.addr %s4912, 2
        %s4914 = smul.addr %s4913, 8
        %s4915 = scalar_lea.vmem %s13, %s4914
        // Predicated region
        $region77: #{audio_net.2} parent=71 // pred_check
          %p4916 = pneg %p321
        $region78: #{audio_net.2} parent=71 // pred_check_branch
          %4918 = sbr.rel (%p4916) target = $region80
        $region79: #{audio_net.2} parent=71 // pred_region
          _
        $region80: #{audio_net.2} parent=71 // pred_fallthru
          _
      $region72: #{audio_net.2} parent=5 // pred_fallthru
        _
      %p4919 = scmp.le.s32.totalorder 2, %s20
      // Predicated region
      $region81: #{audio_net.2} parent=5 // pred_check
        %p4920 = pneg %p4919
      $region82: #{audio_net.2} parent=5 // pred_check_branch
        %4922 = sbr.rel (%p4920) target = $region84
      $region83: #{audio_net.2} parent=5 // pred_region
        %s4923 = ssub.s32 %s20, 2
        // Predicated region
        $region85: #{audio_net.2} parent=83 // pred_check
          %p4924 = pneg %p327
        $region86: #{audio_net.2} parent=83 // pred_check_branch
          %4926 = sbr.rel (%p4924) target = $region88
        $region87: #{audio_net.2} parent=83 // pred_region
          %p4927 = scmp.lt.s32.totalorder %s26, 1
          %s4928 = scalar_select %p4927, %s26, 1
          %s4929 = smul.addr %s4928, 2
          %s4930 = smul.addr %s4929, 8
          %s4931 = scalar_lea.vmem %s13, %s4930
        $region88: #{audio_net.2} parent=83 // pred_fallthru
          _
      $region84: #{audio_net.2} parent=5 // pred_fallthru
        _
    $region6: #{audio_net.2} parent=1 // loop_footer
      %s24 = sadd.s32 1, %s20
    $region7: #{audio_net.2} parent=1 // loop_footer_branch
      %19 = sbr.rel target = $region3
    $region8: #{audio_net.2} parent=1 // loop_exit
      _
    %4932 = vsyncpa [#allocation4], 1
    %s4933 = scalar_lea.sflag [#allocation4], 1
    %4934 = vsyncpa %s4933, 1

</llo_original>
